<compile_context>
chip_gen: v7x
topology: tpu7x:2x2x1
jax: 0.10.0
libtpu: 0.0.40
codegen_flags: <defaults>
</compile_context>

<pallas_src>
import functools

import numpy as np
import jax
import jax.numpy as jnp
from jax import lax
from jax.experimental import pallas as pl
from jax.experimental.pallas import tpu as pltpu

EPS = 1e-5          # nn.BatchNorm2d default
C_OUT = 32          # both conv layers in BaseConv have 32 output channels
POOL_OFFSET = 2.0   # tanh outputs lie in (-1, 1); +2 keeps every valid pool
                    # candidate > 1 > 0, so the all-zero row produced by an
                    # out-of-window (padded) one-hot selector can never win.


# ---------------------------------------------------------------------------
# Fused Pallas kernel: conv1->BN1->tanh->pool1->conv2->BN2->tanh->pool2
# ---------------------------------------------------------------------------
def _bn_tanh(y, gamma, beta):
    """Training-mode BatchNorm (batch stats, biased variance) + tanh, in f32."""
    inv_p = 1.0 / y.shape[0]
    mean = jnp.sum(y, axis=0, keepdims=True) * inv_p
    centered = y - mean
    var = jnp.sum(centered * centered, axis=0, keepdims=True) * inv_p
    scale = lax.rsqrt(var + EPS) * gamma          # folded 1/std * gamma (feedback #2)
    return jnp.tanh(centered * scale + beta)


def _maxpool_select(t, sel_ref):
    """2x2 / stride-2 / pad-1 max pool via 4 one-hot row-selection matmuls.

    sel_ref[j] is a (P_out, P_in) 0/1 matrix picking window candidate j of every
    pooled position (all-zero row where that candidate falls in the padding)."""
    tp = t + POOL_OFFSET
    out = jnp.dot(sel_ref[0], tp, preferred_element_type=jnp.float32)
    for j in range(1, 4):
        out = jnp.maximum(
            out, jnp.dot(sel_ref[j], tp, preferred_element_type=jnp.float32))
    return out - POOL_OFFSET


def fused_base_conv_kernel(p1_ref, w1_ref, g1_ref, b1_ref, s1_ref,
                           gmat_ref, w2_ref, g2_ref, b2_ref, s2_ref, out_ref):
    f32 = jnp.float32

    # ---- stage 1: conv1 (im2col matmul, bf16 MXU operands, f32 accumulate) ----
    y1 = jnp.dot(p1_ref[...], w1_ref[...], preferred_element_type=f32)   # (P1,32)
    t1 = _bn_tanh(y1, g1_ref[...], b1_ref[...])
    pooled1 = _maxpool_select(t1, s1_ref)                                 # (P2,32)

    # ---- stage 2: conv2 as 9 one-hot neighbour gathers + per-tap matmuls ----
    p1b = pooled1.astype(jnp.bfloat16)
    y2 = jnp.zeros((pooled1.shape[0], out_ref.shape[-1]), f32)
    for k in range(9):
        nbr = jnp.dot(gmat_ref[k], p1b,
                      preferred_element_type=f32).astype(jnp.bfloat16)
        y2 = y2 + jnp.dot(nbr, w2_ref[k], preferred_element_type=f32)
    t2 = _bn_tanh(y2, g2_ref[...], b2_ref[...])
    out_ref[...] = _maxpool_select(t2, s2_ref)                            # (P3,32)


# ---------------------------------------------------------------------------
# Shape-only one-hot selectors (numpy at trace time -> folded into constants)
# ---------------------------------------------------------------------------
@functools.lru_cache(maxsize=None)
def _pool_selectors(n, h, w):
    """One-hot selectors for nn.MaxPool2d(kernel_size=2, stride=2, padding=1)."""
    ho, wo = h // 2 + 1, w // 2 + 1
    sel = np.zeros((4, n * ho * wo, n * h * w), np.float32)
    for b in range(n):
        for i in range(ho):
            for j in range(wo):
                p_out = (b * ho + i) * wo + j
                for cand, (dh, dw) in enumerate(((0, 0), (0, 1), (1, 0), (1, 1))):
                    hh, ww = 2 * i - 1 + dh, 2 * j - 1 + dw
                    if 0 <= hh < h and 0 <= ww < w:
                        sel[cand, p_out, (b * h + hh) * w + ww] = 1.0
    return sel, ho, wo


@functools.lru_cache(maxsize=None)
def _conv3x3_gathers(n, h, w):
    """One-hot row gathers for the 9 taps of a 3x3 / stride-1 / zero-pad-1 conv.

    gather[k, p, q] = 1 iff tap k (row-major over (dy,dx)) of output position p
    reads input position q; rows stay all-zero where the tap hits the zero pad."""
    gather = np.zeros((9, n * h * w, n * h * w), np.float32)
    for b in range(n):
        for i in range(h):
            for j in range(w):
                p = (b * h + i) * w + j
                for k in range(9):
                    dy, dx = k // 3 - 1, k % 3 - 1
                    ii, jj = i + dy, j + dx
                    if 0 <= ii < h and 0 <= jj < w:
                        gather[k, p, (b * h + ii) * w + jj] = 1.0
    return gather


def _im2col_3x3_pad1(x_nhwc):
    """(N,H,W,C) -> (N*H*W, 9*C) patches for a 3x3 / stride-1 / zero-pad-1 conv.
    Column order (dy, dx, c) matches w.reshape(9*Cin, Cout) from (3,3,Cin,Cout)."""
    n, h, w, c = x_nhwc.shape
    xp = jnp.pad(x_nhwc, ((0, 0), (1, 1), (1, 1), (0, 0)))
    cols = [xp[:, dy:dy + h, dx:dx + w, :] for dy in range(3) for dx in range(3)]
    return jnp.concatenate(cols, axis=-1).reshape(n * h * w, 9 * c)


def _full_spec(shape):
    return pl.BlockSpec(shape, lambda *_: (0,) * len(shape))


# ---------------------------------------------------------------------------
# Forward pass
# ---------------------------------------------------------------------------
@jax.jit
def base_conv_forward(x_nchw, params):
    w1, g1, b1, w2, g2, b2 = params
    x = jnp.transpose(x_nchw, (0, 2, 3, 1)).astype(jnp.float32)   # NCHW -> NHWC
    n, h, w, c_in = x.shape

    # conv1 im2col patches, bf16 for the MXU, K zero-padded to a multiple of 128.
    k1 = 9 * c_in
    k1p = ((k1 + 127) // 128) * 128
    patches1 = _im2col_3x3_pad1(x)
    patches1 = jnp.pad(patches1, ((0, 0), (0, k1p - k1))).astype(jnp.bfloat16)
    w1p = jnp.pad(w1, ((0, k1p - k1), (0, 0))).astype(jnp.bfloat16)

    s1_np, h2, w2sz = _pool_selectors(n, h, w)        # pool1: HxW  -> H2xW2
    g_np = _conv3x3_gathers(n, h2, w2sz)              # conv2 taps on the pooled map
    s2_np, h3, w3 = _pool_selectors(n, h2, w2sz)      # pool2: H2xW2 -> H3xW3

    s1 = jnp.asarray(s1_np)                           # f32: pools f32 activations exactly
    s2 = jnp.asarray(s2_np)
    gm = jnp.asarray(g_np, dtype=jnp.bfloat16)        # 0/1 gather of bf16 data is exact
    w2b = w2.astype(jnp.bfloat16)                     # (9, 32, 32)

    c_out = w1.shape[-1]
    p1, p2, p3 = n * h * w, n * h2 * w2sz, n * h3 * w3

    cost = pl.CostEstimate(
        flops=2 * (p1 * k1p * c_out + 4 * p2 * p1 * c_out
                   + 9 * (p2 * p2 * c_out + p2 * c_out * c_out)
                   + 4 * p3 * p2 * c_out),
        transcendentals=(p1 + p2) * c_out,
        bytes_accessed=(patches1.size + w1p.size + gm.size + w2b.size) * 2
                       + (s1.size + s2.size + 4 * c_out + p3 * c_out) * 4)

    operands = (patches1, w1p, g1, b1, s1, gm, w2b, g2, b2, s2)
    out = pl.pallas_call(
        fused_base_conv_kernel,
        out_shape=jax.ShapeDtypeStruct((p3, c_out), jnp.float32),
        grid=(1,),
        in_specs=[_full_spec(a.shape) for a in operands],
        out_specs=pl.BlockSpec((p3, c_out), lambda i: (0, 0)),
        compiler_params=pltpu.CompilerParams(dimension_semantics=("arbitrary",)),
        cost_estimate=cost,
    )(*operands)

    return jnp.transpose(out.reshape(n, h3, w3, c_out), (0, 3, 1, 2))  # -> NCHW


# ---------------------------------------------------------------------------
# Parameters / reference
# ---------------------------------------------------------------------------
def init_params(key, n_channels, c_out=C_OUT):
    """Deterministic parameters mirroring the PyTorch module.  Conv biases are
    omitted: under training-mode BatchNorm they cancel exactly (feedback #2)."""
    k1, k2 = jax.random.split(key, 2)
    bnd1 = 1.0 / float(np.sqrt(9 * n_channels))
    bnd2 = 1.0 / float(np.sqrt(9 * c_out))
    w1 = jax.random.uniform(k1, (3, 3, n_channels, c_out), jnp.float32, -bnd1, bnd1)
    w2 = jax.random.uniform(k2, (3, 3, c_out, c_out), jnp.float32, -bnd2, bnd2)
    g1 = jnp.ones((1, c_out), jnp.float32)
    b1 = jnp.zeros((1, c_out), jnp.float32)
    g2 = jnp.ones((1, c_out), jnp.float32)
    b2 = jnp.zeros((1, c_out), jnp.float32)
    return (w1.reshape(9 * n_channels, c_out), g1, b1,
            w2.reshape(9, c_out, c_out), g2, b2)


def reference_forward(x_nchw, params):
    """Pure-JAX/XLA reference with the exact semantics of BaseConv.forward."""
    w1, g1, b1, w2, g2, b2 = params
    c_in = w1.shape[0] // 9
    c_out = w1.shape[1]
    x = jnp.transpose(x_nchw, (0, 2, 3, 1)).astype(jnp.float32)

    def conv(v, w_hwio):
        return lax.conv_general_dilated(
            v, w_hwio, window_strides=(1, 1), padding=((1, 1), (1, 1)),
            dimension_numbers=("NHWC", "HWIO", "NHWC"))

    def bn_tanh(v, gamma, beta):
        mean = jnp.mean(v, axis=(0, 1, 2), keepdims=True)
        var = jnp.mean((v - mean) ** 2, axis=(0, 1, 2), keepdims=True)
        vn = (v - mean) * lax.rsqrt(var + EPS)
        return jnp.tanh(vn * gamma.reshape(1, 1, 1, -1) + beta.reshape(1, 1, 1, -1))

    def maxpool(v):
        return lax.reduce_window(v, -jnp.inf, lax.max, (1, 2, 2, 1), (1, 2, 2, 1),
                                 ((0, 0), (1, 1), (1, 1), (0, 0)))

    y = maxpool(bn_tanh(conv(x, w1.reshape(3, 3, c_in, c_out)), g1, b1))
    y = maxpool(bn_tanh(conv(y, w2.reshape(3, 3, c_out, c_out)), g2, b2))
    return jnp.transpose(y, (0, 3, 1, 2))


if __name__ == "__main__":
    key = jax.random.PRNGKey(0)
    pkey, xkey = jax.random.split(key)
    n_channels = 4
    params = init_params(pkey, n_channels)
    x = jax.random.normal(xkey, (2, n_channels, 16, 16), jnp.float32)

    out = base_conv_forward(x, params)
    jax.block_until_ready(out)

    assert out.shape == (2, 32, 5, 5), out.shape
    assert bool(jnp.all(jnp.isfinite(out)))

    # Correctness check against a pure-XLA reference; tolerance covers the bf16
    # MXU operands (feedback #3) -- everything else in the kernel is exact f32.
    ref = reference_forward(x, params)
    max_err = float(jnp.max(jnp.abs(out - ref)))
    assert max_err < 0.08, f"max |pallas - reference| = {max_err}"

    print("KERNEL_OK")
</pallas_src>

<mosaic_0001>
module attributes {stable_mosaic.version = 11 : i64} {
  func.func @fused_base_conv_kernel(%arg0: i32, %arg1: memref<512x128xbf16, #tpu.memory_space<vmem>>, %arg2: memref<128x32xbf16, #tpu.memory_space<vmem>>, %arg3: memref<1x32xf32, #tpu.memory_space<vmem>>, %arg4: memref<1x32xf32, #tpu.memory_space<vmem>>, %arg5: memref<4x162x512xf32, #tpu.memory_space<vmem>>, %arg6: memref<9x162x162xbf16, #tpu.memory_space<vmem>>, %arg7: memref<9x32x32xbf16, #tpu.memory_space<vmem>>, %arg8: memref<1x32xf32, #tpu.memory_space<vmem>>, %arg9: memref<1x32xf32, #tpu.memory_space<vmem>>, %arg10: memref<4x50x162xf32, #tpu.memory_space<vmem>>, %arg11: memref<50x32xf32, #tpu.memory_space<vmem>>) attributes {dimension_semantics = [#tpu.dimension_semantics<arbitrary>], iteration_bounds = array<i64: 1>, scalar_prefetch = 0 : i64, scratch_operands = 0 : i64, tpu.core_type = #tpu.core_type<tc>, window_params = [{pipeline_mode = #tpu.pipeline_mode<synchronous>, transform_indices = @transform_0, window_bounds = array<i64: 512, 128>}, {pipeline_mode = #tpu.pipeline_mode<synchronous>, transform_indices = @transform_1, window_bounds = array<i64: 128, 32>}, {pipeline_mode = #tpu.pipeline_mode<synchronous>, transform_indices = @transform_2, window_bounds = array<i64: 1, 32>}, {pipeline_mode = #tpu.pipeline_mode<synchronous>, transform_indices = @transform_3, window_bounds = array<i64: 1, 32>}, {pipeline_mode = #tpu.pipeline_mode<synchronous>, transform_indices = @transform_4, window_bounds = array<i64: 4, 162, 512>}, {pipeline_mode = #tpu.pipeline_mode<synchronous>, transform_indices = @transform_5, window_bounds = array<i64: 9, 162, 162>}, {pipeline_mode = #tpu.pipeline_mode<synchronous>, transform_indices = @transform_6, window_bounds = array<i64: 9, 32, 32>}, {pipeline_mode = #tpu.pipeline_mode<synchronous>, transform_indices = @transform_7, window_bounds = array<i64: 1, 32>}, {pipeline_mode = #tpu.pipeline_mode<synchronous>, transform_indices = @transform_8, window_bounds = array<i64: 1, 32>}, {pipeline_mode = #tpu.pipeline_mode<synchronous>, transform_indices = @transform_9, window_bounds = array<i64: 4, 50, 162>}, {pipeline_mode = #tpu.pipeline_mode<synchronous>, transform_indices = @transform_10, window_bounds = array<i64: 50, 32>}]} {
    %c0 = arith.constant 0 : index
    %c0_0 = arith.constant 0 : index
    %0 = vector.load %arg1[%c0, %c0_0] : memref<512x128xbf16, #tpu.memory_space<vmem>>, vector<512x128xbf16>
    %c0_1 = arith.constant 0 : index
    %c0_2 = arith.constant 0 : index
    %1 = vector.load %arg2[%c0_1, %c0_2] : memref<128x32xbf16, #tpu.memory_space<vmem>>, vector<128x32xbf16>
    %cst = arith.constant dense<0.000000e+00> : vector<512x32xf32>
    %2 = tpu.matmul %0, %1, %cst {dimension_numbers = #tpu.dot_dimension_numbers<[1], [0], [0], [1], [0, 0, 1, 1], [], []>} : vector<512x128xbf16>, vector<128x32xbf16>, vector<512x32xf32> -> vector<512x32xf32>
    %c0_3 = arith.constant 0 : index
    %c0_4 = arith.constant 0 : index
    %3 = vector.load %arg3[%c0_3, %c0_4] : memref<1x32xf32, #tpu.memory_space<vmem>>, vector<1x32xf32>
    %c0_5 = arith.constant 0 : index
    %c0_6 = arith.constant 0 : index
    %4 = vector.load %arg4[%c0_5, %c0_6] : memref<1x32xf32, #tpu.memory_space<vmem>>, vector<1x32xf32>
    %cst_7 = arith.constant dense<0.000000e+00> : vector<32xf32>
    %5 = vector.multi_reduction <add>, %2, %cst_7 [0] : vector<512x32xf32> to vector<32xf32>
    %6 = vector.shape_cast %5 : vector<32xf32> to vector<1x32xf32>
    %cst_8 = arith.constant 0.001953125 : f32
    %7 = vector.broadcast %cst_8 : f32 to vector<1x32xf32>
    %8 = arith.mulf %6, %7 : vector<1x32xf32>
    %9 = vector.broadcast %8 : vector<1x32xf32> to vector<512x32xf32>
    %10 = arith.subf %2, %9 : vector<512x32xf32>
    %11 = arith.mulf %10, %10 : vector<512x32xf32>
    %cst_9 = arith.constant dense<0.000000e+00> : vector<32xf32>
    %12 = vector.multi_reduction <add>, %11, %cst_9 [0] : vector<512x32xf32> to vector<32xf32>
    %13 = vector.shape_cast %12 : vector<32xf32> to vector<1x32xf32>
    %cst_10 = arith.constant 0.001953125 : f32
    %14 = vector.broadcast %cst_10 : f32 to vector<1x32xf32>
    %15 = arith.mulf %13, %14 : vector<1x32xf32>
    %cst_11 = arith.constant 9.99999974E-6 : f32
    %16 = vector.broadcast %cst_11 : f32 to vector<1x32xf32>
    %17 = arith.addf %15, %16 : vector<1x32xf32>
    %18 = math.rsqrt %17 : vector<1x32xf32>
    %19 = arith.mulf %18, %3 : vector<1x32xf32>
    %20 = vector.broadcast %19 : vector<1x32xf32> to vector<512x32xf32>
    %21 = arith.mulf %10, %20 : vector<512x32xf32>
    %22 = vector.broadcast %4 : vector<1x32xf32> to vector<512x32xf32>
    %23 = arith.addf %21, %22 : vector<512x32xf32>
    %24 = math.tanh %23 : vector<512x32xf32>
    %cst_12 = arith.constant 2.000000e+00 : f32
    %25 = vector.broadcast %cst_12 : f32 to vector<512x32xf32>
    %26 = arith.addf %24, %25 : vector<512x32xf32>
    %c0_13 = arith.constant 0 : index
    %c0_14 = arith.constant 0 : index
    %c0_15 = arith.constant 0 : index
    %27 = vector.load %arg5[%c0_13, %c0_14, %c0_15] : memref<4x162x512xf32, #tpu.memory_space<vmem>>, vector<1x162x512xf32>
    %28 = vector.shape_cast %27 : vector<1x162x512xf32> to vector<162x512xf32>
    %cst_16 = arith.constant dense<0.000000e+00> : vector<162x32xf32>
    %29 = tpu.matmul %28, %26, %cst_16 {dimension_numbers = #tpu.dot_dimension_numbers<[1], [0], [0], [1], [0, 0, 1, 1], [], []>} : vector<162x512xf32>, vector<512x32xf32>, vector<162x32xf32> -> vector<162x32xf32>
    %c1 = arith.constant 1 : index
    %c0_17 = arith.constant 0 : index
    %c0_18 = arith.constant 0 : index
    %30 = vector.load %arg5[%c1, %c0_17, %c0_18] : memref<4x162x512xf32, #tpu.memory_space<vmem>>, vector<1x162x512xf32>
    %31 = vector.shape_cast %30 : vector<1x162x512xf32> to vector<162x512xf32>
    %cst_19 = arith.constant dense<0.000000e+00> : vector<162x32xf32>
    %32 = tpu.matmul %31, %26, %cst_19 {dimension_numbers = #tpu.dot_dimension_numbers<[1], [0], [0], [1], [0, 0, 1, 1], [], []>} : vector<162x512xf32>, vector<512x32xf32>, vector<162x32xf32> -> vector<162x32xf32>
    %33 = arith.maximumf %29, %32 : vector<162x32xf32>
    %c2 = arith.constant 2 : index
    %c0_20 = arith.constant 0 : index
    %c0_21 = arith.constant 0 : index
    %34 = vector.load %arg5[%c2, %c0_20, %c0_21] : memref<4x162x512xf32, #tpu.memory_space<vmem>>, vector<1x162x512xf32>
    %35 = vector.shape_cast %34 : vector<1x162x512xf32> to vector<162x512xf32>
    %cst_22 = arith.constant dense<0.000000e+00> : vector<162x32xf32>
    %36 = tpu.matmul %35, %26, %cst_22 {dimension_numbers = #tpu.dot_dimension_numbers<[1], [0], [0], [1], [0, 0, 1, 1], [], []>} : vector<162x512xf32>, vector<512x32xf32>, vector<162x32xf32> -> vector<162x32xf32>
    %37 = arith.maximumf %33, %36 : vector<162x32xf32>
    %c3 = arith.constant 3 : index
    %c0_23 = arith.constant 0 : index
    %c0_24 = arith.constant 0 : index
    %38 = vector.load %arg5[%c3, %c0_23, %c0_24] : memref<4x162x512xf32, #tpu.memory_space<vmem>>, vector<1x162x512xf32>
    %39 = vector.shape_cast %38 : vector<1x162x512xf32> to vector<162x512xf32>
    %cst_25 = arith.constant dense<0.000000e+00> : vector<162x32xf32>
    %40 = tpu.matmul %39, %26, %cst_25 {dimension_numbers = #tpu.dot_dimension_numbers<[1], [0], [0], [1], [0, 0, 1, 1], [], []>} : vector<162x512xf32>, vector<512x32xf32>, vector<162x32xf32> -> vector<162x32xf32>
    %41 = arith.maximumf %37, %40 : vector<162x32xf32>
    %cst_26 = arith.constant 2.000000e+00 : f32
    %42 = vector.broadcast %cst_26 : f32 to vector<162x32xf32>
    %43 = arith.subf %41, %42 : vector<162x32xf32>
    %44 = arith.truncf %43 : vector<162x32xf32> to vector<162x32xbf16>
    %cst_27 = arith.constant 0.000000e+00 : f32
    %45 = vector.broadcast %cst_27 : f32 to vector<162x32xf32>
    %c0_28 = arith.constant 0 : index
    %c0_29 = arith.constant 0 : index
    %c0_30 = arith.constant 0 : index
    %46 = vector.load %arg6[%c0_28, %c0_29, %c0_30] : memref<9x162x162xbf16, #tpu.memory_space<vmem>>, vector<1x162x162xbf16>
    %47 = vector.shape_cast %46 : vector<1x162x162xbf16> to vector<162x162xbf16>
    %cst_31 = arith.constant dense<0.000000e+00> : vector<162x32xf32>
    %48 = tpu.matmul %47, %44, %cst_31 {dimension_numbers = #tpu.dot_dimension_numbers<[1], [0], [0], [1], [0, 0, 1, 1], [], []>} : vector<162x162xbf16>, vector<162x32xbf16>, vector<162x32xf32> -> vector<162x32xf32>
    %49 = arith.truncf %48 : vector<162x32xf32> to vector<162x32xbf16>
    %c0_32 = arith.constant 0 : index
    %c0_33 = arith.constant 0 : index
    %c0_34 = arith.constant 0 : index
    %50 = vector.load %arg7[%c0_32, %c0_33, %c0_34] : memref<9x32x32xbf16, #tpu.memory_space<vmem>>, vector<1x32x32xbf16>
    %51 = vector.shape_cast %50 : vector<1x32x32xbf16> to vector<32x32xbf16>
    %cst_35 = arith.constant dense<0.000000e+00> : vector<162x32xf32>
    %52 = tpu.matmul %49, %51, %cst_35 {dimension_numbers = #tpu.dot_dimension_numbers<[1], [0], [0], [1], [0, 0, 1, 1], [], []>} : vector<162x32xbf16>, vector<32x32xbf16>, vector<162x32xf32> -> vector<162x32xf32>
    %53 = arith.addf %45, %52 : vector<162x32xf32>
    %c1_36 = arith.constant 1 : index
    %c0_37 = arith.constant 0 : index
    %c0_38 = arith.constant 0 : index
    %54 = vector.load %arg6[%c1_36, %c0_37, %c0_38] : memref<9x162x162xbf16, #tpu.memory_space<vmem>>, vector<1x162x162xbf16>
    %55 = vector.shape_cast %54 : vector<1x162x162xbf16> to vector<162x162xbf16>
    %cst_39 = arith.constant dense<0.000000e+00> : vector<162x32xf32>
    %56 = tpu.matmul %55, %44, %cst_39 {dimension_numbers = #tpu.dot_dimension_numbers<[1], [0], [0], [1], [0, 0, 1, 1], [], []>} : vector<162x162xbf16>, vector<162x32xbf16>, vector<162x32xf32> -> vector<162x32xf32>
    %57 = arith.truncf %56 : vector<162x32xf32> to vector<162x32xbf16>
    %c1_40 = arith.constant 1 : index
    %c0_41 = arith.constant 0 : index
    %c0_42 = arith.constant 0 : index
    %58 = vector.load %arg7[%c1_40, %c0_41, %c0_42] : memref<9x32x32xbf16, #tpu.memory_space<vmem>>, vector<1x32x32xbf16>
    %59 = vector.shape_cast %58 : vector<1x32x32xbf16> to vector<32x32xbf16>
    %cst_43 = arith.constant dense<0.000000e+00> : vector<162x32xf32>
    %60 = tpu.matmul %57, %59, %cst_43 {dimension_numbers = #tpu.dot_dimension_numbers<[1], [0], [0], [1], [0, 0, 1, 1], [], []>} : vector<162x32xbf16>, vector<32x32xbf16>, vector<162x32xf32> -> vector<162x32xf32>
    %61 = arith.addf %53, %60 : vector<162x32xf32>
    %c2_44 = arith.constant 2 : index
    %c0_45 = arith.constant 0 : index
    %c0_46 = arith.constant 0 : index
    %62 = vector.load %arg6[%c2_44, %c0_45, %c0_46] : memref<9x162x162xbf16, #tpu.memory_space<vmem>>, vector<1x162x162xbf16>
    %63 = vector.shape_cast %62 : vector<1x162x162xbf16> to vector<162x162xbf16>
    %cst_47 = arith.constant dense<0.000000e+00> : vector<162x32xf32>
    %64 = tpu.matmul %63, %44, %cst_47 {dimension_numbers = #tpu.dot_dimension_numbers<[1], [0], [0], [1], [0, 0, 1, 1], [], []>} : vector<162x162xbf16>, vector<162x32xbf16>, vector<162x32xf32> -> vector<162x32xf32>
    %65 = arith.truncf %64 : vector<162x32xf32> to vector<162x32xbf16>
    %c2_48 = arith.constant 2 : index
    %c0_49 = arith.constant 0 : index
    %c0_50 = arith.constant 0 : index
    %66 = vector.load %arg7[%c2_48, %c0_49, %c0_50] : memref<9x32x32xbf16, #tpu.memory_space<vmem>>, vector<1x32x32xbf16>
    %67 = vector.shape_cast %66 : vector<1x32x32xbf16> to vector<32x32xbf16>
    %cst_51 = arith.constant dense<0.000000e+00> : vector<162x32xf32>
    %68 = tpu.matmul %65, %67, %cst_51 {dimension_numbers = #tpu.dot_dimension_numbers<[1], [0], [0], [1], [0, 0, 1, 1], [], []>} : vector<162x32xbf16>, vector<32x32xbf16>, vector<162x32xf32> -> vector<162x32xf32>
    %69 = arith.addf %61, %68 : vector<162x32xf32>
    %c3_52 = arith.constant 3 : index
    %c0_53 = arith.constant 0 : index
    %c0_54 = arith.constant 0 : index
    %70 = vector.load %arg6[%c3_52, %c0_53, %c0_54] : memref<9x162x162xbf16, #tpu.memory_space<vmem>>, vector<1x162x162xbf16>
    %71 = vector.shape_cast %70 : vector<1x162x162xbf16> to vector<162x162xbf16>
    %cst_55 = arith.constant dense<0.000000e+00> : vector<162x32xf32>
    %72 = tpu.matmul %71, %44, %cst_55 {dimension_numbers = #tpu.dot_dimension_numbers<[1], [0], [0], [1], [0, 0, 1, 1], [], []>} : vector<162x162xbf16>, vector<162x32xbf16>, vector<162x32xf32> -> vector<162x32xf32>
    %73 = arith.truncf %72 : vector<162x32xf32> to vector<162x32xbf16>
    %c3_56 = arith.constant 3 : index
    %c0_57 = arith.constant 0 : index
    %c0_58 = arith.constant 0 : index
    %74 = vector.load %arg7[%c3_56, %c0_57, %c0_58] : memref<9x32x32xbf16, #tpu.memory_space<vmem>>, vector<1x32x32xbf16>
    %75 = vector.shape_cast %74 : vector<1x32x32xbf16> to vector<32x32xbf16>
    %cst_59 = arith.constant dense<0.000000e+00> : vector<162x32xf32>
    %76 = tpu.matmul %73, %75, %cst_59 {dimension_numbers = #tpu.dot_dimension_numbers<[1], [0], [0], [1], [0, 0, 1, 1], [], []>} : vector<162x32xbf16>, vector<32x32xbf16>, vector<162x32xf32> -> vector<162x32xf32>
    %77 = arith.addf %69, %76 : vector<162x32xf32>
    %c4 = arith.constant 4 : index
    %c0_60 = arith.constant 0 : index
    %c0_61 = arith.constant 0 : index
    %78 = vector.load %arg6[%c4, %c0_60, %c0_61] : memref<9x162x162xbf16, #tpu.memory_space<vmem>>, vector<1x162x162xbf16>
    %79 = vector.shape_cast %78 : vector<1x162x162xbf16> to vector<162x162xbf16>
    %cst_62 = arith.constant dense<0.000000e+00> : vector<162x32xf32>
    %80 = tpu.matmul %79, %44, %cst_62 {dimension_numbers = #tpu.dot_dimension_numbers<[1], [0], [0], [1], [0, 0, 1, 1], [], []>} : vector<162x162xbf16>, vector<162x32xbf16>, vector<162x32xf32> -> vector<162x32xf32>
    %81 = arith.truncf %80 : vector<162x32xf32> to vector<162x32xbf16>
    %c4_63 = arith.constant 4 : index
    %c0_64 = arith.constant 0 : index
    %c0_65 = arith.constant 0 : index
    %82 = vector.load %arg7[%c4_63, %c0_64, %c0_65] : memref<9x32x32xbf16, #tpu.memory_space<vmem>>, vector<1x32x32xbf16>
    %83 = vector.shape_cast %82 : vector<1x32x32xbf16> to vector<32x32xbf16>
    %cst_66 = arith.constant dense<0.000000e+00> : vector<162x32xf32>
    %84 = tpu.matmul %81, %83, %cst_66 {dimension_numbers = #tpu.dot_dimension_numbers<[1], [0], [0], [1], [0, 0, 1, 1], [], []>} : vector<162x32xbf16>, vector<32x32xbf16>, vector<162x32xf32> -> vector<162x32xf32>
    %85 = arith.addf %77, %84 : vector<162x32xf32>
    %c5 = arith.constant 5 : index
    %c0_67 = arith.constant 0 : index
    %c0_68 = arith.constant 0 : index
    %86 = vector.load %arg6[%c5, %c0_67, %c0_68] : memref<9x162x162xbf16, #tpu.memory_space<vmem>>, vector<1x162x162xbf16>
    %87 = vector.shape_cast %86 : vector<1x162x162xbf16> to vector<162x162xbf16>
    %cst_69 = arith.constant dense<0.000000e+00> : vector<162x32xf32>
    %88 = tpu.matmul %87, %44, %cst_69 {dimension_numbers = #tpu.dot_dimension_numbers<[1], [0], [0], [1], [0, 0, 1, 1], [], []>} : vector<162x162xbf16>, vector<162x32xbf16>, vector<162x32xf32> -> vector<162x32xf32>
    %89 = arith.truncf %88 : vector<162x32xf32> to vector<162x32xbf16>
    %c5_70 = arith.constant 5 : index
    %c0_71 = arith.constant 0 : index
    %c0_72 = arith.constant 0 : index
    %90 = vector.load %arg7[%c5_70, %c0_71, %c0_72] : memref<9x32x32xbf16, #tpu.memory_space<vmem>>, vector<1x32x32xbf16>
    %91 = vector.shape_cast %90 : vector<1x32x32xbf16> to vector<32x32xbf16>
    %cst_73 = arith.constant dense<0.000000e+00> : vector<162x32xf32>
    %92 = tpu.matmul %89, %91, %cst_73 {dimension_numbers = #tpu.dot_dimension_numbers<[1], [0], [0], [1], [0, 0, 1, 1], [], []>} : vector<162x32xbf16>, vector<32x32xbf16>, vector<162x32xf32> -> vector<162x32xf32>
    %93 = arith.addf %85, %92 : vector<162x32xf32>
    %c6 = arith.constant 6 : index
    %c0_74 = arith.constant 0 : index
    %c0_75 = arith.constant 0 : index
    %94 = vector.load %arg6[%c6, %c0_74, %c0_75] : memref<9x162x162xbf16, #tpu.memory_space<vmem>>, vector<1x162x162xbf16>
    %95 = vector.shape_cast %94 : vector<1x162x162xbf16> to vector<162x162xbf16>
    %cst_76 = arith.constant dense<0.000000e+00> : vector<162x32xf32>
    %96 = tpu.matmul %95, %44, %cst_76 {dimension_numbers = #tpu.dot_dimension_numbers<[1], [0], [0], [1], [0, 0, 1, 1], [], []>} : vector<162x162xbf16>, vector<162x32xbf16>, vector<162x32xf32> -> vector<162x32xf32>
    %97 = arith.truncf %96 : vector<162x32xf32> to vector<162x32xbf16>
    %c6_77 = arith.constant 6 : index
    %c0_78 = arith.constant 0 : index
    %c0_79 = arith.constant 0 : index
    %98 = vector.load %arg7[%c6_77, %c0_78, %c0_79] : memref<9x32x32xbf16, #tpu.memory_space<vmem>>, vector<1x32x32xbf16>
    %99 = vector.shape_cast %98 : vector<1x32x32xbf16> to vector<32x32xbf16>
    %cst_80 = arith.constant dense<0.000000e+00> : vector<162x32xf32>
    %100 = tpu.matmul %97, %99, %cst_80 {dimension_numbers = #tpu.dot_dimension_numbers<[1], [0], [0], [1], [0, 0, 1, 1], [], []>} : vector<162x32xbf16>, vector<32x32xbf16>, vector<162x32xf32> -> vector<162x32xf32>
    %101 = arith.addf %93, %100 : vector<162x32xf32>
    %c7 = arith.constant 7 : index
    %c0_81 = arith.constant 0 : index
    %c0_82 = arith.constant 0 : index
    %102 = vector.load %arg6[%c7, %c0_81, %c0_82] : memref<9x162x162xbf16, #tpu.memory_space<vmem>>, vector<1x162x162xbf16>
    %103 = vector.shape_cast %102 : vector<1x162x162xbf16> to vector<162x162xbf16>
    %cst_83 = arith.constant dense<0.000000e+00> : vector<162x32xf32>
    %104 = tpu.matmul %103, %44, %cst_83 {dimension_numbers = #tpu.dot_dimension_numbers<[1], [0], [0], [1], [0, 0, 1, 1], [], []>} : vector<162x162xbf16>, vector<162x32xbf16>, vector<162x32xf32> -> vector<162x32xf32>
    %105 = arith.truncf %104 : vector<162x32xf32> to vector<162x32xbf16>
    %c7_84 = arith.constant 7 : index
    %c0_85 = arith.constant 0 : index
    %c0_86 = arith.constant 0 : index
    %106 = vector.load %arg7[%c7_84, %c0_85, %c0_86] : memref<9x32x32xbf16, #tpu.memory_space<vmem>>, vector<1x32x32xbf16>
    %107 = vector.shape_cast %106 : vector<1x32x32xbf16> to vector<32x32xbf16>
    %cst_87 = arith.constant dense<0.000000e+00> : vector<162x32xf32>
    %108 = tpu.matmul %105, %107, %cst_87 {dimension_numbers = #tpu.dot_dimension_numbers<[1], [0], [0], [1], [0, 0, 1, 1], [], []>} : vector<162x32xbf16>, vector<32x32xbf16>, vector<162x32xf32> -> vector<162x32xf32>
    %109 = arith.addf %101, %108 : vector<162x32xf32>
    %c8 = arith.constant 8 : index
    %c0_88 = arith.constant 0 : index
    %c0_89 = arith.constant 0 : index
    %110 = vector.load %arg6[%c8, %c0_88, %c0_89] : memref<9x162x162xbf16, #tpu.memory_space<vmem>>, vector<1x162x162xbf16>
    %111 = vector.shape_cast %110 : vector<1x162x162xbf16> to vector<162x162xbf16>
    %cst_90 = arith.constant dense<0.000000e+00> : vector<162x32xf32>
    %112 = tpu.matmul %111, %44, %cst_90 {dimension_numbers = #tpu.dot_dimension_numbers<[1], [0], [0], [1], [0, 0, 1, 1], [], []>} : vector<162x162xbf16>, vector<162x32xbf16>, vector<162x32xf32> -> vector<162x32xf32>
    %113 = arith.truncf %112 : vector<162x32xf32> to vector<162x32xbf16>
    %c8_91 = arith.constant 8 : index
    %c0_92 = arith.constant 0 : index
    %c0_93 = arith.constant 0 : index
    %114 = vector.load %arg7[%c8_91, %c0_92, %c0_93] : memref<9x32x32xbf16, #tpu.memory_space<vmem>>, vector<1x32x32xbf16>
    %115 = vector.shape_cast %114 : vector<1x32x32xbf16> to vector<32x32xbf16>
    %cst_94 = arith.constant dense<0.000000e+00> : vector<162x32xf32>
    %116 = tpu.matmul %113, %115, %cst_94 {dimension_numbers = #tpu.dot_dimension_numbers<[1], [0], [0], [1], [0, 0, 1, 1], [], []>} : vector<162x32xbf16>, vector<32x32xbf16>, vector<162x32xf32> -> vector<162x32xf32>
    %117 = arith.addf %109, %116 : vector<162x32xf32>
    %c0_95 = arith.constant 0 : index
    %c0_96 = arith.constant 0 : index
    %118 = vector.load %arg8[%c0_95, %c0_96] : memref<1x32xf32, #tpu.memory_space<vmem>>, vector<1x32xf32>
    %c0_97 = arith.constant 0 : index
    %c0_98 = arith.constant 0 : index
    %119 = vector.load %arg9[%c0_97, %c0_98] : memref<1x32xf32, #tpu.memory_space<vmem>>, vector<1x32xf32>
    %cst_99 = arith.constant dense<0.000000e+00> : vector<32xf32>
    %120 = vector.multi_reduction <add>, %117, %cst_99 [0] : vector<162x32xf32> to vector<32xf32>
    %121 = vector.shape_cast %120 : vector<32xf32> to vector<1x32xf32>
    %cst_100 = arith.constant 0.00617283955 : f32
    %122 = vector.broadcast %cst_100 : f32 to vector<1x32xf32>
    %123 = arith.mulf %121, %122 : vector<1x32xf32>
    %124 = vector.broadcast %123 : vector<1x32xf32> to vector<162x32xf32>
    %125 = arith.subf %117, %124 : vector<162x32xf32>
    %126 = arith.mulf %125, %125 : vector<162x32xf32>
    %cst_101 = arith.constant dense<0.000000e+00> : vector<32xf32>
    %127 = vector.multi_reduction <add>, %126, %cst_101 [0] : vector<162x32xf32> to vector<32xf32>
    %128 = vector.shape_cast %127 : vector<32xf32> to vector<1x32xf32>
    %cst_102 = arith.constant 0.00617283955 : f32
    %129 = vector.broadcast %cst_102 : f32 to vector<1x32xf32>
    %130 = arith.mulf %128, %129 : vector<1x32xf32>
    %cst_103 = arith.constant 9.99999974E-6 : f32
    %131 = vector.broadcast %cst_103 : f32 to vector<1x32xf32>
    %132 = arith.addf %130, %131 : vector<1x32xf32>
    %133 = math.rsqrt %132 : vector<1x32xf32>
    %134 = arith.mulf %133, %118 : vector<1x32xf32>
    %135 = vector.broadcast %134 : vector<1x32xf32> to vector<162x32xf32>
    %136 = arith.mulf %125, %135 : vector<162x32xf32>
    %137 = vector.broadcast %119 : vector<1x32xf32> to vector<162x32xf32>
    %138 = arith.addf %136, %137 : vector<162x32xf32>
    %139 = math.tanh %138 : vector<162x32xf32>
    %cst_104 = arith.constant 2.000000e+00 : f32
    %140 = vector.broadcast %cst_104 : f32 to vector<162x32xf32>
    %141 = arith.addf %139, %140 : vector<162x32xf32>
    %c0_105 = arith.constant 0 : index
    %c0_106 = arith.constant 0 : index
    %c0_107 = arith.constant 0 : index
    %142 = vector.load %arg10[%c0_105, %c0_106, %c0_107] : memref<4x50x162xf32, #tpu.memory_space<vmem>>, vector<1x50x162xf32>
    %143 = vector.shape_cast %142 : vector<1x50x162xf32> to vector<50x162xf32>
    %cst_108 = arith.constant dense<0.000000e+00> : vector<50x32xf32>
    %144 = tpu.matmul %143, %141, %cst_108 {dimension_numbers = #tpu.dot_dimension_numbers<[1], [0], [0], [1], [0, 0, 1, 1], [], []>} : vector<50x162xf32>, vector<162x32xf32>, vector<50x32xf32> -> vector<50x32xf32>
    %c1_109 = arith.constant 1 : index
    %c0_110 = arith.constant 0 : index
    %c0_111 = arith.constant 0 : index
    %145 = vector.load %arg10[%c1_109, %c0_110, %c0_111] : memref<4x50x162xf32, #tpu.memory_space<vmem>>, vector<1x50x162xf32>
    %146 = vector.shape_cast %145 : vector<1x50x162xf32> to vector<50x162xf32>
    %cst_112 = arith.constant dense<0.000000e+00> : vector<50x32xf32>
    %147 = tpu.matmul %146, %141, %cst_112 {dimension_numbers = #tpu.dot_dimension_numbers<[1], [0], [0], [1], [0, 0, 1, 1], [], []>} : vector<50x162xf32>, vector<162x32xf32>, vector<50x32xf32> -> vector<50x32xf32>
    %148 = arith.maximumf %144, %147 : vector<50x32xf32>
    %c2_113 = arith.constant 2 : index
    %c0_114 = arith.constant 0 : index
    %c0_115 = arith.constant 0 : index
    %149 = vector.load %arg10[%c2_113, %c0_114, %c0_115] : memref<4x50x162xf32, #tpu.memory_space<vmem>>, vector<1x50x162xf32>
    %150 = vector.shape_cast %149 : vector<1x50x162xf32> to vector<50x162xf32>
    %cst_116 = arith.constant dense<0.000000e+00> : vector<50x32xf32>
    %151 = tpu.matmul %150, %141, %cst_116 {dimension_numbers = #tpu.dot_dimension_numbers<[1], [0], [0], [1], [0, 0, 1, 1], [], []>} : vector<50x162xf32>, vector<162x32xf32>, vector<50x32xf32> -> vector<50x32xf32>
    %152 = arith.maximumf %148, %151 : vector<50x32xf32>
    %c3_117 = arith.constant 3 : index
    %c0_118 = arith.constant 0 : index
    %c0_119 = arith.constant 0 : index
    %153 = vector.load %arg10[%c3_117, %c0_118, %c0_119] : memref<4x50x162xf32, #tpu.memory_space<vmem>>, vector<1x50x162xf32>
    %154 = vector.shape_cast %153 : vector<1x50x162xf32> to vector<50x162xf32>
    %cst_120 = arith.constant dense<0.000000e+00> : vector<50x32xf32>
    %155 = tpu.matmul %154, %141, %cst_120 {dimension_numbers = #tpu.dot_dimension_numbers<[1], [0], [0], [1], [0, 0, 1, 1], [], []>} : vector<50x162xf32>, vector<162x32xf32>, vector<50x32xf32> -> vector<50x32xf32>
    %156 = arith.maximumf %152, %155 : vector<50x32xf32>
    %cst_121 = arith.constant 2.000000e+00 : f32
    %157 = vector.broadcast %cst_121 : f32 to vector<50x32xf32>
    %158 = arith.subf %156, %157 : vector<50x32xf32>
    %c0_122 = arith.constant 0 : index
    %c0_123 = arith.constant 0 : index
    %159 = vector.load %arg11[%c0_122, %c0_123] : memref<50x32xf32, #tpu.memory_space<vmem>>, vector<50x32xf32>
    tpu.vector_store %arg11[%c0_122, %c0_123], %158 {strides = array<i32>} : memref<50x32xf32, #tpu.memory_space<vmem>>, vector<50x32xf32>,
    return
  }
  func.func @transform_0(%arg0: i32) -> (i32, i32) {
    %c0_i32 = arith.constant 0 : i32
    %c0_i32_0 = arith.constant 0 : i32
    %c0_i32_1 = arith.constant 0 : i32
    return %c0_i32, %c0_i32_0 : i32, i32
  }
  func.func @transform_1(%arg0: i32) -> (i32, i32) {
    %c0_i32 = arith.constant 0 : i32
    %c0_i32_0 = arith.constant 0 : i32
    %c0_i32_1 = arith.constant 0 : i32
    return %c0_i32, %c0_i32_0 : i32, i32
  }
  func.func @transform_2(%arg0: i32) -> (i32, i32) {
    %c0_i32 = arith.constant 0 : i32
    %c0_i32_0 = arith.constant 0 : i32
    %c0_i32_1 = arith.constant 0 : i32
    return %c0_i32, %c0_i32_0 : i32, i32
  }
  func.func @transform_3(%arg0: i32) -> (i32, i32) {
    %c0_i32 = arith.constant 0 : i32
    %c0_i32_0 = arith.constant 0 : i32
    %c0_i32_1 = arith.constant 0 : i32
    return %c0_i32, %c0_i32_0 : i32, i32
  }
  func.func @transform_4(%arg0: i32) -> (i32, i32, i32) {
    %c0_i32 = arith.constant 0 : i32
    %c0_i32_0 = arith.constant 0 : i32
    %c0_i32_1 = arith.constant 0 : i32
    %c0_i32_2 = arith.constant 0 : i32
    return %c0_i32, %c0_i32_0, %c0_i32_1 : i32, i32, i32
  }
  func.func @transform_5(%arg0: i32) -> (i32, i32, i32) {
    %c0_i32 = arith.constant 0 : i32
    %c0_i32_0 = arith.constant 0 : i32
    %c0_i32_1 = arith.constant 0 : i32
    %c0_i32_2 = arith.constant 0 : i32
    return %c0_i32, %c0_i32_0, %c0_i32_1 : i32, i32, i32
  }
  func.func @transform_6(%arg0: i32) -> (i32, i32, i32) {
    %c0_i32 = arith.constant 0 : i32
    %c0_i32_0 = arith.constant 0 : i32
    %c0_i32_1 = arith.constant 0 : i32
    %c0_i32_2 = arith.constant 0 : i32
    return %c0_i32, %c0_i32_0, %c0_i32_1 : i32, i32, i32
  }
  func.func @transform_7(%arg0: i32) -> (i32, i32) {
    %c0_i32 = arith.constant 0 : i32
    %c0_i32_0 = arith.constant 0 : i32
    %c0_i32_1 = arith.constant 0 : i32
    return %c0_i32, %c0_i32_0 : i32, i32
  }
  func.func @transform_8(%arg0: i32) -> (i32, i32) {
    %c0_i32 = arith.constant 0 : i32
    %c0_i32_0 = arith.constant 0 : i32
    %c0_i32_1 = arith.constant 0 : i32
    return %c0_i32, %c0_i32_0 : i32, i32
  }
  func.func @transform_9(%arg0: i32) -> (i32, i32, i32) {
    %c0_i32 = arith.constant 0 : i32
    %c0_i32_0 = arith.constant 0 : i32
    %c0_i32_1 = arith.constant 0 : i32
    %c0_i32_2 = arith.constant 0 : i32
    return %c0_i32, %c0_i32_0, %c0_i32_1 : i32, i32, i32
  }
  func.func @transform_10(%arg0: i32) -> (i32, i32) {
    %c0_i32 = arith.constant 0 : i32
    %c0_i32_0 = arith.constant 0 : i32
    %c0_i32_1 = arith.constant 0 : i32
    return %c0_i32, %c0_i32_0 : i32, i32
  }
}

</mosaic_0001>

<llo_original>
// kernel: base_conv_forward.1
$region0: #{base_conv_forward.1}
  #allocation0 [shape = 'u32[]', space=smem, size = 0x4, offset = 0x4, fixed_abs, tag = 'smem constant byte address 0x4 - core index']
  #allocation1 [shape = 'u32[144,128]{1,0:T(1,128)}', space=vmem, size = 0x12000, scoped, tag = 'internal scratch']
  %s0 = inlined_call_operand.vmem [shape: bf16[512,128], index: 0, kind: input, shape index: {}]
  %s1 = inlined_call_operand.vmem [shape: bf16[128,32], index: 1, kind: input, shape index: {}]
  %s2 = inlined_call_operand.vmem [shape: f32[1,32], index: 2, kind: input, shape index: {}]
  %s3 = inlined_call_operand.vmem [shape: f32[1,32], index: 3, kind: input, shape index: {}]
  %s4 = inlined_call_operand.vmem [shape: f32[4,162,512], index: 4, kind: input, shape index: {}]
  %s5 = inlined_call_operand.vmem [shape: bf16[9,162,162], index: 5, kind: input, shape index: {}]
  %s6 = inlined_call_operand.vmem [shape: bf16[9,32,32], index: 6, kind: input, shape index: {}]
  %s7 = inlined_call_operand.vmem [shape: f32[1,32], index: 7, kind: input, shape index: {}]
  %s8 = inlined_call_operand.vmem [shape: f32[1,32], index: 8, kind: input, shape index: {}]
  %s9 = inlined_call_operand.vmem [shape: f32[4,50,162], index: 9, kind: input, shape index: {}]
  %s10 = inlined_call_operand.vmem [shape: f32[50,32], index: 10, kind: output, shape index: {}]
  %s11 = sld [smem:[#allocation0]]
  $region50: #{base_conv_forward.1} parent=0
    _
  %s13 = ssub.s32 1, %s11
  %s14 = scalar_select 0, %s13, %s11
  // Predicated region
  $region2: #{base_conv_forward.1} parent=0 // pred_check
    _
  $region3: #{base_conv_forward.1} parent=0 // pred_check_branch
    %16 = sbr.rel (0) target = $region5
  $region4: #{base_conv_forward.1} parent=0 // pred_region
    _
  $region5: #{base_conv_forward.1} parent=0 // pred_fallthru
    _
  // Predicated region
  $region6: #{base_conv_forward.1} parent=0 // pred_check
    _
  $region7: #{base_conv_forward.1} parent=0 // pred_check_branch
    %18 = sbr.rel (0) target = $region9
  $region8: #{base_conv_forward.1} parent=0 // pred_region
    _
  $region9: #{base_conv_forward.1} parent=0 // pred_fallthru
    _
  // Predicated region
  $region10: #{base_conv_forward.1} parent=0 // pred_check
    _
  $region11: #{base_conv_forward.1} parent=0 // pred_check_branch
    %20 = sbr.rel (0) target = $region13
  $region12: #{base_conv_forward.1} parent=0 // pred_region
    _
  $region13: #{base_conv_forward.1} parent=0 // pred_fallthru
    _
  // Predicated region
  $region14: #{base_conv_forward.1} parent=0 // pred_check
    _
  $region15: #{base_conv_forward.1} parent=0 // pred_check_branch
    %22 = sbr.rel (0) target = $region17
  $region16: #{base_conv_forward.1} parent=0 // pred_region
    _
  $region17: #{base_conv_forward.1} parent=0 // pred_fallthru
    _
  // Predicated region
  $region18: #{base_conv_forward.1} parent=0 // pred_check
    _
  $region19: #{base_conv_forward.1} parent=0 // pred_check_branch
    %24 = sbr.rel (0) target = $region21
  $region20: #{base_conv_forward.1} parent=0 // pred_region
    _
  $region21: #{base_conv_forward.1} parent=0 // pred_fallthru
    _
  // Predicated region
  $region22: #{base_conv_forward.1} parent=0 // pred_check
    _
  $region23: #{base_conv_forward.1} parent=0 // pred_check_branch
    %26 = sbr.rel (0) target = $region25
  $region24: #{base_conv_forward.1} parent=0 // pred_region
    _
  $region25: #{base_conv_forward.1} parent=0 // pred_fallthru
    _
  // Predicated region
  $region26: #{base_conv_forward.1} parent=0 // pred_check
    _
  $region27: #{base_conv_forward.1} parent=0 // pred_check_branch
    %28 = sbr.rel (0) target = $region29
  $region28: #{base_conv_forward.1} parent=0 // pred_region
    _
  $region29: #{base_conv_forward.1} parent=0 // pred_fallthru
    _
  // Predicated region
  $region30: #{base_conv_forward.1} parent=0 // pred_check
    _
  $region31: #{base_conv_forward.1} parent=0 // pred_check_branch
    %30 = sbr.rel (0) target = $region33
  $region32: #{base_conv_forward.1} parent=0 // pred_region
    _
  $region33: #{base_conv_forward.1} parent=0 // pred_fallthru
    _
  // Predicated region
  $region34: #{base_conv_forward.1} parent=0 // pred_check
    _
  $region35: #{base_conv_forward.1} parent=0 // pred_check_branch
    %32 = sbr.rel (0) target = $region37
  $region36: #{base_conv_forward.1} parent=0 // pred_region
    _
  $region37: #{base_conv_forward.1} parent=0 // pred_fallthru
    _
  // Predicated region
  $region38: #{base_conv_forward.1} parent=0 // pred_check
    _
  $region39: #{base_conv_forward.1} parent=0 // pred_check_branch
    %34 = sbr.rel (0) target = $region41
  $region40: #{base_conv_forward.1} parent=0 // pred_region
    _
  $region41: #{base_conv_forward.1} parent=0 // pred_fallthru
    _
  %v36 = vld [vmem:[%s0] sm:$0xf]
  %v37 = vld [vmem:[%s0 + $0x4] sm:$0xf]
  %v38 = vld [vmem:[%s0 + $0x8] sm:$0xf]
  %v39 = vld [vmem:[%s0 + $0xc] sm:$0xf]
  %v40 = vld [vmem:[%s0 + $0x10] sm:$0xf]
  %v41 = vld [vmem:[%s0 + $0x14] sm:$0xf]
  %v42 = vld [vmem:[%s0 + $0x18] sm:$0xf]
  %v43 = vld [vmem:[%s0 + $0x1c] sm:$0xf]
  %v44 = vld [vmem:[%s0 + $0x20] sm:$0xf]
  %v45 = vld [vmem:[%s0 + $0x24] sm:$0xf]
  %v46 = vld [vmem:[%s0 + $0x28] sm:$0xf]
  %v47 = vld [vmem:[%s0 + $0x2c] sm:$0xf]
  %v48 = vld [vmem:[%s0 + $0x30] sm:$0xf]
  %v49 = vld [vmem:[%s0 + $0x34] sm:$0xf]
  %v50 = vld [vmem:[%s0 + $0x38] sm:$0xf]
  %v51 = vld [vmem:[%s0 + $0x3c] sm:$0xf]
  %v52 = vld [vmem:[%s0 + $0x40] sm:$0xf]
  %v53 = vld [vmem:[%s0 + $0x44] sm:$0xf]
  %v54 = vld [vmem:[%s0 + $0x48] sm:$0xf]
  %v55 = vld [vmem:[%s0 + $0x4c] sm:$0xf]
  %v56 = vld [vmem:[%s0 + $0x50] sm:$0xf]
  %v57 = vld [vmem:[%s0 + $0x54] sm:$0xf]
  %v58 = vld [vmem:[%s0 + $0x58] sm:$0xf]
  %v59 = vld [vmem:[%s0 + $0x5c] sm:$0xf]
  %v60 = vld [vmem:[%s0 + $0x60] sm:$0xf]
  %v61 = vld [vmem:[%s0 + $0x64] sm:$0xf]
  %v62 = vld [vmem:[%s0 + $0x68] sm:$0xf]
  %v63 = vld [vmem:[%s0 + $0x6c] sm:$0xf]
  %v64 = vld [vmem:[%s0 + $0x70] sm:$0xf]
  %v65 = vld [vmem:[%s0 + $0x74] sm:$0xf]
  %v66 = vld [vmem:[%s0 + $0x78] sm:$0xf]
  %v67 = vld [vmem:[%s0 + $0x7c] sm:$0xf]
  %v68 = vld [vmem:[%s0 + $0x80] sm:$0xf]
  %v69 = vld [vmem:[%s0 + $0x84] sm:$0xf]
  %v70 = vld [vmem:[%s0 + $0x88] sm:$0xf]
  %v71 = vld [vmem:[%s0 + $0x8c] sm:$0xf]
  %v72 = vld [vmem:[%s0 + $0x90] sm:$0xf]
  %v73 = vld [vmem:[%s0 + $0x94] sm:$0xf]
  %v74 = vld [vmem:[%s0 + $0x98] sm:$0xf]
  %v75 = vld [vmem:[%s0 + $0x9c] sm:$0xf]
  %v76 = vld [vmem:[%s0 + $0xa0] sm:$0xf]
  %v77 = vld [vmem:[%s0 + $0xa4] sm:$0xf]
  %v78 = vld [vmem:[%s0 + $0xa8] sm:$0xf]
  %v79 = vld [vmem:[%s0 + $0xac] sm:$0xf]
  %v80 = vld [vmem:[%s0 + $0xb0] sm:$0xf]
  %v81 = vld [vmem:[%s0 + $0xb4] sm:$0xf]
  %v82 = vld [vmem:[%s0 + $0xb8] sm:$0xf]
  %v83 = vld [vmem:[%s0 + $0xbc] sm:$0xf]
  %v84 = vld [vmem:[%s0 + $0xc0] sm:$0xf]
  %v85 = vld [vmem:[%s0 + $0xc4] sm:$0xf]
  %v86 = vld [vmem:[%s0 + $0xc8] sm:$0xf]
  %v87 = vld [vmem:[%s0 + $0xcc] sm:$0xf]
  %v88 = vld [vmem:[%s0 + $0xd0] sm:$0xf]
  %v89 = vld [vmem:[%s0 + $0xd4] sm:$0xf]
  %v90 = vld [vmem:[%s0 + $0xd8] sm:$0xf]
  %v91 = vld [vmem:[%s0 + $0xdc] sm:$0xf]
  %v92 = vld [vmem:[%s0 + $0xe0] sm:$0xf]
  %v93 = vld [vmem:[%s0 + $0xe4] sm:$0xf]
  %v94 = vld [vmem:[%s0 + $0xe8] sm:$0xf]
  %v95 = vld [vmem:[%s0 + $0xec] sm:$0xf]
  %v96 = vld [vmem:[%s0 + $0xf0] sm:$0xf]
  %v97 = vld [vmem:[%s0 + $0xf4] sm:$0xf]
  %v98 = vld [vmem:[%s0 + $0xf8] sm:$0xf]
  %v99 = vld [vmem:[%s0 + $0xfc] sm:$0xf]
  %v100 = vld [vmem:[%s1] sm:$0xf]
  %v101 = vld [vmem:[%s1 + $0x4] sm:$0xf]
  %v102 = vld [vmem:[%s1 + $0x8] sm:$0xf]
  %v103 = vld [vmem:[%s1 + $0xc] sm:$0xf]
  %v104 = vld [vmem:[%s1 + $0x10] sm:$0xf]
  %v105 = vld [vmem:[%s1 + $0x14] sm:$0xf]
  %v106 = vld [vmem:[%s1 + $0x18] sm:$0xf]
  %v107 = vld [vmem:[%s1 + $0x1c] sm:$0xf]
  %v108 = vld [vmem:[%s1 + $0x20] sm:$0xf]
  %v109 = vld [vmem:[%s1 + $0x24] sm:$0xf]
  %v110 = vld [vmem:[%s1 + $0x28] sm:$0xf]
  %v111 = vld [vmem:[%s1 + $0x2c] sm:$0xf]
  %v112 = vld [vmem:[%s1 + $0x30] sm:$0xf]
  %v113 = vld [vmem:[%s1 + $0x34] sm:$0xf]
  %v114 = vld [vmem:[%s1 + $0x38] sm:$0xf]
  %v115 = vld [vmem:[%s1 + $0x3c] sm:$0xf]
  %v180 = vunpack.c.l.b16 %v36
  %v181 = vunpack.c.l.b16 %v37
  %v182 = vunpack.c.l.b16 %v38
  %v183 = vunpack.c.l.b16 %v39
  %v184 = vunpack.c.l.b16 %v40
  %v185 = vunpack.c.l.b16 %v41
  %v186 = vunpack.c.l.b16 %v42
  %v187 = vunpack.c.l.b16 %v43
  %v188 = vunpack.c.l.b16 %v44
  %v189 = vunpack.c.l.b16 %v45
  %v190 = vunpack.c.l.b16 %v46
  %v191 = vunpack.c.l.b16 %v47
  %v192 = vunpack.c.l.b16 %v48
  %v193 = vunpack.c.l.b16 %v49
  %v194 = vunpack.c.l.b16 %v50
  %v195 = vunpack.c.l.b16 %v51
  %v196 = vunpack.c.l.b16 %v52
  %v197 = vunpack.c.l.b16 %v53
  %v198 = vunpack.c.l.b16 %v54
  %v199 = vunpack.c.l.b16 %v55
  %v200 = vunpack.c.l.b16 %v56
  %v201 = vunpack.c.l.b16 %v57
  %v202 = vunpack.c.l.b16 %v58
  %v203 = vunpack.c.l.b16 %v59
  %v204 = vunpack.c.l.b16 %v60
  %v205 = vunpack.c.l.b16 %v61
  %v206 = vunpack.c.l.b16 %v62
  %v207 = vunpack.c.l.b16 %v63
  %v208 = vunpack.c.l.b16 %v64
  %v209 = vunpack.c.l.b16 %v65
  %v210 = vunpack.c.l.b16 %v66
  %v211 = vunpack.c.l.b16 %v67
  %v212 = vunpack.c.l.b16 %v68
  %v213 = vunpack.c.l.b16 %v69
  %v214 = vunpack.c.l.b16 %v70
  %v215 = vunpack.c.l.b16 %v71
  %v216 = vunpack.c.l.b16 %v72
  %v217 = vunpack.c.l.b16 %v73
  %v218 = vunpack.c.l.b16 %v74
  %v219 = vunpack.c.l.b16 %v75
  %v220 = vunpack.c.l.b16 %v76
  %v221 = vunpack.c.l.b16 %v77
  %v222 = vunpack.c.l.b16 %v78
  %v223 = vunpack.c.l.b16 %v79
  %v224 = vunpack.c.l.b16 %v80
  %v225 = vunpack.c.l.b16 %v81
  %v226 = vunpack.c.l.b16 %v82
  %v227 = vunpack.c.l.b16 %v83
  %v228 = vunpack.c.l.b16 %v84
  %v229 = vunpack.c.l.b16 %v85
  %v230 = vunpack.c.l.b16 %v86
  %v231 = vunpack.c.l.b16 %v87
  %v232 = vunpack.c.l.b16 %v88
  %v233 = vunpack.c.l.b16 %v89
  %v234 = vunpack.c.l.b16 %v90
  %v235 = vunpack.c.l.b16 %v91
  %v236 = vunpack.c.l.b16 %v92
  %v237 = vunpack.c.l.b16 %v93
  %v238 = vunpack.c.l.b16 %v94
  %v239 = vunpack.c.l.b16 %v95
  %v240 = vunpack.c.l.b16 %v96
  %v241 = vunpack.c.l.b16 %v97
  %v242 = vunpack.c.l.b16 %v98
  %v243 = vunpack.c.l.b16 %v99
  %v244 = vpack.c.b16 %v181, %v180
  %v245 = vpack.c.b16 %v183, %v182
  %v246 = vpack.c.b16 %v185, %v184
  %v247 = vpack.c.b16 %v187, %v186
  %v248 = vpack.c.b16 %v189, %v188
  %v249 = vpack.c.b16 %v191, %v190
  %v250 = vpack.c.b16 %v193, %v192
  %v251 = vpack.c.b16 %v195, %v194
  %v252 = vpack.c.b16 %v197, %v196
  %v253 = vpack.c.b16 %v199, %v198
  %v254 = vpack.c.b16 %v201, %v200
  %v255 = vpack.c.b16 %v203, %v202
  %v256 = vpack.c.b16 %v205, %v204
  %v257 = vpack.c.b16 %v207, %v206
  %v258 = vpack.c.b16 %v209, %v208
  %v259 = vpack.c.b16 %v211, %v210
  %v260 = vpack.c.b16 %v213, %v212
  %v261 = vpack.c.b16 %v215, %v214
  %v262 = vpack.c.b16 %v217, %v216
  %v263 = vpack.c.b16 %v219, %v218
  %v264 = vpack.c.b16 %v221, %v220
  %v265 = vpack.c.b16 %v223, %v222
  %v266 = vpack.c.b16 %v225, %v224
  %v267 = vpack.c.b16 %v227, %v226
  %v268 = vpack.c.b16 %v229, %v228
  %v269 = vpack.c.b16 %v231, %v230
  %v270 = vpack.c.b16 %v233, %v232
  %v271 = vpack.c.b16 %v235, %v234
  %v272 = vpack.c.b16 %v237, %v236
  %v273 = vpack.c.b16 %v239, %v238
  %v274 = vpack.c.b16 %v241, %v240
  %v275 = vpack.c.b16 %v243, %v242
  %v324 = vunpack.c.l.b16 %v100
  %v325 = vunpack.c.l.b16 %v101
  %v326 = vunpack.c.l.b16 %v102
  %v327 = vunpack.c.l.b16 %v103
  %v328 = vunpack.c.l.b16 %v104
  %v329 = vunpack.c.l.b16 %v105
  %v330 = vunpack.c.l.b16 %v106
  %v331 = vunpack.c.l.b16 %v107
  %v332 = vunpack.c.l.b16 %v108
  %v333 = vunpack.c.l.b16 %v109
  %v334 = vunpack.c.l.b16 %v110
  %v335 = vunpack.c.l.b16 %v111
  %v336 = vunpack.c.l.b16 %v112
  %v337 = vunpack.c.l.b16 %v113
  %v338 = vunpack.c.l.b16 %v114
  %v339 = vunpack.c.l.b16 %v115
  %v340 = vpack.c.b16 %v325, %v324
  %v341 = vpack.c.b16 %v327, %v326
  %v342 = vpack.c.b16 %v329, %v328
  %v343 = vpack.c.b16 %v331, %v330
  %v344 = vpack.c.b16 %v333, %v332
  %v345 = vpack.c.b16 %v335, %v334
  %v346 = vpack.c.b16 %v337, %v336
  %v347 = vpack.c.b16 %v339, %v338
  %356 = vmatprep.subr.bf16.mxu0 0
  %357 = vmatpush1.bf16.msra.mxu0 %v340
  %358 = vmatprep.subr.bf16.mxu0 0
  %359 = vmatpush1.bf16.msra.mxu0 %v341
  %360 = vmatprep.subr.bf16.mxu0 0
  %361 = vmatpush1.bf16.msra.mxu0 %v342
  %362 = vmatprep.subr.bf16.mxu0 0
  %363 = vmatpush1.bf16.msra.mxu0 %v343
  %364 = vmatprep.subr.bf16.mxu0 0
  %365 = vmatpush1.bf16.msra.mxu0 %v344
  %366 = vmatprep.subr.bf16.mxu0 0
  %367 = vmatpush1.bf16.msra.mxu0 %v345
  %368 = vmatprep.subr.bf16.mxu0 0
  %369 = vmatpush1.bf16.msra.mxu0 %v346
  %370 = vmatprep.subr.bf16.mxu0 0
  %371 = vmatpush1.bf16.msra.mxu0 %v347
  %372 = vmatprep.subr.bf16.mxu0 0
  %373 = vmatpush1.bf16.msra.mxu0 0
  %374 = vmatprep.subr.bf16.mxu0 0
  %375 = vmatpush1.bf16.msra.mxu0 0
  %376 = vmatprep.subr.bf16.mxu0 0
  %377 = vmatpush1.bf16.msra.mxu0 0
  %378 = vmatprep.subr.bf16.mxu0 0
  %379 = vmatpush1.bf16.msra.mxu0 0
  %380 = vmatprep.subr.bf16.mxu0 0
  %381 = vmatpush1.bf16.msra.mxu0 0
  %382 = vmatprep.subr.bf16.mxu0 0
  %383 = vmatpush1.bf16.msra.mxu0 0
  %384 = vmatprep.subr.bf16.mxu0 0
  %385 = vmatpush1.bf16.msra.mxu0 0
  %386 = vmatprep.subr.bf16.mxu0 0
  %387 = vmatpush1.bf16.msra.mxu0 0
  %388 = vmatprep.mubr.bf16.mxu0 0
  %389 = vmatmul.mubr.bf16.gmra.mrb[0].mxu0 %v244
  %v390 = vpop.f32.mrb[0].mxu0
  %v391 = vadd.f32 0.0, %v390
  %v392 = vpop.f32.mrb[0].mxu0
  %v393 = vpop.f32.mrb[0].mxu0
  %v394 = vadd.f32 0.0, %v393
  %v395 = vpop.f32.mrb[0].mxu0
  %396 = vmatprep.mubr.bf16.mxu0 0
  %397 = vmatmul.mubr.bf16.gmra.mrb[0].mxu0 %v245
  %v398 = vpop.f32.mrb[0].mxu0
  %v399 = vadd.f32 0.0, %v398
  %v400 = vpop.f32.mrb[0].mxu0
  %v401 = vpop.f32.mrb[0].mxu0
  %v402 = vadd.f32 0.0, %v401
  %v403 = vpop.f32.mrb[0].mxu0
  %404 = vmatprep.mubr.bf16.mxu0 0
  %405 = vmatmul.mubr.bf16.gmra.mrb[0].mxu0 %v246
  %v406 = vpop.f32.mrb[0].mxu0
  %v407 = vadd.f32 0.0, %v406
  %v408 = vpop.f32.mrb[0].mxu0
  %v409 = vpop.f32.mrb[0].mxu0
  %v410 = vadd.f32 0.0, %v409
  %v411 = vpop.f32.mrb[0].mxu0
  %412 = vmatprep.mubr.bf16.mxu0 0
  %413 = vmatmul.mubr.bf16.gmra.mrb[0].mxu0 %v247
  %v414 = vpop.f32.mrb[0].mxu0
  %v415 = vadd.f32 0.0, %v414
  %v416 = vpop.f32.mrb[0].mxu0
  %v417 = vpop.f32.mrb[0].mxu0
  %v418 = vadd.f32 0.0, %v417
  %v419 = vpop.f32.mrb[0].mxu0
  %420 = vmatprep.mubr.bf16.mxu0 0
  %421 = vmatmul.mubr.bf16.gmra.mrb[0].mxu0 %v248
  %v422 = vpop.f32.mrb[0].mxu0
  %v423 = vadd.f32 0.0, %v422
  %v424 = vpop.f32.mrb[0].mxu0
  %v425 = vpop.f32.mrb[0].mxu0
  %v426 = vadd.f32 0.0, %v425
  %v427 = vpop.f32.mrb[0].mxu0
  %428 = vmatprep.mubr.bf16.mxu0 0
  %429 = vmatmul.mubr.bf16.gmra.mrb[0].mxu0 %v249
  %v430 = vpop.f32.mrb[0].mxu0
  %v431 = vadd.f32 0.0, %v430
  %v432 = vpop.f32.mrb[0].mxu0
  %v433 = vpop.f32.mrb[0].mxu0
  %v434 = vadd.f32 0.0, %v433
  %v435 = vpop.f32.mrb[0].mxu0
  %436 = vmatprep.mubr.bf16.mxu0 0
  %437 = vmatmul.mubr.bf16.gmra.mrb[0].mxu0 %v250
  %v438 = vpop.f32.mrb[0].mxu0
  %v439 = vadd.f32 0.0, %v438
  %v440 = vpop.f32.mrb[0].mxu0
  %v441 = vpop.f32.mrb[0].mxu0
  %v442 = vadd.f32 0.0, %v441
  %v443 = vpop.f32.mrb[0].mxu0
  %444 = vmatprep.mubr.bf16.mxu0 0
  %445 = vmatmul.mubr.bf16.gmra.mrb[0].mxu0 %v251
  %v446 = vpop.f32.mrb[0].mxu0
  %v447 = vadd.f32 0.0, %v446
  %v448 = vpop.f32.mrb[0].mxu0
  %v449 = vpop.f32.mrb[0].mxu0
  %v450 = vadd.f32 0.0, %v449
  %v451 = vpop.f32.mrb[0].mxu0
  %452 = vmatprep.mubr.bf16.mxu0 0
  %453 = vmatmul.mubr.bf16.gmra.mrb[0].mxu0 %v252
  %v454 = vpop.f32.mrb[0].mxu0
  %v455 = vadd.f32 0.0, %v454
  %v456 = vpop.f32.mrb[0].mxu0
  %v457 = vpop.f32.mrb[0].mxu0
  %v458 = vadd.f32 0.0, %v457
  %v459 = vpop.f32.mrb[0].mxu0
  %460 = vmatprep.mubr.bf16.mxu0 0
  %461 = vmatmul.mubr.bf16.gmra.mrb[0].mxu0 %v253
  %v462 = vpop.f32.mrb[0].mxu0
  %v463 = vadd.f32 0.0, %v462
  %v464 = vpop.f32.mrb[0].mxu0
  %v465 = vpop.f32.mrb[0].mxu0
  %v466 = vadd.f32 0.0, %v465
  %v467 = vpop.f32.mrb[0].mxu0
  %468 = vmatprep.mubr.bf16.mxu0 0
  %469 = vmatmul.mubr.bf16.gmra.mrb[0].mxu0 %v254
  %v470 = vpop.f32.mrb[0].mxu0
  %v471 = vadd.f32 0.0, %v470
  %v472 = vpop.f32.mrb[0].mxu0
  %v473 = vpop.f32.mrb[0].mxu0
  %v474 = vadd.f32 0.0, %v473
  %v475 = vpop.f32.mrb[0].mxu0
  %476 = vmatprep.mubr.bf16.mxu0 0
  %477 = vmatmul.mubr.bf16.gmra.mrb[0].mxu0 %v255
  %v478 = vpop.f32.mrb[0].mxu0
  %v479 = vadd.f32 0.0, %v478
  %v480 = vpop.f32.mrb[0].mxu0
  %v481 = vpop.f32.mrb[0].mxu0
  %v482 = vadd.f32 0.0, %v481
  %v483 = vpop.f32.mrb[0].mxu0
  %484 = vmatprep.mubr.bf16.mxu0 0
  %485 = vmatmul.mubr.bf16.gmra.mrb[0].mxu0 %v256
  %v486 = vpop.f32.mrb[0].mxu0
  %v487 = vadd.f32 0.0, %v486
  %v488 = vpop.f32.mrb[0].mxu0
  %v489 = vpop.f32.mrb[0].mxu0
  %v490 = vadd.f32 0.0, %v489
  %v491 = vpop.f32.mrb[0].mxu0
  %492 = vmatprep.mubr.bf16.mxu0 0
  %493 = vmatmul.mubr.bf16.gmra.mrb[0].mxu0 %v257
  %v494 = vpop.f32.mrb[0].mxu0
  %v495 = vadd.f32 0.0, %v494
  %v496 = vpop.f32.mrb[0].mxu0
  %v497 = vpop.f32.mrb[0].mxu0
  %v498 = vadd.f32 0.0, %v497
  %v499 = vpop.f32.mrb[0].mxu0
  %500 = vmatprep.mubr.bf16.mxu0 0
  %501 = vmatmul.mubr.bf16.gmra.mrb[0].mxu0 %v258
  %v502 = vpop.f32.mrb[0].mxu0
  %v503 = vadd.f32 0.0, %v502
  %v504 = vpop.f32.mrb[0].mxu0
  %v505 = vpop.f32.mrb[0].mxu0
  %v506 = vadd.f32 0.0, %v505
  %v507 = vpop.f32.mrb[0].mxu0
  %508 = vmatprep.mubr.bf16.mxu0 0
  %509 = vmatmul.mubr.bf16.gmra.mrb[0].mxu0 %v259
  %v510 = vpop.f32.mrb[0].mxu0
  %v511 = vadd.f32 0.0, %v510
  %v512 = vpop.f32.mrb[0].mxu0
  %v513 = vpop.f32.mrb[0].mxu0
  %v514 = vadd.f32 0.0, %v513
  %v515 = vpop.f32.mrb[0].mxu0
  %516 = vmatprep.mubr.bf16.mxu0 0
  %517 = vmatmul.mubr.bf16.gmra.mrb[0].mxu0 %v260
  %v518 = vpop.f32.mrb[0].mxu0
  %v519 = vadd.f32 0.0, %v518
  %v520 = vpop.f32.mrb[0].mxu0
  %v521 = vpop.f32.mrb[0].mxu0
  %v522 = vadd.f32 0.0, %v521
  %v523 = vpop.f32.mrb[0].mxu0
  %524 = vmatprep.mubr.bf16.mxu0 0
  %525 = vmatmul.mubr.bf16.gmra.mrb[0].mxu0 %v261
  %v526 = vpop.f32.mrb[0].mxu0
  %v527 = vadd.f32 0.0, %v526
  %v528 = vpop.f32.mrb[0].mxu0
  %v529 = vpop.f32.mrb[0].mxu0
  %v530 = vadd.f32 0.0, %v529
  %v531 = vpop.f32.mrb[0].mxu0
  %532 = vmatprep.mubr.bf16.mxu0 0
  %533 = vmatmul.mubr.bf16.gmra.mrb[0].mxu0 %v262
  %v534 = vpop.f32.mrb[0].mxu0
  %v535 = vadd.f32 0.0, %v534
  %v536 = vpop.f32.mrb[0].mxu0
  %v537 = vpop.f32.mrb[0].mxu0
  %v538 = vadd.f32 0.0, %v537
  %v539 = vpop.f32.mrb[0].mxu0
  %540 = vmatprep.mubr.bf16.mxu0 0
  %541 = vmatmul.mubr.bf16.gmra.mrb[0].mxu0 %v263
  %v542 = vpop.f32.mrb[0].mxu0
  %v543 = vadd.f32 0.0, %v542
  %v544 = vpop.f32.mrb[0].mxu0
  %v545 = vpop.f32.mrb[0].mxu0
  %v546 = vadd.f32 0.0, %v545
  %v547 = vpop.f32.mrb[0].mxu0
  %548 = vmatprep.mubr.bf16.mxu0 0
  %549 = vmatmul.mubr.bf16.gmra.mrb[0].mxu0 %v264
  %v550 = vpop.f32.mrb[0].mxu0
  %v551 = vadd.f32 0.0, %v550
  %v552 = vpop.f32.mrb[0].mxu0
  %v553 = vpop.f32.mrb[0].mxu0
  %v554 = vadd.f32 0.0, %v553
  %v555 = vpop.f32.mrb[0].mxu0
  %556 = vmatprep.mubr.bf16.mxu0 0
  %557 = vmatmul.mubr.bf16.gmra.mrb[0].mxu0 %v265
  %v558 = vpop.f32.mrb[0].mxu0
  %v559 = vadd.f32 0.0, %v558
  %v560 = vpop.f32.mrb[0].mxu0
  %v561 = vpop.f32.mrb[0].mxu0
  %v562 = vadd.f32 0.0, %v561
  %v563 = vpop.f32.mrb[0].mxu0
  %564 = vmatprep.mubr.bf16.mxu0 0
  %565 = vmatmul.mubr.bf16.gmra.mrb[0].mxu0 %v266
  %v566 = vpop.f32.mrb[0].mxu0
  %v567 = vadd.f32 0.0, %v566
  %v568 = vpop.f32.mrb[0].mxu0
  %v569 = vpop.f32.mrb[0].mxu0
  %v570 = vadd.f32 0.0, %v569
  %v571 = vpop.f32.mrb[0].mxu0
  %572 = vmatprep.mubr.bf16.mxu0 0
  %573 = vmatmul.mubr.bf16.gmra.mrb[0].mxu0 %v267
  %v574 = vpop.f32.mrb[0].mxu0
  %v575 = vadd.f32 0.0, %v574
  %v576 = vpop.f32.mrb[0].mxu0
  %v577 = vpop.f32.mrb[0].mxu0
  %v578 = vadd.f32 0.0, %v577
  %v579 = vpop.f32.mrb[0].mxu0
  %580 = vmatprep.mubr.bf16.mxu0 0
  %581 = vmatmul.mubr.bf16.gmra.mrb[0].mxu0 %v268
  %v582 = vpop.f32.mrb[0].mxu0
  %v583 = vadd.f32 0.0, %v582
  %v584 = vpop.f32.mrb[0].mxu0
  %v585 = vpop.f32.mrb[0].mxu0
  %v586 = vadd.f32 0.0, %v585
  %v587 = vpop.f32.mrb[0].mxu0
  %588 = vmatprep.mubr.bf16.mxu0 0
  %589 = vmatmul.mubr.bf16.gmra.mrb[0].mxu0 %v269
  %v590 = vpop.f32.mrb[0].mxu0
  %v591 = vadd.f32 0.0, %v590
  %v592 = vpop.f32.mrb[0].mxu0
  %v593 = vpop.f32.mrb[0].mxu0
  %v594 = vadd.f32 0.0, %v593
  %v595 = vpop.f32.mrb[0].mxu0
  %596 = vmatprep.mubr.bf16.mxu0 0
  %597 = vmatmul.mubr.bf16.gmra.mrb[0].mxu0 %v270
  %v598 = vpop.f32.mrb[0].mxu0
  %v599 = vadd.f32 0.0, %v598
  %v600 = vpop.f32.mrb[0].mxu0
  %v601 = vpop.f32.mrb[0].mxu0
  %v602 = vadd.f32 0.0, %v601
  %v603 = vpop.f32.mrb[0].mxu0
  %604 = vmatprep.mubr.bf16.mxu0 0
  %605 = vmatmul.mubr.bf16.gmra.mrb[0].mxu0 %v271
  %v606 = vpop.f32.mrb[0].mxu0
  %v607 = vadd.f32 0.0, %v606
  %v608 = vpop.f32.mrb[0].mxu0
  %v609 = vpop.f32.mrb[0].mxu0
  %v610 = vadd.f32 0.0, %v609
  %v611 = vpop.f32.mrb[0].mxu0
  %612 = vmatprep.mubr.bf16.mxu0 0
  %613 = vmatmul.mubr.bf16.gmra.mrb[0].mxu0 %v272
  %v614 = vpop.f32.mrb[0].mxu0
  %v615 = vadd.f32 0.0, %v614
  %v616 = vpop.f32.mrb[0].mxu0
  %v617 = vpop.f32.mrb[0].mxu0
  %v618 = vadd.f32 0.0, %v617
  %v619 = vpop.f32.mrb[0].mxu0
  %620 = vmatprep.mubr.bf16.mxu0 0
  %621 = vmatmul.mubr.bf16.gmra.mrb[0].mxu0 %v273
  %v622 = vpop.f32.mrb[0].mxu0
  %v623 = vadd.f32 0.0, %v622
  %v624 = vpop.f32.mrb[0].mxu0
  %v625 = vpop.f32.mrb[0].mxu0
  %v626 = vadd.f32 0.0, %v625
  %v627 = vpop.f32.mrb[0].mxu0
  %628 = vmatprep.mubr.bf16.mxu0 0
  %629 = vmatmul.mubr.bf16.gmra.mrb[0].mxu0 %v274
  %v630 = vpop.f32.mrb[0].mxu0
  %v631 = vadd.f32 0.0, %v630
  %v632 = vpop.f32.mrb[0].mxu0
  %v633 = vpop.f32.mrb[0].mxu0
  %v634 = vadd.f32 0.0, %v633
  %v635 = vpop.f32.mrb[0].mxu0
  %636 = vmatprep.mubr.bf16.mxu0 0
  %637 = vmatmul.mubr.bf16.gmra.mrb[0].mxu0 %v275
  %v638 = vpop.f32.mrb[0].mxu0
  %v639 = vadd.f32 0.0, %v638
  %v640 = vpop.f32.mrb[0].mxu0
  %v641 = vpop.f32.mrb[0].mxu0
  %v642 = vadd.f32 0.0, %v641
  %v643 = vpop.f32.mrb[0].mxu0
  %644 = vdwg.mxu0
  %v645 = vld [vmem:[%s2] sm:$0x1]
  %v646 = vld [vmem:[%s3] sm:$0x1]
  %vm647 = vcmask 261120
  %v648 = vsel %vm647, %v391, 0.0
  %v649 = vsel %vm647, %v394, 0.0
  %v650 = vadd.f32 %v648, %v649
  %v651 = vsel %vm647, %v399, 0.0
  %v652 = vadd.f32 %v650, %v651
  %v653 = vsel %vm647, %v402, 0.0
  %v654 = vadd.f32 %v652, %v653
  %v655 = vsel %vm647, %v407, 0.0
  %v656 = vadd.f32 %v654, %v655
  %v657 = vsel %vm647, %v410, 0.0
  %v658 = vadd.f32 %v656, %v657
  %v659 = vsel %vm647, %v415, 0.0
  %v660 = vadd.f32 %v658, %v659
  %v661 = vsel %vm647, %v418, 0.0
  %v662 = vadd.f32 %v660, %v661
  %v663 = vsel %vm647, %v423, 0.0
  %v664 = vadd.f32 %v662, %v663
  %v665 = vsel %vm647, %v426, 0.0
  %v666 = vadd.f32 %v664, %v665
  %v667 = vsel %vm647, %v431, 0.0
  %v668 = vadd.f32 %v666, %v667
  %v669 = vsel %vm647, %v434, 0.0
  %v670 = vadd.f32 %v668, %v669
  %v671 = vsel %vm647, %v439, 0.0
  %v672 = vadd.f32 %v670, %v671
  %v673 = vsel %vm647, %v442, 0.0
  %v674 = vadd.f32 %v672, %v673
  %v675 = vsel %vm647, %v447, 0.0
  %v676 = vadd.f32 %v674, %v675
  %v677 = vsel %vm647, %v450, 0.0
  %v678 = vadd.f32 %v676, %v677
  %v679 = vsel %vm647, %v455, 0.0
  %v680 = vadd.f32 %v678, %v679
  %v681 = vsel %vm647, %v458, 0.0
  %v682 = vadd.f32 %v680, %v681
  %v683 = vsel %vm647, %v463, 0.0
  %v684 = vadd.f32 %v682, %v683
  %v685 = vsel %vm647, %v466, 0.0
  %v686 = vadd.f32 %v684, %v685
  %v687 = vsel %vm647, %v471, 0.0
  %v688 = vadd.f32 %v686, %v687
  %v689 = vsel %vm647, %v474, 0.0
  %v690 = vadd.f32 %v688, %v689
  %v691 = vsel %vm647, %v479, 0.0
  %v692 = vadd.f32 %v690, %v691
  %v693 = vsel %vm647, %v482, 0.0
  %v694 = vadd.f32 %v692, %v693
  %v695 = vsel %vm647, %v487, 0.0
  %v696 = vadd.f32 %v694, %v695
  %v697 = vsel %vm647, %v490, 0.0
  %v698 = vadd.f32 %v696, %v697
  %v699 = vsel %vm647, %v495, 0.0
  %v700 = vadd.f32 %v698, %v699
  %v701 = vsel %vm647, %v498, 0.0
  %v702 = vadd.f32 %v700, %v701
  %v703 = vsel %vm647, %v503, 0.0
  %v704 = vadd.f32 %v702, %v703
  %v705 = vsel %vm647, %v506, 0.0
  %v706 = vadd.f32 %v704, %v705
  %v707 = vsel %vm647, %v511, 0.0
  %v708 = vadd.f32 %v706, %v707
  %v709 = vsel %vm647, %v514, 0.0
  %v710 = vadd.f32 %v708, %v709
  %v711 = vsel %vm647, %v519, 0.0
  %v712 = vadd.f32 %v710, %v711
  %v713 = vsel %vm647, %v522, 0.0
  %v714 = vadd.f32 %v712, %v713
  %v715 = vsel %vm647, %v527, 0.0
  %v716 = vadd.f32 %v714, %v715
  %v717 = vsel %vm647, %v530, 0.0
  %v718 = vadd.f32 %v716, %v717
  %v719 = vsel %vm647, %v535, 0.0
  %v720 = vadd.f32 %v718, %v719
  %v721 = vsel %vm647, %v538, 0.0
  %v722 = vadd.f32 %v720, %v721
  %v723 = vsel %vm647, %v543, 0.0
  %v724 = vadd.f32 %v722, %v723
  %v725 = vsel %vm647, %v546, 0.0
  %v726 = vadd.f32 %v724, %v725
  %v727 = vsel %vm647, %v551, 0.0
  %v728 = vadd.f32 %v726, %v727
  %v729 = vsel %vm647, %v554, 0.0
  %v730 = vadd.f32 %v728, %v729
  %v731 = vsel %vm647, %v559, 0.0
  %v732 = vadd.f32 %v730, %v731
  %v733 = vsel %vm647, %v562, 0.0
  %v734 = vadd.f32 %v732, %v733
  %v735 = vsel %vm647, %v567, 0.0
  %v736 = vadd.f32 %v734, %v735
  %v737 = vsel %vm647, %v570, 0.0
  %v738 = vadd.f32 %v736, %v737
  %v739 = vsel %vm647, %v575, 0.0
  %v740 = vadd.f32 %v738, %v739
  %v741 = vsel %vm647, %v578, 0.0
  %v742 = vadd.f32 %v740, %v741
  %v743 = vsel %vm647, %v583, 0.0
  %v744 = vadd.f32 %v742, %v743
  %v745 = vsel %vm647, %v586, 0.0
  %v746 = vadd.f32 %v744, %v745
  %v747 = vsel %vm647, %v591, 0.0
  %v748 = vadd.f32 %v746, %v747
  %v749 = vsel %vm647, %v594, 0.0
  %v750 = vadd.f32 %v748, %v749
  %v751 = vsel %vm647, %v599, 0.0
  %v752 = vadd.f32 %v750, %v751
  %v753 = vsel %vm647, %v602, 0.0
  %v754 = vadd.f32 %v752, %v753
  %v755 = vsel %vm647, %v607, 0.0
  %v756 = vadd.f32 %v754, %v755
  %v757 = vsel %vm647, %v610, 0.0
  %v758 = vadd.f32 %v756, %v757
  %v759 = vsel %vm647, %v615, 0.0
  %v760 = vadd.f32 %v758, %v759
  %v761 = vsel %vm647, %v618, 0.0
  %v762 = vadd.f32 %v760, %v761
  %v763 = vsel %vm647, %v623, 0.0
  %v764 = vadd.f32 %v762, %v763
  %v765 = vsel %vm647, %v626, 0.0
  %v766 = vadd.f32 %v764, %v765
  %v767 = vsel %vm647, %v631, 0.0
  %v768 = vadd.f32 %v766, %v767
  %v769 = vsel %vm647, %v634, 0.0
  %v770 = vadd.f32 %v768, %v769
  %v771 = vsel %vm647, %v639, 0.0
  %v772 = vadd.f32 %v770, %v771
  %v773 = vsel %vm647, %v642, 0.0
  %v774 = vadd.f32 %v772, %v773
  %v775 = vrot.slane %v774, 4
  %v776 = vadd.f32 %v774, %v775
  %v777 = vrot.slane %v776, 2
  %v778 = vadd.f32 %v776, %v777
  %v779 = vrot.slane %v778, 1
  %v780 = vadd.f32 %v778, %v779
  %v781 = vmul.f32 %v780, 0.001953125
  %v782 = vsub.f32 %v391, %v781
  %v783 = vsub.f32 %v394, %v781
  %v784 = vsub.f32 %v399, %v781
  %v785 = vsub.f32 %v402, %v781
  %v786 = vsub.f32 %v407, %v781
  %v787 = vsub.f32 %v410, %v781
  %v788 = vsub.f32 %v415, %v781
  %v789 = vsub.f32 %v418, %v781
  %v790 = vsub.f32 %v423, %v781
  %v791 = vsub.f32 %v426, %v781
  %v792 = vsub.f32 %v431, %v781
  %v793 = vsub.f32 %v434, %v781
  %v794 = vsub.f32 %v439, %v781
  %v795 = vsub.f32 %v442, %v781
  %v796 = vsub.f32 %v447, %v781
  %v797 = vsub.f32 %v450, %v781
  %v798 = vsub.f32 %v455, %v781
  %v799 = vsub.f32 %v458, %v781
  %v800 = vsub.f32 %v463, %v781
  %v801 = vsub.f32 %v466, %v781
  %v802 = vsub.f32 %v471, %v781
  %v803 = vsub.f32 %v474, %v781
  %v804 = vsub.f32 %v479, %v781
  %v805 = vsub.f32 %v482, %v781
  %v806 = vsub.f32 %v487, %v781
  %v807 = vsub.f32 %v490, %v781
  %v808 = vsub.f32 %v495, %v781
  %v809 = vsub.f32 %v498, %v781
  %v810 = vsub.f32 %v503, %v781
  %v811 = vsub.f32 %v506, %v781
  %v812 = vsub.f32 %v511, %v781
  %v813 = vsub.f32 %v514, %v781
  %v814 = vsub.f32 %v519, %v781
  %v815 = vsub.f32 %v522, %v781
  %v816 = vsub.f32 %v527, %v781
  %v817 = vsub.f32 %v530, %v781
  %v818 = vsub.f32 %v535, %v781
  %v819 = vsub.f32 %v538, %v781
  %v820 = vsub.f32 %v543, %v781
  %v821 = vsub.f32 %v546, %v781
  %v822 = vsub.f32 %v551, %v781
  %v823 = vsub.f32 %v554, %v781
  %v824 = vsub.f32 %v559, %v781
  %v825 = vsub.f32 %v562, %v781
  %v826 = vsub.f32 %v567, %v781
  %v827 = vsub.f32 %v570, %v781
  %v828 = vsub.f32 %v575, %v781
  %v829 = vsub.f32 %v578, %v781
  %v830 = vsub.f32 %v583, %v781
  %v831 = vsub.f32 %v586, %v781
  %v832 = vsub.f32 %v591, %v781
  %v833 = vsub.f32 %v594, %v781
  %v834 = vsub.f32 %v599, %v781
  %v835 = vsub.f32 %v602, %v781
  %v836 = vsub.f32 %v607, %v781
  %v837 = vsub.f32 %v610, %v781
  %v838 = vsub.f32 %v615, %v781
  %v839 = vsub.f32 %v618, %v781
  %v840 = vsub.f32 %v623, %v781
  %v841 = vsub.f32 %v626, %v781
  %v842 = vsub.f32 %v631, %v781
  %v843 = vsub.f32 %v634, %v781
  %v844 = vsub.f32 %v639, %v781
  %v845 = vsub.f32 %v642, %v781
  %v846 = vmul.f32 %v782, %v782
  %v847 = vmul.f32 %v783, %v783
  %v848 = vmul.f32 %v784, %v784
  %v849 = vmul.f32 %v785, %v785
  %v850 = vmul.f32 %v786, %v786
  %v851 = vmul.f32 %v787, %v787
  %v852 = vmul.f32 %v788, %v788
  %v853 = vmul.f32 %v789, %v789
  %v854 = vmul.f32 %v790, %v790
  %v855 = vmul.f32 %v791, %v791
  %v856 = vmul.f32 %v792, %v792
  %v857 = vmul.f32 %v793, %v793
  %v858 = vmul.f32 %v794, %v794
  %v859 = vmul.f32 %v795, %v795
  %v860 = vmul.f32 %v796, %v796
  %v861 = vmul.f32 %v797, %v797
  %v862 = vmul.f32 %v798, %v798
  %v863 = vmul.f32 %v799, %v799
  %v864 = vmul.f32 %v800, %v800
  %v865 = vmul.f32 %v801, %v801
  %v866 = vmul.f32 %v802, %v802
  %v867 = vmul.f32 %v803, %v803
  %v868 = vmul.f32 %v804, %v804
  %v869 = vmul.f32 %v805, %v805
  %v870 = vmul.f32 %v806, %v806
  %v871 = vmul.f32 %v807, %v807
  %v872 = vmul.f32 %v808, %v808
  %v873 = vmul.f32 %v809, %v809
  %v874 = vmul.f32 %v810, %v810
  %v875 = vmul.f32 %v811, %v811
  %v876 = vmul.f32 %v812, %v812
  %v877 = vmul.f32 %v813, %v813
  %v878 = vmul.f32 %v814, %v814
  %v879 = vmul.f32 %v815, %v815
  %v880 = vmul.f32 %v816, %v816
  %v881 = vmul.f32 %v817, %v817
  %v882 = vmul.f32 %v818, %v818
  %v883 = vmul.f32 %v819, %v819
  %v884 = vmul.f32 %v820, %v820
  %v885 = vmul.f32 %v821, %v821
  %v886 = vmul.f32 %v822, %v822
  %v887 = vmul.f32 %v823, %v823
  %v888 = vmul.f32 %v824, %v824
  %v889 = vmul.f32 %v825, %v825
  %v890 = vmul.f32 %v826, %v826
  %v891 = vmul.f32 %v827, %v827
  %v892 = vmul.f32 %v828, %v828
  %v893 = vmul.f32 %v829, %v829
  %v894 = vmul.f32 %v830, %v830
  %v895 = vmul.f32 %v831, %v831
  %v896 = vmul.f32 %v832, %v832
  %v897 = vmul.f32 %v833, %v833
  %v898 = vmul.f32 %v834, %v834
  %v899 = vmul.f32 %v835, %v835
  %v900 = vmul.f32 %v836, %v836
  %v901 = vmul.f32 %v837, %v837
  %v902 = vmul.f32 %v838, %v838
  %v903 = vmul.f32 %v839, %v839
  %v904 = vmul.f32 %v840, %v840
  %v905 = vmul.f32 %v841, %v841
  %v906 = vmul.f32 %v842, %v842
  %v907 = vmul.f32 %v843, %v843
  %v908 = vmul.f32 %v844, %v844
  %v909 = vmul.f32 %v845, %v845
  %v910 = vsel %vm647, %v846, 0.0
  %v911 = vsel %vm647, %v847, 0.0
  %v912 = vadd.f32 %v910, %v911
  %v913 = vsel %vm647, %v848, 0.0
  %v914 = vadd.f32 %v912, %v913
  %v915 = vsel %vm647, %v849, 0.0
  %v916 = vadd.f32 %v914, %v915
  %v917 = vsel %vm647, %v850, 0.0
  %v918 = vadd.f32 %v916, %v917
  %v919 = vsel %vm647, %v851, 0.0
  %v920 = vadd.f32 %v918, %v919
  %v921 = vsel %vm647, %v852, 0.0
  %v922 = vadd.f32 %v920, %v921
  %v923 = vsel %vm647, %v853, 0.0
  %v924 = vadd.f32 %v922, %v923
  %v925 = vsel %vm647, %v854, 0.0
  %v926 = vadd.f32 %v924, %v925
  %v927 = vsel %vm647, %v855, 0.0
  %v928 = vadd.f32 %v926, %v927
  %v929 = vsel %vm647, %v856, 0.0
  %v930 = vadd.f32 %v928, %v929
  %v931 = vsel %vm647, %v857, 0.0
  %v932 = vadd.f32 %v930, %v931
  %v933 = vsel %vm647, %v858, 0.0
  %v934 = vadd.f32 %v932, %v933
  %v935 = vsel %vm647, %v859, 0.0
  %v936 = vadd.f32 %v934, %v935
  %v937 = vsel %vm647, %v860, 0.0
  %v938 = vadd.f32 %v936, %v937
  %v939 = vsel %vm647, %v861, 0.0
  %v940 = vadd.f32 %v938, %v939
  %v941 = vsel %vm647, %v862, 0.0
  %v942 = vadd.f32 %v940, %v941
  %v943 = vsel %vm647, %v863, 0.0
  %v944 = vadd.f32 %v942, %v943
  %v945 = vsel %vm647, %v864, 0.0
  %v946 = vadd.f32 %v944, %v945
  %v947 = vsel %vm647, %v865, 0.0
  %v948 = vadd.f32 %v946, %v947
  %v949 = vsel %vm647, %v866, 0.0
  %v950 = vadd.f32 %v948, %v949
  %v951 = vsel %vm647, %v867, 0.0
  %v952 = vadd.f32 %v950, %v951
  %v953 = vsel %vm647, %v868, 0.0
  %v954 = vadd.f32 %v952, %v953
  %v955 = vsel %vm647, %v869, 0.0
  %v956 = vadd.f32 %v954, %v955
  %v957 = vsel %vm647, %v870, 0.0
  %v958 = vadd.f32 %v956, %v957
  %v959 = vsel %vm647, %v871, 0.0
  %v960 = vadd.f32 %v958, %v959
  %v961 = vsel %vm647, %v872, 0.0
  %v962 = vadd.f32 %v960, %v961
  %v963 = vsel %vm647, %v873, 0.0
  %v964 = vadd.f32 %v962, %v963
  %v965 = vsel %vm647, %v874, 0.0
  %v966 = vadd.f32 %v964, %v965
  %v967 = vsel %vm647, %v875, 0.0
  %v968 = vadd.f32 %v966, %v967
  %v969 = vsel %vm647, %v876, 0.0
  %v970 = vadd.f32 %v968, %v969
  %v971 = vsel %vm647, %v877, 0.0
  %v972 = vadd.f32 %v970, %v971
  %v973 = vsel %vm647, %v878, 0.0
  %v974 = vadd.f32 %v972, %v973
  %v975 = vsel %vm647, %v879, 0.0
  %v976 = vadd.f32 %v974, %v975
  %v977 = vsel %vm647, %v880, 0.0
  %v978 = vadd.f32 %v976, %v977
  %v979 = vsel %vm647, %v881, 0.0
  %v980 = vadd.f32 %v978, %v979
  %v981 = vsel %vm647, %v882, 0.0
  %v982 = vadd.f32 %v980, %v981
  %v983 = vsel %vm647, %v883, 0.0
  %v984 = vadd.f32 %v982, %v983
  %v985 = vsel %vm647, %v884, 0.0
  %v986 = vadd.f32 %v984, %v985
  %v987 = vsel %vm647, %v885, 0.0
  %v988 = vadd.f32 %v986, %v987
  %v989 = vsel %vm647, %v886, 0.0
  %v990 = vadd.f32 %v988, %v989
  %v991 = vsel %vm647, %v887, 0.0
  %v992 = vadd.f32 %v990, %v991
  %v993 = vsel %vm647, %v888, 0.0
  %v994 = vadd.f32 %v992, %v993
  %v995 = vsel %vm647, %v889, 0.0
  %v996 = vadd.f32 %v994, %v995
  %v997 = vsel %vm647, %v890, 0.0
  %v998 = vadd.f32 %v996, %v997
  %v999 = vsel %vm647, %v891, 0.0
  %v1000 = vadd.f32 %v998, %v999
  %v1001 = vsel %vm647, %v892, 0.0
  %v1002 = vadd.f32 %v1000, %v1001
  %v1003 = vsel %vm647, %v893, 0.0
  %v1004 = vadd.f32 %v1002, %v1003
  %v1005 = vsel %vm647, %v894, 0.0
  %v1006 = vadd.f32 %v1004, %v1005
  %v1007 = vsel %vm647, %v895, 0.0
  %v1008 = vadd.f32 %v1006, %v1007
  %v1009 = vsel %vm647, %v896, 0.0
  %v1010 = vadd.f32 %v1008, %v1009
  %v1011 = vsel %vm647, %v897, 0.0
  %v1012 = vadd.f32 %v1010, %v1011
  %v1013 = vsel %vm647, %v898, 0.0
  %v1014 = vadd.f32 %v1012, %v1013
  %v1015 = vsel %vm647, %v899, 0.0
  %v1016 = vadd.f32 %v1014, %v1015
  %v1017 = vsel %vm647, %v900, 0.0
  %v1018 = vadd.f32 %v1016, %v1017
  %v1019 = vsel %vm647, %v901, 0.0
  %v1020 = vadd.f32 %v1018, %v1019
  %v1021 = vsel %vm647, %v902, 0.0
  %v1022 = vadd.f32 %v1020, %v1021
  %v1023 = vsel %vm647, %v903, 0.0
  %v1024 = vadd.f32 %v1022, %v1023
  %v1025 = vsel %vm647, %v904, 0.0
  %v1026 = vadd.f32 %v1024, %v1025
  %v1027 = vsel %vm647, %v905, 0.0
  %v1028 = vadd.f32 %v1026, %v1027
  %v1029 = vsel %vm647, %v906, 0.0
  %v1030 = vadd.f32 %v1028, %v1029
  %v1031 = vsel %vm647, %v907, 0.0
  %v1032 = vadd.f32 %v1030, %v1031
  %v1033 = vsel %vm647, %v908, 0.0
  %v1034 = vadd.f32 %v1032, %v1033
  %v1035 = vsel %vm647, %v909, 0.0
  %v1036 = vadd.f32 %v1034, %v1035
  %v1037 = vrot.slane %v1036, 4
  %v1038 = vadd.f32 %v1036, %v1037
  %v1039 = vrot.slane %v1038, 2
  %v1040 = vadd.f32 %v1038, %v1039
  %v1041 = vrot.slane %v1040, 1
  %v1042 = vadd.f32 %v1040, %v1041
  %v1043 = vmul.f32 %v1042, 0.001953125
  %v1044 = vadd.f32 %v1043, 1e-05
  %v1045 = vrsqrt.pop %v1044
  %v1046 = vmul.f32 %v1045, %v645
  %v1047 = vlaneseq
  %v1048 = vshrl.u32 %v1047, 7
  %v1049 = vsub.s32 0, %v1048
  %v1050 = vrot.slane %v1046, %v1049
  %v1051 = vmul.f32 %v782, %v1050
  %v1052 = vmul.f32 %v783, %v1050
  %v1053 = vmul.f32 %v784, %v1050
  %v1054 = vmul.f32 %v785, %v1050
  %v1055 = vmul.f32 %v786, %v1050
  %v1056 = vmul.f32 %v787, %v1050
  %v1057 = vmul.f32 %v788, %v1050
  %v1058 = vmul.f32 %v789, %v1050
  %v1059 = vmul.f32 %v790, %v1050
  %v1060 = vmul.f32 %v791, %v1050
  %v1061 = vmul.f32 %v792, %v1050
  %v1062 = vmul.f32 %v793, %v1050
  %v1063 = vmul.f32 %v794, %v1050
  %v1064 = vmul.f32 %v795, %v1050
  %v1065 = vmul.f32 %v796, %v1050
  %v1066 = vmul.f32 %v797, %v1050
  %v1067 = vmul.f32 %v798, %v1050
  %v1068 = vmul.f32 %v799, %v1050
  %v1069 = vmul.f32 %v800, %v1050
  %v1070 = vmul.f32 %v801, %v1050
  %v1071 = vmul.f32 %v802, %v1050
  %v1072 = vmul.f32 %v803, %v1050
  %v1073 = vmul.f32 %v804, %v1050
  %v1074 = vmul.f32 %v805, %v1050
  %v1075 = vmul.f32 %v806, %v1050
  %v1076 = vmul.f32 %v807, %v1050
  %v1077 = vmul.f32 %v808, %v1050
  %v1078 = vmul.f32 %v809, %v1050
  %v1079 = vmul.f32 %v810, %v1050
  %v1080 = vmul.f32 %v811, %v1050
  %v1081 = vmul.f32 %v812, %v1050
  %v1082 = vmul.f32 %v813, %v1050
  %v1083 = vmul.f32 %v814, %v1050
  %v1084 = vmul.f32 %v815, %v1050
  %v1085 = vmul.f32 %v816, %v1050
  %v1086 = vmul.f32 %v817, %v1050
  %v1087 = vmul.f32 %v818, %v1050
  %v1088 = vmul.f32 %v819, %v1050
  %v1089 = vmul.f32 %v820, %v1050
  %v1090 = vmul.f32 %v821, %v1050
  %v1091 = vmul.f32 %v822, %v1050
  %v1092 = vmul.f32 %v823, %v1050
  %v1093 = vmul.f32 %v824, %v1050
  %v1094 = vmul.f32 %v825, %v1050
  %v1095 = vmul.f32 %v826, %v1050
  %v1096 = vmul.f32 %v827, %v1050
  %v1097 = vmul.f32 %v828, %v1050
  %v1098 = vmul.f32 %v829, %v1050
  %v1099 = vmul.f32 %v830, %v1050
  %v1100 = vmul.f32 %v831, %v1050
  %v1101 = vmul.f32 %v832, %v1050
  %v1102 = vmul.f32 %v833, %v1050
  %v1103 = vmul.f32 %v834, %v1050
  %v1104 = vmul.f32 %v835, %v1050
  %v1105 = vmul.f32 %v836, %v1050
  %v1106 = vmul.f32 %v837, %v1050
  %v1107 = vmul.f32 %v838, %v1050
  %v1108 = vmul.f32 %v839, %v1050
  %v1109 = vmul.f32 %v840, %v1050
  %v1110 = vmul.f32 %v841, %v1050
  %v1111 = vmul.f32 %v842, %v1050
  %v1112 = vmul.f32 %v843, %v1050
  %v1113 = vmul.f32 %v844, %v1050
  %v1114 = vmul.f32 %v845, %v1050
  %v1116 = vlaneseq
  %v1117 = vshrl.u32 %v1116, 7
  %v1118 = vsub.s32 0, %v1117
  %v1119 = vrot.slane %v646, %v1118
  %v1121 = vadd.f32 %v1051, %v1119
  %v1122 = vadd.f32 %v1052, %v1119
  %v1123 = vadd.f32 %v1053, %v1119
  %v1124 = vadd.f32 %v1054, %v1119
  %v1125 = vadd.f32 %v1055, %v1119
  %v1126 = vadd.f32 %v1056, %v1119
  %v1127 = vadd.f32 %v1057, %v1119
  %v1128 = vadd.f32 %v1058, %v1119
  %v1129 = vadd.f32 %v1059, %v1119
  %v1130 = vadd.f32 %v1060, %v1119
  %v1131 = vadd.f32 %v1061, %v1119
  %v1132 = vadd.f32 %v1062, %v1119
  %v1133 = vadd.f32 %v1063, %v1119
  %v1134 = vadd.f32 %v1064, %v1119
  %v1135 = vadd.f32 %v1065, %v1119
  %v1136 = vadd.f32 %v1066, %v1119
  %v1137 = vadd.f32 %v1067, %v1119
  %v1138 = vadd.f32 %v1068, %v1119
  %v1139 = vadd.f32 %v1069, %v1119
  %v1140 = vadd.f32 %v1070, %v1119
  %v1141 = vadd.f32 %v1071, %v1119
  %v1142 = vadd.f32 %v1072, %v1119
  %v1143 = vadd.f32 %v1073, %v1119
  %v1144 = vadd.f32 %v1074, %v1119
  %v1145 = vadd.f32 %v1075, %v1119
  %v1146 = vadd.f32 %v1076, %v1119
  %v1147 = vadd.f32 %v1077, %v1119
  %v1148 = vadd.f32 %v1078, %v1119
  %v1149 = vadd.f32 %v1079, %v1119
  %v1150 = vadd.f32 %v1080, %v1119
  %v1151 = vadd.f32 %v1081, %v1119
  %v1152 = vadd.f32 %v1082, %v1119
  %v1153 = vadd.f32 %v1083, %v1119
  %v1154 = vadd.f32 %v1084, %v1119
  %v1155 = vadd.f32 %v1085, %v1119
  %v1156 = vadd.f32 %v1086, %v1119
  %v1157 = vadd.f32 %v1087, %v1119
  %v1158 = vadd.f32 %v1088, %v1119
  %v1159 = vadd.f32 %v1089, %v1119
  %v1160 = vadd.f32 %v1090, %v1119
  %v1161 = vadd.f32 %v1091, %v1119
  %v1162 = vadd.f32 %v1092, %v1119
  %v1163 = vadd.f32 %v1093, %v1119
  %v1164 = vadd.f32 %v1094, %v1119
  %v1165 = vadd.f32 %v1095, %v1119
  %v1166 = vadd.f32 %v1096, %v1119
  %v1167 = vadd.f32 %v1097, %v1119
  %v1168 = vadd.f32 %v1098, %v1119
  %v1169 = vadd.f32 %v1099, %v1119
  %v1170 = vadd.f32 %v1100, %v1119
  %v1171 = vadd.f32 %v1101, %v1119
  %v1172 = vadd.f32 %v1102, %v1119
  %v1173 = vadd.f32 %v1103, %v1119
  %v1174 = vadd.f32 %v1104, %v1119
  %v1175 = vadd.f32 %v1105, %v1119
  %v1176 = vadd.f32 %v1106, %v1119
  %v1177 = vadd.f32 %v1107, %v1119
  %v1178 = vadd.f32 %v1108, %v1119
  %v1179 = vadd.f32 %v1109, %v1119
  %v1180 = vadd.f32 %v1110, %v1119
  %v1181 = vadd.f32 %v1111, %v1119
  %v1182 = vadd.f32 %v1112, %v1119
  %v1183 = vadd.f32 %v1113, %v1119
  %v1184 = vadd.f32 %v1114, %v1119
  %v1185 = vtanh.pop %v1121
  %v1186 = vtanh.pop %v1122
  %v1187 = vtanh.pop %v1123
  %v1188 = vtanh.pop %v1124
  %v1189 = vtanh.pop %v1125
  %v1190 = vtanh.pop %v1126
  %v1191 = vtanh.pop %v1127
  %v1192 = vtanh.pop %v1128
  %v1193 = vtanh.pop %v1129
  %v1194 = vtanh.pop %v1130
  %v1195 = vtanh.pop %v1131
  %v1196 = vtanh.pop %v1132
  %v1197 = vtanh.pop %v1133
  %v1198 = vtanh.pop %v1134
  %v1199 = vtanh.pop %v1135
  %v1200 = vtanh.pop %v1136
  %v1201 = vtanh.pop %v1137
  %v1202 = vtanh.pop %v1138
  %v1203 = vtanh.pop %v1139
  %v1204 = vtanh.pop %v1140
  %v1205 = vtanh.pop %v1141
  %v1206 = vtanh.pop %v1142
  %v1207 = vtanh.pop %v1143
  %v1208 = vtanh.pop %v1144
  %v1209 = vtanh.pop %v1145
  %v1210 = vtanh.pop %v1146
  %v1211 = vtanh.pop %v1147
  %v1212 = vtanh.pop %v1148
  %v1213 = vtanh.pop %v1149
  %v1214 = vtanh.pop %v1150
  %v1215 = vtanh.pop %v1151
  %v1216 = vtanh.pop %v1152
  %v1217 = vtanh.pop %v1153
  %v1218 = vtanh.pop %v1154
  %v1219 = vtanh.pop %v1155
  %v1220 = vtanh.pop %v1156
  %v1221 = vtanh.pop %v1157
  %v1222 = vtanh.pop %v1158
  %v1223 = vtanh.pop %v1159
  %v1224 = vtanh.pop %v1160
  %v1225 = vtanh.pop %v1161
  %v1226 = vtanh.pop %v1162
  %v1227 = vtanh.pop %v1163
  %v1228 = vtanh.pop %v1164
  %v1229 = vtanh.pop %v1165
  %v1230 = vtanh.pop %v1166
  %v1231 = vtanh.pop %v1167
  %v1232 = vtanh.pop %v1168
  %v1233 = vtanh.pop %v1169
  %v1234 = vtanh.pop %v1170
  %v1235 = vtanh.pop %v1171
  %v1236 = vtanh.pop %v1172
  %v1237 = vtanh.pop %v1173
  %v1238 = vtanh.pop %v1174
  %v1239 = vtanh.pop %v1175
  %v1240 = vtanh.pop %v1176
  %v1241 = vtanh.pop %v1177
  %v1242 = vtanh.pop %v1178
  %v1243 = vtanh.pop %v1179
  %v1244 = vtanh.pop %v1180
  %v1245 = vtanh.pop %v1181
  %v1246 = vtanh.pop %v1182
  %v1247 = vtanh.pop %v1183
  %v1248 = vtanh.pop %v1184
  %v1249 = vadd.f32 %v1185, 2.0
  %v1250 = vadd.f32 %v1186, 2.0
  %v1251 = vadd.f32 %v1187, 2.0
  %v1252 = vadd.f32 %v1188, 2.0
  %v1253 = vadd.f32 %v1189, 2.0
  %v1254 = vadd.f32 %v1190, 2.0
  %v1255 = vadd.f32 %v1191, 2.0
  %v1256 = vadd.f32 %v1192, 2.0
  %v1257 = vadd.f32 %v1193, 2.0
  %v1258 = vadd.f32 %v1194, 2.0
  %v1259 = vadd.f32 %v1195, 2.0
  %v1260 = vadd.f32 %v1196, 2.0
  %v1261 = vadd.f32 %v1197, 2.0
  %v1262 = vadd.f32 %v1198, 2.0
  %v1263 = vadd.f32 %v1199, 2.0
  %v1264 = vadd.f32 %v1200, 2.0
  %v1265 = vadd.f32 %v1201, 2.0
  %v1266 = vadd.f32 %v1202, 2.0
  %v1267 = vadd.f32 %v1203, 2.0
  %v1268 = vadd.f32 %v1204, 2.0
  %v1269 = vadd.f32 %v1205, 2.0
  %v1270 = vadd.f32 %v1206, 2.0
  %v1271 = vadd.f32 %v1207, 2.0
  %v1272 = vadd.f32 %v1208, 2.0
  %v1273 = vadd.f32 %v1209, 2.0
  %v1274 = vadd.f32 %v1210, 2.0
  %v1275 = vadd.f32 %v1211, 2.0
  %v1276 = vadd.f32 %v1212, 2.0
  %v1277 = vadd.f32 %v1213, 2.0
  %v1278 = vadd.f32 %v1214, 2.0
  %v1279 = vadd.f32 %v1215, 2.0
  %v1280 = vadd.f32 %v1216, 2.0
  %v1281 = vadd.f32 %v1217, 2.0
  %v1282 = vadd.f32 %v1218, 2.0
  %v1283 = vadd.f32 %v1219, 2.0
  %v1284 = vadd.f32 %v1220, 2.0
  %v1285 = vadd.f32 %v1221, 2.0
  %v1286 = vadd.f32 %v1222, 2.0
  %v1287 = vadd.f32 %v1223, 2.0
  %v1288 = vadd.f32 %v1224, 2.0
  %v1289 = vadd.f32 %v1225, 2.0
  %v1290 = vadd.f32 %v1226, 2.0
  %v1291 = vadd.f32 %v1227, 2.0
  %v1292 = vadd.f32 %v1228, 2.0
  %v1293 = vadd.f32 %v1229, 2.0
  %v1294 = vadd.f32 %v1230, 2.0
  %v1295 = vadd.f32 %v1231, 2.0
  %v1296 = vadd.f32 %v1232, 2.0
  %v1297 = vadd.f32 %v1233, 2.0
  %v1298 = vadd.f32 %v1234, 2.0
  %v1299 = vadd.f32 %v1235, 2.0
  %v1300 = vadd.f32 %v1236, 2.0
  %v1301 = vadd.f32 %v1237, 2.0
  %v1302 = vadd.f32 %v1238, 2.0
  %v1303 = vadd.f32 %v1239, 2.0
  %v1304 = vadd.f32 %v1240, 2.0
  %v1305 = vadd.f32 %v1241, 2.0
  %v1306 = vadd.f32 %v1242, 2.0
  %v1307 = vadd.f32 %v1243, 2.0
  %v1308 = vadd.f32 %v1244, 2.0
  %v1309 = vadd.f32 %v1245, 2.0
  %v1310 = vadd.f32 %v1246, 2.0
  %v1311 = vadd.f32 %v1247, 2.0
  %v1312 = vadd.f32 %v1248, 2.0
  %v1313 = vld [vmem:[%s4] sm:$0xff]
  %v1314 = vld [vmem:[%s4 + $0x8] sm:$0xff]
  %v1315 = vld [vmem:[%s4 + $0x10] sm:$0xff]
  %v1316 = vld [vmem:[%s4 + $0x18] sm:$0xff]
  %v1317 = vld [vmem:[%s4 + $0x20] sm:$0xff]
  %v1318 = vld [vmem:[%s4 + $0x28] sm:$0xff]
  %v1319 = vld [vmem:[%s4 + $0x30] sm:$0xff]
  %v1320 = vld [vmem:[%s4 + $0x38] sm:$0xff]
  %v1321 = vld [vmem:[%s4 + $0x40] sm:$0xff]
  %v1322 = vld [vmem:[%s4 + $0x48] sm:$0xff]
  %v1323 = vld [vmem:[%s4 + $0x50] sm:$0xff]
  %v1324 = vld [vmem:[%s4 + $0x58] sm:$0xff]
  %v1325 = vld [vmem:[%s4 + $0x60] sm:$0xff]
  %v1326 = vld [vmem:[%s4 + $0x68] sm:$0xff]
  %v1327 = vld [vmem:[%s4 + $0x70] sm:$0xff]
  %v1328 = vld [vmem:[%s4 + $0x78] sm:$0xff]
  %v1329 = vld [vmem:[%s4 + $0x80] sm:$0xff]
  %v1330 = vld [vmem:[%s4 + $0x88] sm:$0xff]
  %v1331 = vld [vmem:[%s4 + $0x90] sm:$0xff]
  %v1332 = vld [vmem:[%s4 + $0x98] sm:$0xff]
  %v1333 = vld [vmem:[%s4 + $0xa0] sm:$0xff]
  %v1334 = vld [vmem:[%s4 + $0xa8] sm:$0xff]
  %v1335 = vld [vmem:[%s4 + $0xb0] sm:$0xff]
  %v1336 = vld [vmem:[%s4 + $0xb8] sm:$0xff]
  %v1337 = vld [vmem:[%s4 + $0xc0] sm:$0xff]
  %v1338 = vld [vmem:[%s4 + $0xc8] sm:$0xff]
  %v1339 = vld [vmem:[%s4 + $0xd0] sm:$0xff]
  %v1340 = vld [vmem:[%s4 + $0xd8] sm:$0xff]
  %v1341 = vld [vmem:[%s4 + $0xe0] sm:$0xff]
  %v1342 = vld [vmem:[%s4 + $0xe8] sm:$0xff]
  %v1343 = vld [vmem:[%s4 + $0xf0] sm:$0xff]
  %v1344 = vld [vmem:[%s4 + $0xf8] sm:$0xff]
  %v1345 = vld [vmem:[%s4 + $0x100] sm:$0xff]
  %v1346 = vld [vmem:[%s4 + $0x108] sm:$0xff]
  %v1347 = vld [vmem:[%s4 + $0x110] sm:$0xff]
  %v1348 = vld [vmem:[%s4 + $0x118] sm:$0xff]
  %v1349 = vld [vmem:[%s4 + $0x120] sm:$0xff]
  %v1350 = vld [vmem:[%s4 + $0x128] sm:$0xff]
  %v1351 = vld [vmem:[%s4 + $0x130] sm:$0xff]
  %v1352 = vld [vmem:[%s4 + $0x138] sm:$0xff]
  %v1353 = vld [vmem:[%s4 + $0x140] sm:$0xff]
  %v1354 = vld [vmem:[%s4 + $0x148] sm:$0xff]
  %v1355 = vld [vmem:[%s4 + $0x150] sm:$0xff]
  %v1356 = vld [vmem:[%s4 + $0x158] sm:$0xff]
  %v1357 = vld [vmem:[%s4 + $0x160] sm:$0xff]
  %v1358 = vld [vmem:[%s4 + $0x168] sm:$0xff]
  %v1359 = vld [vmem:[%s4 + $0x170] sm:$0xff]
  %v1360 = vld [vmem:[%s4 + $0x178] sm:$0xff]
  %v1361 = vld [vmem:[%s4 + $0x180] sm:$0xff]
  %v1362 = vld [vmem:[%s4 + $0x188] sm:$0xff]
  %v1363 = vld [vmem:[%s4 + $0x190] sm:$0xff]
  %v1364 = vld [vmem:[%s4 + $0x198] sm:$0xff]
  %v1365 = vld [vmem:[%s4 + $0x1a0] sm:$0xff]
  %v1366 = vld [vmem:[%s4 + $0x1a8] sm:$0xff]
  %v1367 = vld [vmem:[%s4 + $0x1b0] sm:$0xff]
  %v1368 = vld [vmem:[%s4 + $0x1b8] sm:$0xff]
  %v1369 = vld [vmem:[%s4 + $0x1c0] sm:$0xff]
  %v1370 = vld [vmem:[%s4 + $0x1c8] sm:$0xff]
  %v1371 = vld [vmem:[%s4 + $0x1d0] sm:$0xff]
  %v1372 = vld [vmem:[%s4 + $0x1d8] sm:$0xff]
  %v1373 = vld [vmem:[%s4 + $0x1e0] sm:$0xff]
  %v1374 = vld [vmem:[%s4 + $0x1e8] sm:$0xff]
  %v1375 = vld [vmem:[%s4 + $0x1f0] sm:$0xff]
  %v1376 = vld [vmem:[%s4 + $0x1f8] sm:$0xff]
  %v1377 = vld [vmem:[%s4 + $0x200] sm:$0xff]
  %v1378 = vld [vmem:[%s4 + $0x208] sm:$0xff]
  %v1379 = vld [vmem:[%s4 + $0x210] sm:$0xff]
  %v1380 = vld [vmem:[%s4 + $0x218] sm:$0xff]
  %v1381 = vld [vmem:[%s4 + $0x220] sm:$0xff]
  %v1382 = vld [vmem:[%s4 + $0x228] sm:$0xff]
  %v1383 = vld [vmem:[%s4 + $0x230] sm:$0xff]
  %v1384 = vld [vmem:[%s4 + $0x238] sm:$0xff]
  %v1385 = vld [vmem:[%s4 + $0x240] sm:$0xff]
  %v1386 = vld [vmem:[%s4 + $0x248] sm:$0xff]
  %v1387 = vld [vmem:[%s4 + $0x250] sm:$0xff]
  %v1388 = vld [vmem:[%s4 + $0x258] sm:$0xff]
  %v1389 = vld [vmem:[%s4 + $0x260] sm:$0xff]
  %v1390 = vld [vmem:[%s4 + $0x268] sm:$0xff]
  %v1391 = vld [vmem:[%s4 + $0x270] sm:$0xff]
  %v1392 = vld [vmem:[%s4 + $0x278] sm:$0xff]
  %v1393 = vld [vmem:[%s4 + $0x280] sm:$0x3]
  %v1394 = vld [vmem:[%s4 + $0x288] sm:$0x3]
  %v1395 = vld [vmem:[%s4 + $0x290] sm:$0x3]
  %v1396 = vld [vmem:[%s4 + $0x298] sm:$0x3]
  %1397 = vmatprep.subr.mxu0 0.0
  %1398 = vmatpush1.msra.mxu0 %v1249
  %1399 = vmatprep.subr.mxu0 0.0
  %1400 = vmatpush1.msra.mxu0 %v1250
  %1401 = vmatprep.subr.mxu0 0.0
  %1402 = vmatpush1.msra.mxu0 %v1251
  %1403 = vmatprep.subr.mxu0 0.0
  %1404 = vmatpush1.msra.mxu0 %v1252
  %1405 = vmatprep.subr.mxu0 0.0
  %1406 = vmatpush1.msra.mxu0 %v1253
  %1407 = vmatprep.subr.mxu0 0.0
  %1408 = vmatpush1.msra.mxu0 %v1254
  %1409 = vmatprep.subr.mxu0 0.0
  %1410 = vmatpush1.msra.mxu0 %v1255
  %1411 = vmatprep.subr.mxu0 0.0
  %1412 = vmatpush1.msra.mxu0 %v1256
  %1413 = vmatprep.subr.mxu0 0.0
  %1414 = vmatpush1.msra.mxu0 %v1257
  %1415 = vmatprep.subr.mxu0 0.0
  %1416 = vmatpush1.msra.mxu0 %v1258
  %1417 = vmatprep.subr.mxu0 0.0
  %1418 = vmatpush1.msra.mxu0 %v1259
  %1419 = vmatprep.subr.mxu0 0.0
  %1420 = vmatpush1.msra.mxu0 %v1260
  %1421 = vmatprep.subr.mxu0 0.0
  %1422 = vmatpush1.msra.mxu0 %v1261
  %1423 = vmatprep.subr.mxu0 0.0
  %1424 = vmatpush1.msra.mxu0 %v1262
  %1425 = vmatprep.subr.mxu0 0.0
  %1426 = vmatpush1.msra.mxu0 %v1263
  %1427 = vmatprep.subr.mxu0 0.0
  %1428 = vmatpush1.msra.mxu0 %v1264
  %1429 = vmatprep.subr.mxu0 0.0
  %1430 = vmatpush1.msra.mxu0 %v1265
  %1431 = vmatprep.subr.mxu0 0.0
  %1432 = vmatpush1.msra.mxu0 %v1266
  %1433 = vmatprep.subr.mxu0 0.0
  %1434 = vmatpush1.msra.mxu0 %v1267
  %1435 = vmatprep.subr.mxu0 0.0
  %1436 = vmatpush1.msra.mxu0 %v1268
  %1437 = vmatprep.subr.mxu0 0.0
  %1438 = vmatpush1.msra.mxu0 %v1269
  %1439 = vmatprep.subr.mxu0 0.0
  %1440 = vmatpush1.msra.mxu0 %v1270
  %1441 = vmatprep.subr.mxu0 0.0
  %1442 = vmatpush1.msra.mxu0 %v1271
  %1443 = vmatprep.subr.mxu0 0.0
  %1444 = vmatpush1.msra.mxu0 %v1272
  %1445 = vmatprep.subr.mxu0 0.0
  %1446 = vmatpush1.msra.mxu0 %v1273
  %1447 = vmatprep.subr.mxu0 0.0
  %1448 = vmatpush1.msra.mxu0 %v1274
  %1449 = vmatprep.subr.mxu0 0.0
  %1450 = vmatpush1.msra.mxu0 %v1275
  %1451 = vmatprep.subr.mxu0 0.0
  %1452 = vmatpush1.msra.mxu0 %v1276
  %1453 = vmatprep.subr.mxu0 0.0
  %1454 = vmatpush1.msra.mxu0 %v1277
  %1455 = vmatprep.subr.mxu0 0.0
  %1456 = vmatpush1.msra.mxu0 %v1278
  %1457 = vmatprep.subr.mxu0 0.0
  %1458 = vmatpush1.msra.mxu0 %v1279
  %1459 = vmatprep.subr.mxu0 0.0
  %1460 = vmatpush1.msra.mxu0 %v1280
  %1461 = vmatprep.mubr.f32.mxu0 %v1314
  %1462 = vmatmul.mubr.f32.gmra.mrb[0].mxu0 %v1313
  %v1463 = vpop.f32.mrb[0].mxu0
  %v1464 = vadd.f32 0.0, %v1463
  %v1465 = vpop.f32.mrb[0].mxu0
  %1466 = vmatprep.mubr.f32.mxu0 %v1318
  %1467 = vmatmul.mubr.f32.gmra.mrb[0].mxu0 %v1317
  %v1468 = vpop.f32.mrb[0].mxu0
  %v1469 = vadd.f32 0.0, %v1468
  %v1470 = vpop.f32.mrb[0].mxu0
  %1471 = vmatprep.mubr.f32.mxu0 %v1322
  %1472 = vmatmul.mubr.f32.gmra.mrb[0].mxu0 %v1321
  %v1473 = vpop.f32.mrb[0].mxu0
  %v1474 = vadd.f32 0.0, %v1473
  %v1475 = vpop.f32.mrb[0].mxu0
  %1476 = vmatprep.mubr.f32.mxu0 %v1326
  %1477 = vmatmul.mubr.f32.gmra.mrb[0].mxu0 %v1325
  %v1478 = vpop.f32.mrb[0].mxu0
  %v1479 = vadd.f32 0.0, %v1478
  %v1480 = vpop.f32.mrb[0].mxu0
  %1481 = vmatprep.mubr.f32.mxu0 %v1330
  %1482 = vmatmul.mubr.f32.gmra.mrb[0].mxu0 %v1329
  %v1483 = vpop.f32.mrb[0].mxu0
  %v1484 = vadd.f32 0.0, %v1483
  %v1485 = vpop.f32.mrb[0].mxu0
  %1486 = vmatprep.mubr.f32.mxu0 %v1334
  %1487 = vmatmul.mubr.f32.gmra.mrb[0].mxu0 %v1333
  %v1488 = vpop.f32.mrb[0].mxu0
  %v1489 = vadd.f32 0.0, %v1488
  %v1490 = vpop.f32.mrb[0].mxu0
  %1491 = vmatprep.mubr.f32.mxu0 %v1338
  %1492 = vmatmul.mubr.f32.gmra.mrb[0].mxu0 %v1337
  %v1493 = vpop.f32.mrb[0].mxu0
  %v1494 = vadd.f32 0.0, %v1493
  %v1495 = vpop.f32.mrb[0].mxu0
  %1496 = vmatprep.mubr.f32.mxu0 %v1342
  %1497 = vmatmul.mubr.f32.gmra.mrb[0].mxu0 %v1341
  %v1498 = vpop.f32.mrb[0].mxu0
  %v1499 = vadd.f32 0.0, %v1498
  %v1500 = vpop.f32.mrb[0].mxu0
  %1501 = vmatprep.mubr.f32.mxu0 %v1346
  %1502 = vmatmul.mubr.f32.gmra.mrb[0].mxu0 %v1345
  %v1503 = vpop.f32.mrb[0].mxu0
  %v1504 = vadd.f32 0.0, %v1503
  %v1505 = vpop.f32.mrb[0].mxu0
  %1506 = vmatprep.mubr.f32.mxu0 %v1350
  %1507 = vmatmul.mubr.f32.gmra.mrb[0].mxu0 %v1349
  %v1508 = vpop.f32.mrb[0].mxu0
  %v1509 = vadd.f32 0.0, %v1508
  %v1510 = vpop.f32.mrb[0].mxu0
  %1511 = vmatprep.mubr.f32.mxu0 %v1354
  %1512 = vmatmul.mubr.f32.gmra.mrb[0].mxu0 %v1353
  %v1513 = vpop.f32.mrb[0].mxu0
  %v1514 = vadd.f32 0.0, %v1513
  %v1515 = vpop.f32.mrb[0].mxu0
  %1516 = vmatprep.mubr.f32.mxu0 %v1358
  %1517 = vmatmul.mubr.f32.gmra.mrb[0].mxu0 %v1357
  %v1518 = vpop.f32.mrb[0].mxu0
  %v1519 = vadd.f32 0.0, %v1518
  %v1520 = vpop.f32.mrb[0].mxu0
  %1521 = vmatprep.mubr.f32.mxu0 %v1362
  %1522 = vmatmul.mubr.f32.gmra.mrb[0].mxu0 %v1361
  %v1523 = vpop.f32.mrb[0].mxu0
  %v1524 = vadd.f32 0.0, %v1523
  %v1525 = vpop.f32.mrb[0].mxu0
  %1526 = vmatprep.mubr.f32.mxu0 %v1366
  %1527 = vmatmul.mubr.f32.gmra.mrb[0].mxu0 %v1365
  %v1528 = vpop.f32.mrb[0].mxu0
  %v1529 = vadd.f32 0.0, %v1528
  %v1530 = vpop.f32.mrb[0].mxu0
  %1531 = vmatprep.mubr.f32.mxu0 %v1370
  %1532 = vmatmul.mubr.f32.gmra.mrb[0].mxu0 %v1369
  %v1533 = vpop.f32.mrb[0].mxu0
  %v1534 = vadd.f32 0.0, %v1533
  %v1535 = vpop.f32.mrb[0].mxu0
  %1536 = vmatprep.mubr.f32.mxu0 %v1374
  %1537 = vmatmul.mubr.f32.gmra.mrb[0].mxu0 %v1373
  %v1538 = vpop.f32.mrb[0].mxu0
  %v1539 = vadd.f32 0.0, %v1538
  %v1540 = vpop.f32.mrb[0].mxu0
  %1541 = vmatprep.mubr.f32.mxu0 %v1378
  %1542 = vmatmul.mubr.f32.gmra.mrb[0].mxu0 %v1377
  %v1543 = vpop.f32.mrb[0].mxu0
  %v1544 = vadd.f32 0.0, %v1543
  %v1545 = vpop.f32.mrb[0].mxu0
  %1546 = vmatprep.mubr.f32.mxu0 %v1382
  %1547 = vmatmul.mubr.f32.gmra.mrb[0].mxu0 %v1381
  %v1548 = vpop.f32.mrb[0].mxu0
  %v1549 = vadd.f32 0.0, %v1548
  %v1550 = vpop.f32.mrb[0].mxu0
  %1551 = vmatprep.mubr.f32.mxu0 %v1386
  %1552 = vmatmul.mubr.f32.gmra.mrb[0].mxu0 %v1385
  %v1553 = vpop.f32.mrb[0].mxu0
  %v1554 = vadd.f32 0.0, %v1553
  %v1555 = vpop.f32.mrb[0].mxu0
  %1556 = vmatprep.mubr.f32.mxu0 %v1390
  %1557 = vmatmul.mubr.f32.gmra.mrb[0].mxu0 %v1389
  %v1558 = vpop.f32.mrb[0].mxu0
  %v1559 = vadd.f32 0.0, %v1558
  %v1560 = vpop.f32.mrb[0].mxu0
  %1561 = vmatprep.mubr.f32.mxu0 %v1394
  %1562 = vmatmul.mubr.f32.gmra.mrb[0].mxu0 %v1393
  %v1563 = vpop.f32.mrb[0].mxu0
  %v1564 = vadd.f32 0.0, %v1563
  %v1565 = vpop.f32.mrb[0].mxu0
  %1566 = vdwg.mxu0
  %1567 = vmatprep.subr.mxu0 0.0
  %1568 = vmatpush1.msra.mxu0 %v1281
  %1569 = vmatprep.subr.mxu0 0.0
  %1570 = vmatpush1.msra.mxu0 %v1282
  %1571 = vmatprep.subr.mxu0 0.0
  %1572 = vmatpush1.msra.mxu0 %v1283
  %1573 = vmatprep.subr.mxu0 0.0
  %1574 = vmatpush1.msra.mxu0 %v1284
  %1575 = vmatprep.subr.mxu0 0.0
  %1576 = vmatpush1.msra.mxu0 %v1285
  %1577 = vmatprep.subr.mxu0 0.0
  %1578 = vmatpush1.msra.mxu0 %v1286
  %1579 = vmatprep.subr.mxu0 0.0
  %1580 = vmatpush1.msra.mxu0 %v1287
  %1581 = vmatprep.subr.mxu0 0.0
  %1582 = vmatpush1.msra.mxu0 %v1288
  %1583 = vmatprep.subr.mxu0 0.0
  %1584 = vmatpush1.msra.mxu0 %v1289
  %1585 = vmatprep.subr.mxu0 0.0
  %1586 = vmatpush1.msra.mxu0 %v1290
  %1587 = vmatprep.subr.mxu0 0.0
  %1588 = vmatpush1.msra.mxu0 %v1291
  %1589 = vmatprep.subr.mxu0 0.0
  %1590 = vmatpush1.msra.mxu0 %v1292
  %1591 = vmatprep.subr.mxu0 0.0
  %1592 = vmatpush1.msra.mxu0 %v1293
  %1593 = vmatprep.subr.mxu0 0.0
  %1594 = vmatpush1.msra.mxu0 %v1294
  %1595 = vmatprep.subr.mxu0 0.0
  %1596 = vmatpush1.msra.mxu0 %v1295
  %1597 = vmatprep.subr.mxu0 0.0
  %1598 = vmatpush1.msra.mxu0 %v1296
  %1599 = vmatprep.subr.mxu0 0.0
  %1600 = vmatpush1.msra.mxu0 %v1297
  %1601 = vmatprep.subr.mxu0 0.0
  %1602 = vmatpush1.msra.mxu0 %v1298
  %1603 = vmatprep.subr.mxu0 0.0
  %1604 = vmatpush1.msra.mxu0 %v1299
  %1605 = vmatprep.subr.mxu0 0.0
  %1606 = vmatpush1.msra.mxu0 %v1300
  %1607 = vmatprep.subr.mxu0 0.0
  %1608 = vmatpush1.msra.mxu0 %v1301
  %1609 = vmatprep.subr.mxu0 0.0
  %1610 = vmatpush1.msra.mxu0 %v1302
  %1611 = vmatprep.subr.mxu0 0.0
  %1612 = vmatpush1.msra.mxu0 %v1303
  %1613 = vmatprep.subr.mxu0 0.0
  %1614 = vmatpush1.msra.mxu0 %v1304
  %1615 = vmatprep.subr.mxu0 0.0
  %1616 = vmatpush1.msra.mxu0 %v1305
  %1617 = vmatprep.subr.mxu0 0.0
  %1618 = vmatpush1.msra.mxu0 %v1306
  %1619 = vmatprep.subr.mxu0 0.0
  %1620 = vmatpush1.msra.mxu0 %v1307
  %1621 = vmatprep.subr.mxu0 0.0
  %1622 = vmatpush1.msra.mxu0 %v1308
  %1623 = vmatprep.subr.mxu0 0.0
  %1624 = vmatpush1.msra.mxu0 %v1309
  %1625 = vmatprep.subr.mxu0 0.0
  %1626 = vmatpush1.msra.mxu0 %v1310
  %1627 = vmatprep.subr.mxu0 0.0
  %1628 = vmatpush1.msra.mxu0 %v1311
  %1629 = vmatprep.subr.mxu0 0.0
  %1630 = vmatpush1.msra.mxu0 %v1312
  %1631 = vmatprep.mubr.f32.mxu0 %v1316
  %1632 = vmatmul.mubr.f32.gmra.mrb[0].mxu0 %v1315
  %v1633 = vpop.f32.mrb[0].mxu0
  %v1634 = vadd.f32 %v1464, %v1633
  %v1635 = vpop.f32.mrb[0].mxu0
  %1636 = vmatprep.mubr.f32.mxu0 %v1320
  %1637 = vmatmul.mubr.f32.gmra.mrb[0].mxu0 %v1319
  %v1638 = vpop.f32.mrb[0].mxu0
  %v1639 = vadd.f32 %v1469, %v1638
  %v1640 = vpop.f32.mrb[0].mxu0
  %1641 = vmatprep.mubr.f32.mxu0 %v1324
  %1642 = vmatmul.mubr.f32.gmra.mrb[0].mxu0 %v1323
  %v1643 = vpop.f32.mrb[0].mxu0
  %v1644 = vadd.f32 %v1474, %v1643
  %v1645 = vpop.f32.mrb[0].mxu0
  %1646 = vmatprep.mubr.f32.mxu0 %v1328
  %1647 = vmatmul.mubr.f32.gmra.mrb[0].mxu0 %v1327
  %v1648 = vpop.f32.mrb[0].mxu0
  %v1649 = vadd.f32 %v1479, %v1648
  %v1650 = vpop.f32.mrb[0].mxu0
  %1651 = vmatprep.mubr.f32.mxu0 %v1332
  %1652 = vmatmul.mubr.f32.gmra.mrb[0].mxu0 %v1331
  %v1653 = vpop.f32.mrb[0].mxu0
  %v1654 = vadd.f32 %v1484, %v1653
  %v1655 = vpop.f32.mrb[0].mxu0
  %1656 = vmatprep.mubr.f32.mxu0 %v1336
  %1657 = vmatmul.mubr.f32.gmra.mrb[0].mxu0 %v1335
  %v1658 = vpop.f32.mrb[0].mxu0
  %v1659 = vadd.f32 %v1489, %v1658
  %v1660 = vpop.f32.mrb[0].mxu0
  %1661 = vmatprep.mubr.f32.mxu0 %v1340
  %1662 = vmatmul.mubr.f32.gmra.mrb[0].mxu0 %v1339
  %v1663 = vpop.f32.mrb[0].mxu0
  %v1664 = vadd.f32 %v1494, %v1663
  %v1665 = vpop.f32.mrb[0].mxu0
  %1666 = vmatprep.mubr.f32.mxu0 %v1344
  %1667 = vmatmul.mubr.f32.gmra.mrb[0].mxu0 %v1343
  %v1668 = vpop.f32.mrb[0].mxu0
  %v1669 = vadd.f32 %v1499, %v1668
  %v1670 = vpop.f32.mrb[0].mxu0
  %1671 = vmatprep.mubr.f32.mxu0 %v1348
  %1672 = vmatmul.mubr.f32.gmra.mrb[0].mxu0 %v1347
  %v1673 = vpop.f32.mrb[0].mxu0
  %v1674 = vadd.f32 %v1504, %v1673
  %v1675 = vpop.f32.mrb[0].mxu0
  %1676 = vmatprep.mubr.f32.mxu0 %v1352
  %1677 = vmatmul.mubr.f32.gmra.mrb[0].mxu0 %v1351
  %v1678 = vpop.f32.mrb[0].mxu0
  %v1679 = vadd.f32 %v1509, %v1678
  %v1680 = vpop.f32.mrb[0].mxu0
  %1681 = vmatprep.mubr.f32.mxu0 %v1356
  %1682 = vmatmul.mubr.f32.gmra.mrb[0].mxu0 %v1355
  %v1683 = vpop.f32.mrb[0].mxu0
  %v1684 = vadd.f32 %v1514, %v1683
  %v1685 = vpop.f32.mrb[0].mxu0
  %1686 = vmatprep.mubr.f32.mxu0 %v1360
  %1687 = vmatmul.mubr.f32.gmra.mrb[0].mxu0 %v1359
  %v1688 = vpop.f32.mrb[0].mxu0
  %v1689 = vadd.f32 %v1519, %v1688
  %v1690 = vpop.f32.mrb[0].mxu0
  %1691 = vmatprep.mubr.f32.mxu0 %v1364
  %1692 = vmatmul.mubr.f32.gmra.mrb[0].mxu0 %v1363
  %v1693 = vpop.f32.mrb[0].mxu0
  %v1694 = vadd.f32 %v1524, %v1693
  %v1695 = vpop.f32.mrb[0].mxu0
  %1696 = vmatprep.mubr.f32.mxu0 %v1368
  %1697 = vmatmul.mubr.f32.gmra.mrb[0].mxu0 %v1367
  %v1698 = vpop.f32.mrb[0].mxu0
  %v1699 = vadd.f32 %v1529, %v1698
  %v1700 = vpop.f32.mrb[0].mxu0
  %1701 = vmatprep.mubr.f32.mxu0 %v1372
  %1702 = vmatmul.mubr.f32.gmra.mrb[0].mxu0 %v1371
  %v1703 = vpop.f32.mrb[0].mxu0
  %v1704 = vadd.f32 %v1534, %v1703
  %v1705 = vpop.f32.mrb[0].mxu0
  %1706 = vmatprep.mubr.f32.mxu0 %v1376
  %1707 = vmatmul.mubr.f32.gmra.mrb[0].mxu0 %v1375
  %v1708 = vpop.f32.mrb[0].mxu0
  %v1709 = vadd.f32 %v1539, %v1708
  %v1710 = vpop.f32.mrb[0].mxu0
  %1711 = vmatprep.mubr.f32.mxu0 %v1380
  %1712 = vmatmul.mubr.f32.gmra.mrb[0].mxu0 %v1379
  %v1713 = vpop.f32.mrb[0].mxu0
  %v1714 = vadd.f32 %v1544, %v1713
  %v1715 = vpop.f32.mrb[0].mxu0
  %1716 = vmatprep.mubr.f32.mxu0 %v1384
  %1717 = vmatmul.mubr.f32.gmra.mrb[0].mxu0 %v1383
  %v1718 = vpop.f32.mrb[0].mxu0
  %v1719 = vadd.f32 %v1549, %v1718
  %v1720 = vpop.f32.mrb[0].mxu0
  %1721 = vmatprep.mubr.f32.mxu0 %v1388
  %1722 = vmatmul.mubr.f32.gmra.mrb[0].mxu0 %v1387
  %v1723 = vpop.f32.mrb[0].mxu0
  %v1724 = vadd.f32 %v1554, %v1723
  %v1725 = vpop.f32.mrb[0].mxu0
  %1726 = vmatprep.mubr.f32.mxu0 %v1392
  %1727 = vmatmul.mubr.f32.gmra.mrb[0].mxu0 %v1391
  %v1728 = vpop.f32.mrb[0].mxu0
  %v1729 = vadd.f32 %v1559, %v1728
  %v1730 = vpop.f32.mrb[0].mxu0
  %1731 = vmatprep.mubr.f32.mxu0 %v1396
  %1732 = vmatmul.mubr.f32.gmra.mrb[0].mxu0 %v1395
  %v1733 = vpop.f32.mrb[0].mxu0
  %v1734 = vadd.f32 %v1564, %v1733
  %v1735 = vpop.f32.mrb[0].mxu0
  %1736 = vdwg.mxu0
  %s1737 = scalar_lea.vmem %s4, 672
  %v1738 = vld [vmem:[%s1737] sm:$0xff]
  %v1739 = vld [vmem:[%s1737 + $0x8] sm:$0xff]
  %v1740 = vld [vmem:[%s1737 + $0x10] sm:$0xff]
  %v1741 = vld [vmem:[%s1737 + $0x18] sm:$0xff]
  %v1742 = vld [vmem:[%s1737 + $0x20] sm:$0xff]
  %v1743 = vld [vmem:[%s1737 + $0x28] sm:$0xff]
  %v1744 = vld [vmem:[%s1737 + $0x30] sm:$0xff]
  %v1745 = vld [vmem:[%s1737 + $0x38] sm:$0xff]
  %v1746 = vld [vmem:[%s1737 + $0x40] sm:$0xff]
  %v1747 = vld [vmem:[%s1737 + $0x48] sm:$0xff]
  %v1748 = vld [vmem:[%s1737 + $0x50] sm:$0xff]
  %v1749 = vld [vmem:[%s1737 + $0x58] sm:$0xff]
  %v1750 = vld [vmem:[%s1737 + $0x60] sm:$0xff]
  %v1751 = vld [vmem:[%s1737 + $0x68] sm:$0xff]
  %v1752 = vld [vmem:[%s1737 + $0x70] sm:$0xff]
  %v1753 = vld [vmem:[%s1737 + $0x78] sm:$0xff]
  %v1754 = vld [vmem:[%s1737 + $0x80] sm:$0xff]
  %v1755 = vld [vmem:[%s1737 + $0x88] sm:$0xff]
  %v1756 = vld [vmem:[%s1737 + $0x90] sm:$0xff]
  %v1757 = vld [vmem:[%s1737 + $0x98] sm:$0xff]
  %v1758 = vld [vmem:[%s1737 + $0xa0] sm:$0xff]
  %v1759 = vld [vmem:[%s1737 + $0xa8] sm:$0xff]
  %v1760 = vld [vmem:[%s1737 + $0xb0] sm:$0xff]
  %v1761 = vld [vmem:[%s1737 + $0xb8] sm:$0xff]
  %v1762 = vld [vmem:[%s1737 + $0xc0] sm:$0xff]
  %v1763 = vld [vmem:[%s1737 + $0xc8] sm:$0xff]
  %v1764 = vld [vmem:[%s1737 + $0xd0] sm:$0xff]
  %v1765 = vld [vmem:[%s1737 + $0xd8] sm:$0xff]
  %v1766 = vld [vmem:[%s1737 + $0xe0] sm:$0xff]
  %v1767 = vld [vmem:[%s1737 + $0xe8] sm:$0xff]
  %v1768 = vld [vmem:[%s1737 + $0xf0] sm:$0xff]
  %v1769 = vld [vmem:[%s1737 + $0xf8] sm:$0xff]
  %v1770 = vld [vmem:[%s1737 + $0x100] sm:$0xff]
  %v1771 = vld [vmem:[%s1737 + $0x108] sm:$0xff]
  %v1772 = vld [vmem:[%s1737 + $0x110] sm:$0xff]
  %v1773 = vld [vmem:[%s1737 + $0x118] sm:$0xff]
  %v1774 = vld [vmem:[%s1737 + $0x120] sm:$0xff]
  %v1775 = vld [vmem:[%s1737 + $0x128] sm:$0xff]
  %v1776 = vld [vmem:[%s1737 + $0x130] sm:$0xff]
  %v1777 = vld [vmem:[%s1737 + $0x138] sm:$0xff]
  %v1778 = vld [vmem:[%s1737 + $0x140] sm:$0xff]
  %v1779 = vld [vmem:[%s1737 + $0x148] sm:$0xff]
  %v1780 = vld [vmem:[%s1737 + $0x150] sm:$0xff]
  %v1781 = vld [vmem:[%s1737 + $0x158] sm:$0xff]
  %v1782 = vld [vmem:[%s1737 + $0x160] sm:$0xff]
  %v1783 = vld [vmem:[%s1737 + $0x168] sm:$0xff]
  %v1784 = vld [vmem:[%s1737 + $0x170] sm:$0xff]
  %v1785 = vld [vmem:[%s1737 + $0x178] sm:$0xff]
  %v1786 = vld [vmem:[%s1737 + $0x180] sm:$0xff]
  %v1787 = vld [vmem:[%s1737 + $0x188] sm:$0xff]
  %v1788 = vld [vmem:[%s1737 + $0x190] sm:$0xff]
  %v1789 = vld [vmem:[%s1737 + $0x198] sm:$0xff]
  %v1790 = vld [vmem:[%s1737 + $0x1a0] sm:$0xff]
  %v1791 = vld [vmem:[%s1737 + $0x1a8] sm:$0xff]
  %v1792 = vld [vmem:[%s1737 + $0x1b0] sm:$0xff]
  %v1793 = vld [vmem:[%s1737 + $0x1b8] sm:$0xff]
  %v1794 = vld [vmem:[%s1737 + $0x1c0] sm:$0xff]
  %v1795 = vld [vmem:[%s1737 + $0x1c8] sm:$0xff]
  %v1796 = vld [vmem:[%s1737 + $0x1d0] sm:$0xff]
  %v1797 = vld [vmem:[%s1737 + $0x1d8] sm:$0xff]
  %v1798 = vld [vmem:[%s1737 + $0x1e0] sm:$0xff]
  %v1799 = vld [vmem:[%s1737 + $0x1e8] sm:$0xff]
  %v1800 = vld [vmem:[%s1737 + $0x1f0] sm:$0xff]
  %v1801 = vld [vmem:[%s1737 + $0x1f8] sm:$0xff]
  %v1802 = vld [vmem:[%s1737 + $0x200] sm:$0xff]
  %v1803 = vld [vmem:[%s1737 + $0x208] sm:$0xff]
  %v1804 = vld [vmem:[%s1737 + $0x210] sm:$0xff]
  %v1805 = vld [vmem:[%s1737 + $0x218] sm:$0xff]
  %v1806 = vld [vmem:[%s1737 + $0x220] sm:$0xff]
  %v1807 = vld [vmem:[%s1737 + $0x228] sm:$0xff]
  %v1808 = vld [vmem:[%s1737 + $0x230] sm:$0xff]
  %v1809 = vld [vmem:[%s1737 + $0x238] sm:$0xff]
  %v1810 = vld [vmem:[%s1737 + $0x240] sm:$0xff]
  %v1811 = vld [vmem:[%s1737 + $0x248] sm:$0xff]
  %v1812 = vld [vmem:[%s1737 + $0x250] sm:$0xff]
  %v1813 = vld [vmem:[%s1737 + $0x258] sm:$0xff]
  %v1814 = vld [vmem:[%s1737 + $0x260] sm:$0xff]
  %v1815 = vld [vmem:[%s1737 + $0x268] sm:$0xff]
  %v1816 = vld [vmem:[%s1737 + $0x270] sm:$0xff]
  %v1817 = vld [vmem:[%s1737 + $0x278] sm:$0xff]
  %v1818 = vld [vmem:[%s1737 + $0x280] sm:$0x3]
  %v1819 = vld [vmem:[%s1737 + $0x288] sm:$0x3]
  %v1820 = vld [vmem:[%s1737 + $0x290] sm:$0x3]
  %v1821 = vld [vmem:[%s1737 + $0x298] sm:$0x3]
  %1822 = vmatprep.subr.mxu0 0.0
  %1823 = vmatpush1.msra.mxu0 %v1249
  %1824 = vmatprep.subr.mxu0 0.0
  %1825 = vmatpush1.msra.mxu0 %v1250
  %1826 = vmatprep.subr.mxu0 0.0
  %1827 = vmatpush1.msra.mxu0 %v1251
  %1828 = vmatprep.subr.mxu0 0.0
  %1829 = vmatpush1.msra.mxu0 %v1252
  %1830 = vmatprep.subr.mxu0 0.0
  %1831 = vmatpush1.msra.mxu0 %v1253
  %1832 = vmatprep.subr.mxu0 0.0
  %1833 = vmatpush1.msra.mxu0 %v1254
  %1834 = vmatprep.subr.mxu0 0.0
  %1835 = vmatpush1.msra.mxu0 %v1255
  %1836 = vmatprep.subr.mxu0 0.0
  %1837 = vmatpush1.msra.mxu0 %v1256
  %1838 = vmatprep.subr.mxu0 0.0
  %1839 = vmatpush1.msra.mxu0 %v1257
  %1840 = vmatprep.subr.mxu0 0.0
  %1841 = vmatpush1.msra.mxu0 %v1258
  %1842 = vmatprep.subr.mxu0 0.0
  %1843 = vmatpush1.msra.mxu0 %v1259
  %1844 = vmatprep.subr.mxu0 0.0
  %1845 = vmatpush1.msra.mxu0 %v1260
  %1846 = vmatprep.subr.mxu0 0.0
  %1847 = vmatpush1.msra.mxu0 %v1261
  %1848 = vmatprep.subr.mxu0 0.0
  %1849 = vmatpush1.msra.mxu0 %v1262
  %1850 = vmatprep.subr.mxu0 0.0
  %1851 = vmatpush1.msra.mxu0 %v1263
  %1852 = vmatprep.subr.mxu0 0.0
  %1853 = vmatpush1.msra.mxu0 %v1264
  %1854 = vmatprep.subr.mxu0 0.0
  %1855 = vmatpush1.msra.mxu0 %v1265
  %1856 = vmatprep.subr.mxu0 0.0
  %1857 = vmatpush1.msra.mxu0 %v1266
  %1858 = vmatprep.subr.mxu0 0.0
  %1859 = vmatpush1.msra.mxu0 %v1267
  %1860 = vmatprep.subr.mxu0 0.0
  %1861 = vmatpush1.msra.mxu0 %v1268
  %1862 = vmatprep.subr.mxu0 0.0
  %1863 = vmatpush1.msra.mxu0 %v1269
  %1864 = vmatprep.subr.mxu0 0.0
  %1865 = vmatpush1.msra.mxu0 %v1270
  %1866 = vmatprep.subr.mxu0 0.0
  %1867 = vmatpush1.msra.mxu0 %v1271
  %1868 = vmatprep.subr.mxu0 0.0
  %1869 = vmatpush1.msra.mxu0 %v1272
  %1870 = vmatprep.subr.mxu0 0.0
  %1871 = vmatpush1.msra.mxu0 %v1273
  %1872 = vmatprep.subr.mxu0 0.0
  %1873 = vmatpush1.msra.mxu0 %v1274
  %1874 = vmatprep.subr.mxu0 0.0
  %1875 = vmatpush1.msra.mxu0 %v1275
  %1876 = vmatprep.subr.mxu0 0.0
  %1877 = vmatpush1.msra.mxu0 %v1276
  %1878 = vmatprep.subr.mxu0 0.0
  %1879 = vmatpush1.msra.mxu0 %v1277
  %1880 = vmatprep.subr.mxu0 0.0
  %1881 = vmatpush1.msra.mxu0 %v1278
  %1882 = vmatprep.subr.mxu0 0.0
  %1883 = vmatpush1.msra.mxu0 %v1279
  %1884 = vmatprep.subr.mxu0 0.0
  %1885 = vmatpush1.msra.mxu0 %v1280
  %1886 = vmatprep.mubr.f32.mxu0 %v1739
  %1887 = vmatmul.mubr.f32.gmra.mrb[0].mxu0 %v1738
  %v1888 = vpop.f32.mrb[0].mxu0
  %v1889 = vadd.f32 0.0, %v1888
  %v1890 = vpop.f32.mrb[0].mxu0
  %1891 = vmatprep.mubr.f32.mxu0 %v1743
  %1892 = vmatmul.mubr.f32.gmra.mrb[0].mxu0 %v1742
  %v1893 = vpop.f32.mrb[0].mxu0
  %v1894 = vadd.f32 0.0, %v1893
  %v1895 = vpop.f32.mrb[0].mxu0
  %1896 = vmatprep.mubr.f32.mxu0 %v1747
  %1897 = vmatmul.mubr.f32.gmra.mrb[0].mxu0 %v1746
  %v1898 = vpop.f32.mrb[0].mxu0
  %v1899 = vadd.f32 0.0, %v1898
  %v1900 = vpop.f32.mrb[0].mxu0
  %1901 = vmatprep.mubr.f32.mxu0 %v1751
  %1902 = vmatmul.mubr.f32.gmra.mrb[0].mxu0 %v1750
  %v1903 = vpop.f32.mrb[0].mxu0
  %v1904 = vadd.f32 0.0, %v1903
  %v1905 = vpop.f32.mrb[0].mxu0
  %1906 = vmatprep.mubr.f32.mxu0 %v1755
  %1907 = vmatmul.mubr.f32.gmra.mrb[0].mxu0 %v1754
  %v1908 = vpop.f32.mrb[0].mxu0
  %v1909 = vadd.f32 0.0, %v1908
  %v1910 = vpop.f32.mrb[0].mxu0
  %1911 = vmatprep.mubr.f32.mxu0 %v1759
  %1912 = vmatmul.mubr.f32.gmra.mrb[0].mxu0 %v1758
  %v1913 = vpop.f32.mrb[0].mxu0
  %v1914 = vadd.f32 0.0, %v1913
  %v1915 = vpop.f32.mrb[0].mxu0
  %1916 = vmatprep.mubr.f32.mxu0 %v1763
  %1917 = vmatmul.mubr.f32.gmra.mrb[0].mxu0 %v1762
  %v1918 = vpop.f32.mrb[0].mxu0
  %v1919 = vadd.f32 0.0, %v1918
  %v1920 = vpop.f32.mrb[0].mxu0
  %1921 = vmatprep.mubr.f32.mxu0 %v1767
  %1922 = vmatmul.mubr.f32.gmra.mrb[0].mxu0 %v1766
  %v1923 = vpop.f32.mrb[0].mxu0
  %v1924 = vadd.f32 0.0, %v1923
  %v1925 = vpop.f32.mrb[0].mxu0
  %1926 = vmatprep.mubr.f32.mxu0 %v1771
  %1927 = vmatmul.mubr.f32.gmra.mrb[0].mxu0 %v1770
  %v1928 = vpop.f32.mrb[0].mxu0
  %v1929 = vadd.f32 0.0, %v1928
  %v1930 = vpop.f32.mrb[0].mxu0
  %1931 = vmatprep.mubr.f32.mxu0 %v1775
  %1932 = vmatmul.mubr.f32.gmra.mrb[0].mxu0 %v1774
  %v1933 = vpop.f32.mrb[0].mxu0
  %v1934 = vadd.f32 0.0, %v1933
  %v1935 = vpop.f32.mrb[0].mxu0
  %1936 = vmatprep.mubr.f32.mxu0 %v1779
  %1937 = vmatmul.mubr.f32.gmra.mrb[0].mxu0 %v1778
  %v1938 = vpop.f32.mrb[0].mxu0
  %v1939 = vadd.f32 0.0, %v1938
  %v1940 = vpop.f32.mrb[0].mxu0
  %1941 = vmatprep.mubr.f32.mxu0 %v1783
  %1942 = vmatmul.mubr.f32.gmra.mrb[0].mxu0 %v1782
  %v1943 = vpop.f32.mrb[0].mxu0
  %v1944 = vadd.f32 0.0, %v1943
  %v1945 = vpop.f32.mrb[0].mxu0
  %1946 = vmatprep.mubr.f32.mxu0 %v1787
  %1947 = vmatmul.mubr.f32.gmra.mrb[0].mxu0 %v1786
  %v1948 = vpop.f32.mrb[0].mxu0
  %v1949 = vadd.f32 0.0, %v1948
  %v1950 = vpop.f32.mrb[0].mxu0
  %1951 = vmatprep.mubr.f32.mxu0 %v1791
  %1952 = vmatmul.mubr.f32.gmra.mrb[0].mxu0 %v1790
  %v1953 = vpop.f32.mrb[0].mxu0
  %v1954 = vadd.f32 0.0, %v1953
  %v1955 = vpop.f32.mrb[0].mxu0
  %1956 = vmatprep.mubr.f32.mxu0 %v1795
  %1957 = vmatmul.mubr.f32.gmra.mrb[0].mxu0 %v1794
  %v1958 = vpop.f32.mrb[0].mxu0
  %v1959 = vadd.f32 0.0, %v1958
  %v1960 = vpop.f32.mrb[0].mxu0
  %1961 = vmatprep.mubr.f32.mxu0 %v1799
  %1962 = vmatmul.mubr.f32.gmra.mrb[0].mxu0 %v1798
  %v1963 = vpop.f32.mrb[0].mxu0
  %v1964 = vadd.f32 0.0, %v1963
  %v1965 = vpop.f32.mrb[0].mxu0
  %1966 = vmatprep.mubr.f32.mxu0 %v1803
  %1967 = vmatmul.mubr.f32.gmra.mrb[0].mxu0 %v1802
  %v1968 = vpop.f32.mrb[0].mxu0
  %v1969 = vadd.f32 0.0, %v1968
  %v1970 = vpop.f32.mrb[0].mxu0
  %1971 = vmatprep.mubr.f32.mxu0 %v1807
  %1972 = vmatmul.mubr.f32.gmra.mrb[0].mxu0 %v1806
  %v1973 = vpop.f32.mrb[0].mxu0
  %v1974 = vadd.f32 0.0, %v1973
  %v1975 = vpop.f32.mrb[0].mxu0
  %1976 = vmatprep.mubr.f32.mxu0 %v1811
  %1977 = vmatmul.mubr.f32.gmra.mrb[0].mxu0 %v1810
  %v1978 = vpop.f32.mrb[0].mxu0
  %v1979 = vadd.f32 0.0, %v1978
  %v1980 = vpop.f32.mrb[0].mxu0
  %1981 = vmatprep.mubr.f32.mxu0 %v1815
  %1982 = vmatmul.mubr.f32.gmra.mrb[0].mxu0 %v1814
  %v1983 = vpop.f32.mrb[0].mxu0
  %v1984 = vadd.f32 0.0, %v1983
  %v1985 = vpop.f32.mrb[0].mxu0
  %1986 = vmatprep.mubr.f32.mxu0 %v1819
  %1987 = vmatmul.mubr.f32.gmra.mrb[0].mxu0 %v1818
  %v1988 = vpop.f32.mrb[0].mxu0
  %v1989 = vadd.f32 0.0, %v1988
  %v1990 = vpop.f32.mrb[0].mxu0
  %1991 = vdwg.mxu0
  %1992 = vmatprep.subr.mxu0 0.0
  %1993 = vmatpush1.msra.mxu0 %v1281
  %1994 = vmatprep.subr.mxu0 0.0
  %1995 = vmatpush1.msra.mxu0 %v1282
  %1996 = vmatprep.subr.mxu0 0.0
  %1997 = vmatpush1.msra.mxu0 %v1283
  %1998 = vmatprep.subr.mxu0 0.0
  %1999 = vmatpush1.msra.mxu0 %v1284
  %2000 = vmatprep.subr.mxu0 0.0
  %2001 = vmatpush1.msra.mxu0 %v1285
  %2002 = vmatprep.subr.mxu0 0.0
  %2003 = vmatpush1.msra.mxu0 %v1286
  %2004 = vmatprep.subr.mxu0 0.0
  %2005 = vmatpush1.msra.mxu0 %v1287
  %2006 = vmatprep.subr.mxu0 0.0
  %2007 = vmatpush1.msra.mxu0 %v1288
  %2008 = vmatprep.subr.mxu0 0.0
  %2009 = vmatpush1.msra.mxu0 %v1289
  %2010 = vmatprep.subr.mxu0 0.0
  %2011 = vmatpush1.msra.mxu0 %v1290
  %2012 = vmatprep.subr.mxu0 0.0
  %2013 = vmatpush1.msra.mxu0 %v1291
  %2014 = vmatprep.subr.mxu0 0.0
  %2015 = vmatpush1.msra.mxu0 %v1292
  %2016 = vmatprep.subr.mxu0 0.0
  %2017 = vmatpush1.msra.mxu0 %v1293
  %2018 = vmatprep.subr.mxu0 0.0
  %2019 = vmatpush1.msra.mxu0 %v1294
  %2020 = vmatprep.subr.mxu0 0.0
  %2021 = vmatpush1.msra.mxu0 %v1295
  %2022 = vmatprep.subr.mxu0 0.0
  %2023 = vmatpush1.msra.mxu0 %v1296
  %2024 = vmatprep.subr.mxu0 0.0
  %2025 = vmatpush1.msra.mxu0 %v1297
  %2026 = vmatprep.subr.mxu0 0.0
  %2027 = vmatpush1.msra.mxu0 %v1298
  %2028 = vmatprep.subr.mxu0 0.0
  %2029 = vmatpush1.msra.mxu0 %v1299
  %2030 = vmatprep.subr.mxu0 0.0
  %2031 = vmatpush1.msra.mxu0 %v1300
  %2032 = vmatprep.subr.mxu0 0.0
  %2033 = vmatpush1.msra.mxu0 %v1301
  %2034 = vmatprep.subr.mxu0 0.0
  %2035 = vmatpush1.msra.mxu0 %v1302
  %2036 = vmatprep.subr.mxu0 0.0
  %2037 = vmatpush1.msra.mxu0 %v1303
  %2038 = vmatprep.subr.mxu0 0.0
  %2039 = vmatpush1.msra.mxu0 %v1304
  %2040 = vmatprep.subr.mxu0 0.0
  %2041 = vmatpush1.msra.mxu0 %v1305
  %2042 = vmatprep.subr.mxu0 0.0
  %2043 = vmatpush1.msra.mxu0 %v1306
  %2044 = vmatprep.subr.mxu0 0.0
  %2045 = vmatpush1.msra.mxu0 %v1307
  %2046 = vmatprep.subr.mxu0 0.0
  %2047 = vmatpush1.msra.mxu0 %v1308
  %2048 = vmatprep.subr.mxu0 0.0
  %2049 = vmatpush1.msra.mxu0 %v1309
  %2050 = vmatprep.subr.mxu0 0.0
  %2051 = vmatpush1.msra.mxu0 %v1310
  %2052 = vmatprep.subr.mxu0 0.0
  %2053 = vmatpush1.msra.mxu0 %v1311
  %2054 = vmatprep.subr.mxu0 0.0
  %2055 = vmatpush1.msra.mxu0 %v1312
  %2056 = vmatprep.mubr.f32.mxu0 %v1741
  %2057 = vmatmul.mubr.f32.gmra.mrb[0].mxu0 %v1740
  %v2058 = vpop.f32.mrb[0].mxu0
  %v2059 = vadd.f32 %v1889, %v2058
  %v2060 = vpop.f32.mrb[0].mxu0
  %2061 = vmatprep.mubr.f32.mxu0 %v1745
  %2062 = vmatmul.mubr.f32.gmra.mrb[0].mxu0 %v1744
  %v2063 = vpop.f32.mrb[0].mxu0
  %v2064 = vadd.f32 %v1894, %v2063
  %v2065 = vpop.f32.mrb[0].mxu0
  %2066 = vmatprep.mubr.f32.mxu0 %v1749
  %2067 = vmatmul.mubr.f32.gmra.mrb[0].mxu0 %v1748
  %v2068 = vpop.f32.mrb[0].mxu0
  %v2069 = vadd.f32 %v1899, %v2068
  %v2070 = vpop.f32.mrb[0].mxu0
  %2071 = vmatprep.mubr.f32.mxu0 %v1753
  %2072 = vmatmul.mubr.f32.gmra.mrb[0].mxu0 %v1752
  %v2073 = vpop.f32.mrb[0].mxu0
  %v2074 = vadd.f32 %v1904, %v2073
  %v2075 = vpop.f32.mrb[0].mxu0
  %2076 = vmatprep.mubr.f32.mxu0 %v1757
  %2077 = vmatmul.mubr.f32.gmra.mrb[0].mxu0 %v1756
  %v2078 = vpop.f32.mrb[0].mxu0
  %v2079 = vadd.f32 %v1909, %v2078
  %v2080 = vpop.f32.mrb[0].mxu0
  %2081 = vmatprep.mubr.f32.mxu0 %v1761
  %2082 = vmatmul.mubr.f32.gmra.mrb[0].mxu0 %v1760
  %v2083 = vpop.f32.mrb[0].mxu0
  %v2084 = vadd.f32 %v1914, %v2083
  %v2085 = vpop.f32.mrb[0].mxu0
  %2086 = vmatprep.mubr.f32.mxu0 %v1765
  %2087 = vmatmul.mubr.f32.gmra.mrb[0].mxu0 %v1764
  %v2088 = vpop.f32.mrb[0].mxu0
  %v2089 = vadd.f32 %v1919, %v2088
  %v2090 = vpop.f32.mrb[0].mxu0
  %2091 = vmatprep.mubr.f32.mxu0 %v1769
  %2092 = vmatmul.mubr.f32.gmra.mrb[0].mxu0 %v1768
  %v2093 = vpop.f32.mrb[0].mxu0
  %v2094 = vadd.f32 %v1924, %v2093
  %v2095 = vpop.f32.mrb[0].mxu0
  %2096 = vmatprep.mubr.f32.mxu0 %v1773
  %2097 = vmatmul.mubr.f32.gmra.mrb[0].mxu0 %v1772
  %v2098 = vpop.f32.mrb[0].mxu0
  %v2099 = vadd.f32 %v1929, %v2098
  %v2100 = vpop.f32.mrb[0].mxu0
  %2101 = vmatprep.mubr.f32.mxu0 %v1777
  %2102 = vmatmul.mubr.f32.gmra.mrb[0].mxu0 %v1776
  %v2103 = vpop.f32.mrb[0].mxu0
  %v2104 = vadd.f32 %v1934, %v2103
  %v2105 = vpop.f32.mrb[0].mxu0
  %2106 = vmatprep.mubr.f32.mxu0 %v1781
  %2107 = vmatmul.mubr.f32.gmra.mrb[0].mxu0 %v1780
  %v2108 = vpop.f32.mrb[0].mxu0
  %v2109 = vadd.f32 %v1939, %v2108
  %v2110 = vpop.f32.mrb[0].mxu0
  %2111 = vmatprep.mubr.f32.mxu0 %v1785
  %2112 = vmatmul.mubr.f32.gmra.mrb[0].mxu0 %v1784
  %v2113 = vpop.f32.mrb[0].mxu0
  %v2114 = vadd.f32 %v1944, %v2113
  %v2115 = vpop.f32.mrb[0].mxu0
  %2116 = vmatprep.mubr.f32.mxu0 %v1789
  %2117 = vmatmul.mubr.f32.gmra.mrb[0].mxu0 %v1788
  %v2118 = vpop.f32.mrb[0].mxu0
  %v2119 = vadd.f32 %v1949, %v2118
  %v2120 = vpop.f32.mrb[0].mxu0
  %2121 = vmatprep.mubr.f32.mxu0 %v1793
  %2122 = vmatmul.mubr.f32.gmra.mrb[0].mxu0 %v1792
  %v2123 = vpop.f32.mrb[0].mxu0
  %v2124 = vadd.f32 %v1954, %v2123
  %v2125 = vpop.f32.mrb[0].mxu0
  %2126 = vmatprep.mubr.f32.mxu0 %v1797
  %2127 = vmatmul.mubr.f32.gmra.mrb[0].mxu0 %v1796
  %v2128 = vpop.f32.mrb[0].mxu0
  %v2129 = vadd.f32 %v1959, %v2128
  %v2130 = vpop.f32.mrb[0].mxu0
  %2131 = vmatprep.mubr.f32.mxu0 %v1801
  %2132 = vmatmul.mubr.f32.gmra.mrb[0].mxu0 %v1800
  %v2133 = vpop.f32.mrb[0].mxu0
  %v2134 = vadd.f32 %v1964, %v2133
  %v2135 = vpop.f32.mrb[0].mxu0
  %2136 = vmatprep.mubr.f32.mxu0 %v1805
  %2137 = vmatmul.mubr.f32.gmra.mrb[0].mxu0 %v1804
  %v2138 = vpop.f32.mrb[0].mxu0
  %v2139 = vadd.f32 %v1969, %v2138
  %v2140 = vpop.f32.mrb[0].mxu0
  %2141 = vmatprep.mubr.f32.mxu0 %v1809
  %2142 = vmatmul.mubr.f32.gmra.mrb[0].mxu0 %v1808
  %v2143 = vpop.f32.mrb[0].mxu0
  %v2144 = vadd.f32 %v1974, %v2143
  %v2145 = vpop.f32.mrb[0].mxu0
  %2146 = vmatprep.mubr.f32.mxu0 %v1813
  %2147 = vmatmul.mubr.f32.gmra.mrb[0].mxu0 %v1812
  %v2148 = vpop.f32.mrb[0].mxu0
  %v2149 = vadd.f32 %v1979, %v2148
  %v2150 = vpop.f32.mrb[0].mxu0
  %2151 = vmatprep.mubr.f32.mxu0 %v1817
  %2152 = vmatmul.mubr.f32.gmra.mrb[0].mxu0 %v1816
  %v2153 = vpop.f32.mrb[0].mxu0
  %v2154 = vadd.f32 %v1984, %v2153
  %v2155 = vpop.f32.mrb[0].mxu0
  %2156 = vmatprep.mubr.f32.mxu0 %v1821
  %2157 = vmatmul.mubr.f32.gmra.mrb[0].mxu0 %v1820
  %v2158 = vpop.f32.mrb[0].mxu0
  %v2159 = vadd.f32 %v1989, %v2158
  %v2160 = vpop.f32.mrb[0].mxu0
  %2161 = vdwg.mxu0
  %v2162 = vmax.f32 %v1634, %v2059
  %v2163 = vmax.f32 %v1639, %v2064
  %v2164 = vmax.f32 %v1644, %v2069
  %v2165 = vmax.f32 %v1649, %v2074
  %v2166 = vmax.f32 %v1654, %v2079
  %v2167 = vmax.f32 %v1659, %v2084
  %v2168 = vmax.f32 %v1664, %v2089
  %v2169 = vmax.f32 %v1669, %v2094
  %v2170 = vmax.f32 %v1674, %v2099
  %v2171 = vmax.f32 %v1679, %v2104
  %v2172 = vmax.f32 %v1684, %v2109
  %v2173 = vmax.f32 %v1689, %v2114
  %v2174 = vmax.f32 %v1694, %v2119
  %v2175 = vmax.f32 %v1699, %v2124
  %v2176 = vmax.f32 %v1704, %v2129
  %v2177 = vmax.f32 %v1709, %v2134
  %v2178 = vmax.f32 %v1714, %v2139
  %v2179 = vmax.f32 %v1719, %v2144
  %v2180 = vmax.f32 %v1724, %v2149
  %v2181 = vmax.f32 %v1729, %v2154
  %v2182 = vmax.f32 %v1734, %v2159
  %s2183 = scalar_lea.vmem %s4, 1344
  %v2184 = vld [vmem:[%s2183] sm:$0xff]
  %v2185 = vld [vmem:[%s2183 + $0x8] sm:$0xff]
  %v2186 = vld [vmem:[%s2183 + $0x10] sm:$0xff]
  %v2187 = vld [vmem:[%s2183 + $0x18] sm:$0xff]
  %v2188 = vld [vmem:[%s2183 + $0x20] sm:$0xff]
  %v2189 = vld [vmem:[%s2183 + $0x28] sm:$0xff]
  %v2190 = vld [vmem:[%s2183 + $0x30] sm:$0xff]
  %v2191 = vld [vmem:[%s2183 + $0x38] sm:$0xff]
  %v2192 = vld [vmem:[%s2183 + $0x40] sm:$0xff]
  %v2193 = vld [vmem:[%s2183 + $0x48] sm:$0xff]
  %v2194 = vld [vmem:[%s2183 + $0x50] sm:$0xff]
  %v2195 = vld [vmem:[%s2183 + $0x58] sm:$0xff]
  %v2196 = vld [vmem:[%s2183 + $0x60] sm:$0xff]
  %v2197 = vld [vmem:[%s2183 + $0x68] sm:$0xff]
  %v2198 = vld [vmem:[%s2183 + $0x70] sm:$0xff]
  %v2199 = vld [vmem:[%s2183 + $0x78] sm:$0xff]
  %v2200 = vld [vmem:[%s2183 + $0x80] sm:$0xff]
  %v2201 = vld [vmem:[%s2183 + $0x88] sm:$0xff]
  %v2202 = vld [vmem:[%s2183 + $0x90] sm:$0xff]
  %v2203 = vld [vmem:[%s2183 + $0x98] sm:$0xff]
  %v2204 = vld [vmem:[%s2183 + $0xa0] sm:$0xff]
  %v2205 = vld [vmem:[%s2183 + $0xa8] sm:$0xff]
  %v2206 = vld [vmem:[%s2183 + $0xb0] sm:$0xff]
  %v2207 = vld [vmem:[%s2183 + $0xb8] sm:$0xff]
  %v2208 = vld [vmem:[%s2183 + $0xc0] sm:$0xff]
  %v2209 = vld [vmem:[%s2183 + $0xc8] sm:$0xff]
  %v2210 = vld [vmem:[%s2183 + $0xd0] sm:$0xff]
  %v2211 = vld [vmem:[%s2183 + $0xd8] sm:$0xff]
  %v2212 = vld [vmem:[%s2183 + $0xe0] sm:$0xff]
  %v2213 = vld [vmem:[%s2183 + $0xe8] sm:$0xff]
  %v2214 = vld [vmem:[%s2183 + $0xf0] sm:$0xff]
  %v2215 = vld [vmem:[%s2183 + $0xf8] sm:$0xff]
  %v2216 = vld [vmem:[%s2183 + $0x100] sm:$0xff]
  %v2217 = vld [vmem:[%s2183 + $0x108] sm:$0xff]
  %v2218 = vld [vmem:[%s2183 + $0x110] sm:$0xff]
  %v2219 = vld [vmem:[%s2183 + $0x118] sm:$0xff]
  %v2220 = vld [vmem:[%s2183 + $0x120] sm:$0xff]
  %v2221 = vld [vmem:[%s2183 + $0x128] sm:$0xff]
  %v2222 = vld [vmem:[%s2183 + $0x130] sm:$0xff]
  %v2223 = vld [vmem:[%s2183 + $0x138] sm:$0xff]
  %v2224 = vld [vmem:[%s2183 + $0x140] sm:$0xff]
  %v2225 = vld [vmem:[%s2183 + $0x148] sm:$0xff]
  %v2226 = vld [vmem:[%s2183 + $0x150] sm:$0xff]
  %v2227 = vld [vmem:[%s2183 + $0x158] sm:$0xff]
  %v2228 = vld [vmem:[%s2183 + $0x160] sm:$0xff]
  %v2229 = vld [vmem:[%s2183 + $0x168] sm:$0xff]
  %v2230 = vld [vmem:[%s2183 + $0x170] sm:$0xff]
  %v2231 = vld [vmem:[%s2183 + $0x178] sm:$0xff]
  %v2232 = vld [vmem:[%s2183 + $0x180] sm:$0xff]
  %v2233 = vld [vmem:[%s2183 + $0x188] sm:$0xff]
  %v2234 = vld [vmem:[%s2183 + $0x190] sm:$0xff]
  %v2235 = vld [vmem:[%s2183 + $0x198] sm:$0xff]
  %v2236 = vld [vmem:[%s2183 + $0x1a0] sm:$0xff]
  %v2237 = vld [vmem:[%s2183 + $0x1a8] sm:$0xff]
  %v2238 = vld [vmem:[%s2183 + $0x1b0] sm:$0xff]
  %v2239 = vld [vmem:[%s2183 + $0x1b8] sm:$0xff]
  %v2240 = vld [vmem:[%s2183 + $0x1c0] sm:$0xff]
  %v2241 = vld [vmem:[%s2183 + $0x1c8] sm:$0xff]
  %v2242 = vld [vmem:[%s2183 + $0x1d0] sm:$0xff]
  %v2243 = vld [vmem:[%s2183 + $0x1d8] sm:$0xff]
  %v2244 = vld [vmem:[%s2183 + $0x1e0] sm:$0xff]
  %v2245 = vld [vmem:[%s2183 + $0x1e8] sm:$0xff]
  %v2246 = vld [vmem:[%s2183 + $0x1f0] sm:$0xff]
  %v2247 = vld [vmem:[%s2183 + $0x1f8] sm:$0xff]
  %v2248 = vld [vmem:[%s2183 + $0x200] sm:$0xff]
  %v2249 = vld [vmem:[%s2183 + $0x208] sm:$0xff]
  %v2250 = vld [vmem:[%s2183 + $0x210] sm:$0xff]
  %v2251 = vld [vmem:[%s2183 + $0x218] sm:$0xff]
  %v2252 = vld [vmem:[%s2183 + $0x220] sm:$0xff]
  %v2253 = vld [vmem:[%s2183 + $0x228] sm:$0xff]
  %v2254 = vld [vmem:[%s2183 + $0x230] sm:$0xff]
  %v2255 = vld [vmem:[%s2183 + $0x238] sm:$0xff]
  %v2256 = vld [vmem:[%s2183 + $0x240] sm:$0xff]
  %v2257 = vld [vmem:[%s2183 + $0x248] sm:$0xff]
  %v2258 = vld [vmem:[%s2183 + $0x250] sm:$0xff]
  %v2259 = vld [vmem:[%s2183 + $0x258] sm:$0xff]
  %v2260 = vld [vmem:[%s2183 + $0x260] sm:$0xff]
  %v2261 = vld [vmem:[%s2183 + $0x268] sm:$0xff]
  %v2262 = vld [vmem:[%s2183 + $0x270] sm:$0xff]
  %v2263 = vld [vmem:[%s2183 + $0x278] sm:$0xff]
  %v2264 = vld [vmem:[%s2183 + $0x280] sm:$0x3]
  %v2265 = vld [vmem:[%s2183 + $0x288] sm:$0x3]
  %v2266 = vld [vmem:[%s2183 + $0x290] sm:$0x3]
  %v2267 = vld [vmem:[%s2183 + $0x298] sm:$0x3]
  %2268 = vmatprep.subr.mxu0 0.0
  %2269 = vmatpush1.msra.mxu0 %v1249
  %2270 = vmatprep.subr.mxu0 0.0
  %2271 = vmatpush1.msra.mxu0 %v1250
  %2272 = vmatprep.subr.mxu0 0.0
  %2273 = vmatpush1.msra.mxu0 %v1251
  %2274 = vmatprep.subr.mxu0 0.0
  %2275 = vmatpush1.msra.mxu0 %v1252
  %2276 = vmatprep.subr.mxu0 0.0
  %2277 = vmatpush1.msra.mxu0 %v1253
  %2278 = vmatprep.subr.mxu0 0.0
  %2279 = vmatpush1.msra.mxu0 %v1254
  %2280 = vmatprep.subr.mxu0 0.0
  %2281 = vmatpush1.msra.mxu0 %v1255
  %2282 = vmatprep.subr.mxu0 0.0
  %2283 = vmatpush1.msra.mxu0 %v1256
  %2284 = vmatprep.subr.mxu0 0.0
  %2285 = vmatpush1.msra.mxu0 %v1257
  %2286 = vmatprep.subr.mxu0 0.0
  %2287 = vmatpush1.msra.mxu0 %v1258
  %2288 = vmatprep.subr.mxu0 0.0
  %2289 = vmatpush1.msra.mxu0 %v1259
  %2290 = vmatprep.subr.mxu0 0.0
  %2291 = vmatpush1.msra.mxu0 %v1260
  %2292 = vmatprep.subr.mxu0 0.0
  %2293 = vmatpush1.msra.mxu0 %v1261
  %2294 = vmatprep.subr.mxu0 0.0
  %2295 = vmatpush1.msra.mxu0 %v1262
  %2296 = vmatprep.subr.mxu0 0.0
  %2297 = vmatpush1.msra.mxu0 %v1263
  %2298 = vmatprep.subr.mxu0 0.0
  %2299 = vmatpush1.msra.mxu0 %v1264
  %2300 = vmatprep.subr.mxu0 0.0
  %2301 = vmatpush1.msra.mxu0 %v1265
  %2302 = vmatprep.subr.mxu0 0.0
  %2303 = vmatpush1.msra.mxu0 %v1266
  %2304 = vmatprep.subr.mxu0 0.0
  %2305 = vmatpush1.msra.mxu0 %v1267
  %2306 = vmatprep.subr.mxu0 0.0
  %2307 = vmatpush1.msra.mxu0 %v1268
  %2308 = vmatprep.subr.mxu0 0.0
  %2309 = vmatpush1.msra.mxu0 %v1269
  %2310 = vmatprep.subr.mxu0 0.0
  %2311 = vmatpush1.msra.mxu0 %v1270
  %2312 = vmatprep.subr.mxu0 0.0
  %2313 = vmatpush1.msra.mxu0 %v1271
  %2314 = vmatprep.subr.mxu0 0.0
  %2315 = vmatpush1.msra.mxu0 %v1272
  %2316 = vmatprep.subr.mxu0 0.0
  %2317 = vmatpush1.msra.mxu0 %v1273
  %2318 = vmatprep.subr.mxu0 0.0
  %2319 = vmatpush1.msra.mxu0 %v1274
  %2320 = vmatprep.subr.mxu0 0.0
  %2321 = vmatpush1.msra.mxu0 %v1275
  %2322 = vmatprep.subr.mxu0 0.0
  %2323 = vmatpush1.msra.mxu0 %v1276
  %2324 = vmatprep.subr.mxu0 0.0
  %2325 = vmatpush1.msra.mxu0 %v1277
  %2326 = vmatprep.subr.mxu0 0.0
  %2327 = vmatpush1.msra.mxu0 %v1278
  %2328 = vmatprep.subr.mxu0 0.0
  %2329 = vmatpush1.msra.mxu0 %v1279
  %2330 = vmatprep.subr.mxu0 0.0
  %2331 = vmatpush1.msra.mxu0 %v1280
  %2332 = vmatprep.mubr.f32.mxu0 %v2185
  %2333 = vmatmul.mubr.f32.gmra.mrb[0].mxu0 %v2184
  %v2334 = vpop.f32.mrb[0].mxu0
  %v2335 = vadd.f32 0.0, %v2334
  %v2336 = vpop.f32.mrb[0].mxu0
  %2337 = vmatprep.mubr.f32.mxu0 %v2189
  %2338 = vmatmul.mubr.f32.gmra.mrb[0].mxu0 %v2188
  %v2339 = vpop.f32.mrb[0].mxu0
  %v2340 = vadd.f32 0.0, %v2339
  %v2341 = vpop.f32.mrb[0].mxu0
  %2342 = vmatprep.mubr.f32.mxu0 %v2193
  %2343 = vmatmul.mubr.f32.gmra.mrb[0].mxu0 %v2192
  %v2344 = vpop.f32.mrb[0].mxu0
  %v2345 = vadd.f32 0.0, %v2344
  %v2346 = vpop.f32.mrb[0].mxu0
  %2347 = vmatprep.mubr.f32.mxu0 %v2197
  %2348 = vmatmul.mubr.f32.gmra.mrb[0].mxu0 %v2196
  %v2349 = vpop.f32.mrb[0].mxu0
  %v2350 = vadd.f32 0.0, %v2349
  %v2351 = vpop.f32.mrb[0].mxu0
  %2352 = vmatprep.mubr.f32.mxu0 %v2201
  %2353 = vmatmul.mubr.f32.gmra.mrb[0].mxu0 %v2200
  %v2354 = vpop.f32.mrb[0].mxu0
  %v2355 = vadd.f32 0.0, %v2354
  %v2356 = vpop.f32.mrb[0].mxu0
  %2357 = vmatprep.mubr.f32.mxu0 %v2205
  %2358 = vmatmul.mubr.f32.gmra.mrb[0].mxu0 %v2204
  %v2359 = vpop.f32.mrb[0].mxu0
  %v2360 = vadd.f32 0.0, %v2359
  %v2361 = vpop.f32.mrb[0].mxu0
  %2362 = vmatprep.mubr.f32.mxu0 %v2209
  %2363 = vmatmul.mubr.f32.gmra.mrb[0].mxu0 %v2208
  %v2364 = vpop.f32.mrb[0].mxu0
  %v2365 = vadd.f32 0.0, %v2364
  %v2366 = vpop.f32.mrb[0].mxu0
  %2367 = vmatprep.mubr.f32.mxu0 %v2213
  %2368 = vmatmul.mubr.f32.gmra.mrb[0].mxu0 %v2212
  %v2369 = vpop.f32.mrb[0].mxu0
  %v2370 = vadd.f32 0.0, %v2369
  %v2371 = vpop.f32.mrb[0].mxu0
  %2372 = vmatprep.mubr.f32.mxu0 %v2217
  %2373 = vmatmul.mubr.f32.gmra.mrb[0].mxu0 %v2216
  %v2374 = vpop.f32.mrb[0].mxu0
  %v2375 = vadd.f32 0.0, %v2374
  %v2376 = vpop.f32.mrb[0].mxu0
  %2377 = vmatprep.mubr.f32.mxu0 %v2221
  %2378 = vmatmul.mubr.f32.gmra.mrb[0].mxu0 %v2220
  %v2379 = vpop.f32.mrb[0].mxu0
  %v2380 = vadd.f32 0.0, %v2379
  %v2381 = vpop.f32.mrb[0].mxu0
  %2382 = vmatprep.mubr.f32.mxu0 %v2225
  %2383 = vmatmul.mubr.f32.gmra.mrb[0].mxu0 %v2224
  %v2384 = vpop.f32.mrb[0].mxu0
  %v2385 = vadd.f32 0.0, %v2384
  %v2386 = vpop.f32.mrb[0].mxu0
  %2387 = vmatprep.mubr.f32.mxu0 %v2229
  %2388 = vmatmul.mubr.f32.gmra.mrb[0].mxu0 %v2228
  %v2389 = vpop.f32.mrb[0].mxu0
  %v2390 = vadd.f32 0.0, %v2389
  %v2391 = vpop.f32.mrb[0].mxu0
  %2392 = vmatprep.mubr.f32.mxu0 %v2233
  %2393 = vmatmul.mubr.f32.gmra.mrb[0].mxu0 %v2232
  %v2394 = vpop.f32.mrb[0].mxu0
  %v2395 = vadd.f32 0.0, %v2394
  %v2396 = vpop.f32.mrb[0].mxu0
  %2397 = vmatprep.mubr.f32.mxu0 %v2237
  %2398 = vmatmul.mubr.f32.gmra.mrb[0].mxu0 %v2236
  %v2399 = vpop.f32.mrb[0].mxu0
  %v2400 = vadd.f32 0.0, %v2399
  %v2401 = vpop.f32.mrb[0].mxu0
  %2402 = vmatprep.mubr.f32.mxu0 %v2241
  %2403 = vmatmul.mubr.f32.gmra.mrb[0].mxu0 %v2240
  %v2404 = vpop.f32.mrb[0].mxu0
  %v2405 = vadd.f32 0.0, %v2404
  %v2406 = vpop.f32.mrb[0].mxu0
  %2407 = vmatprep.mubr.f32.mxu0 %v2245
  %2408 = vmatmul.mubr.f32.gmra.mrb[0].mxu0 %v2244
  %v2409 = vpop.f32.mrb[0].mxu0
  %v2410 = vadd.f32 0.0, %v2409
  %v2411 = vpop.f32.mrb[0].mxu0
  %2412 = vmatprep.mubr.f32.mxu0 %v2249
  %2413 = vmatmul.mubr.f32.gmra.mrb[0].mxu0 %v2248
  %v2414 = vpop.f32.mrb[0].mxu0
  %v2415 = vadd.f32 0.0, %v2414
  %v2416 = vpop.f32.mrb[0].mxu0
  %2417 = vmatprep.mubr.f32.mxu0 %v2253
  %2418 = vmatmul.mubr.f32.gmra.mrb[0].mxu0 %v2252
  %v2419 = vpop.f32.mrb[0].mxu0
  %v2420 = vadd.f32 0.0, %v2419
  %v2421 = vpop.f32.mrb[0].mxu0
  %2422 = vmatprep.mubr.f32.mxu0 %v2257
  %2423 = vmatmul.mubr.f32.gmra.mrb[0].mxu0 %v2256
  %v2424 = vpop.f32.mrb[0].mxu0
  %v2425 = vadd.f32 0.0, %v2424
  %v2426 = vpop.f32.mrb[0].mxu0
  %2427 = vmatprep.mubr.f32.mxu0 %v2261
  %2428 = vmatmul.mubr.f32.gmra.mrb[0].mxu0 %v2260
  %v2429 = vpop.f32.mrb[0].mxu0
  %v2430 = vadd.f32 0.0, %v2429
  %v2431 = vpop.f32.mrb[0].mxu0
  %2432 = vmatprep.mubr.f32.mxu0 %v2265
  %2433 = vmatmul.mubr.f32.gmra.mrb[0].mxu0 %v2264
  %v2434 = vpop.f32.mrb[0].mxu0
  %v2435 = vadd.f32 0.0, %v2434
  %v2436 = vpop.f32.mrb[0].mxu0
  %2437 = vdwg.mxu0
  %2438 = vmatprep.subr.mxu0 0.0
  %2439 = vmatpush1.msra.mxu0 %v1281
  %2440 = vmatprep.subr.mxu0 0.0
  %2441 = vmatpush1.msra.mxu0 %v1282
  %2442 = vmatprep.subr.mxu0 0.0
  %2443 = vmatpush1.msra.mxu0 %v1283
  %2444 = vmatprep.subr.mxu0 0.0
  %2445 = vmatpush1.msra.mxu0 %v1284
  %2446 = vmatprep.subr.mxu0 0.0
  %2447 = vmatpush1.msra.mxu0 %v1285
  %2448 = vmatprep.subr.mxu0 0.0
  %2449 = vmatpush1.msra.mxu0 %v1286
  %2450 = vmatprep.subr.mxu0 0.0
  %2451 = vmatpush1.msra.mxu0 %v1287
  %2452 = vmatprep.subr.mxu0 0.0
  %2453 = vmatpush1.msra.mxu0 %v1288
  %2454 = vmatprep.subr.mxu0 0.0
  %2455 = vmatpush1.msra.mxu0 %v1289
  %2456 = vmatprep.subr.mxu0 0.0
  %2457 = vmatpush1.msra.mxu0 %v1290
  %2458 = vmatprep.subr.mxu0 0.0
  %2459 = vmatpush1.msra.mxu0 %v1291
  %2460 = vmatprep.subr.mxu0 0.0
  %2461 = vmatpush1.msra.mxu0 %v1292
  %2462 = vmatprep.subr.mxu0 0.0
  %2463 = vmatpush1.msra.mxu0 %v1293
  %2464 = vmatprep.subr.mxu0 0.0
  %2465 = vmatpush1.msra.mxu0 %v1294
  %2466 = vmatprep.subr.mxu0 0.0
  %2467 = vmatpush1.msra.mxu0 %v1295
  %2468 = vmatprep.subr.mxu0 0.0
  %2469 = vmatpush1.msra.mxu0 %v1296
  %2470 = vmatprep.subr.mxu0 0.0
  %2471 = vmatpush1.msra.mxu0 %v1297
  %2472 = vmatprep.subr.mxu0 0.0
  %2473 = vmatpush1.msra.mxu0 %v1298
  %2474 = vmatprep.subr.mxu0 0.0
  %2475 = vmatpush1.msra.mxu0 %v1299
  %2476 = vmatprep.subr.mxu0 0.0
  %2477 = vmatpush1.msra.mxu0 %v1300
  %2478 = vmatprep.subr.mxu0 0.0
  %2479 = vmatpush1.msra.mxu0 %v1301
  %2480 = vmatprep.subr.mxu0 0.0
  %2481 = vmatpush1.msra.mxu0 %v1302
  %2482 = vmatprep.subr.mxu0 0.0
  %2483 = vmatpush1.msra.mxu0 %v1303
  %2484 = vmatprep.subr.mxu0 0.0
  %2485 = vmatpush1.msra.mxu0 %v1304
  %2486 = vmatprep.subr.mxu0 0.0
  %2487 = vmatpush1.msra.mxu0 %v1305
  %2488 = vmatprep.subr.mxu0 0.0
  %2489 = vmatpush1.msra.mxu0 %v1306
  %2490 = vmatprep.subr.mxu0 0.0
  %2491 = vmatpush1.msra.mxu0 %v1307
  %2492 = vmatprep.subr.mxu0 0.0
  %2493 = vmatpush1.msra.mxu0 %v1308
  %2494 = vmatprep.subr.mxu0 0.0
  %2495 = vmatpush1.msra.mxu0 %v1309
  %2496 = vmatprep.subr.mxu0 0.0
  %2497 = vmatpush1.msra.mxu0 %v1310
  %2498 = vmatprep.subr.mxu0 0.0
  %2499 = vmatpush1.msra.mxu0 %v1311
  %2500 = vmatprep.subr.mxu0 0.0
  %2501 = vmatpush1.msra.mxu0 %v1312
  %2502 = vmatprep.mubr.f32.mxu0 %v2187
  %2503 = vmatmul.mubr.f32.gmra.mrb[0].mxu0 %v2186
  %v2504 = vpop.f32.mrb[0].mxu0
  %v2505 = vadd.f32 %v2335, %v2504
  %v2506 = vpop.f32.mrb[0].mxu0
  %2507 = vmatprep.mubr.f32.mxu0 %v2191
  %2508 = vmatmul.mubr.f32.gmra.mrb[0].mxu0 %v2190
  %v2509 = vpop.f32.mrb[0].mxu0
  %v2510 = vadd.f32 %v2340, %v2509
  %v2511 = vpop.f32.mrb[0].mxu0
  %2512 = vmatprep.mubr.f32.mxu0 %v2195
  %2513 = vmatmul.mubr.f32.gmra.mrb[0].mxu0 %v2194
  %v2514 = vpop.f32.mrb[0].mxu0
  %v2515 = vadd.f32 %v2345, %v2514
  %v2516 = vpop.f32.mrb[0].mxu0
  %2517 = vmatprep.mubr.f32.mxu0 %v2199
  %2518 = vmatmul.mubr.f32.gmra.mrb[0].mxu0 %v2198
  %v2519 = vpop.f32.mrb[0].mxu0
  %v2520 = vadd.f32 %v2350, %v2519
  %v2521 = vpop.f32.mrb[0].mxu0
  %2522 = vmatprep.mubr.f32.mxu0 %v2203
  %2523 = vmatmul.mubr.f32.gmra.mrb[0].mxu0 %v2202
  %v2524 = vpop.f32.mrb[0].mxu0
  %v2525 = vadd.f32 %v2355, %v2524
  %v2526 = vpop.f32.mrb[0].mxu0
  %2527 = vmatprep.mubr.f32.mxu0 %v2207
  %2528 = vmatmul.mubr.f32.gmra.mrb[0].mxu0 %v2206
  %v2529 = vpop.f32.mrb[0].mxu0
  %v2530 = vadd.f32 %v2360, %v2529
  %v2531 = vpop.f32.mrb[0].mxu0
  %2532 = vmatprep.mubr.f32.mxu0 %v2211
  %2533 = vmatmul.mubr.f32.gmra.mrb[0].mxu0 %v2210
  %v2534 = vpop.f32.mrb[0].mxu0
  %v2535 = vadd.f32 %v2365, %v2534
  %v2536 = vpop.f32.mrb[0].mxu0
  %2537 = vmatprep.mubr.f32.mxu0 %v2215
  %2538 = vmatmul.mubr.f32.gmra.mrb[0].mxu0 %v2214
  %v2539 = vpop.f32.mrb[0].mxu0
  %v2540 = vadd.f32 %v2370, %v2539
  %v2541 = vpop.f32.mrb[0].mxu0
  %2542 = vmatprep.mubr.f32.mxu0 %v2219
  %2543 = vmatmul.mubr.f32.gmra.mrb[0].mxu0 %v2218
  %v2544 = vpop.f32.mrb[0].mxu0
  %v2545 = vadd.f32 %v2375, %v2544
  %v2546 = vpop.f32.mrb[0].mxu0
  %2547 = vmatprep.mubr.f32.mxu0 %v2223
  %2548 = vmatmul.mubr.f32.gmra.mrb[0].mxu0 %v2222
  %v2549 = vpop.f32.mrb[0].mxu0
  %v2550 = vadd.f32 %v2380, %v2549
  %v2551 = vpop.f32.mrb[0].mxu0
  %2552 = vmatprep.mubr.f32.mxu0 %v2227
  %2553 = vmatmul.mubr.f32.gmra.mrb[0].mxu0 %v2226
  %v2554 = vpop.f32.mrb[0].mxu0
  %v2555 = vadd.f32 %v2385, %v2554
  %v2556 = vpop.f32.mrb[0].mxu0
  %2557 = vmatprep.mubr.f32.mxu0 %v2231
  %2558 = vmatmul.mubr.f32.gmra.mrb[0].mxu0 %v2230
  %v2559 = vpop.f32.mrb[0].mxu0
  %v2560 = vadd.f32 %v2390, %v2559
  %v2561 = vpop.f32.mrb[0].mxu0
  %2562 = vmatprep.mubr.f32.mxu0 %v2235
  %2563 = vmatmul.mubr.f32.gmra.mrb[0].mxu0 %v2234
  %v2564 = vpop.f32.mrb[0].mxu0
  %v2565 = vadd.f32 %v2395, %v2564
  %v2566 = vpop.f32.mrb[0].mxu0
  %2567 = vmatprep.mubr.f32.mxu0 %v2239
  %2568 = vmatmul.mubr.f32.gmra.mrb[0].mxu0 %v2238
  %v2569 = vpop.f32.mrb[0].mxu0
  %v2570 = vadd.f32 %v2400, %v2569
  %v2571 = vpop.f32.mrb[0].mxu0
  %2572 = vmatprep.mubr.f32.mxu0 %v2243
  %2573 = vmatmul.mubr.f32.gmra.mrb[0].mxu0 %v2242
  %v2574 = vpop.f32.mrb[0].mxu0
  %v2575 = vadd.f32 %v2405, %v2574
  %v2576 = vpop.f32.mrb[0].mxu0
  %2577 = vmatprep.mubr.f32.mxu0 %v2247
  %2578 = vmatmul.mubr.f32.gmra.mrb[0].mxu0 %v2246
  %v2579 = vpop.f32.mrb[0].mxu0
  %v2580 = vadd.f32 %v2410, %v2579
  %v2581 = vpop.f32.mrb[0].mxu0
  %2582 = vmatprep.mubr.f32.mxu0 %v2251
  %2583 = vmatmul.mubr.f32.gmra.mrb[0].mxu0 %v2250
  %v2584 = vpop.f32.mrb[0].mxu0
  %v2585 = vadd.f32 %v2415, %v2584
  %v2586 = vpop.f32.mrb[0].mxu0
  %2587 = vmatprep.mubr.f32.mxu0 %v2255
  %2588 = vmatmul.mubr.f32.gmra.mrb[0].mxu0 %v2254
  %v2589 = vpop.f32.mrb[0].mxu0
  %v2590 = vadd.f32 %v2420, %v2589
  %v2591 = vpop.f32.mrb[0].mxu0
  %2592 = vmatprep.mubr.f32.mxu0 %v2259
  %2593 = vmatmul.mubr.f32.gmra.mrb[0].mxu0 %v2258
  %v2594 = vpop.f32.mrb[0].mxu0
  %v2595 = vadd.f32 %v2425, %v2594
  %v2596 = vpop.f32.mrb[0].mxu0
  %2597 = vmatprep.mubr.f32.mxu0 %v2263
  %2598 = vmatmul.mubr.f32.gmra.mrb[0].mxu0 %v2262
  %v2599 = vpop.f32.mrb[0].mxu0
  %v2600 = vadd.f32 %v2430, %v2599
  %v2601 = vpop.f32.mrb[0].mxu0
  %2602 = vmatprep.mubr.f32.mxu0 %v2267
  %2603 = vmatmul.mubr.f32.gmra.mrb[0].mxu0 %v2266
  %v2604 = vpop.f32.mrb[0].mxu0
  %v2605 = vadd.f32 %v2435, %v2604
  %v2606 = vpop.f32.mrb[0].mxu0
  %2607 = vdwg.mxu0
  %v2608 = vmax.f32 %v2162, %v2505
  %v2609 = vmax.f32 %v2163, %v2510
  %v2610 = vmax.f32 %v2164, %v2515
  %v2611 = vmax.f32 %v2165, %v2520
  %v2612 = vmax.f32 %v2166, %v2525
  %v2613 = vmax.f32 %v2167, %v2530
  %v2614 = vmax.f32 %v2168, %v2535
  %v2615 = vmax.f32 %v2169, %v2540
  %v2616 = vmax.f32 %v2170, %v2545
  %v2617 = vmax.f32 %v2171, %v2550
  %v2618 = vmax.f32 %v2172, %v2555
  %v2619 = vmax.f32 %v2173, %v2560
  %v2620 = vmax.f32 %v2174, %v2565
  %v2621 = vmax.f32 %v2175, %v2570
  %v2622 = vmax.f32 %v2176, %v2575
  %v2623 = vmax.f32 %v2177, %v2580
  %v2624 = vmax.f32 %v2178, %v2585
  %v2625 = vmax.f32 %v2179, %v2590
  %v2626 = vmax.f32 %v2180, %v2595
  %v2627 = vmax.f32 %v2181, %v2600
  %v2628 = vmax.f32 %v2182, %v2605
  %s2629 = scalar_lea.vmem %s4, 2016
  %v2630 = vld [vmem:[%s2629] sm:$0xff]
  %v2631 = vld [vmem:[%s2629 + $0x8] sm:$0xff]
  %v2632 = vld [vmem:[%s2629 + $0x10] sm:$0xff]
  %v2633 = vld [vmem:[%s2629 + $0x18] sm:$0xff]
  %v2634 = vld [vmem:[%s2629 + $0x20] sm:$0xff]
  %v2635 = vld [vmem:[%s2629 + $0x28] sm:$0xff]
  %v2636 = vld [vmem:[%s2629 + $0x30] sm:$0xff]
  %v2637 = vld [vmem:[%s2629 + $0x38] sm:$0xff]
  %v2638 = vld [vmem:[%s2629 + $0x40] sm:$0xff]
  %v2639 = vld [vmem:[%s2629 + $0x48] sm:$0xff]
  %v2640 = vld [vmem:[%s2629 + $0x50] sm:$0xff]
  %v2641 = vld [vmem:[%s2629 + $0x58] sm:$0xff]
  %v2642 = vld [vmem:[%s2629 + $0x60] sm:$0xff]
  %v2643 = vld [vmem:[%s2629 + $0x68] sm:$0xff]
  %v2644 = vld [vmem:[%s2629 + $0x70] sm:$0xff]
  %v2645 = vld [vmem:[%s2629 + $0x78] sm:$0xff]
  %v2646 = vld [vmem:[%s2629 + $0x80] sm:$0xff]
  %v2647 = vld [vmem:[%s2629 + $0x88] sm:$0xff]
  %v2648 = vld [vmem:[%s2629 + $0x90] sm:$0xff]
  %v2649 = vld [vmem:[%s2629 + $0x98] sm:$0xff]
  %v2650 = vld [vmem:[%s2629 + $0xa0] sm:$0xff]
  %v2651 = vld [vmem:[%s2629 + $0xa8] sm:$0xff]
  %v2652 = vld [vmem:[%s2629 + $0xb0] sm:$0xff]
  %v2653 = vld [vmem:[%s2629 + $0xb8] sm:$0xff]
  %v2654 = vld [vmem:[%s2629 + $0xc0] sm:$0xff]
  %v2655 = vld [vmem:[%s2629 + $0xc8] sm:$0xff]
  %v2656 = vld [vmem:[%s2629 + $0xd0] sm:$0xff]
  %v2657 = vld [vmem:[%s2629 + $0xd8] sm:$0xff]
  %v2658 = vld [vmem:[%s2629 + $0xe0] sm:$0xff]
  %v2659 = vld [vmem:[%s2629 + $0xe8] sm:$0xff]
  %v2660 = vld [vmem:[%s2629 + $0xf0] sm:$0xff]
  %v2661 = vld [vmem:[%s2629 + $0xf8] sm:$0xff]
  %v2662 = vld [vmem:[%s2629 + $0x100] sm:$0xff]
  %v2663 = vld [vmem:[%s2629 + $0x108] sm:$0xff]
  %v2664 = vld [vmem:[%s2629 + $0x110] sm:$0xff]
  %v2665 = vld [vmem:[%s2629 + $0x118] sm:$0xff]
  %v2666 = vld [vmem:[%s2629 + $0x120] sm:$0xff]
  %v2667 = vld [vmem:[%s2629 + $0x128] sm:$0xff]
  %v2668 = vld [vmem:[%s2629 + $0x130] sm:$0xff]
  %v2669 = vld [vmem:[%s2629 + $0x138] sm:$0xff]
  %v2670 = vld [vmem:[%s2629 + $0x140] sm:$0xff]
  %v2671 = vld [vmem:[%s2629 + $0x148] sm:$0xff]
  %v2672 = vld [vmem:[%s2629 + $0x150] sm:$0xff]
  %v2673 = vld [vmem:[%s2629 + $0x158] sm:$0xff]
  %v2674 = vld [vmem:[%s2629 + $0x160] sm:$0xff]
  %v2675 = vld [vmem:[%s2629 + $0x168] sm:$0xff]
  %v2676 = vld [vmem:[%s2629 + $0x170] sm:$0xff]
  %v2677 = vld [vmem:[%s2629 + $0x178] sm:$0xff]
  %v2678 = vld [vmem:[%s2629 + $0x180] sm:$0xff]
  %v2679 = vld [vmem:[%s2629 + $0x188] sm:$0xff]
  %v2680 = vld [vmem:[%s2629 + $0x190] sm:$0xff]
  %v2681 = vld [vmem:[%s2629 + $0x198] sm:$0xff]
  %v2682 = vld [vmem:[%s2629 + $0x1a0] sm:$0xff]
  %v2683 = vld [vmem:[%s2629 + $0x1a8] sm:$0xff]
  %v2684 = vld [vmem:[%s2629 + $0x1b0] sm:$0xff]
  %v2685 = vld [vmem:[%s2629 + $0x1b8] sm:$0xff]
  %v2686 = vld [vmem:[%s2629 + $0x1c0] sm:$0xff]
  %v2687 = vld [vmem:[%s2629 + $0x1c8] sm:$0xff]
  %v2688 = vld [vmem:[%s2629 + $0x1d0] sm:$0xff]
  %v2689 = vld [vmem:[%s2629 + $0x1d8] sm:$0xff]
  %v2690 = vld [vmem:[%s2629 + $0x1e0] sm:$0xff]
  %v2691 = vld [vmem:[%s2629 + $0x1e8] sm:$0xff]
  %v2692 = vld [vmem:[%s2629 + $0x1f0] sm:$0xff]
  %v2693 = vld [vmem:[%s2629 + $0x1f8] sm:$0xff]
  %v2694 = vld [vmem:[%s2629 + $0x200] sm:$0xff]
  %v2695 = vld [vmem:[%s2629 + $0x208] sm:$0xff]
  %v2696 = vld [vmem:[%s2629 + $0x210] sm:$0xff]
  %v2697 = vld [vmem:[%s2629 + $0x218] sm:$0xff]
  %v2698 = vld [vmem:[%s2629 + $0x220] sm:$0xff]
  %v2699 = vld [vmem:[%s2629 + $0x228] sm:$0xff]
  %v2700 = vld [vmem:[%s2629 + $0x230] sm:$0xff]
  %v2701 = vld [vmem:[%s2629 + $0x238] sm:$0xff]
  %v2702 = vld [vmem:[%s2629 + $0x240] sm:$0xff]
  %v2703 = vld [vmem:[%s2629 + $0x248] sm:$0xff]
  %v2704 = vld [vmem:[%s2629 + $0x250] sm:$0xff]
  %v2705 = vld [vmem:[%s2629 + $0x258] sm:$0xff]
  %v2706 = vld [vmem:[%s2629 + $0x260] sm:$0xff]
  %v2707 = vld [vmem:[%s2629 + $0x268] sm:$0xff]
  %v2708 = vld [vmem:[%s2629 + $0x270] sm:$0xff]
  %v2709 = vld [vmem:[%s2629 + $0x278] sm:$0xff]
  %v2710 = vld [vmem:[%s2629 + $0x280] sm:$0x3]
  %v2711 = vld [vmem:[%s2629 + $0x288] sm:$0x3]
  %v2712 = vld [vmem:[%s2629 + $0x290] sm:$0x3]
  %v2713 = vld [vmem:[%s2629 + $0x298] sm:$0x3]
  %2714 = vmatprep.subr.mxu0 0.0
  %2715 = vmatpush1.msra.mxu0 %v1249
  %2716 = vmatprep.subr.mxu0 0.0
  %2717 = vmatpush1.msra.mxu0 %v1250
  %2718 = vmatprep.subr.mxu0 0.0
  %2719 = vmatpush1.msra.mxu0 %v1251
  %2720 = vmatprep.subr.mxu0 0.0
  %2721 = vmatpush1.msra.mxu0 %v1252
  %2722 = vmatprep.subr.mxu0 0.0
  %2723 = vmatpush1.msra.mxu0 %v1253
  %2724 = vmatprep.subr.mxu0 0.0
  %2725 = vmatpush1.msra.mxu0 %v1254
  %2726 = vmatprep.subr.mxu0 0.0
  %2727 = vmatpush1.msra.mxu0 %v1255
  %2728 = vmatprep.subr.mxu0 0.0
  %2729 = vmatpush1.msra.mxu0 %v1256
  %2730 = vmatprep.subr.mxu0 0.0
  %2731 = vmatpush1.msra.mxu0 %v1257
  %2732 = vmatprep.subr.mxu0 0.0
  %2733 = vmatpush1.msra.mxu0 %v1258
  %2734 = vmatprep.subr.mxu0 0.0
  %2735 = vmatpush1.msra.mxu0 %v1259
  %2736 = vmatprep.subr.mxu0 0.0
  %2737 = vmatpush1.msra.mxu0 %v1260
  %2738 = vmatprep.subr.mxu0 0.0
  %2739 = vmatpush1.msra.mxu0 %v1261
  %2740 = vmatprep.subr.mxu0 0.0
  %2741 = vmatpush1.msra.mxu0 %v1262
  %2742 = vmatprep.subr.mxu0 0.0
  %2743 = vmatpush1.msra.mxu0 %v1263
  %2744 = vmatprep.subr.mxu0 0.0
  %2745 = vmatpush1.msra.mxu0 %v1264
  %2746 = vmatprep.subr.mxu0 0.0
  %2747 = vmatpush1.msra.mxu0 %v1265
  %2748 = vmatprep.subr.mxu0 0.0
  %2749 = vmatpush1.msra.mxu0 %v1266
  %2750 = vmatprep.subr.mxu0 0.0
  %2751 = vmatpush1.msra.mxu0 %v1267
  %2752 = vmatprep.subr.mxu0 0.0
  %2753 = vmatpush1.msra.mxu0 %v1268
  %2754 = vmatprep.subr.mxu0 0.0
  %2755 = vmatpush1.msra.mxu0 %v1269
  %2756 = vmatprep.subr.mxu0 0.0
  %2757 = vmatpush1.msra.mxu0 %v1270
  %2758 = vmatprep.subr.mxu0 0.0
  %2759 = vmatpush1.msra.mxu0 %v1271
  %2760 = vmatprep.subr.mxu0 0.0
  %2761 = vmatpush1.msra.mxu0 %v1272
  %2762 = vmatprep.subr.mxu0 0.0
  %2763 = vmatpush1.msra.mxu0 %v1273
  %2764 = vmatprep.subr.mxu0 0.0
  %2765 = vmatpush1.msra.mxu0 %v1274
  %2766 = vmatprep.subr.mxu0 0.0
  %2767 = vmatpush1.msra.mxu0 %v1275
  %2768 = vmatprep.subr.mxu0 0.0
  %2769 = vmatpush1.msra.mxu0 %v1276
  %2770 = vmatprep.subr.mxu0 0.0
  %2771 = vmatpush1.msra.mxu0 %v1277
  %2772 = vmatprep.subr.mxu0 0.0
  %2773 = vmatpush1.msra.mxu0 %v1278
  %2774 = vmatprep.subr.mxu0 0.0
  %2775 = vmatpush1.msra.mxu0 %v1279
  %2776 = vmatprep.subr.mxu0 0.0
  %2777 = vmatpush1.msra.mxu0 %v1280
  %2778 = vmatprep.mubr.f32.mxu0 %v2631
  %2779 = vmatmul.mubr.f32.gmra.mrb[0].mxu0 %v2630
  %v2780 = vpop.f32.mrb[0].mxu0
  %v2781 = vadd.f32 0.0, %v2780
  %v2782 = vpop.f32.mrb[0].mxu0
  %2783 = vmatprep.mubr.f32.mxu0 %v2635
  %2784 = vmatmul.mubr.f32.gmra.mrb[0].mxu0 %v2634
  %v2785 = vpop.f32.mrb[0].mxu0
  %v2786 = vadd.f32 0.0, %v2785
  %v2787 = vpop.f32.mrb[0].mxu0
  %2788 = vmatprep.mubr.f32.mxu0 %v2639
  %2789 = vmatmul.mubr.f32.gmra.mrb[0].mxu0 %v2638
  %v2790 = vpop.f32.mrb[0].mxu0
  %v2791 = vadd.f32 0.0, %v2790
  %v2792 = vpop.f32.mrb[0].mxu0
  %2793 = vmatprep.mubr.f32.mxu0 %v2643
  %2794 = vmatmul.mubr.f32.gmra.mrb[0].mxu0 %v2642
  %v2795 = vpop.f32.mrb[0].mxu0
  %v2796 = vadd.f32 0.0, %v2795
  %v2797 = vpop.f32.mrb[0].mxu0
  %2798 = vmatprep.mubr.f32.mxu0 %v2647
  %2799 = vmatmul.mubr.f32.gmra.mrb[0].mxu0 %v2646
  %v2800 = vpop.f32.mrb[0].mxu0
  %v2801 = vadd.f32 0.0, %v2800
  %v2802 = vpop.f32.mrb[0].mxu0
  %2803 = vmatprep.mubr.f32.mxu0 %v2651
  %2804 = vmatmul.mubr.f32.gmra.mrb[0].mxu0 %v2650
  %v2805 = vpop.f32.mrb[0].mxu0
  %v2806 = vadd.f32 0.0, %v2805
  %v2807 = vpop.f32.mrb[0].mxu0
  %2808 = vmatprep.mubr.f32.mxu0 %v2655
  %2809 = vmatmul.mubr.f32.gmra.mrb[0].mxu0 %v2654
  %v2810 = vpop.f32.mrb[0].mxu0
  %v2811 = vadd.f32 0.0, %v2810
  %v2812 = vpop.f32.mrb[0].mxu0
  %2813 = vmatprep.mubr.f32.mxu0 %v2659
  %2814 = vmatmul.mubr.f32.gmra.mrb[0].mxu0 %v2658
  %v2815 = vpop.f32.mrb[0].mxu0
  %v2816 = vadd.f32 0.0, %v2815
  %v2817 = vpop.f32.mrb[0].mxu0
  %2818 = vmatprep.mubr.f32.mxu0 %v2663
  %2819 = vmatmul.mubr.f32.gmra.mrb[0].mxu0 %v2662
  %v2820 = vpop.f32.mrb[0].mxu0
  %v2821 = vadd.f32 0.0, %v2820
  %v2822 = vpop.f32.mrb[0].mxu0
  %2823 = vmatprep.mubr.f32.mxu0 %v2667
  %2824 = vmatmul.mubr.f32.gmra.mrb[0].mxu0 %v2666
  %v2825 = vpop.f32.mrb[0].mxu0
  %v2826 = vadd.f32 0.0, %v2825
  %v2827 = vpop.f32.mrb[0].mxu0
  %2828 = vmatprep.mubr.f32.mxu0 %v2671
  %2829 = vmatmul.mubr.f32.gmra.mrb[0].mxu0 %v2670
  %v2830 = vpop.f32.mrb[0].mxu0
  %v2831 = vadd.f32 0.0, %v2830
  %v2832 = vpop.f32.mrb[0].mxu0
  %2833 = vmatprep.mubr.f32.mxu0 %v2675
  %2834 = vmatmul.mubr.f32.gmra.mrb[0].mxu0 %v2674
  %v2835 = vpop.f32.mrb[0].mxu0
  %v2836 = vadd.f32 0.0, %v2835
  %v2837 = vpop.f32.mrb[0].mxu0
  %2838 = vmatprep.mubr.f32.mxu0 %v2679
  %2839 = vmatmul.mubr.f32.gmra.mrb[0].mxu0 %v2678
  %v2840 = vpop.f32.mrb[0].mxu0
  %v2841 = vadd.f32 0.0, %v2840
  %v2842 = vpop.f32.mrb[0].mxu0
  %2843 = vmatprep.mubr.f32.mxu0 %v2683
  %2844 = vmatmul.mubr.f32.gmra.mrb[0].mxu0 %v2682
  %v2845 = vpop.f32.mrb[0].mxu0
  %v2846 = vadd.f32 0.0, %v2845
  %v2847 = vpop.f32.mrb[0].mxu0
  %2848 = vmatprep.mubr.f32.mxu0 %v2687
  %2849 = vmatmul.mubr.f32.gmra.mrb[0].mxu0 %v2686
  %v2850 = vpop.f32.mrb[0].mxu0
  %v2851 = vadd.f32 0.0, %v2850
  %v2852 = vpop.f32.mrb[0].mxu0
  %2853 = vmatprep.mubr.f32.mxu0 %v2691
  %2854 = vmatmul.mubr.f32.gmra.mrb[0].mxu0 %v2690
  %v2855 = vpop.f32.mrb[0].mxu0
  %v2856 = vadd.f32 0.0, %v2855
  %v2857 = vpop.f32.mrb[0].mxu0
  %2858 = vmatprep.mubr.f32.mxu0 %v2695
  %2859 = vmatmul.mubr.f32.gmra.mrb[0].mxu0 %v2694
  %v2860 = vpop.f32.mrb[0].mxu0
  %v2861 = vadd.f32 0.0, %v2860
  %v2862 = vpop.f32.mrb[0].mxu0
  %2863 = vmatprep.mubr.f32.mxu0 %v2699
  %2864 = vmatmul.mubr.f32.gmra.mrb[0].mxu0 %v2698
  %v2865 = vpop.f32.mrb[0].mxu0
  %v2866 = vadd.f32 0.0, %v2865
  %v2867 = vpop.f32.mrb[0].mxu0
  %2868 = vmatprep.mubr.f32.mxu0 %v2703
  %2869 = vmatmul.mubr.f32.gmra.mrb[0].mxu0 %v2702
  %v2870 = vpop.f32.mrb[0].mxu0
  %v2871 = vadd.f32 0.0, %v2870
  %v2872 = vpop.f32.mrb[0].mxu0
  %2873 = vmatprep.mubr.f32.mxu0 %v2707
  %2874 = vmatmul.mubr.f32.gmra.mrb[0].mxu0 %v2706
  %v2875 = vpop.f32.mrb[0].mxu0
  %v2876 = vadd.f32 0.0, %v2875
  %v2877 = vpop.f32.mrb[0].mxu0
  %2878 = vmatprep.mubr.f32.mxu0 %v2711
  %2879 = vmatmul.mubr.f32.gmra.mrb[0].mxu0 %v2710
  %v2880 = vpop.f32.mrb[0].mxu0
  %v2881 = vadd.f32 0.0, %v2880
  %v2882 = vpop.f32.mrb[0].mxu0
  %2883 = vdwg.mxu0
  %2884 = vmatprep.subr.mxu0 0.0
  %2885 = vmatpush1.msra.mxu0 %v1281
  %2886 = vmatprep.subr.mxu0 0.0
  %2887 = vmatpush1.msra.mxu0 %v1282
  %2888 = vmatprep.subr.mxu0 0.0
  %2889 = vmatpush1.msra.mxu0 %v1283
  %2890 = vmatprep.subr.mxu0 0.0
  %2891 = vmatpush1.msra.mxu0 %v1284
  %2892 = vmatprep.subr.mxu0 0.0
  %2893 = vmatpush1.msra.mxu0 %v1285
  %2894 = vmatprep.subr.mxu0 0.0
  %2895 = vmatpush1.msra.mxu0 %v1286
  %2896 = vmatprep.subr.mxu0 0.0
  %2897 = vmatpush1.msra.mxu0 %v1287
  %2898 = vmatprep.subr.mxu0 0.0
  %2899 = vmatpush1.msra.mxu0 %v1288
  %2900 = vmatprep.subr.mxu0 0.0
  %2901 = vmatpush1.msra.mxu0 %v1289
  %2902 = vmatprep.subr.mxu0 0.0
  %2903 = vmatpush1.msra.mxu0 %v1290
  %2904 = vmatprep.subr.mxu0 0.0
  %2905 = vmatpush1.msra.mxu0 %v1291
  %2906 = vmatprep.subr.mxu0 0.0
  %2907 = vmatpush1.msra.mxu0 %v1292
  %2908 = vmatprep.subr.mxu0 0.0
  %2909 = vmatpush1.msra.mxu0 %v1293
  %2910 = vmatprep.subr.mxu0 0.0
  %2911 = vmatpush1.msra.mxu0 %v1294
  %2912 = vmatprep.subr.mxu0 0.0
  %2913 = vmatpush1.msra.mxu0 %v1295
  %2914 = vmatprep.subr.mxu0 0.0
  %2915 = vmatpush1.msra.mxu0 %v1296
  %2916 = vmatprep.subr.mxu0 0.0
  %2917 = vmatpush1.msra.mxu0 %v1297
  %2918 = vmatprep.subr.mxu0 0.0
  %2919 = vmatpush1.msra.mxu0 %v1298
  %2920 = vmatprep.subr.mxu0 0.0
  %2921 = vmatpush1.msra.mxu0 %v1299
  %2922 = vmatprep.subr.mxu0 0.0
  %2923 = vmatpush1.msra.mxu0 %v1300
  %2924 = vmatprep.subr.mxu0 0.0
  %2925 = vmatpush1.msra.mxu0 %v1301
  %2926 = vmatprep.subr.mxu0 0.0
  %2927 = vmatpush1.msra.mxu0 %v1302
  %2928 = vmatprep.subr.mxu0 0.0
  %2929 = vmatpush1.msra.mxu0 %v1303
  %2930 = vmatprep.subr.mxu0 0.0
  %2931 = vmatpush1.msra.mxu0 %v1304
  %2932 = vmatprep.subr.mxu0 0.0
  %2933 = vmatpush1.msra.mxu0 %v1305
  %2934 = vmatprep.subr.mxu0 0.0
  %2935 = vmatpush1.msra.mxu0 %v1306
  %2936 = vmatprep.subr.mxu0 0.0
  %2937 = vmatpush1.msra.mxu0 %v1307
  %2938 = vmatprep.subr.mxu0 0.0
  %2939 = vmatpush1.msra.mxu0 %v1308
  %2940 = vmatprep.subr.mxu0 0.0
  %2941 = vmatpush1.msra.mxu0 %v1309
  %2942 = vmatprep.subr.mxu0 0.0
  %2943 = vmatpush1.msra.mxu0 %v1310
  %2944 = vmatprep.subr.mxu0 0.0
  %2945 = vmatpush1.msra.mxu0 %v1311
  %2946 = vmatprep.subr.mxu0 0.0
  %2947 = vmatpush1.msra.mxu0 %v1312
  %2948 = vmatprep.mubr.f32.mxu0 %v2633
  %2949 = vmatmul.mubr.f32.gmra.mrb[0].mxu0 %v2632
  %v2950 = vpop.f32.mrb[0].mxu0
  %v2951 = vadd.f32 %v2781, %v2950
  %v2952 = vpop.f32.mrb[0].mxu0
  %2953 = vmatprep.mubr.f32.mxu0 %v2637
  %2954 = vmatmul.mubr.f32.gmra.mrb[0].mxu0 %v2636
  %v2955 = vpop.f32.mrb[0].mxu0
  %v2956 = vadd.f32 %v2786, %v2955
  %v2957 = vpop.f32.mrb[0].mxu0
  %2958 = vmatprep.mubr.f32.mxu0 %v2641
  %2959 = vmatmul.mubr.f32.gmra.mrb[0].mxu0 %v2640
  %v2960 = vpop.f32.mrb[0].mxu0
  %v2961 = vadd.f32 %v2791, %v2960
  %v2962 = vpop.f32.mrb[0].mxu0
  %2963 = vmatprep.mubr.f32.mxu0 %v2645
  %2964 = vmatmul.mubr.f32.gmra.mrb[0].mxu0 %v2644
  %v2965 = vpop.f32.mrb[0].mxu0
  %v2966 = vadd.f32 %v2796, %v2965
  %v2967 = vpop.f32.mrb[0].mxu0
  %2968 = vmatprep.mubr.f32.mxu0 %v2649
  %2969 = vmatmul.mubr.f32.gmra.mrb[0].mxu0 %v2648
  %v2970 = vpop.f32.mrb[0].mxu0
  %v2971 = vadd.f32 %v2801, %v2970
  %v2972 = vpop.f32.mrb[0].mxu0
  %2973 = vmatprep.mubr.f32.mxu0 %v2653
  %2974 = vmatmul.mubr.f32.gmra.mrb[0].mxu0 %v2652
  %v2975 = vpop.f32.mrb[0].mxu0
  %v2976 = vadd.f32 %v2806, %v2975
  %v2977 = vpop.f32.mrb[0].mxu0
  %2978 = vmatprep.mubr.f32.mxu0 %v2657
  %2979 = vmatmul.mubr.f32.gmra.mrb[0].mxu0 %v2656
  %v2980 = vpop.f32.mrb[0].mxu0
  %v2981 = vadd.f32 %v2811, %v2980
  %v2982 = vpop.f32.mrb[0].mxu0
  %2983 = vmatprep.mubr.f32.mxu0 %v2661
  %2984 = vmatmul.mubr.f32.gmra.mrb[0].mxu0 %v2660
  %v2985 = vpop.f32.mrb[0].mxu0
  %v2986 = vadd.f32 %v2816, %v2985
  %v2987 = vpop.f32.mrb[0].mxu0
  %2988 = vmatprep.mubr.f32.mxu0 %v2665
  %2989 = vmatmul.mubr.f32.gmra.mrb[0].mxu0 %v2664
  %v2990 = vpop.f32.mrb[0].mxu0
  %v2991 = vadd.f32 %v2821, %v2990
  %v2992 = vpop.f32.mrb[0].mxu0
  %2993 = vmatprep.mubr.f32.mxu0 %v2669
  %2994 = vmatmul.mubr.f32.gmra.mrb[0].mxu0 %v2668
  %v2995 = vpop.f32.mrb[0].mxu0
  %v2996 = vadd.f32 %v2826, %v2995
  %v2997 = vpop.f32.mrb[0].mxu0
  %2998 = vmatprep.mubr.f32.mxu0 %v2673
  %2999 = vmatmul.mubr.f32.gmra.mrb[0].mxu0 %v2672
  %v3000 = vpop.f32.mrb[0].mxu0
  %v3001 = vadd.f32 %v2831, %v3000
  %v3002 = vpop.f32.mrb[0].mxu0
  %3003 = vmatprep.mubr.f32.mxu0 %v2677
  %3004 = vmatmul.mubr.f32.gmra.mrb[0].mxu0 %v2676
  %v3005 = vpop.f32.mrb[0].mxu0
  %v3006 = vadd.f32 %v2836, %v3005
  %v3007 = vpop.f32.mrb[0].mxu0
  %3008 = vmatprep.mubr.f32.mxu0 %v2681
  %3009 = vmatmul.mubr.f32.gmra.mrb[0].mxu0 %v2680
  %v3010 = vpop.f32.mrb[0].mxu0
  %v3011 = vadd.f32 %v2841, %v3010
  %v3012 = vpop.f32.mrb[0].mxu0
  %3013 = vmatprep.mubr.f32.mxu0 %v2685
  %3014 = vmatmul.mubr.f32.gmra.mrb[0].mxu0 %v2684
  %v3015 = vpop.f32.mrb[0].mxu0
  %v3016 = vadd.f32 %v2846, %v3015
  %v3017 = vpop.f32.mrb[0].mxu0
  %3018 = vmatprep.mubr.f32.mxu0 %v2689
  %3019 = vmatmul.mubr.f32.gmra.mrb[0].mxu0 %v2688
  %v3020 = vpop.f32.mrb[0].mxu0
  %v3021 = vadd.f32 %v2851, %v3020
  %v3022 = vpop.f32.mrb[0].mxu0
  %3023 = vmatprep.mubr.f32.mxu0 %v2693
  %3024 = vmatmul.mubr.f32.gmra.mrb[0].mxu0 %v2692
  %v3025 = vpop.f32.mrb[0].mxu0
  %v3026 = vadd.f32 %v2856, %v3025
  %v3027 = vpop.f32.mrb[0].mxu0
  %3028 = vmatprep.mubr.f32.mxu0 %v2697
  %3029 = vmatmul.mubr.f32.gmra.mrb[0].mxu0 %v2696
  %v3030 = vpop.f32.mrb[0].mxu0
  %v3031 = vadd.f32 %v2861, %v3030
  %v3032 = vpop.f32.mrb[0].mxu0
  %3033 = vmatprep.mubr.f32.mxu0 %v2701
  %3034 = vmatmul.mubr.f32.gmra.mrb[0].mxu0 %v2700
  %v3035 = vpop.f32.mrb[0].mxu0
  %v3036 = vadd.f32 %v2866, %v3035
  %v3037 = vpop.f32.mrb[0].mxu0
  %3038 = vmatprep.mubr.f32.mxu0 %v2705
  %3039 = vmatmul.mubr.f32.gmra.mrb[0].mxu0 %v2704
  %v3040 = vpop.f32.mrb[0].mxu0
  %v3041 = vadd.f32 %v2871, %v3040
  %v3042 = vpop.f32.mrb[0].mxu0
  %3043 = vmatprep.mubr.f32.mxu0 %v2709
  %3044 = vmatmul.mubr.f32.gmra.mrb[0].mxu0 %v2708
  %v3045 = vpop.f32.mrb[0].mxu0
  %v3046 = vadd.f32 %v2876, %v3045
  %v3047 = vpop.f32.mrb[0].mxu0
  %3048 = vmatprep.mubr.f32.mxu0 %v2713
  %3049 = vmatmul.mubr.f32.gmra.mrb[0].mxu0 %v2712
  %v3050 = vpop.f32.mrb[0].mxu0
  %v3051 = vadd.f32 %v2881, %v3050
  %v3052 = vpop.f32.mrb[0].mxu0
  %3053 = vdwg.mxu0
  %v3054 = vmax.f32 %v2608, %v2951
  %v3055 = vmax.f32 %v2609, %v2956
  %v3056 = vmax.f32 %v2610, %v2961
  %v3057 = vmax.f32 %v2611, %v2966
  %v3058 = vmax.f32 %v2612, %v2971
  %v3059 = vmax.f32 %v2613, %v2976
  %v3060 = vmax.f32 %v2614, %v2981
  %v3061 = vmax.f32 %v2615, %v2986
  %v3062 = vmax.f32 %v2616, %v2991
  %v3063 = vmax.f32 %v2617, %v2996
  %v3064 = vmax.f32 %v2618, %v3001
  %v3065 = vmax.f32 %v2619, %v3006
  %v3066 = vmax.f32 %v2620, %v3011
  %v3067 = vmax.f32 %v2621, %v3016
  %v3068 = vmax.f32 %v2622, %v3021
  %v3069 = vmax.f32 %v2623, %v3026
  %v3070 = vmax.f32 %v2624, %v3031
  %v3071 = vmax.f32 %v2625, %v3036
  %v3072 = vmax.f32 %v2626, %v3041
  %v3073 = vmax.f32 %v2627, %v3046
  %v3074 = vmax.f32 %v2628, %v3051
  %v3075 = vsub.f32 %v3054, 2.0
  %v3076 = vsub.f32 %v3055, 2.0
  %v3077 = vsub.f32 %v3056, 2.0
  %v3078 = vsub.f32 %v3057, 2.0
  %v3079 = vsub.f32 %v3058, 2.0
  %v3080 = vsub.f32 %v3059, 2.0
  %v3081 = vsub.f32 %v3060, 2.0
  %v3082 = vsub.f32 %v3061, 2.0
  %v3083 = vsub.f32 %v3062, 2.0
  %v3084 = vsub.f32 %v3063, 2.0
  %v3085 = vsub.f32 %v3064, 2.0
  %v3086 = vsub.f32 %v3065, 2.0
  %v3087 = vsub.f32 %v3066, 2.0
  %v3088 = vsub.f32 %v3067, 2.0
  %v3089 = vsub.f32 %v3068, 2.0
  %v3090 = vsub.f32 %v3069, 2.0
  %v3091 = vsub.f32 %v3070, 2.0
  %v3092 = vsub.f32 %v3071, 2.0
  %v3093 = vsub.f32 %v3072, 2.0
  %v3094 = vsub.f32 %v3073, 2.0
  %v3095 = vsub.f32 %v3074, 2.0
  %v3096 = vpack.c.bf16 %v3076, %v3075
  %v3097 = vpack.c.bf16 %v3078, %v3077
  %v3098 = vpack.c.bf16 %v3080, %v3079
  %v3099 = vpack.c.bf16 %v3082, %v3081
  %v3100 = vpack.c.bf16 %v3084, %v3083
  %v3101 = vpack.c.bf16 %v3086, %v3085
  %v3102 = vpack.c.bf16 %v3088, %v3087
  %v3103 = vpack.c.bf16 %v3090, %v3089
  %v3104 = vpack.c.bf16 %v3092, %v3091
  %v3105 = vpack.c.bf16 %v3094, %v3093
  %v3106 = vpack.c.bf16 %v3095, %v3095
  %v3107 = vld [vmem:[%s5] sm:$0xff]
  %v3108 = vld [vmem:[%s5 + $0x8] sm:$0xff]
  %v3109 = vld [vmem:[%s5 + $0x10] sm:$0xff]
  %v3110 = vld [vmem:[%s5 + $0x18] sm:$0xff]
  %v3111 = vld [vmem:[%s5 + $0x20] sm:$0xff]
  %v3112 = vld [vmem:[%s5 + $0x28] sm:$0xff]
  %v3113 = vld [vmem:[%s5 + $0x30] sm:$0xff]
  %v3114 = vld [vmem:[%s5 + $0x38] sm:$0xff]
  %v3115 = vld [vmem:[%s5 + $0x40] sm:$0xff]
  %v3116 = vld [vmem:[%s5 + $0x48] sm:$0xff]
  %v3117 = vld [vmem:[%s5 + $0x50] sm:$0xff]
  %v3118 = vld [vmem:[%s5 + $0x58] sm:$0xff]
  %v3119 = vld [vmem:[%s5 + $0x60] sm:$0xff]
  %v3120 = vld [vmem:[%s5 + $0x68] sm:$0xff]
  %v3121 = vld [vmem:[%s5 + $0x70] sm:$0xff]
  %v3122 = vld [vmem:[%s5 + $0x78] sm:$0xff]
  %v3123 = vld [vmem:[%s5 + $0x80] sm:$0xff]
  %v3124 = vld [vmem:[%s5 + $0x88] sm:$0xff]
  %v3125 = vld [vmem:[%s5 + $0x90] sm:$0xff]
  %v3126 = vld [vmem:[%s5 + $0x98] sm:$0xff]
  %v3127 = vld [vmem:[%s5 + $0xa0] sm:$0x11]
  %v3149 = vunpack.c.l.b16 %v3107
  %v3150 = vunpack.c.h.b16 %v3107
  %v3151 = vunpack.c.l.b16 %v3108
  %v3152 = vunpack.c.h.b16 %v3108
  %v3153 = vunpack.c.l.b16 %v3109
  %v3154 = vunpack.c.h.b16 %v3109
  %v3155 = vunpack.c.l.b16 %v3110
  %v3156 = vunpack.c.h.b16 %v3110
  %v3157 = vunpack.c.l.b16 %v3111
  %v3158 = vunpack.c.h.b16 %v3111
  %v3159 = vunpack.c.l.b16 %v3112
  %v3160 = vunpack.c.h.b16 %v3112
  %v3161 = vunpack.c.l.b16 %v3113
  %v3162 = vunpack.c.h.b16 %v3113
  %v3163 = vunpack.c.l.b16 %v3114
  %v3164 = vunpack.c.h.b16 %v3114
  %v3165 = vunpack.c.l.b16 %v3115
  %v3166 = vunpack.c.h.b16 %v3115
  %v3167 = vunpack.c.l.b16 %v3116
  %v3168 = vunpack.c.h.b16 %v3116
  %v3169 = vunpack.c.l.b16 %v3117
  %v3170 = vunpack.c.h.b16 %v3117
  %v3171 = vunpack.c.l.b16 %v3118
  %v3172 = vunpack.c.h.b16 %v3118
  %v3173 = vunpack.c.l.b16 %v3119
  %v3174 = vunpack.c.h.b16 %v3119
  %v3175 = vunpack.c.l.b16 %v3120
  %v3176 = vunpack.c.h.b16 %v3120
  %v3177 = vunpack.c.l.b16 %v3121
  %v3178 = vunpack.c.h.b16 %v3121
  %v3179 = vunpack.c.l.b16 %v3122
  %v3180 = vunpack.c.h.b16 %v3122
  %v3181 = vunpack.c.l.b16 %v3123
  %v3182 = vunpack.c.h.b16 %v3123
  %v3183 = vunpack.c.l.b16 %v3124
  %v3184 = vunpack.c.h.b16 %v3124
  %v3185 = vunpack.c.l.b16 %v3125
  %v3186 = vunpack.c.h.b16 %v3125
  %v3187 = vunpack.c.l.b16 %v3126
  %v3188 = vunpack.c.h.b16 %v3126
  %v3189 = vunpack.c.l.b16 %v3127
  %v3190 = vunpack.c.h.b16 %v3127
  %v3191 = vpack.c.b16 %v3151, %v3149
  %v3192 = vpack.c.b16 %v3152, %v3150
  %v3193 = vpack.c.b16 %v3155, %v3153
  %v3194 = vpack.c.b16 %v3156, %v3154
  %v3195 = vpack.c.b16 %v3159, %v3157
  %v3196 = vpack.c.b16 %v3160, %v3158
  %v3197 = vpack.c.b16 %v3163, %v3161
  %v3198 = vpack.c.b16 %v3164, %v3162
  %v3199 = vpack.c.b16 %v3167, %v3165
  %v3200 = vpack.c.b16 %v3168, %v3166
  %v3201 = vpack.c.b16 %v3171, %v3169
  %v3202 = vpack.c.b16 %v3172, %v3170
  %v3203 = vpack.c.b16 %v3175, %v3173
  %v3204 = vpack.c.b16 %v3176, %v3174
  %v3205 = vpack.c.b16 %v3179, %v3177
  %v3206 = vpack.c.b16 %v3180, %v3178
  %v3207 = vpack.c.b16 %v3183, %v3181
  %v3208 = vpack.c.b16 %v3184, %v3182
  %v3209 = vpack.c.b16 %v3187, %v3185
  %v3210 = vpack.c.b16 %v3188, %v3186
  %v3211 = vpack.c.b16 %v3189, %v3189
  %v3212 = vpack.c.b16 %v3190, %v3190
  %vm3224 = vcmask 277504
  %v3226 = vsel %vm3224, %v3192, 0
  %v3229 = vsel %vm3224, %v3194, 0
  %v3232 = vsel %vm3224, %v3196, 0
  %v3235 = vsel %vm3224, %v3198, 0
  %v3238 = vsel %vm3224, %v3200, 0
  %v3241 = vsel %vm3224, %v3202, 0
  %v3244 = vsel %vm3224, %v3204, 0
  %v3247 = vsel %vm3224, %v3206, 0
  %v3250 = vsel %vm3224, %v3208, 0
  %v3253 = vsel %vm3224, %v3210, 0
  %v3256 = vsel %vm3224, %v3212, 0
  %vm3258 = vcmask 1040384
  %v3260 = vsel %vm3258, %v3106, 0
  %3262 = vmatprep.subr.bf16.mxu0 0
  %3263 = vmatpush1.bf16.msra.mxu0 %v3096
  %3264 = vmatprep.subr.bf16.mxu0 0
  %3265 = vmatpush1.bf16.msra.mxu0 %v3097
  %3266 = vmatprep.subr.bf16.mxu0 0
  %3267 = vmatpush1.bf16.msra.mxu0 %v3098
  %3268 = vmatprep.subr.bf16.mxu0 0
  %3269 = vmatpush1.bf16.msra.mxu0 %v3099
  %3270 = vmatprep.subr.bf16.mxu0 0
  %3271 = vmatpush1.bf16.msra.mxu0 %v3100
  %3272 = vmatprep.subr.bf16.mxu0 0
  %3273 = vmatpush1.bf16.msra.mxu0 %v3101
  %3274 = vmatprep.subr.bf16.mxu0 0
  %3275 = vmatpush1.bf16.msra.mxu0 %v3102
  %3276 = vmatprep.subr.bf16.mxu0 0
  %3277 = vmatpush1.bf16.msra.mxu0 %v3103
  %3278 = vmatprep.subr.bf16.mxu0 0
  %3279 = vmatpush1.bf16.msra.mxu0 %v3104
  %3280 = vmatprep.subr.bf16.mxu0 0
  %3281 = vmatpush1.bf16.msra.mxu0 %v3105
  %3282 = vmatprep.subr.bf16.mxu0 0
  %3283 = vmatpush1.bf16.msra.mxu0 %v3260
  %3284 = vmatprep.subr.bf16.mxu0 0
  %3285 = vmatpush1.bf16.msra.mxu0 0
  %3286 = vmatprep.subr.bf16.mxu0 0
  %3287 = vmatpush1.bf16.msra.mxu0 0
  %3288 = vmatprep.subr.bf16.mxu0 0
  %3289 = vmatpush1.bf16.msra.mxu0 0
  %3290 = vmatprep.subr.bf16.mxu0 0
  %3291 = vmatpush1.bf16.msra.mxu0 0
  %3292 = vmatprep.subr.bf16.mxu0 0
  %3293 = vmatpush1.bf16.msra.mxu0 0
  %3294 = vmatprep.mubr.bf16.mxu0 %v3226
  %3295 = vmatmul.mubr.bf16.gmra.mrb[0].mxu0 %v3191
  %v3296 = vpop.f32.mrb[0].mxu0
  %v3297 = vadd.f32 0.0, %v3296
  %v3298 = vpop.f32.mrb[0].mxu0
  %v3299 = vpop.f32.mrb[0].mxu0
  %v3300 = vadd.f32 0.0, %v3299
  %v3301 = vpop.f32.mrb[0].mxu0
  %3302 = vmatprep.mubr.bf16.mxu0 %v3229
  %3303 = vmatmul.mubr.bf16.gmra.mrb[0].mxu0 %v3193
  %v3304 = vpop.f32.mrb[0].mxu0
  %v3305 = vadd.f32 0.0, %v3304
  %v3306 = vpop.f32.mrb[0].mxu0
  %v3307 = vpop.f32.mrb[0].mxu0
  %v3308 = vadd.f32 0.0, %v3307
  %v3309 = vpop.f32.mrb[0].mxu0
  %3310 = vmatprep.mubr.bf16.mxu0 %v3232
  %3311 = vmatmul.mubr.bf16.gmra.mrb[0].mxu0 %v3195
  %v3312 = vpop.f32.mrb[0].mxu0
  %v3313 = vadd.f32 0.0, %v3312
  %v3314 = vpop.f32.mrb[0].mxu0
  %v3315 = vpop.f32.mrb[0].mxu0
  %v3316 = vadd.f32 0.0, %v3315
  %v3317 = vpop.f32.mrb[0].mxu0
  %3318 = vmatprep.mubr.bf16.mxu0 %v3235
  %3319 = vmatmul.mubr.bf16.gmra.mrb[0].mxu0 %v3197
  %v3320 = vpop.f32.mrb[0].mxu0
  %v3321 = vadd.f32 0.0, %v3320
  %v3322 = vpop.f32.mrb[0].mxu0
  %v3323 = vpop.f32.mrb[0].mxu0
  %v3324 = vadd.f32 0.0, %v3323
  %v3325 = vpop.f32.mrb[0].mxu0
  %3326 = vmatprep.mubr.bf16.mxu0 %v3238
  %3327 = vmatmul.mubr.bf16.gmra.mrb[0].mxu0 %v3199
  %v3328 = vpop.f32.mrb[0].mxu0
  %v3329 = vadd.f32 0.0, %v3328
  %v3330 = vpop.f32.mrb[0].mxu0
  %v3331 = vpop.f32.mrb[0].mxu0
  %v3332 = vadd.f32 0.0, %v3331
  %v3333 = vpop.f32.mrb[0].mxu0
  %3334 = vmatprep.mubr.bf16.mxu0 %v3241
  %3335 = vmatmul.mubr.bf16.gmra.mrb[0].mxu0 %v3201
  %v3336 = vpop.f32.mrb[0].mxu0
  %v3337 = vadd.f32 0.0, %v3336
  %v3338 = vpop.f32.mrb[0].mxu0
  %v3339 = vpop.f32.mrb[0].mxu0
  %v3340 = vadd.f32 0.0, %v3339
  %v3341 = vpop.f32.mrb[0].mxu0
  %3342 = vmatprep.mubr.bf16.mxu0 %v3244
  %3343 = vmatmul.mubr.bf16.gmra.mrb[0].mxu0 %v3203
  %v3344 = vpop.f32.mrb[0].mxu0
  %v3345 = vadd.f32 0.0, %v3344
  %v3346 = vpop.f32.mrb[0].mxu0
  %v3347 = vpop.f32.mrb[0].mxu0
  %v3348 = vadd.f32 0.0, %v3347
  %v3349 = vpop.f32.mrb[0].mxu0
  %3350 = vmatprep.mubr.bf16.mxu0 %v3247
  %3351 = vmatmul.mubr.bf16.gmra.mrb[0].mxu0 %v3205
  %v3352 = vpop.f32.mrb[0].mxu0
  %v3353 = vadd.f32 0.0, %v3352
  %v3354 = vpop.f32.mrb[0].mxu0
  %v3355 = vpop.f32.mrb[0].mxu0
  %v3356 = vadd.f32 0.0, %v3355
  %v3357 = vpop.f32.mrb[0].mxu0
  %3358 = vmatprep.mubr.bf16.mxu0 %v3250
  %3359 = vmatmul.mubr.bf16.gmra.mrb[0].mxu0 %v3207
  %v3360 = vpop.f32.mrb[0].mxu0
  %v3361 = vadd.f32 0.0, %v3360
  %v3362 = vpop.f32.mrb[0].mxu0
  %v3363 = vpop.f32.mrb[0].mxu0
  %v3364 = vadd.f32 0.0, %v3363
  %v3365 = vpop.f32.mrb[0].mxu0
  %3366 = vmatprep.mubr.bf16.mxu0 %v3253
  %3367 = vmatmul.mubr.bf16.gmra.mrb[0].mxu0 %v3209
  %v3368 = vpop.f32.mrb[0].mxu0
  %v3369 = vadd.f32 0.0, %v3368
  %v3370 = vpop.f32.mrb[0].mxu0
  %v3371 = vpop.f32.mrb[0].mxu0
  %v3372 = vadd.f32 0.0, %v3371
  %v3373 = vpop.f32.mrb[0].mxu0
  %3374 = vmatprep.mubr.bf16.mxu0 %v3256
  %3375 = vmatmul.mubr.bf16.gmra.mrb[0].mxu0 %v3211
  %v3376 = vpop.f32.mrb[0].mxu0
  %v3377 = vadd.f32 0.0, %v3376
  %v3378 = vpop.f32.mrb[0].mxu0
  %v3379 = vpop.f32.mrb[0].mxu0
  %v3380 = vpop.f32.mrb[0].mxu0
  %3381 = vdwg.mxu0
  %v3382 = vpack.c.bf16 %v3300, %v3297
  %v3383 = vpack.c.bf16 %v3308, %v3305
  %v3384 = vpack.c.bf16 %v3316, %v3313
  %v3385 = vpack.c.bf16 %v3324, %v3321
  %v3386 = vpack.c.bf16 %v3332, %v3329
  %v3387 = vpack.c.bf16 %v3340, %v3337
  %v3388 = vpack.c.bf16 %v3348, %v3345
  %v3389 = vpack.c.bf16 %v3356, %v3353
  %v3390 = vpack.c.bf16 %v3364, %v3361
  %v3391 = vpack.c.bf16 %v3372, %v3369
  %v3392 = vpack.c.bf16 %v3377, %v3377
  %v3393 = vld [vmem:[%s6] sm:$0xf]
  %v3394 = vld [vmem:[%s6 + $0x4] sm:$0xf]
  %v3395 = vld [vmem:[%s6 + $0x8] sm:$0xf]
  %v3396 = vld [vmem:[%s6 + $0xc] sm:$0xf]
  %s3397 = scalar_lea.vmem %s5, 168
  %v3398 = vld [vmem:[%s3397] sm:$0xff]
  %v3399 = vld [vmem:[%s3397 + $0x8] sm:$0xff]
  %v3400 = vld [vmem:[%s3397 + $0x10] sm:$0xff]
  %v3401 = vld [vmem:[%s3397 + $0x18] sm:$0xff]
  %v3402 = vld [vmem:[%s3397 + $0x20] sm:$0xff]
  %v3403 = vld [vmem:[%s3397 + $0x28] sm:$0xff]
  %v3404 = vld [vmem:[%s3397 + $0x30] sm:$0xff]
  %v3405 = vld [vmem:[%s3397 + $0x38] sm:$0xff]
  %v3406 = vld [vmem:[%s3397 + $0x40] sm:$0xff]
  %v3407 = vld [vmem:[%s3397 + $0x48] sm:$0xff]
  %v3408 = vld [vmem:[%s3397 + $0x50] sm:$0xff]
  %v3409 = vld [vmem:[%s3397 + $0x58] sm:$0xff]
  %v3410 = vld [vmem:[%s3397 + $0x60] sm:$0xff]
  %v3411 = vld [vmem:[%s3397 + $0x68] sm:$0xff]
  %v3412 = vld [vmem:[%s3397 + $0x70] sm:$0xff]
  %v3413 = vld [vmem:[%s3397 + $0x78] sm:$0xff]
  %v3414 = vld [vmem:[%s3397 + $0x80] sm:$0xff]
  %v3415 = vld [vmem:[%s3397 + $0x88] sm:$0xff]
  %v3416 = vld [vmem:[%s3397 + $0x90] sm:$0xff]
  %v3417 = vld [vmem:[%s3397 + $0x98] sm:$0xff]
  %v3418 = vld [vmem:[%s3397 + $0xa0] sm:$0x11]
  %v3440 = vunpack.c.l.b16 %v3398
  %v3441 = vunpack.c.h.b16 %v3398
  %v3442 = vunpack.c.l.b16 %v3399
  %v3443 = vunpack.c.h.b16 %v3399
  %v3444 = vunpack.c.l.b16 %v3400
  %v3445 = vunpack.c.h.b16 %v3400
  %v3446 = vunpack.c.l.b16 %v3401
  %v3447 = vunpack.c.h.b16 %v3401
  %v3448 = vunpack.c.l.b16 %v3402
  %v3449 = vunpack.c.h.b16 %v3402
  %v3450 = vunpack.c.l.b16 %v3403
  %v3451 = vunpack.c.h.b16 %v3403
  %v3452 = vunpack.c.l.b16 %v3404
  %v3453 = vunpack.c.h.b16 %v3404
  %v3454 = vunpack.c.l.b16 %v3405
  %v3455 = vunpack.c.h.b16 %v3405
  %v3456 = vunpack.c.l.b16 %v3406
  %v3457 = vunpack.c.h.b16 %v3406
  %v3458 = vunpack.c.l.b16 %v3407
  %v3459 = vunpack.c.h.b16 %v3407
  %v3460 = vunpack.c.l.b16 %v3408
  %v3461 = vunpack.c.h.b16 %v3408
  %v3462 = vunpack.c.l.b16 %v3409
  %v3463 = vunpack.c.h.b16 %v3409
  %v3464 = vunpack.c.l.b16 %v3410
  %v3465 = vunpack.c.h.b16 %v3410
  %v3466 = vunpack.c.l.b16 %v3411
  %v3467 = vunpack.c.h.b16 %v3411
  %v3468 = vunpack.c.l.b16 %v3412
  %v3469 = vunpack.c.h.b16 %v3412
  %v3470 = vunpack.c.l.b16 %v3413
  %v3471 = vunpack.c.h.b16 %v3413
  %v3472 = vunpack.c.l.b16 %v3414
  %v3473 = vunpack.c.h.b16 %v3414
  %v3474 = vunpack.c.l.b16 %v3415
  %v3475 = vunpack.c.h.b16 %v3415
  %v3476 = vunpack.c.l.b16 %v3416
  %v3477 = vunpack.c.h.b16 %v3416
  %v3478 = vunpack.c.l.b16 %v3417
  %v3479 = vunpack.c.h.b16 %v3417
  %v3480 = vunpack.c.l.b16 %v3418
  %v3481 = vunpack.c.h.b16 %v3418
  %v3482 = vpack.c.b16 %v3442, %v3440
  %v3483 = vpack.c.b16 %v3443, %v3441
  %v3484 = vpack.c.b16 %v3446, %v3444
  %v3485 = vpack.c.b16 %v3447, %v3445
  %v3486 = vpack.c.b16 %v3450, %v3448
  %v3487 = vpack.c.b16 %v3451, %v3449
  %v3488 = vpack.c.b16 %v3454, %v3452
  %v3489 = vpack.c.b16 %v3455, %v3453
  %v3490 = vpack.c.b16 %v3458, %v3456
  %v3491 = vpack.c.b16 %v3459, %v3457
  %v3492 = vpack.c.b16 %v3462, %v3460
  %v3493 = vpack.c.b16 %v3463, %v3461
  %v3494 = vpack.c.b16 %v3466, %v3464
  %v3495 = vpack.c.b16 %v3467, %v3465
  %v3496 = vpack.c.b16 %v3470, %v3468
  %v3497 = vpack.c.b16 %v3471, %v3469
  %v3498 = vpack.c.b16 %v3474, %v3472
  %v3499 = vpack.c.b16 %v3475, %v3473
  %v3500 = vpack.c.b16 %v3478, %v3476
  %v3501 = vpack.c.b16 %v3479, %v3477
  %v3502 = vpack.c.b16 %v3480, %v3480
  %v3503 = vpack.c.b16 %v3481, %v3481
  %v3516 = vsel %vm3224, %v3483, 0
  %v3519 = vsel %vm3224, %v3485, 0
  %v3522 = vsel %vm3224, %v3487, 0
  %v3525 = vsel %vm3224, %v3489, 0
  %v3528 = vsel %vm3224, %v3491, 0
  %v3531 = vsel %vm3224, %v3493, 0
  %v3534 = vsel %vm3224, %v3495, 0
  %v3537 = vsel %vm3224, %v3497, 0
  %v3540 = vsel %vm3224, %v3499, 0
  %v3543 = vsel %vm3224, %v3501, 0
  %v3546 = vsel %vm3224, %v3503, 0
  %3548 = vmatprep.subr.bf16.mxu0 0
  %3549 = vmatpush1.bf16.msra.mxu0 %v3096
  %3550 = vmatprep.subr.bf16.mxu0 0
  %3551 = vmatpush1.bf16.msra.mxu0 %v3097
  %3552 = vmatprep.subr.bf16.mxu0 0
  %3553 = vmatpush1.bf16.msra.mxu0 %v3098
  %3554 = vmatprep.subr.bf16.mxu0 0
  %3555 = vmatpush1.bf16.msra.mxu0 %v3099
  %3556 = vmatprep.subr.bf16.mxu0 0
  %3557 = vmatpush1.bf16.msra.mxu0 %v3100
  %3558 = vmatprep.subr.bf16.mxu0 0
  %3559 = vmatpush1.bf16.msra.mxu0 %v3101
  %3560 = vmatprep.subr.bf16.mxu0 0
  %3561 = vmatpush1.bf16.msra.mxu0 %v3102
  %3562 = vmatprep.subr.bf16.mxu0 0
  %3563 = vmatpush1.bf16.msra.mxu0 %v3103
  %3564 = vmatprep.subr.bf16.mxu0 0
  %3565 = vmatpush1.bf16.msra.mxu0 %v3104
  %3566 = vmatprep.subr.bf16.mxu0 0
  %3567 = vmatpush1.bf16.msra.mxu0 %v3105
  %3568 = vmatprep.subr.bf16.mxu0 0
  %3569 = vmatpush1.bf16.msra.mxu0 %v3260
  %3570 = vmatprep.subr.bf16.mxu0 0
  %3571 = vmatpush1.bf16.msra.mxu0 0
  %3572 = vmatprep.subr.bf16.mxu0 0
  %3573 = vmatpush1.bf16.msra.mxu0 0
  %3574 = vmatprep.subr.bf16.mxu0 0
  %3575 = vmatpush1.bf16.msra.mxu0 0
  %3576 = vmatprep.subr.bf16.mxu0 0
  %3577 = vmatpush1.bf16.msra.mxu0 0
  %3578 = vmatprep.subr.bf16.mxu0 0
  %3579 = vmatpush1.bf16.msra.mxu0 0
  %3580 = vmatprep.mubr.bf16.mxu0 %v3516
  %3581 = vmatmul.mubr.bf16.gmra.mrb[0].mxu0 %v3482
  %v3582 = vpop.f32.mrb[0].mxu0
  %v3583 = vadd.f32 0.0, %v3582
  %v3584 = vpop.f32.mrb[0].mxu0
  %v3585 = vpop.f32.mrb[0].mxu0
  %v3586 = vadd.f32 0.0, %v3585
  %v3587 = vpop.f32.mrb[0].mxu0
  %3588 = vmatprep.mubr.bf16.mxu0 %v3519
  %3589 = vmatmul.mubr.bf16.gmra.mrb[0].mxu0 %v3484
  %v3590 = vpop.f32.mrb[0].mxu0
  %v3591 = vadd.f32 0.0, %v3590
  %v3592 = vpop.f32.mrb[0].mxu0
  %v3593 = vpop.f32.mrb[0].mxu0
  %v3594 = vadd.f32 0.0, %v3593
  %v3595 = vpop.f32.mrb[0].mxu0
  %3596 = vmatprep.mubr.bf16.mxu0 %v3522
  %3597 = vmatmul.mubr.bf16.gmra.mrb[0].mxu0 %v3486
  %v3598 = vpop.f32.mrb[0].mxu0
  %v3599 = vadd.f32 0.0, %v3598
  %v3600 = vpop.f32.mrb[0].mxu0
  %v3601 = vpop.f32.mrb[0].mxu0
  %v3602 = vadd.f32 0.0, %v3601
  %v3603 = vpop.f32.mrb[0].mxu0
  %3604 = vmatprep.mubr.bf16.mxu0 %v3525
  %3605 = vmatmul.mubr.bf16.gmra.mrb[0].mxu0 %v3488
  %v3606 = vpop.f32.mrb[0].mxu0
  %v3607 = vadd.f32 0.0, %v3606
  %v3608 = vpop.f32.mrb[0].mxu0
  %v3609 = vpop.f32.mrb[0].mxu0
  %v3610 = vadd.f32 0.0, %v3609
  %v3611 = vpop.f32.mrb[0].mxu0
  %3612 = vmatprep.mubr.bf16.mxu0 %v3528
  %3613 = vmatmul.mubr.bf16.gmra.mrb[0].mxu0 %v3490
  %v3614 = vpop.f32.mrb[0].mxu0
  %v3615 = vadd.f32 0.0, %v3614
  %v3616 = vpop.f32.mrb[0].mxu0
  %v3617 = vpop.f32.mrb[0].mxu0
  %v3618 = vadd.f32 0.0, %v3617
  %v3619 = vpop.f32.mrb[0].mxu0
  %3620 = vmatprep.mubr.bf16.mxu0 %v3531
  %3621 = vmatmul.mubr.bf16.gmra.mrb[0].mxu0 %v3492
  %v3622 = vpop.f32.mrb[0].mxu0
  %v3623 = vadd.f32 0.0, %v3622
  %v3624 = vpop.f32.mrb[0].mxu0
  %v3625 = vpop.f32.mrb[0].mxu0
  %v3626 = vadd.f32 0.0, %v3625
  %v3627 = vpop.f32.mrb[0].mxu0
  %3628 = vmatprep.mubr.bf16.mxu0 %v3534
  %3629 = vmatmul.mubr.bf16.gmra.mrb[0].mxu0 %v3494
  %v3630 = vpop.f32.mrb[0].mxu0
  %v3631 = vadd.f32 0.0, %v3630
  %v3632 = vpop.f32.mrb[0].mxu0
  %v3633 = vpop.f32.mrb[0].mxu0
  %v3634 = vadd.f32 0.0, %v3633
  %v3635 = vpop.f32.mrb[0].mxu0
  %3636 = vmatprep.mubr.bf16.mxu0 %v3537
  %3637 = vmatmul.mubr.bf16.gmra.mrb[0].mxu0 %v3496
  %v3638 = vpop.f32.mrb[0].mxu0
  %v3639 = vadd.f32 0.0, %v3638
  %v3640 = vpop.f32.mrb[0].mxu0
  %v3641 = vpop.f32.mrb[0].mxu0
  %v3642 = vadd.f32 0.0, %v3641
  %v3643 = vpop.f32.mrb[0].mxu0
  %3644 = vmatprep.mubr.bf16.mxu0 %v3540
  %3645 = vmatmul.mubr.bf16.gmra.mrb[0].mxu0 %v3498
  %v3646 = vpop.f32.mrb[0].mxu0
  %v3647 = vadd.f32 0.0, %v3646
  %v3648 = vpop.f32.mrb[0].mxu0
  %v3649 = vpop.f32.mrb[0].mxu0
  %v3650 = vadd.f32 0.0, %v3649
  %v3651 = vpop.f32.mrb[0].mxu0
  %3652 = vmatprep.mubr.bf16.mxu0 %v3543
  %3653 = vmatmul.mubr.bf16.gmra.mrb[0].mxu0 %v3500
  %v3654 = vpop.f32.mrb[0].mxu0
  %v3655 = vadd.f32 0.0, %v3654
  %v3656 = vpop.f32.mrb[0].mxu0
  %v3657 = vpop.f32.mrb[0].mxu0
  %v3658 = vadd.f32 0.0, %v3657
  %v3659 = vpop.f32.mrb[0].mxu0
  %3660 = vmatprep.mubr.bf16.mxu0 %v3546
  %3661 = vmatmul.mubr.bf16.gmra.mrb[0].mxu0 %v3502
  %v3662 = vpop.f32.mrb[0].mxu0
  %v3663 = vadd.f32 0.0, %v3662
  %v3664 = vpop.f32.mrb[0].mxu0
  %v3665 = vpop.f32.mrb[0].mxu0
  %v3666 = vpop.f32.mrb[0].mxu0
  %3667 = vdwg.mxu0
  %v3668 = vpack.c.bf16 %v3586, %v3583
  %v3669 = vpack.c.bf16 %v3594, %v3591
  %v3670 = vpack.c.bf16 %v3602, %v3599
  %v3671 = vpack.c.bf16 %v3610, %v3607
  %v3672 = vpack.c.bf16 %v3618, %v3615
  %v3673 = vpack.c.bf16 %v3626, %v3623
  %v3674 = vpack.c.bf16 %v3634, %v3631
  %v3675 = vpack.c.bf16 %v3642, %v3639
  %v3676 = vpack.c.bf16 %v3650, %v3647
  %v3677 = vpack.c.bf16 %v3658, %v3655
  %v3678 = vpack.c.bf16 %v3663, %v3663
  %s3679 = scalar_lea.vmem %s6, 16
  %v3680 = vld [vmem:[%s3679] sm:$0xf]
  %v3681 = vld [vmem:[%s3679 + $0x4] sm:$0xf]
  %v3682 = vld [vmem:[%s3679 + $0x8] sm:$0xf]
  %v3683 = vld [vmem:[%s3679 + $0xc] sm:$0xf]
  %v3688 = vunpack.c.l.b16 %v3680
  %v3689 = vunpack.c.l.b16 %v3681
  %v3690 = vunpack.c.l.b16 %v3682
  %v3691 = vunpack.c.l.b16 %v3683
  %v3692 = vpack.c.b16 %v3689, %v3688
  %v3693 = vpack.c.b16 %v3691, %v3690
  %v3697 = vsel %vm647, %v3668, 0
  %v3700 = vsel %vm647, %v3669, 0
  %v3703 = vsel %vm647, %v3670, 0
  %v3706 = vsel %vm647, %v3671, 0
  %v3709 = vsel %vm647, %v3672, 0
  %v3712 = vsel %vm647, %v3673, 0
  %v3715 = vsel %vm647, %v3674, 0
  %v3718 = vsel %vm647, %v3675, 0
  %v3721 = vsel %vm647, %v3676, 0
  %v3724 = vsel %vm647, %v3677, 0
  %v3727 = vsel %vm647, %v3678, 0
  %3729 = vmatprep.subr.bf16.mxu0 0
  %3730 = vmatpush1.bf16.msra.mxu0 %v3692
  %3731 = vmatprep.subr.bf16.mxu0 0
  %3732 = vmatpush1.bf16.msra.mxu0 %v3693
  %3733 = vmatprep.subr.bf16.mxu0 0
  %3734 = vmatpush1.bf16.msra.mxu0 0
  %3735 = vmatprep.subr.bf16.mxu0 0
  %3736 = vmatpush1.bf16.msra.mxu0 0
  %3737 = vmatprep.subr.bf16.mxu0 0
  %3738 = vmatpush1.bf16.msra.mxu0 0
  %3739 = vmatprep.subr.bf16.mxu0 0
  %3740 = vmatpush1.bf16.msra.mxu0 0
  %3741 = vmatprep.subr.bf16.mxu0 0
  %3742 = vmatpush1.bf16.msra.mxu0 0
  %3743 = vmatprep.subr.bf16.mxu0 0
  %3744 = vmatpush1.bf16.msra.mxu0 0
  %3745 = vmatprep.subr.bf16.mxu0 0
  %3746 = vmatpush1.bf16.msra.mxu0 0
  %3747 = vmatprep.subr.bf16.mxu0 0
  %3748 = vmatpush1.bf16.msra.mxu0 0
  %3749 = vmatprep.subr.bf16.mxu0 0
  %3750 = vmatpush1.bf16.msra.mxu0 0
  %3751 = vmatprep.subr.bf16.mxu0 0
  %3752 = vmatpush1.bf16.msra.mxu0 0
  %3753 = vmatprep.subr.bf16.mxu0 0
  %3754 = vmatpush1.bf16.msra.mxu0 0
  %3755 = vmatprep.subr.bf16.mxu0 0
  %3756 = vmatpush1.bf16.msra.mxu0 0
  %3757 = vmatprep.subr.bf16.mxu0 0
  %3758 = vmatpush1.bf16.msra.mxu0 0
  %3759 = vmatprep.subr.bf16.mxu0 0
  %3760 = vmatpush1.bf16.msra.mxu0 0
  %3761 = vmatprep.mubr.bf16.mxu0 0
  %3762 = vmatmul.mubr.bf16.gmra.mrb[0].mxu0 %v3697
  %v3763 = vpop.f32.mrb[0].mxu0
  %v3764 = vadd.f32 0.0, %v3763
  %v3765 = vpop.f32.mrb[0].mxu0
  %v3766 = vpop.f32.mrb[0].mxu0
  %v3767 = vadd.f32 0.0, %v3766
  %v3768 = vpop.f32.mrb[0].mxu0
  %3769 = vmatprep.mubr.bf16.mxu0 0
  %3770 = vmatmul.mubr.bf16.gmra.mrb[0].mxu0 %v3700
  %v3771 = vpop.f32.mrb[0].mxu0
  %v3772 = vadd.f32 0.0, %v3771
  %v3773 = vpop.f32.mrb[0].mxu0
  %v3774 = vpop.f32.mrb[0].mxu0
  %v3775 = vadd.f32 0.0, %v3774
  %v3776 = vpop.f32.mrb[0].mxu0
  %3777 = vmatprep.mubr.bf16.mxu0 0
  %3778 = vmatmul.mubr.bf16.gmra.mrb[0].mxu0 %v3703
  %v3779 = vpop.f32.mrb[0].mxu0
  %v3780 = vadd.f32 0.0, %v3779
  %v3781 = vpop.f32.mrb[0].mxu0
  %v3782 = vpop.f32.mrb[0].mxu0
  %v3783 = vadd.f32 0.0, %v3782
  %v3784 = vpop.f32.mrb[0].mxu0
  %3785 = vmatprep.mubr.bf16.mxu0 0
  %3786 = vmatmul.mubr.bf16.gmra.mrb[0].mxu0 %v3706
  %v3787 = vpop.f32.mrb[0].mxu0
  %v3788 = vadd.f32 0.0, %v3787
  %v3789 = vpop.f32.mrb[0].mxu0
  %v3790 = vpop.f32.mrb[0].mxu0
  %v3791 = vadd.f32 0.0, %v3790
  %v3792 = vpop.f32.mrb[0].mxu0
  %3793 = vmatprep.mubr.bf16.mxu0 0
  %3794 = vmatmul.mubr.bf16.gmra.mrb[0].mxu0 %v3709
  %v3795 = vpop.f32.mrb[0].mxu0
  %v3796 = vadd.f32 0.0, %v3795
  %v3797 = vpop.f32.mrb[0].mxu0
  %v3798 = vpop.f32.mrb[0].mxu0
  %v3799 = vadd.f32 0.0, %v3798
  %v3800 = vpop.f32.mrb[0].mxu0
  %3801 = vmatprep.mubr.bf16.mxu0 0
  %3802 = vmatmul.mubr.bf16.gmra.mrb[0].mxu0 %v3712
  %v3803 = vpop.f32.mrb[0].mxu0
  %v3804 = vadd.f32 0.0, %v3803
  %v3805 = vpop.f32.mrb[0].mxu0
  %v3806 = vpop.f32.mrb[0].mxu0
  %v3807 = vadd.f32 0.0, %v3806
  %v3808 = vpop.f32.mrb[0].mxu0
  %3809 = vmatprep.mubr.bf16.mxu0 0
  %3810 = vmatmul.mubr.bf16.gmra.mrb[0].mxu0 %v3715
  %v3811 = vpop.f32.mrb[0].mxu0
  %v3812 = vadd.f32 0.0, %v3811
  %v3813 = vpop.f32.mrb[0].mxu0
  %v3814 = vpop.f32.mrb[0].mxu0
  %v3815 = vadd.f32 0.0, %v3814
  %v3816 = vpop.f32.mrb[0].mxu0
  %3817 = vmatprep.mubr.bf16.mxu0 0
  %3818 = vmatmul.mubr.bf16.gmra.mrb[0].mxu0 %v3718
  %v3819 = vpop.f32.mrb[0].mxu0
  %v3820 = vadd.f32 0.0, %v3819
  %v3821 = vpop.f32.mrb[0].mxu0
  %v3822 = vpop.f32.mrb[0].mxu0
  %v3823 = vadd.f32 0.0, %v3822
  %v3824 = vpop.f32.mrb[0].mxu0
  %3825 = vmatprep.mubr.bf16.mxu0 0
  %3826 = vmatmul.mubr.bf16.gmra.mrb[0].mxu0 %v3721
  %v3827 = vpop.f32.mrb[0].mxu0
  %v3828 = vadd.f32 0.0, %v3827
  %v3829 = vpop.f32.mrb[0].mxu0
  %v3830 = vpop.f32.mrb[0].mxu0
  %v3831 = vadd.f32 0.0, %v3830
  %v3832 = vpop.f32.mrb[0].mxu0
  %3833 = vmatprep.mubr.bf16.mxu0 0
  %3834 = vmatmul.mubr.bf16.gmra.mrb[0].mxu0 %v3724
  %v3835 = vpop.f32.mrb[0].mxu0
  %v3836 = vadd.f32 0.0, %v3835
  %v3837 = vpop.f32.mrb[0].mxu0
  %v3838 = vpop.f32.mrb[0].mxu0
  %v3839 = vadd.f32 0.0, %v3838
  %v3840 = vpop.f32.mrb[0].mxu0
  %3841 = vmatprep.mubr.bf16.mxu0 0
  %3842 = vmatmul.mubr.bf16.gmra.mrb[0].mxu0 %v3727
  %v3843 = vpop.f32.mrb[0].mxu0
  %v3844 = vadd.f32 0.0, %v3843
  %v3845 = vpop.f32.mrb[0].mxu0
  %v3846 = vpop.f32.mrb[0].mxu0
  %v3847 = vpop.f32.mrb[0].mxu0
  %3848 = vdwg.mxu0
  %v3853 = vunpack.c.l.b16 %v3393
  %v3854 = vunpack.c.l.b16 %v3394
  %v3855 = vunpack.c.l.b16 %v3395
  %v3856 = vunpack.c.l.b16 %v3396
  %v3857 = vpack.c.b16 %v3854, %v3853
  %v3858 = vpack.c.b16 %v3856, %v3855
  %v3862 = vsel %vm647, %v3382, 0
  %v3865 = vsel %vm647, %v3383, 0
  %v3868 = vsel %vm647, %v3384, 0
  %v3871 = vsel %vm647, %v3385, 0
  %v3874 = vsel %vm647, %v3386, 0
  %v3877 = vsel %vm647, %v3387, 0
  %v3880 = vsel %vm647, %v3388, 0
  %v3883 = vsel %vm647, %v3389, 0
  %v3886 = vsel %vm647, %v3390, 0
  %v3889 = vsel %vm647, %v3391, 0
  %v3892 = vsel %vm647, %v3392, 0
  %3894 = vmatprep.subr.bf16.mxu0 0
  %3895 = vmatpush1.bf16.msra.mxu0 %v3857
  %3896 = vmatprep.subr.bf16.mxu0 0
  %3897 = vmatpush1.bf16.msra.mxu0 %v3858
  %3898 = vmatprep.subr.bf16.mxu0 0
  %3899 = vmatpush1.bf16.msra.mxu0 0
  %3900 = vmatprep.subr.bf16.mxu0 0
  %3901 = vmatpush1.bf16.msra.mxu0 0
  %3902 = vmatprep.subr.bf16.mxu0 0
  %3903 = vmatpush1.bf16.msra.mxu0 0
  %3904 = vmatprep.subr.bf16.mxu0 0
  %3905 = vmatpush1.bf16.msra.mxu0 0
  %3906 = vmatprep.subr.bf16.mxu0 0
  %3907 = vmatpush1.bf16.msra.mxu0 0
  %3908 = vmatprep.subr.bf16.mxu0 0
  %3909 = vmatpush1.bf16.msra.mxu0 0
  %3910 = vmatprep.subr.bf16.mxu0 0
  %3911 = vmatpush1.bf16.msra.mxu0 0
  %3912 = vmatprep.subr.bf16.mxu0 0
  %3913 = vmatpush1.bf16.msra.mxu0 0
  %3914 = vmatprep.subr.bf16.mxu0 0
  %3915 = vmatpush1.bf16.msra.mxu0 0
  %3916 = vmatprep.subr.bf16.mxu0 0
  %3917 = vmatpush1.bf16.msra.mxu0 0
  %3918 = vmatprep.subr.bf16.mxu0 0
  %3919 = vmatpush1.bf16.msra.mxu0 0
  %3920 = vmatprep.subr.bf16.mxu0 0
  %3921 = vmatpush1.bf16.msra.mxu0 0
  %3922 = vmatprep.subr.bf16.mxu0 0
  %3923 = vmatpush1.bf16.msra.mxu0 0
  %3924 = vmatprep.subr.bf16.mxu0 0
  %3925 = vmatpush1.bf16.msra.mxu0 0
  %3926 = vmatprep.mubr.bf16.mxu0 0
  %3927 = vmatmul.mubr.bf16.gmra.mrb[0].mxu0 %v3862
  %v3928 = vpop.f32.mrb[0].mxu0
  %v3929 = vadd.f32 %v3764, %v3928
  %v3930 = vpop.f32.mrb[0].mxu0
  %v3931 = vpop.f32.mrb[0].mxu0
  %v3932 = vadd.f32 %v3767, %v3931
  %v3933 = vpop.f32.mrb[0].mxu0
  %3934 = vmatprep.mubr.bf16.mxu0 0
  %3935 = vmatmul.mubr.bf16.gmra.mrb[0].mxu0 %v3865
  %v3936 = vpop.f32.mrb[0].mxu0
  %v3937 = vadd.f32 %v3772, %v3936
  %v3938 = vpop.f32.mrb[0].mxu0
  %v3939 = vpop.f32.mrb[0].mxu0
  %v3940 = vadd.f32 %v3775, %v3939
  %v3941 = vpop.f32.mrb[0].mxu0
  %3942 = vmatprep.mubr.bf16.mxu0 0
  %3943 = vmatmul.mubr.bf16.gmra.mrb[0].mxu0 %v3868
  %v3944 = vpop.f32.mrb[0].mxu0
  %v3945 = vadd.f32 %v3780, %v3944
  %v3946 = vpop.f32.mrb[0].mxu0
  %v3947 = vpop.f32.mrb[0].mxu0
  %v3948 = vadd.f32 %v3783, %v3947
  %v3949 = vpop.f32.mrb[0].mxu0
  %3950 = vmatprep.mubr.bf16.mxu0 0
  %3951 = vmatmul.mubr.bf16.gmra.mrb[0].mxu0 %v3871
  %v3952 = vpop.f32.mrb[0].mxu0
  %v3953 = vadd.f32 %v3788, %v3952
  %v3954 = vpop.f32.mrb[0].mxu0
  %v3955 = vpop.f32.mrb[0].mxu0
  %v3956 = vadd.f32 %v3791, %v3955
  %v3957 = vpop.f32.mrb[0].mxu0
  %3958 = vmatprep.mubr.bf16.mxu0 0
  %3959 = vmatmul.mubr.bf16.gmra.mrb[0].mxu0 %v3874
  %v3960 = vpop.f32.mrb[0].mxu0
  %v3961 = vadd.f32 %v3796, %v3960
  %v3962 = vpop.f32.mrb[0].mxu0
  %v3963 = vpop.f32.mrb[0].mxu0
  %v3964 = vadd.f32 %v3799, %v3963
  %v3965 = vpop.f32.mrb[0].mxu0
  %3966 = vmatprep.mubr.bf16.mxu0 0
  %3967 = vmatmul.mubr.bf16.gmra.mrb[0].mxu0 %v3877
  %v3968 = vpop.f32.mrb[0].mxu0
  %v3969 = vadd.f32 %v3804, %v3968
  %v3970 = vpop.f32.mrb[0].mxu0
  %v3971 = vpop.f32.mrb[0].mxu0
  %v3972 = vadd.f32 %v3807, %v3971
  %v3973 = vpop.f32.mrb[0].mxu0
  %3974 = vmatprep.mubr.bf16.mxu0 0
  %3975 = vmatmul.mubr.bf16.gmra.mrb[0].mxu0 %v3880
  %v3976 = vpop.f32.mrb[0].mxu0
  %v3977 = vadd.f32 %v3812, %v3976
  %v3978 = vpop.f32.mrb[0].mxu0
  %v3979 = vpop.f32.mrb[0].mxu0
  %v3980 = vadd.f32 %v3815, %v3979
  %v3981 = vpop.f32.mrb[0].mxu0
  %3982 = vmatprep.mubr.bf16.mxu0 0
  %3983 = vmatmul.mubr.bf16.gmra.mrb[0].mxu0 %v3883
  %v3984 = vpop.f32.mrb[0].mxu0
  %v3985 = vadd.f32 %v3820, %v3984
  %v3986 = vpop.f32.mrb[0].mxu0
  %v3987 = vpop.f32.mrb[0].mxu0
  %v3988 = vadd.f32 %v3823, %v3987
  %v3989 = vpop.f32.mrb[0].mxu0
  %3990 = vmatprep.mubr.bf16.mxu0 0
  %3991 = vmatmul.mubr.bf16.gmra.mrb[0].mxu0 %v3886
  %v3992 = vpop.f32.mrb[0].mxu0
  %v3993 = vadd.f32 %v3828, %v3992
  %v3994 = vpop.f32.mrb[0].mxu0
  %v3995 = vpop.f32.mrb[0].mxu0
  %v3996 = vadd.f32 %v3831, %v3995
  %v3997 = vpop.f32.mrb[0].mxu0
  %3998 = vmatprep.mubr.bf16.mxu0 0
  %3999 = vmatmul.mubr.bf16.gmra.mrb[0].mxu0 %v3889
  %v4000 = vpop.f32.mrb[0].mxu0
  %v4001 = vadd.f32 %v3836, %v4000
  %v4002 = vpop.f32.mrb[0].mxu0
  %v4003 = vpop.f32.mrb[0].mxu0
  %v4004 = vadd.f32 %v3839, %v4003
  %v4005 = vpop.f32.mrb[0].mxu0
  %4006 = vmatprep.mubr.bf16.mxu0 0
  %4007 = vmatmul.mubr.bf16.gmra.mrb[0].mxu0 %v3892
  %v4008 = vpop.f32.mrb[0].mxu0
  %v4009 = vadd.f32 %v3844, %v4008
  %v4010 = vpop.f32.mrb[0].mxu0
  %v4011 = vpop.f32.mrb[0].mxu0
  %v4012 = vpop.f32.mrb[0].mxu0
  %4013 = vdwg.mxu0
  %s4014 = scalar_lea.vmem %s5, 336
  %v4015 = vld [vmem:[%s4014] sm:$0xff]
  %v4016 = vld [vmem:[%s4014 + $0x8] sm:$0xff]
  %v4017 = vld [vmem:[%s4014 + $0x10] sm:$0xff]
  %v4018 = vld [vmem:[%s4014 + $0x18] sm:$0xff]
  %v4019 = vld [vmem:[%s4014 + $0x20] sm:$0xff]
  %v4020 = vld [vmem:[%s4014 + $0x28] sm:$0xff]
  %v4021 = vld [vmem:[%s4014 + $0x30] sm:$0xff]
  %v4022 = vld [vmem:[%s4014 + $0x38] sm:$0xff]
  %v4023 = vld [vmem:[%s4014 + $0x40] sm:$0xff]
  %v4024 = vld [vmem:[%s4014 + $0x48] sm:$0xff]
  %v4025 = vld [vmem:[%s4014 + $0x50] sm:$0xff]
  %v4026 = vld [vmem:[%s4014 + $0x58] sm:$0xff]
  %v4027 = vld [vmem:[%s4014 + $0x60] sm:$0xff]
  %v4028 = vld [vmem:[%s4014 + $0x68] sm:$0xff]
  %v4029 = vld [vmem:[%s4014 + $0x70] sm:$0xff]
  %v4030 = vld [vmem:[%s4014 + $0x78] sm:$0xff]
  %v4031 = vld [vmem:[%s4014 + $0x80] sm:$0xff]
  %v4032 = vld [vmem:[%s4014 + $0x88] sm:$0xff]
  %v4033 = vld [vmem:[%s4014 + $0x90] sm:$0xff]
  %v4034 = vld [vmem:[%s4014 + $0x98] sm:$0xff]
  %v4035 = vld [vmem:[%s4014 + $0xa0] sm:$0x11]
  %v4057 = vunpack.c.l.b16 %v4015
  %v4058 = vunpack.c.h.b16 %v4015
  %v4059 = vunpack.c.l.b16 %v4016
  %v4060 = vunpack.c.h.b16 %v4016
  %v4061 = vunpack.c.l.b16 %v4017
  %v4062 = vunpack.c.h.b16 %v4017
  %v4063 = vunpack.c.l.b16 %v4018
  %v4064 = vunpack.c.h.b16 %v4018
  %v4065 = vunpack.c.l.b16 %v4019
  %v4066 = vunpack.c.h.b16 %v4019
  %v4067 = vunpack.c.l.b16 %v4020
  %v4068 = vunpack.c.h.b16 %v4020
  %v4069 = vunpack.c.l.b16 %v4021
  %v4070 = vunpack.c.h.b16 %v4021
  %v4071 = vunpack.c.l.b16 %v4022
  %v4072 = vunpack.c.h.b16 %v4022
  %v4073 = vunpack.c.l.b16 %v4023
  %v4074 = vunpack.c.h.b16 %v4023
  %v4075 = vunpack.c.l.b16 %v4024
  %v4076 = vunpack.c.h.b16 %v4024
  %v4077 = vunpack.c.l.b16 %v4025
  %v4078 = vunpack.c.h.b16 %v4025
  %v4079 = vunpack.c.l.b16 %v4026
  %v4080 = vunpack.c.h.b16 %v4026
  %v4081 = vunpack.c.l.b16 %v4027
  %v4082 = vunpack.c.h.b16 %v4027
  %v4083 = vunpack.c.l.b16 %v4028
  %v4084 = vunpack.c.h.b16 %v4028
  %v4085 = vunpack.c.l.b16 %v4029
  %v4086 = vunpack.c.h.b16 %v4029
  %v4087 = vunpack.c.l.b16 %v4030
  %v4088 = vunpack.c.h.b16 %v4030
  %v4089 = vunpack.c.l.b16 %v4031
  %v4090 = vunpack.c.h.b16 %v4031
  %v4091 = vunpack.c.l.b16 %v4032
  %v4092 = vunpack.c.h.b16 %v4032
  %v4093 = vunpack.c.l.b16 %v4033
  %v4094 = vunpack.c.h.b16 %v4033
  %v4095 = vunpack.c.l.b16 %v4034
  %v4096 = vunpack.c.h.b16 %v4034
  %v4097 = vunpack.c.l.b16 %v4035
  %v4098 = vunpack.c.h.b16 %v4035
  %v4099 = vpack.c.b16 %v4059, %v4057
  %v4100 = vpack.c.b16 %v4060, %v4058
  %v4101 = vpack.c.b16 %v4063, %v4061
  %v4102 = vpack.c.b16 %v4064, %v4062
  %v4103 = vpack.c.b16 %v4067, %v4065
  %v4104 = vpack.c.b16 %v4068, %v4066
  %v4105 = vpack.c.b16 %v4071, %v4069
  %v4106 = vpack.c.b16 %v4072, %v4070
  %v4107 = vpack.c.b16 %v4075, %v4073
  %v4108 = vpack.c.b16 %v4076, %v4074
  %v4109 = vpack.c.b16 %v4079, %v4077
  %v4110 = vpack.c.b16 %v4080, %v4078
  %v4111 = vpack.c.b16 %v4083, %v4081
  %v4112 = vpack.c.b16 %v4084, %v4082
  %v4113 = vpack.c.b16 %v4087, %v4085
  %v4114 = vpack.c.b16 %v4088, %v4086
  %v4115 = vpack.c.b16 %v4091, %v4089
  %v4116 = vpack.c.b16 %v4092, %v4090
  %v4117 = vpack.c.b16 %v4095, %v4093
  %v4118 = vpack.c.b16 %v4096, %v4094
  %v4119 = vpack.c.b16 %v4097, %v4097
  %v4120 = vpack.c.b16 %v4098, %v4098
  %v4133 = vsel %vm3224, %v4100, 0
  %v4136 = vsel %vm3224, %v4102, 0
  %v4139 = vsel %vm3224, %v4104, 0
  %v4142 = vsel %vm3224, %v4106, 0
  %v4145 = vsel %vm3224, %v4108, 0
  %v4148 = vsel %vm3224, %v4110, 0
  %v4151 = vsel %vm3224, %v4112, 0
  %v4154 = vsel %vm3224, %v4114, 0
  %v4157 = vsel %vm3224, %v4116, 0
  %v4160 = vsel %vm3224, %v4118, 0
  %v4163 = vsel %vm3224, %v4120, 0
  %4165 = vmatprep.subr.bf16.mxu0 0
  %4166 = vmatpush1.bf16.msra.mxu0 %v3096
  %4167 = vmatprep.subr.bf16.mxu0 0
  %4168 = vmatpush1.bf16.msra.mxu0 %v3097
  %4169 = vmatprep.subr.bf16.mxu0 0
  %4170 = vmatpush1.bf16.msra.mxu0 %v3098
  %4171 = vmatprep.subr.bf16.mxu0 0
  %4172 = vmatpush1.bf16.msra.mxu0 %v3099
  %4173 = vmatprep.subr.bf16.mxu0 0
  %4174 = vmatpush1.bf16.msra.mxu0 %v3100
  %4175 = vmatprep.subr.bf16.mxu0 0
  %4176 = vmatpush1.bf16.msra.mxu0 %v3101
  %4177 = vmatprep.subr.bf16.mxu0 0
  %4178 = vmatpush1.bf16.msra.mxu0 %v3102
  %4179 = vmatprep.subr.bf16.mxu0 0
  %4180 = vmatpush1.bf16.msra.mxu0 %v3103
  %4181 = vmatprep.subr.bf16.mxu0 0
  %4182 = vmatpush1.bf16.msra.mxu0 %v3104
  %4183 = vmatprep.subr.bf16.mxu0 0
  %4184 = vmatpush1.bf16.msra.mxu0 %v3105
  %4185 = vmatprep.subr.bf16.mxu0 0
  %4186 = vmatpush1.bf16.msra.mxu0 %v3260
  %4187 = vmatprep.subr.bf16.mxu0 0
  %4188 = vmatpush1.bf16.msra.mxu0 0
  %4189 = vmatprep.subr.bf16.mxu0 0
  %4190 = vmatpush1.bf16.msra.mxu0 0
  %4191 = vmatprep.subr.bf16.mxu0 0
  %4192 = vmatpush1.bf16.msra.mxu0 0
  %4193 = vmatprep.subr.bf16.mxu0 0
  %4194 = vmatpush1.bf16.msra.mxu0 0
  %4195 = vmatprep.subr.bf16.mxu0 0
  %4196 = vmatpush1.bf16.msra.mxu0 0
  %4197 = vmatprep.mubr.bf16.mxu0 %v4133
  %4198 = vmatmul.mubr.bf16.gmra.mrb[0].mxu0 %v4099
  %v4199 = vpop.f32.mrb[0].mxu0
  %v4200 = vadd.f32 0.0, %v4199
  %v4201 = vpop.f32.mrb[0].mxu0
  %v4202 = vpop.f32.mrb[0].mxu0
  %v4203 = vadd.f32 0.0, %v4202
  %v4204 = vpop.f32.mrb[0].mxu0
  %4205 = vmatprep.mubr.bf16.mxu0 %v4136
  %4206 = vmatmul.mubr.bf16.gmra.mrb[0].mxu0 %v4101
  %v4207 = vpop.f32.mrb[0].mxu0
  %v4208 = vadd.f32 0.0, %v4207
  %v4209 = vpop.f32.mrb[0].mxu0
  %v4210 = vpop.f32.mrb[0].mxu0
  %v4211 = vadd.f32 0.0, %v4210
  %v4212 = vpop.f32.mrb[0].mxu0
  %4213 = vmatprep.mubr.bf16.mxu0 %v4139
  %4214 = vmatmul.mubr.bf16.gmra.mrb[0].mxu0 %v4103
  %v4215 = vpop.f32.mrb[0].mxu0
  %v4216 = vadd.f32 0.0, %v4215
  %v4217 = vpop.f32.mrb[0].mxu0
  %v4218 = vpop.f32.mrb[0].mxu0
  %v4219 = vadd.f32 0.0, %v4218
  %v4220 = vpop.f32.mrb[0].mxu0
  %4221 = vmatprep.mubr.bf16.mxu0 %v4142
  %4222 = vmatmul.mubr.bf16.gmra.mrb[0].mxu0 %v4105
  %v4223 = vpop.f32.mrb[0].mxu0
  %v4224 = vadd.f32 0.0, %v4223
  %v4225 = vpop.f32.mrb[0].mxu0
  %v4226 = vpop.f32.mrb[0].mxu0
  %v4227 = vadd.f32 0.0, %v4226
  %v4228 = vpop.f32.mrb[0].mxu0
  %4229 = vmatprep.mubr.bf16.mxu0 %v4145
  %4230 = vmatmul.mubr.bf16.gmra.mrb[0].mxu0 %v4107
  %v4231 = vpop.f32.mrb[0].mxu0
  %v4232 = vadd.f32 0.0, %v4231
  %v4233 = vpop.f32.mrb[0].mxu0
  %v4234 = vpop.f32.mrb[0].mxu0
  %v4235 = vadd.f32 0.0, %v4234
  %v4236 = vpop.f32.mrb[0].mxu0
  %4237 = vmatprep.mubr.bf16.mxu0 %v4148
  %4238 = vmatmul.mubr.bf16.gmra.mrb[0].mxu0 %v4109
  %v4239 = vpop.f32.mrb[0].mxu0
  %v4240 = vadd.f32 0.0, %v4239
  %v4241 = vpop.f32.mrb[0].mxu0
  %v4242 = vpop.f32.mrb[0].mxu0
  %v4243 = vadd.f32 0.0, %v4242
  %v4244 = vpop.f32.mrb[0].mxu0
  %4245 = vmatprep.mubr.bf16.mxu0 %v4151
  %4246 = vmatmul.mubr.bf16.gmra.mrb[0].mxu0 %v4111
  %v4247 = vpop.f32.mrb[0].mxu0
  %v4248 = vadd.f32 0.0, %v4247
  %v4249 = vpop.f32.mrb[0].mxu0
  %v4250 = vpop.f32.mrb[0].mxu0
  %v4251 = vadd.f32 0.0, %v4250
  %v4252 = vpop.f32.mrb[0].mxu0
  %4253 = vmatprep.mubr.bf16.mxu0 %v4154
  %4254 = vmatmul.mubr.bf16.gmra.mrb[0].mxu0 %v4113
  %v4255 = vpop.f32.mrb[0].mxu0
  %v4256 = vadd.f32 0.0, %v4255
  %v4257 = vpop.f32.mrb[0].mxu0
  %v4258 = vpop.f32.mrb[0].mxu0
  %v4259 = vadd.f32 0.0, %v4258
  %v4260 = vpop.f32.mrb[0].mxu0
  %4261 = vmatprep.mubr.bf16.mxu0 %v4157
  %4262 = vmatmul.mubr.bf16.gmra.mrb[0].mxu0 %v4115
  %v4263 = vpop.f32.mrb[0].mxu0
  %v4264 = vadd.f32 0.0, %v4263
  %v4265 = vpop.f32.mrb[0].mxu0
  %v4266 = vpop.f32.mrb[0].mxu0
  %v4267 = vadd.f32 0.0, %v4266
  %v4268 = vpop.f32.mrb[0].mxu0
  %4269 = vmatprep.mubr.bf16.mxu0 %v4160
  %4270 = vmatmul.mubr.bf16.gmra.mrb[0].mxu0 %v4117
  %v4271 = vpop.f32.mrb[0].mxu0
  %v4272 = vadd.f32 0.0, %v4271
  %v4273 = vpop.f32.mrb[0].mxu0
  %v4274 = vpop.f32.mrb[0].mxu0
  %v4275 = vadd.f32 0.0, %v4274
  %v4276 = vpop.f32.mrb[0].mxu0
  %4277 = vmatprep.mubr.bf16.mxu0 %v4163
  %4278 = vmatmul.mubr.bf16.gmra.mrb[0].mxu0 %v4119
  %v4279 = vpop.f32.mrb[0].mxu0
  %v4280 = vadd.f32 0.0, %v4279
  %v4281 = vpop.f32.mrb[0].mxu0
  %v4282 = vpop.f32.mrb[0].mxu0
  %v4283 = vpop.f32.mrb[0].mxu0
  %4284 = vdwg.mxu0
  %v4285 = vpack.c.bf16 %v4203, %v4200
  %v4286 = vpack.c.bf16 %v4211, %v4208
  %v4287 = vpack.c.bf16 %v4219, %v4216
  %v4288 = vpack.c.bf16 %v4227, %v4224
  %v4289 = vpack.c.bf16 %v4235, %v4232
  %v4290 = vpack.c.bf16 %v4243, %v4240
  %v4291 = vpack.c.bf16 %v4251, %v4248
  %v4292 = vpack.c.bf16 %v4259, %v4256
  %v4293 = vpack.c.bf16 %v4267, %v4264
  %v4294 = vpack.c.bf16 %v4275, %v4272
  %v4295 = vpack.c.bf16 %v4280, %v4280
  %s4296 = scalar_lea.vmem %s6, 32
  %v4297 = vld [vmem:[%s4296] sm:$0xf]
  %v4298 = vld [vmem:[%s4296 + $0x4] sm:$0xf]
  %v4299 = vld [vmem:[%s4296 + $0x8] sm:$0xf]
  %v4300 = vld [vmem:[%s4296 + $0xc] sm:$0xf]
  %v4305 = vunpack.c.l.b16 %v4297
  %v4306 = vunpack.c.l.b16 %v4298
  %v4307 = vunpack.c.l.b16 %v4299
  %v4308 = vunpack.c.l.b16 %v4300
  %v4309 = vpack.c.b16 %v4306, %v4305
  %v4310 = vpack.c.b16 %v4308, %v4307
  %v4314 = vsel %vm647, %v4285, 0
  %v4317 = vsel %vm647, %v4286, 0
  %v4320 = vsel %vm647, %v4287, 0
  %v4323 = vsel %vm647, %v4288, 0
  %v4326 = vsel %vm647, %v4289, 0
  %v4329 = vsel %vm647, %v4290, 0
  %v4332 = vsel %vm647, %v4291, 0
  %v4335 = vsel %vm647, %v4292, 0
  %v4338 = vsel %vm647, %v4293, 0
  %v4341 = vsel %vm647, %v4294, 0
  %v4344 = vsel %vm647, %v4295, 0
  %4346 = vmatprep.subr.bf16.mxu0 0
  %4347 = vmatpush1.bf16.msra.mxu0 %v4309
  %4348 = vmatprep.subr.bf16.mxu0 0
  %4349 = vmatpush1.bf16.msra.mxu0 %v4310
  %4350 = vmatprep.subr.bf16.mxu0 0
  %4351 = vmatpush1.bf16.msra.mxu0 0
  %4352 = vmatprep.subr.bf16.mxu0 0
  %4353 = vmatpush1.bf16.msra.mxu0 0
  %4354 = vmatprep.subr.bf16.mxu0 0
  %4355 = vmatpush1.bf16.msra.mxu0 0
  %4356 = vmatprep.subr.bf16.mxu0 0
  %4357 = vmatpush1.bf16.msra.mxu0 0
  %4358 = vmatprep.subr.bf16.mxu0 0
  %4359 = vmatpush1.bf16.msra.mxu0 0
  %4360 = vmatprep.subr.bf16.mxu0 0
  %4361 = vmatpush1.bf16.msra.mxu0 0
  %4362 = vmatprep.subr.bf16.mxu0 0
  %4363 = vmatpush1.bf16.msra.mxu0 0
  %4364 = vmatprep.subr.bf16.mxu0 0
  %4365 = vmatpush1.bf16.msra.mxu0 0
  %4366 = vmatprep.subr.bf16.mxu0 0
  %4367 = vmatpush1.bf16.msra.mxu0 0
  %4368 = vmatprep.subr.bf16.mxu0 0
  %4369 = vmatpush1.bf16.msra.mxu0 0
  %4370 = vmatprep.subr.bf16.mxu0 0
  %4371 = vmatpush1.bf16.msra.mxu0 0
  %4372 = vmatprep.subr.bf16.mxu0 0
  %4373 = vmatpush1.bf16.msra.mxu0 0
  %4374 = vmatprep.subr.bf16.mxu0 0
  %4375 = vmatpush1.bf16.msra.mxu0 0
  %4376 = vmatprep.subr.bf16.mxu0 0
  %4377 = vmatpush1.bf16.msra.mxu0 0
  %4378 = vmatprep.mubr.bf16.mxu0 0
  %4379 = vmatmul.mubr.bf16.gmra.mrb[0].mxu0 %v4314
  %v4380 = vpop.f32.mrb[0].mxu0
  %v4381 = vadd.f32 0.0, %v4380
  %v4382 = vpop.f32.mrb[0].mxu0
  %v4383 = vpop.f32.mrb[0].mxu0
  %v4384 = vadd.f32 0.0, %v4383
  %v4385 = vpop.f32.mrb[0].mxu0
  %4386 = vmatprep.mubr.bf16.mxu0 0
  %4387 = vmatmul.mubr.bf16.gmra.mrb[0].mxu0 %v4317
  %v4388 = vpop.f32.mrb[0].mxu0
  %v4389 = vadd.f32 0.0, %v4388
  %v4390 = vpop.f32.mrb[0].mxu0
  %v4391 = vpop.f32.mrb[0].mxu0
  %v4392 = vadd.f32 0.0, %v4391
  %v4393 = vpop.f32.mrb[0].mxu0
  %4394 = vmatprep.mubr.bf16.mxu0 0
  %4395 = vmatmul.mubr.bf16.gmra.mrb[0].mxu0 %v4320
  %v4396 = vpop.f32.mrb[0].mxu0
  %v4397 = vadd.f32 0.0, %v4396
  %v4398 = vpop.f32.mrb[0].mxu0
  %v4399 = vpop.f32.mrb[0].mxu0
  %v4400 = vadd.f32 0.0, %v4399
  %v4401 = vpop.f32.mrb[0].mxu0
  %4402 = vmatprep.mubr.bf16.mxu0 0
  %4403 = vmatmul.mubr.bf16.gmra.mrb[0].mxu0 %v4323
  %v4404 = vpop.f32.mrb[0].mxu0
  %v4405 = vadd.f32 0.0, %v4404
  %v4406 = vpop.f32.mrb[0].mxu0
  %v4407 = vpop.f32.mrb[0].mxu0
  %v4408 = vadd.f32 0.0, %v4407
  %v4409 = vpop.f32.mrb[0].mxu0
  %4410 = vmatprep.mubr.bf16.mxu0 0
  %4411 = vmatmul.mubr.bf16.gmra.mrb[0].mxu0 %v4326
  %v4412 = vpop.f32.mrb[0].mxu0
  %v4413 = vadd.f32 0.0, %v4412
  %v4414 = vpop.f32.mrb[0].mxu0
  %v4415 = vpop.f32.mrb[0].mxu0
  %v4416 = vadd.f32 0.0, %v4415
  %v4417 = vpop.f32.mrb[0].mxu0
  %4418 = vmatprep.mubr.bf16.mxu0 0
  %4419 = vmatmul.mubr.bf16.gmra.mrb[0].mxu0 %v4329
  %v4420 = vpop.f32.mrb[0].mxu0
  %v4421 = vadd.f32 0.0, %v4420
  %v4422 = vpop.f32.mrb[0].mxu0
  %v4423 = vpop.f32.mrb[0].mxu0
  %v4424 = vadd.f32 0.0, %v4423
  %v4425 = vpop.f32.mrb[0].mxu0
  %4426 = vmatprep.mubr.bf16.mxu0 0
  %4427 = vmatmul.mubr.bf16.gmra.mrb[0].mxu0 %v4332
  %v4428 = vpop.f32.mrb[0].mxu0
  %v4429 = vadd.f32 0.0, %v4428
  %v4430 = vpop.f32.mrb[0].mxu0
  %v4431 = vpop.f32.mrb[0].mxu0
  %v4432 = vadd.f32 0.0, %v4431
  %v4433 = vpop.f32.mrb[0].mxu0
  %4434 = vmatprep.mubr.bf16.mxu0 0
  %4435 = vmatmul.mubr.bf16.gmra.mrb[0].mxu0 %v4335
  %v4436 = vpop.f32.mrb[0].mxu0
  %v4437 = vadd.f32 0.0, %v4436
  %v4438 = vpop.f32.mrb[0].mxu0
  %v4439 = vpop.f32.mrb[0].mxu0
  %v4440 = vadd.f32 0.0, %v4439
  %v4441 = vpop.f32.mrb[0].mxu0
  %4442 = vmatprep.mubr.bf16.mxu0 0
  %4443 = vmatmul.mubr.bf16.gmra.mrb[0].mxu0 %v4338
  %v4444 = vpop.f32.mrb[0].mxu0
  %v4445 = vadd.f32 0.0, %v4444
  %v4446 = vpop.f32.mrb[0].mxu0
  %v4447 = vpop.f32.mrb[0].mxu0
  %v4448 = vadd.f32 0.0, %v4447
  %v4449 = vpop.f32.mrb[0].mxu0
  %4450 = vmatprep.mubr.bf16.mxu0 0
  %4451 = vmatmul.mubr.bf16.gmra.mrb[0].mxu0 %v4341
  %v4452 = vpop.f32.mrb[0].mxu0
  %v4453 = vadd.f32 0.0, %v4452
  %v4454 = vpop.f32.mrb[0].mxu0
  %v4455 = vpop.f32.mrb[0].mxu0
  %v4456 = vadd.f32 0.0, %v4455
  %v4457 = vpop.f32.mrb[0].mxu0
  %4458 = vmatprep.mubr.bf16.mxu0 0
  %4459 = vmatmul.mubr.bf16.gmra.mrb[0].mxu0 %v4344
  %v4460 = vpop.f32.mrb[0].mxu0
  %v4461 = vadd.f32 0.0, %v4460
  %v4462 = vpop.f32.mrb[0].mxu0
  %v4463 = vpop.f32.mrb[0].mxu0
  %v4464 = vpop.f32.mrb[0].mxu0
  %4465 = vdwg.mxu0
  %v4466 = vadd.f32 %v3929, %v4381
  %v4467 = vadd.f32 %v3932, %v4384
  %v4468 = vadd.f32 %v3937, %v4389
  %v4469 = vadd.f32 %v3940, %v4392
  %v4470 = vadd.f32 %v3945, %v4397
  %v4471 = vadd.f32 %v3948, %v4400
  %v4472 = vadd.f32 %v3953, %v4405
  %v4473 = vadd.f32 %v3956, %v4408
  %v4474 = vadd.f32 %v3961, %v4413
  %v4475 = vadd.f32 %v3964, %v4416
  %v4476 = vadd.f32 %v3969, %v4421
  %v4477 = vadd.f32 %v3972, %v4424
  %v4478 = vadd.f32 %v3977, %v4429
  %v4479 = vadd.f32 %v3980, %v4432
  %v4480 = vadd.f32 %v3985, %v4437
  %v4481 = vadd.f32 %v3988, %v4440
  %v4482 = vadd.f32 %v3993, %v4445
  %v4483 = vadd.f32 %v3996, %v4448
  %v4484 = vadd.f32 %v4001, %v4453
  %v4485 = vadd.f32 %v4004, %v4456
  %v4486 = vadd.f32 %v4009, %v4461
  %s4487 = scalar_lea.vmem %s5, 504
  %v4488 = vld [vmem:[%s4487] sm:$0xff]
  %v4489 = vld [vmem:[%s4487 + $0x8] sm:$0xff]
  %v4490 = vld [vmem:[%s4487 + $0x10] sm:$0xff]
  %v4491 = vld [vmem:[%s4487 + $0x18] sm:$0xff]
  %v4492 = vld [vmem:[%s4487 + $0x20] sm:$0xff]
  %v4493 = vld [vmem:[%s4487 + $0x28] sm:$0xff]
  %v4494 = vld [vmem:[%s4487 + $0x30] sm:$0xff]
  %v4495 = vld [vmem:[%s4487 + $0x38] sm:$0xff]
  %v4496 = vld [vmem:[%s4487 + $0x40] sm:$0xff]
  %v4497 = vld [vmem:[%s4487 + $0x48] sm:$0xff]
  %v4498 = vld [vmem:[%s4487 + $0x50] sm:$0xff]
  %v4499 = vld [vmem:[%s4487 + $0x58] sm:$0xff]
  %v4500 = vld [vmem:[%s4487 + $0x60] sm:$0xff]
  %v4501 = vld [vmem:[%s4487 + $0x68] sm:$0xff]
  %v4502 = vld [vmem:[%s4487 + $0x70] sm:$0xff]
  %v4503 = vld [vmem:[%s4487 + $0x78] sm:$0xff]
  %v4504 = vld [vmem:[%s4487 + $0x80] sm:$0xff]
  %v4505 = vld [vmem:[%s4487 + $0x88] sm:$0xff]
  %v4506 = vld [vmem:[%s4487 + $0x90] sm:$0xff]
  %v4507 = vld [vmem:[%s4487 + $0x98] sm:$0xff]
  %v4508 = vld [vmem:[%s4487 + $0xa0] sm:$0x11]
  %v4530 = vunpack.c.l.b16 %v4488
  %v4531 = vunpack.c.h.b16 %v4488
  %v4532 = vunpack.c.l.b16 %v4489
  %v4533 = vunpack.c.h.b16 %v4489
  %v4534 = vunpack.c.l.b16 %v4490
  %v4535 = vunpack.c.h.b16 %v4490
  %v4536 = vunpack.c.l.b16 %v4491
  %v4537 = vunpack.c.h.b16 %v4491
  %v4538 = vunpack.c.l.b16 %v4492
  %v4539 = vunpack.c.h.b16 %v4492
  %v4540 = vunpack.c.l.b16 %v4493
  %v4541 = vunpack.c.h.b16 %v4493
  %v4542 = vunpack.c.l.b16 %v4494
  %v4543 = vunpack.c.h.b16 %v4494
  %v4544 = vunpack.c.l.b16 %v4495
  %v4545 = vunpack.c.h.b16 %v4495
  %v4546 = vunpack.c.l.b16 %v4496
  %v4547 = vunpack.c.h.b16 %v4496
  %v4548 = vunpack.c.l.b16 %v4497
  %v4549 = vunpack.c.h.b16 %v4497
  %v4550 = vunpack.c.l.b16 %v4498
  %v4551 = vunpack.c.h.b16 %v4498
  %v4552 = vunpack.c.l.b16 %v4499
  %v4553 = vunpack.c.h.b16 %v4499
  %v4554 = vunpack.c.l.b16 %v4500
  %v4555 = vunpack.c.h.b16 %v4500
  %v4556 = vunpack.c.l.b16 %v4501
  %v4557 = vunpack.c.h.b16 %v4501
  %v4558 = vunpack.c.l.b16 %v4502
  %v4559 = vunpack.c.h.b16 %v4502
  %v4560 = vunpack.c.l.b16 %v4503
  %v4561 = vunpack.c.h.b16 %v4503
  %v4562 = vunpack.c.l.b16 %v4504
  %v4563 = vunpack.c.h.b16 %v4504
  %v4564 = vunpack.c.l.b16 %v4505
  %v4565 = vunpack.c.h.b16 %v4505
  %v4566 = vunpack.c.l.b16 %v4506
  %v4567 = vunpack.c.h.b16 %v4506
  %v4568 = vunpack.c.l.b16 %v4507
  %v4569 = vunpack.c.h.b16 %v4507
  %v4570 = vunpack.c.l.b16 %v4508
  %v4571 = vunpack.c.h.b16 %v4508
  %v4572 = vpack.c.b16 %v4532, %v4530
  %v4573 = vpack.c.b16 %v4533, %v4531
  %v4574 = vpack.c.b16 %v4536, %v4534
  %v4575 = vpack.c.b16 %v4537, %v4535
  %v4576 = vpack.c.b16 %v4540, %v4538
  %v4577 = vpack.c.b16 %v4541, %v4539
  %v4578 = vpack.c.b16 %v4544, %v4542
  %v4579 = vpack.c.b16 %v4545, %v4543
  %v4580 = vpack.c.b16 %v4548, %v4546
  %v4581 = vpack.c.b16 %v4549, %v4547
  %v4582 = vpack.c.b16 %v4552, %v4550
  %v4583 = vpack.c.b16 %v4553, %v4551
  %v4584 = vpack.c.b16 %v4556, %v4554
  %v4585 = vpack.c.b16 %v4557, %v4555
  %v4586 = vpack.c.b16 %v4560, %v4558
  %v4587 = vpack.c.b16 %v4561, %v4559
  %v4588 = vpack.c.b16 %v4564, %v4562
  %v4589 = vpack.c.b16 %v4565, %v4563
  %v4590 = vpack.c.b16 %v4568, %v4566
  %v4591 = vpack.c.b16 %v4569, %v4567
  %v4592 = vpack.c.b16 %v4570, %v4570
  %v4593 = vpack.c.b16 %v4571, %v4571
  %v4606 = vsel %vm3224, %v4573, 0
  %v4609 = vsel %vm3224, %v4575, 0
  %v4612 = vsel %vm3224, %v4577, 0
  %v4615 = vsel %vm3224, %v4579, 0
  %v4618 = vsel %vm3224, %v4581, 0
  %v4621 = vsel %vm3224, %v4583, 0
  %v4624 = vsel %vm3224, %v4585, 0
  %v4627 = vsel %vm3224, %v4587, 0
  %v4630 = vsel %vm3224, %v4589, 0
  %v4633 = vsel %vm3224, %v4591, 0
  %v4636 = vsel %vm3224, %v4593, 0
  %4638 = vmatprep.subr.bf16.mxu0 0
  %4639 = vmatpush1.bf16.msra.mxu0 %v3096
  %4640 = vmatprep.subr.bf16.mxu0 0
  %4641 = vmatpush1.bf16.msra.mxu0 %v3097
  %4642 = vmatprep.subr.bf16.mxu0 0
  %4643 = vmatpush1.bf16.msra.mxu0 %v3098
  %4644 = vmatprep.subr.bf16.mxu0 0
  %4645 = vmatpush1.bf16.msra.mxu0 %v3099
  %4646 = vmatprep.subr.bf16.mxu0 0
  %4647 = vmatpush1.bf16.msra.mxu0 %v3100
  %4648 = vmatprep.subr.bf16.mxu0 0
  %4649 = vmatpush1.bf16.msra.mxu0 %v3101
  %4650 = vmatprep.subr.bf16.mxu0 0
  %4651 = vmatpush1.bf16.msra.mxu0 %v3102
  %4652 = vmatprep.subr.bf16.mxu0 0
  %4653 = vmatpush1.bf16.msra.mxu0 %v3103
  %4654 = vmatprep.subr.bf16.mxu0 0
  %4655 = vmatpush1.bf16.msra.mxu0 %v3104
  %4656 = vmatprep.subr.bf16.mxu0 0
  %4657 = vmatpush1.bf16.msra.mxu0 %v3105
  %4658 = vmatprep.subr.bf16.mxu0 0
  %4659 = vmatpush1.bf16.msra.mxu0 %v3260
  %4660 = vmatprep.subr.bf16.mxu0 0
  %4661 = vmatpush1.bf16.msra.mxu0 0
  %4662 = vmatprep.subr.bf16.mxu0 0
  %4663 = vmatpush1.bf16.msra.mxu0 0
  %4664 = vmatprep.subr.bf16.mxu0 0
  %4665 = vmatpush1.bf16.msra.mxu0 0
  %4666 = vmatprep.subr.bf16.mxu0 0
  %4667 = vmatpush1.bf16.msra.mxu0 0
  %4668 = vmatprep.subr.bf16.mxu0 0
  %4669 = vmatpush1.bf16.msra.mxu0 0
  %4670 = vmatprep.mubr.bf16.mxu0 %v4606
  %4671 = vmatmul.mubr.bf16.gmra.mrb[0].mxu0 %v4572
  %v4672 = vpop.f32.mrb[0].mxu0
  %v4673 = vadd.f32 0.0, %v4672
  %v4674 = vpop.f32.mrb[0].mxu0
  %v4675 = vpop.f32.mrb[0].mxu0
  %v4676 = vadd.f32 0.0, %v4675
  %v4677 = vpop.f32.mrb[0].mxu0
  %4678 = vmatprep.mubr.bf16.mxu0 %v4609
  %4679 = vmatmul.mubr.bf16.gmra.mrb[0].mxu0 %v4574
  %v4680 = vpop.f32.mrb[0].mxu0
  %v4681 = vadd.f32 0.0, %v4680
  %v4682 = vpop.f32.mrb[0].mxu0
  %v4683 = vpop.f32.mrb[0].mxu0
  %v4684 = vadd.f32 0.0, %v4683
  %v4685 = vpop.f32.mrb[0].mxu0
  %4686 = vmatprep.mubr.bf16.mxu0 %v4612
  %4687 = vmatmul.mubr.bf16.gmra.mrb[0].mxu0 %v4576
  %v4688 = vpop.f32.mrb[0].mxu0
  %v4689 = vadd.f32 0.0, %v4688
  %v4690 = vpop.f32.mrb[0].mxu0
  %v4691 = vpop.f32.mrb[0].mxu0
  %v4692 = vadd.f32 0.0, %v4691
  %v4693 = vpop.f32.mrb[0].mxu0
  %4694 = vmatprep.mubr.bf16.mxu0 %v4615
  %4695 = vmatmul.mubr.bf16.gmra.mrb[0].mxu0 %v4578
  %v4696 = vpop.f32.mrb[0].mxu0
  %v4697 = vadd.f32 0.0, %v4696
  %v4698 = vpop.f32.mrb[0].mxu0
  %v4699 = vpop.f32.mrb[0].mxu0
  %v4700 = vadd.f32 0.0, %v4699
  %v4701 = vpop.f32.mrb[0].mxu0
  %4702 = vmatprep.mubr.bf16.mxu0 %v4618
  %4703 = vmatmul.mubr.bf16.gmra.mrb[0].mxu0 %v4580
  %v4704 = vpop.f32.mrb[0].mxu0
  %v4705 = vadd.f32 0.0, %v4704
  %v4706 = vpop.f32.mrb[0].mxu0
  %v4707 = vpop.f32.mrb[0].mxu0
  %v4708 = vadd.f32 0.0, %v4707
  %v4709 = vpop.f32.mrb[0].mxu0
  %4710 = vmatprep.mubr.bf16.mxu0 %v4621
  %4711 = vmatmul.mubr.bf16.gmra.mrb[0].mxu0 %v4582
  %v4712 = vpop.f32.mrb[0].mxu0
  %v4713 = vadd.f32 0.0, %v4712
  %v4714 = vpop.f32.mrb[0].mxu0
  %v4715 = vpop.f32.mrb[0].mxu0
  %v4716 = vadd.f32 0.0, %v4715
  %v4717 = vpop.f32.mrb[0].mxu0
  %4718 = vmatprep.mubr.bf16.mxu0 %v4624
  %4719 = vmatmul.mubr.bf16.gmra.mrb[0].mxu0 %v4584
  %v4720 = vpop.f32.mrb[0].mxu0
  %v4721 = vadd.f32 0.0, %v4720
  %v4722 = vpop.f32.mrb[0].mxu0
  %v4723 = vpop.f32.mrb[0].mxu0
  %v4724 = vadd.f32 0.0, %v4723
  %v4725 = vpop.f32.mrb[0].mxu0
  %4726 = vmatprep.mubr.bf16.mxu0 %v4627
  %4727 = vmatmul.mubr.bf16.gmra.mrb[0].mxu0 %v4586
  %v4728 = vpop.f32.mrb[0].mxu0
  %v4729 = vadd.f32 0.0, %v4728
  %v4730 = vpop.f32.mrb[0].mxu0
  %v4731 = vpop.f32.mrb[0].mxu0
  %v4732 = vadd.f32 0.0, %v4731
  %v4733 = vpop.f32.mrb[0].mxu0
  %4734 = vmatprep.mubr.bf16.mxu0 %v4630
  %4735 = vmatmul.mubr.bf16.gmra.mrb[0].mxu0 %v4588
  %v4736 = vpop.f32.mrb[0].mxu0
  %v4737 = vadd.f32 0.0, %v4736
  %v4738 = vpop.f32.mrb[0].mxu0
  %v4739 = vpop.f32.mrb[0].mxu0
  %v4740 = vadd.f32 0.0, %v4739
  %v4741 = vpop.f32.mrb[0].mxu0
  %4742 = vmatprep.mubr.bf16.mxu0 %v4633
  %4743 = vmatmul.mubr.bf16.gmra.mrb[0].mxu0 %v4590
  %v4744 = vpop.f32.mrb[0].mxu0
  %v4745 = vadd.f32 0.0, %v4744
  %v4746 = vpop.f32.mrb[0].mxu0
  %v4747 = vpop.f32.mrb[0].mxu0
  %v4748 = vadd.f32 0.0, %v4747
  %v4749 = vpop.f32.mrb[0].mxu0
  %4750 = vmatprep.mubr.bf16.mxu0 %v4636
  %4751 = vmatmul.mubr.bf16.gmra.mrb[0].mxu0 %v4592
  %v4752 = vpop.f32.mrb[0].mxu0
  %v4753 = vadd.f32 0.0, %v4752
  %v4754 = vpop.f32.mrb[0].mxu0
  %v4755 = vpop.f32.mrb[0].mxu0
  %v4756 = vpop.f32.mrb[0].mxu0
  %4757 = vdwg.mxu0
  %v4758 = vpack.c.bf16 %v4676, %v4673
  %v4759 = vpack.c.bf16 %v4684, %v4681
  %v4760 = vpack.c.bf16 %v4692, %v4689
  %v4761 = vpack.c.bf16 %v4700, %v4697
  %v4762 = vpack.c.bf16 %v4708, %v4705
  %v4763 = vpack.c.bf16 %v4716, %v4713
  %v4764 = vpack.c.bf16 %v4724, %v4721
  %v4765 = vpack.c.bf16 %v4732, %v4729
  %v4766 = vpack.c.bf16 %v4740, %v4737
  %v4767 = vpack.c.bf16 %v4748, %v4745
  %v4768 = vpack.c.bf16 %v4753, %v4753
  %s4769 = scalar_lea.vmem %s6, 48
  %v4770 = vld [vmem:[%s4769] sm:$0xf]
  %v4771 = vld [vmem:[%s4769 + $0x4] sm:$0xf]
  %v4772 = vld [vmem:[%s4769 + $0x8] sm:$0xf]
  %v4773 = vld [vmem:[%s4769 + $0xc] sm:$0xf]
  %v4778 = vunpack.c.l.b16 %v4770
  %v4779 = vunpack.c.l.b16 %v4771
  %v4780 = vunpack.c.l.b16 %v4772
  %v4781 = vunpack.c.l.b16 %v4773
  %v4782 = vpack.c.b16 %v4779, %v4778
  %v4783 = vpack.c.b16 %v4781, %v4780
  %v4787 = vsel %vm647, %v4758, 0
  %v4790 = vsel %vm647, %v4759, 0
  %v4793 = vsel %vm647, %v4760, 0
  %v4796 = vsel %vm647, %v4761, 0
  %v4799 = vsel %vm647, %v4762, 0
  %v4802 = vsel %vm647, %v4763, 0
  %v4805 = vsel %vm647, %v4764, 0
  %v4808 = vsel %vm647, %v4765, 0
  %v4811 = vsel %vm647, %v4766, 0
  %v4814 = vsel %vm647, %v4767, 0
  %v4817 = vsel %vm647, %v4768, 0
  %4819 = vmatprep.subr.bf16.mxu0 0
  %4820 = vmatpush1.bf16.msra.mxu0 %v4782
  %4821 = vmatprep.subr.bf16.mxu0 0
  %4822 = vmatpush1.bf16.msra.mxu0 %v4783
  %4823 = vmatprep.subr.bf16.mxu0 0
  %4824 = vmatpush1.bf16.msra.mxu0 0
  %4825 = vmatprep.subr.bf16.mxu0 0
  %4826 = vmatpush1.bf16.msra.mxu0 0
  %4827 = vmatprep.subr.bf16.mxu0 0
  %4828 = vmatpush1.bf16.msra.mxu0 0
  %4829 = vmatprep.subr.bf16.mxu0 0
  %4830 = vmatpush1.bf16.msra.mxu0 0
  %4831 = vmatprep.subr.bf16.mxu0 0
  %4832 = vmatpush1.bf16.msra.mxu0 0
  %4833 = vmatprep.subr.bf16.mxu0 0
  %4834 = vmatpush1.bf16.msra.mxu0 0
  %4835 = vmatprep.subr.bf16.mxu0 0
  %4836 = vmatpush1.bf16.msra.mxu0 0
  %4837 = vmatprep.subr.bf16.mxu0 0
  %4838 = vmatpush1.bf16.msra.mxu0 0
  %4839 = vmatprep.subr.bf16.mxu0 0
  %4840 = vmatpush1.bf16.msra.mxu0 0
  %4841 = vmatprep.subr.bf16.mxu0 0
  %4842 = vmatpush1.bf16.msra.mxu0 0
  %4843 = vmatprep.subr.bf16.mxu0 0
  %4844 = vmatpush1.bf16.msra.mxu0 0
  %4845 = vmatprep.subr.bf16.mxu0 0
  %4846 = vmatpush1.bf16.msra.mxu0 0
  %4847 = vmatprep.subr.bf16.mxu0 0
  %4848 = vmatpush1.bf16.msra.mxu0 0
  %4849 = vmatprep.subr.bf16.mxu0 0
  %4850 = vmatpush1.bf16.msra.mxu0 0
  %4851 = vmatprep.mubr.bf16.mxu0 0
  %4852 = vmatmul.mubr.bf16.gmra.mrb[0].mxu0 %v4787
  %v4853 = vpop.f32.mrb[0].mxu0
  %v4854 = vadd.f32 0.0, %v4853
  %v4855 = vpop.f32.mrb[0].mxu0
  %v4856 = vpop.f32.mrb[0].mxu0
  %v4857 = vadd.f32 0.0, %v4856
  %v4858 = vpop.f32.mrb[0].mxu0
  %4859 = vmatprep.mubr.bf16.mxu0 0
  %4860 = vmatmul.mubr.bf16.gmra.mrb[0].mxu0 %v4790
  %v4861 = vpop.f32.mrb[0].mxu0
  %v4862 = vadd.f32 0.0, %v4861
  %v4863 = vpop.f32.mrb[0].mxu0
  %v4864 = vpop.f32.mrb[0].mxu0
  %v4865 = vadd.f32 0.0, %v4864
  %v4866 = vpop.f32.mrb[0].mxu0
  %4867 = vmatprep.mubr.bf16.mxu0 0
  %4868 = vmatmul.mubr.bf16.gmra.mrb[0].mxu0 %v4793
  %v4869 = vpop.f32.mrb[0].mxu0
  %v4870 = vadd.f32 0.0, %v4869
  %v4871 = vpop.f32.mrb[0].mxu0
  %v4872 = vpop.f32.mrb[0].mxu0
  %v4873 = vadd.f32 0.0, %v4872
  %v4874 = vpop.f32.mrb[0].mxu0
  %4875 = vmatprep.mubr.bf16.mxu0 0
  %4876 = vmatmul.mubr.bf16.gmra.mrb[0].mxu0 %v4796
  %v4877 = vpop.f32.mrb[0].mxu0
  %v4878 = vadd.f32 0.0, %v4877
  %v4879 = vpop.f32.mrb[0].mxu0
  %v4880 = vpop.f32.mrb[0].mxu0
  %v4881 = vadd.f32 0.0, %v4880
  %v4882 = vpop.f32.mrb[0].mxu0
  %4883 = vmatprep.mubr.bf16.mxu0 0
  %4884 = vmatmul.mubr.bf16.gmra.mrb[0].mxu0 %v4799
  %v4885 = vpop.f32.mrb[0].mxu0
  %v4886 = vadd.f32 0.0, %v4885
  %v4887 = vpop.f32.mrb[0].mxu0
  %v4888 = vpop.f32.mrb[0].mxu0
  %v4889 = vadd.f32 0.0, %v4888
  %v4890 = vpop.f32.mrb[0].mxu0
  %4891 = vmatprep.mubr.bf16.mxu0 0
  %4892 = vmatmul.mubr.bf16.gmra.mrb[0].mxu0 %v4802
  %v4893 = vpop.f32.mrb[0].mxu0
  %v4894 = vadd.f32 0.0, %v4893
  %v4895 = vpop.f32.mrb[0].mxu0
  %v4896 = vpop.f32.mrb[0].mxu0
  %v4897 = vadd.f32 0.0, %v4896
  %v4898 = vpop.f32.mrb[0].mxu0
  %4899 = vmatprep.mubr.bf16.mxu0 0
  %4900 = vmatmul.mubr.bf16.gmra.mrb[0].mxu0 %v4805
  %v4901 = vpop.f32.mrb[0].mxu0
  %v4902 = vadd.f32 0.0, %v4901
  %v4903 = vpop.f32.mrb[0].mxu0
  %v4904 = vpop.f32.mrb[0].mxu0
  %v4905 = vadd.f32 0.0, %v4904
  %v4906 = vpop.f32.mrb[0].mxu0
  %4907 = vmatprep.mubr.bf16.mxu0 0
  %4908 = vmatmul.mubr.bf16.gmra.mrb[0].mxu0 %v4808
  %v4909 = vpop.f32.mrb[0].mxu0
  %v4910 = vadd.f32 0.0, %v4909
  %v4911 = vpop.f32.mrb[0].mxu0
  %v4912 = vpop.f32.mrb[0].mxu0
  %v4913 = vadd.f32 0.0, %v4912
  %v4914 = vpop.f32.mrb[0].mxu0
  %4915 = vmatprep.mubr.bf16.mxu0 0
  %4916 = vmatmul.mubr.bf16.gmra.mrb[0].mxu0 %v4811
  %v4917 = vpop.f32.mrb[0].mxu0
  %v4918 = vadd.f32 0.0, %v4917
  %v4919 = vpop.f32.mrb[0].mxu0
  %v4920 = vpop.f32.mrb[0].mxu0
  %v4921 = vadd.f32 0.0, %v4920
  %v4922 = vpop.f32.mrb[0].mxu0
  %4923 = vmatprep.mubr.bf16.mxu0 0
  %4924 = vmatmul.mubr.bf16.gmra.mrb[0].mxu0 %v4814
  %v4925 = vpop.f32.mrb[0].mxu0
  %v4926 = vadd.f32 0.0, %v4925
  %v4927 = vpop.f32.mrb[0].mxu0
  %v4928 = vpop.f32.mrb[0].mxu0
  %v4929 = vadd.f32 0.0, %v4928
  %v4930 = vpop.f32.mrb[0].mxu0
  %4931 = vmatprep.mubr.bf16.mxu0 0
  %4932 = vmatmul.mubr.bf16.gmra.mrb[0].mxu0 %v4817
  %v4933 = vpop.f32.mrb[0].mxu0
  %v4934 = vadd.f32 0.0, %v4933
  %v4935 = vpop.f32.mrb[0].mxu0
  %v4936 = vpop.f32.mrb[0].mxu0
  %v4937 = vpop.f32.mrb[0].mxu0
  %4938 = vdwg.mxu0
  %v4939 = vadd.f32 %v4466, %v4854
  %v4940 = vadd.f32 %v4467, %v4857
  %v4941 = vadd.f32 %v4468, %v4862
  %v4942 = vadd.f32 %v4469, %v4865
  %v4943 = vadd.f32 %v4470, %v4870
  %v4944 = vadd.f32 %v4471, %v4873
  %v4945 = vadd.f32 %v4472, %v4878
  %v4946 = vadd.f32 %v4473, %v4881
  %v4947 = vadd.f32 %v4474, %v4886
  %v4948 = vadd.f32 %v4475, %v4889
  %v4949 = vadd.f32 %v4476, %v4894
  %v4950 = vadd.f32 %v4477, %v4897
  %v4951 = vadd.f32 %v4478, %v4902
  %v4952 = vadd.f32 %v4479, %v4905
  %v4953 = vadd.f32 %v4480, %v4910
  %v4954 = vadd.f32 %v4481, %v4913
  %v4955 = vadd.f32 %v4482, %v4918
  %v4956 = vadd.f32 %v4483, %v4921
  %v4957 = vadd.f32 %v4484, %v4926
  %v4958 = vadd.f32 %v4485, %v4929
  %v4959 = vadd.f32 %v4486, %v4934
  %s4960 = scalar_lea.vmem %s5, 672
  %v4961 = vld [vmem:[%s4960] sm:$0xff]
  %v4962 = vld [vmem:[%s4960 + $0x8] sm:$0xff]
  %v4963 = vld [vmem:[%s4960 + $0x10] sm:$0xff]
  %v4964 = vld [vmem:[%s4960 + $0x18] sm:$0xff]
  %v4965 = vld [vmem:[%s4960 + $0x20] sm:$0xff]
  %v4966 = vld [vmem:[%s4960 + $0x28] sm:$0xff]
  %v4967 = vld [vmem:[%s4960 + $0x30] sm:$0xff]
  %v4968 = vld [vmem:[%s4960 + $0x38] sm:$0xff]
  %v4969 = vld [vmem:[%s4960 + $0x40] sm:$0xff]
  %v4970 = vld [vmem:[%s4960 + $0x48] sm:$0xff]
  %v4971 = vld [vmem:[%s4960 + $0x50] sm:$0xff]
  %v4972 = vld [vmem:[%s4960 + $0x58] sm:$0xff]
  %v4973 = vld [vmem:[%s4960 + $0x60] sm:$0xff]
  %v4974 = vld [vmem:[%s4960 + $0x68] sm:$0xff]
  %v4975 = vld [vmem:[%s4960 + $0x70] sm:$0xff]
  %v4976 = vld [vmem:[%s4960 + $0x78] sm:$0xff]
  %v4977 = vld [vmem:[%s4960 + $0x80] sm:$0xff]
  %v4978 = vld [vmem:[%s4960 + $0x88] sm:$0xff]
  %v4979 = vld [vmem:[%s4960 + $0x90] sm:$0xff]
  %v4980 = vld [vmem:[%s4960 + $0x98] sm:$0xff]
  %v4981 = vld [vmem:[%s4960 + $0xa0] sm:$0x11]
  %v5003 = vunpack.c.l.b16 %v4961
  %v5004 = vunpack.c.h.b16 %v4961
  %v5005 = vunpack.c.l.b16 %v4962
  %v5006 = vunpack.c.h.b16 %v4962
  %v5007 = vunpack.c.l.b16 %v4963
  %v5008 = vunpack.c.h.b16 %v4963
  %v5009 = vunpack.c.l.b16 %v4964
  %v5010 = vunpack.c.h.b16 %v4964
  %v5011 = vunpack.c.l.b16 %v4965
  %v5012 = vunpack.c.h.b16 %v4965
  %v5013 = vunpack.c.l.b16 %v4966
  %v5014 = vunpack.c.h.b16 %v4966
  %v5015 = vunpack.c.l.b16 %v4967
  %v5016 = vunpack.c.h.b16 %v4967
  %v5017 = vunpack.c.l.b16 %v4968
  %v5018 = vunpack.c.h.b16 %v4968
  %v5019 = vunpack.c.l.b16 %v4969
  %v5020 = vunpack.c.h.b16 %v4969
  %v5021 = vunpack.c.l.b16 %v4970
  %v5022 = vunpack.c.h.b16 %v4970
  %v5023 = vunpack.c.l.b16 %v4971
  %v5024 = vunpack.c.h.b16 %v4971
  %v5025 = vunpack.c.l.b16 %v4972
  %v5026 = vunpack.c.h.b16 %v4972
  %v5027 = vunpack.c.l.b16 %v4973
  %v5028 = vunpack.c.h.b16 %v4973
  %v5029 = vunpack.c.l.b16 %v4974
  %v5030 = vunpack.c.h.b16 %v4974
  %v5031 = vunpack.c.l.b16 %v4975
  %v5032 = vunpack.c.h.b16 %v4975
  %v5033 = vunpack.c.l.b16 %v4976
  %v5034 = vunpack.c.h.b16 %v4976
  %v5035 = vunpack.c.l.b16 %v4977
  %v5036 = vunpack.c.h.b16 %v4977
  %v5037 = vunpack.c.l.b16 %v4978
  %v5038 = vunpack.c.h.b16 %v4978
  %v5039 = vunpack.c.l.b16 %v4979
  %v5040 = vunpack.c.h.b16 %v4979
  %v5041 = vunpack.c.l.b16 %v4980
  %v5042 = vunpack.c.h.b16 %v4980
  %v5043 = vunpack.c.l.b16 %v4981
  %v5044 = vunpack.c.h.b16 %v4981
  %v5045 = vpack.c.b16 %v5005, %v5003
  %v5046 = vpack.c.b16 %v5006, %v5004
  %v5047 = vpack.c.b16 %v5009, %v5007
  %v5048 = vpack.c.b16 %v5010, %v5008
  %v5049 = vpack.c.b16 %v5013, %v5011
  %v5050 = vpack.c.b16 %v5014, %v5012
  %v5051 = vpack.c.b16 %v5017, %v5015
  %v5052 = vpack.c.b16 %v5018, %v5016
  %v5053 = vpack.c.b16 %v5021, %v5019
  %v5054 = vpack.c.b16 %v5022, %v5020
  %v5055 = vpack.c.b16 %v5025, %v5023
  %v5056 = vpack.c.b16 %v5026, %v5024
  %v5057 = vpack.c.b16 %v5029, %v5027
  %v5058 = vpack.c.b16 %v5030, %v5028
  %v5059 = vpack.c.b16 %v5033, %v5031
  %v5060 = vpack.c.b16 %v5034, %v5032
  %v5061 = vpack.c.b16 %v5037, %v5035
  %v5062 = vpack.c.b16 %v5038, %v5036
  %v5063 = vpack.c.b16 %v5041, %v5039
  %v5064 = vpack.c.b16 %v5042, %v5040
  %v5065 = vpack.c.b16 %v5043, %v5043
  %v5066 = vpack.c.b16 %v5044, %v5044
  %v5079 = vsel %vm3224, %v5046, 0
  %v5082 = vsel %vm3224, %v5048, 0
  %v5085 = vsel %vm3224, %v5050, 0
  %v5088 = vsel %vm3224, %v5052, 0
  %v5091 = vsel %vm3224, %v5054, 0
  %v5094 = vsel %vm3224, %v5056, 0
  %v5097 = vsel %vm3224, %v5058, 0
  %v5100 = vsel %vm3224, %v5060, 0
  %v5103 = vsel %vm3224, %v5062, 0
  %v5106 = vsel %vm3224, %v5064, 0
  %v5109 = vsel %vm3224, %v5066, 0
  %5111 = vmatprep.subr.bf16.mxu0 0
  %5112 = vmatpush1.bf16.msra.mxu0 %v3096
  %5113 = vmatprep.subr.bf16.mxu0 0
  %5114 = vmatpush1.bf16.msra.mxu0 %v3097
  %5115 = vmatprep.subr.bf16.mxu0 0
  %5116 = vmatpush1.bf16.msra.mxu0 %v3098
  %5117 = vmatprep.subr.bf16.mxu0 0
  %5118 = vmatpush1.bf16.msra.mxu0 %v3099
  %5119 = vmatprep.subr.bf16.mxu0 0
  %5120 = vmatpush1.bf16.msra.mxu0 %v3100
  %5121 = vmatprep.subr.bf16.mxu0 0
  %5122 = vmatpush1.bf16.msra.mxu0 %v3101
  %5123 = vmatprep.subr.bf16.mxu0 0
  %5124 = vmatpush1.bf16.msra.mxu0 %v3102
  %5125 = vmatprep.subr.bf16.mxu0 0
  %5126 = vmatpush1.bf16.msra.mxu0 %v3103
  %5127 = vmatprep.subr.bf16.mxu0 0
  %5128 = vmatpush1.bf16.msra.mxu0 %v3104
  %5129 = vmatprep.subr.bf16.mxu0 0
  %5130 = vmatpush1.bf16.msra.mxu0 %v3105
  %5131 = vmatprep.subr.bf16.mxu0 0
  %5132 = vmatpush1.bf16.msra.mxu0 %v3260
  %5133 = vmatprep.subr.bf16.mxu0 0
  %5134 = vmatpush1.bf16.msra.mxu0 0
  %5135 = vmatprep.subr.bf16.mxu0 0
  %5136 = vmatpush1.bf16.msra.mxu0 0
  %5137 = vmatprep.subr.bf16.mxu0 0
  %5138 = vmatpush1.bf16.msra.mxu0 0
  %5139 = vmatprep.subr.bf16.mxu0 0
  %5140 = vmatpush1.bf16.msra.mxu0 0
  %5141 = vmatprep.subr.bf16.mxu0 0
  %5142 = vmatpush1.bf16.msra.mxu0 0
  %5143 = vmatprep.mubr.bf16.mxu0 %v5079
  %5144 = vmatmul.mubr.bf16.gmra.mrb[0].mxu0 %v5045
  %v5145 = vpop.f32.mrb[0].mxu0
  %v5146 = vadd.f32 0.0, %v5145
  %v5147 = vpop.f32.mrb[0].mxu0
  %v5148 = vpop.f32.mrb[0].mxu0
  %v5149 = vadd.f32 0.0, %v5148
  %v5150 = vpop.f32.mrb[0].mxu0
  %5151 = vmatprep.mubr.bf16.mxu0 %v5082
  %5152 = vmatmul.mubr.bf16.gmra.mrb[0].mxu0 %v5047
  %v5153 = vpop.f32.mrb[0].mxu0
  %v5154 = vadd.f32 0.0, %v5153
  %v5155 = vpop.f32.mrb[0].mxu0
  %v5156 = vpop.f32.mrb[0].mxu0
  %v5157 = vadd.f32 0.0, %v5156
  %v5158 = vpop.f32.mrb[0].mxu0
  %5159 = vmatprep.mubr.bf16.mxu0 %v5085
  %5160 = vmatmul.mubr.bf16.gmra.mrb[0].mxu0 %v5049
  %v5161 = vpop.f32.mrb[0].mxu0
  %v5162 = vadd.f32 0.0, %v5161
  %v5163 = vpop.f32.mrb[0].mxu0
  %v5164 = vpop.f32.mrb[0].mxu0
  %v5165 = vadd.f32 0.0, %v5164
  %v5166 = vpop.f32.mrb[0].mxu0
  %5167 = vmatprep.mubr.bf16.mxu0 %v5088
  %5168 = vmatmul.mubr.bf16.gmra.mrb[0].mxu0 %v5051
  %v5169 = vpop.f32.mrb[0].mxu0
  %v5170 = vadd.f32 0.0, %v5169
  %v5171 = vpop.f32.mrb[0].mxu0
  %v5172 = vpop.f32.mrb[0].mxu0
  %v5173 = vadd.f32 0.0, %v5172
  %v5174 = vpop.f32.mrb[0].mxu0
  %5175 = vmatprep.mubr.bf16.mxu0 %v5091
  %5176 = vmatmul.mubr.bf16.gmra.mrb[0].mxu0 %v5053
  %v5177 = vpop.f32.mrb[0].mxu0
  %v5178 = vadd.f32 0.0, %v5177
  %v5179 = vpop.f32.mrb[0].mxu0
  %v5180 = vpop.f32.mrb[0].mxu0
  %v5181 = vadd.f32 0.0, %v5180
  %v5182 = vpop.f32.mrb[0].mxu0
  %5183 = vmatprep.mubr.bf16.mxu0 %v5094
  %5184 = vmatmul.mubr.bf16.gmra.mrb[0].mxu0 %v5055
  %v5185 = vpop.f32.mrb[0].mxu0
  %v5186 = vadd.f32 0.0, %v5185
  %v5187 = vpop.f32.mrb[0].mxu0
  %v5188 = vpop.f32.mrb[0].mxu0
  %v5189 = vadd.f32 0.0, %v5188
  %v5190 = vpop.f32.mrb[0].mxu0
  %5191 = vmatprep.mubr.bf16.mxu0 %v5097
  %5192 = vmatmul.mubr.bf16.gmra.mrb[0].mxu0 %v5057
  %v5193 = vpop.f32.mrb[0].mxu0
  %v5194 = vadd.f32 0.0, %v5193
  %v5195 = vpop.f32.mrb[0].mxu0
  %v5196 = vpop.f32.mrb[0].mxu0
  %v5197 = vadd.f32 0.0, %v5196
  %v5198 = vpop.f32.mrb[0].mxu0
  %5199 = vmatprep.mubr.bf16.mxu0 %v5100
  %5200 = vmatmul.mubr.bf16.gmra.mrb[0].mxu0 %v5059
  %v5201 = vpop.f32.mrb[0].mxu0
  %v5202 = vadd.f32 0.0, %v5201
  %v5203 = vpop.f32.mrb[0].mxu0
  %v5204 = vpop.f32.mrb[0].mxu0
  %v5205 = vadd.f32 0.0, %v5204
  %v5206 = vpop.f32.mrb[0].mxu0
  %5207 = vmatprep.mubr.bf16.mxu0 %v5103
  %5208 = vmatmul.mubr.bf16.gmra.mrb[0].mxu0 %v5061
  %v5209 = vpop.f32.mrb[0].mxu0
  %v5210 = vadd.f32 0.0, %v5209
  %v5211 = vpop.f32.mrb[0].mxu0
  %v5212 = vpop.f32.mrb[0].mxu0
  %v5213 = vadd.f32 0.0, %v5212
  %v5214 = vpop.f32.mrb[0].mxu0
  %5215 = vmatprep.mubr.bf16.mxu0 %v5106
  %5216 = vmatmul.mubr.bf16.gmra.mrb[0].mxu0 %v5063
  %v5217 = vpop.f32.mrb[0].mxu0
  %v5218 = vadd.f32 0.0, %v5217
  %v5219 = vpop.f32.mrb[0].mxu0
  %v5220 = vpop.f32.mrb[0].mxu0
  %v5221 = vadd.f32 0.0, %v5220
  %v5222 = vpop.f32.mrb[0].mxu0
  %5223 = vmatprep.mubr.bf16.mxu0 %v5109
  %5224 = vmatmul.mubr.bf16.gmra.mrb[0].mxu0 %v5065
  %v5225 = vpop.f32.mrb[0].mxu0
  %v5226 = vadd.f32 0.0, %v5225
  %v5227 = vpop.f32.mrb[0].mxu0
  %v5228 = vpop.f32.mrb[0].mxu0
  %v5229 = vpop.f32.mrb[0].mxu0
  %5230 = vdwg.mxu0
  %v5231 = vpack.c.bf16 %v5149, %v5146
  %v5232 = vpack.c.bf16 %v5157, %v5154
  %v5233 = vpack.c.bf16 %v5165, %v5162
  %v5234 = vpack.c.bf16 %v5173, %v5170
  %v5235 = vpack.c.bf16 %v5181, %v5178
  %v5236 = vpack.c.bf16 %v5189, %v5186
  %v5237 = vpack.c.bf16 %v5197, %v5194
  %v5238 = vpack.c.bf16 %v5205, %v5202
  %v5239 = vpack.c.bf16 %v5213, %v5210
  %v5240 = vpack.c.bf16 %v5221, %v5218
  %v5241 = vpack.c.bf16 %v5226, %v5226
  %s5242 = scalar_lea.vmem %s6, 64
  %v5243 = vld [vmem:[%s5242] sm:$0xf]
  %v5244 = vld [vmem:[%s5242 + $0x4] sm:$0xf]
  %v5245 = vld [vmem:[%s5242 + $0x8] sm:$0xf]
  %v5246 = vld [vmem:[%s5242 + $0xc] sm:$0xf]
  %v5251 = vunpack.c.l.b16 %v5243
  %v5252 = vunpack.c.l.b16 %v5244
  %v5253 = vunpack.c.l.b16 %v5245
  %v5254 = vunpack.c.l.b16 %v5246
  %v5255 = vpack.c.b16 %v5252, %v5251
  %v5256 = vpack.c.b16 %v5254, %v5253
  %v5260 = vsel %vm647, %v5231, 0
  %v5263 = vsel %vm647, %v5232, 0
  %v5266 = vsel %vm647, %v5233, 0
  %v5269 = vsel %vm647, %v5234, 0
  %v5272 = vsel %vm647, %v5235, 0
  %v5275 = vsel %vm647, %v5236, 0
  %v5278 = vsel %vm647, %v5237, 0
  %v5281 = vsel %vm647, %v5238, 0
  %v5284 = vsel %vm647, %v5239, 0
  %v5287 = vsel %vm647, %v5240, 0
  %v5290 = vsel %vm647, %v5241, 0
  %5292 = vmatprep.subr.bf16.mxu0 0
  %5293 = vmatpush1.bf16.msra.mxu0 %v5255
  %5294 = vmatprep.subr.bf16.mxu0 0
  %5295 = vmatpush1.bf16.msra.mxu0 %v5256
  %5296 = vmatprep.subr.bf16.mxu0 0
  %5297 = vmatpush1.bf16.msra.mxu0 0
  %5298 = vmatprep.subr.bf16.mxu0 0
  %5299 = vmatpush1.bf16.msra.mxu0 0
  %5300 = vmatprep.subr.bf16.mxu0 0
  %5301 = vmatpush1.bf16.msra.mxu0 0
  %5302 = vmatprep.subr.bf16.mxu0 0
  %5303 = vmatpush1.bf16.msra.mxu0 0
  %5304 = vmatprep.subr.bf16.mxu0 0
  %5305 = vmatpush1.bf16.msra.mxu0 0
  %5306 = vmatprep.subr.bf16.mxu0 0
  %5307 = vmatpush1.bf16.msra.mxu0 0
  %5308 = vmatprep.subr.bf16.mxu0 0
  %5309 = vmatpush1.bf16.msra.mxu0 0
  %5310 = vmatprep.subr.bf16.mxu0 0
  %5311 = vmatpush1.bf16.msra.mxu0 0
  %5312 = vmatprep.subr.bf16.mxu0 0
  %5313 = vmatpush1.bf16.msra.mxu0 0
  %5314 = vmatprep.subr.bf16.mxu0 0
  %5315 = vmatpush1.bf16.msra.mxu0 0
  %5316 = vmatprep.subr.bf16.mxu0 0
  %5317 = vmatpush1.bf16.msra.mxu0 0
  %5318 = vmatprep.subr.bf16.mxu0 0
  %5319 = vmatpush1.bf16.msra.mxu0 0
  %5320 = vmatprep.subr.bf16.mxu0 0
  %5321 = vmatpush1.bf16.msra.mxu0 0
  %5322 = vmatprep.subr.bf16.mxu0 0
  %5323 = vmatpush1.bf16.msra.mxu0 0
  %5324 = vmatprep.mubr.bf16.mxu0 0
  %5325 = vmatmul.mubr.bf16.gmra.mrb[0].mxu0 %v5260
  %v5326 = vpop.f32.mrb[0].mxu0
  %v5327 = vadd.f32 0.0, %v5326
  %v5328 = vpop.f32.mrb[0].mxu0
  %v5329 = vpop.f32.mrb[0].mxu0
  %v5330 = vadd.f32 0.0, %v5329
  %v5331 = vpop.f32.mrb[0].mxu0
  %5332 = vmatprep.mubr.bf16.mxu0 0
  %5333 = vmatmul.mubr.bf16.gmra.mrb[0].mxu0 %v5263
  %v5334 = vpop.f32.mrb[0].mxu0
  %v5335 = vadd.f32 0.0, %v5334
  %v5336 = vpop.f32.mrb[0].mxu0
  %v5337 = vpop.f32.mrb[0].mxu0
  %v5338 = vadd.f32 0.0, %v5337
  %v5339 = vpop.f32.mrb[0].mxu0
  %5340 = vmatprep.mubr.bf16.mxu0 0
  %5341 = vmatmul.mubr.bf16.gmra.mrb[0].mxu0 %v5266
  %v5342 = vpop.f32.mrb[0].mxu0
  %v5343 = vadd.f32 0.0, %v5342
  %v5344 = vpop.f32.mrb[0].mxu0
  %v5345 = vpop.f32.mrb[0].mxu0
  %v5346 = vadd.f32 0.0, %v5345
  %v5347 = vpop.f32.mrb[0].mxu0
  %5348 = vmatprep.mubr.bf16.mxu0 0
  %5349 = vmatmul.mubr.bf16.gmra.mrb[0].mxu0 %v5269
  %v5350 = vpop.f32.mrb[0].mxu0
  %v5351 = vadd.f32 0.0, %v5350
  %v5352 = vpop.f32.mrb[0].mxu0
  %v5353 = vpop.f32.mrb[0].mxu0
  %v5354 = vadd.f32 0.0, %v5353
  %v5355 = vpop.f32.mrb[0].mxu0
  %5356 = vmatprep.mubr.bf16.mxu0 0
  %5357 = vmatmul.mubr.bf16.gmra.mrb[0].mxu0 %v5272
  %v5358 = vpop.f32.mrb[0].mxu0
  %v5359 = vadd.f32 0.0, %v5358
  %v5360 = vpop.f32.mrb[0].mxu0
  %v5361 = vpop.f32.mrb[0].mxu0
  %v5362 = vadd.f32 0.0, %v5361
  %v5363 = vpop.f32.mrb[0].mxu0
  %5364 = vmatprep.mubr.bf16.mxu0 0
  %5365 = vmatmul.mubr.bf16.gmra.mrb[0].mxu0 %v5275
  %v5366 = vpop.f32.mrb[0].mxu0
  %v5367 = vadd.f32 0.0, %v5366
  %v5368 = vpop.f32.mrb[0].mxu0
  %v5369 = vpop.f32.mrb[0].mxu0
  %v5370 = vadd.f32 0.0, %v5369
  %v5371 = vpop.f32.mrb[0].mxu0
  %5372 = vmatprep.mubr.bf16.mxu0 0
  %5373 = vmatmul.mubr.bf16.gmra.mrb[0].mxu0 %v5278
  %v5374 = vpop.f32.mrb[0].mxu0
  %v5375 = vadd.f32 0.0, %v5374
  %v5376 = vpop.f32.mrb[0].mxu0
  %v5377 = vpop.f32.mrb[0].mxu0
  %v5378 = vadd.f32 0.0, %v5377
  %v5379 = vpop.f32.mrb[0].mxu0
  %5380 = vmatprep.mubr.bf16.mxu0 0
  %5381 = vmatmul.mubr.bf16.gmra.mrb[0].mxu0 %v5281
  %v5382 = vpop.f32.mrb[0].mxu0
  %v5383 = vadd.f32 0.0, %v5382
  %v5384 = vpop.f32.mrb[0].mxu0
  %v5385 = vpop.f32.mrb[0].mxu0
  %v5386 = vadd.f32 0.0, %v5385
  %v5387 = vpop.f32.mrb[0].mxu0
  %5388 = vmatprep.mubr.bf16.mxu0 0
  %5389 = vmatmul.mubr.bf16.gmra.mrb[0].mxu0 %v5284
  %v5390 = vpop.f32.mrb[0].mxu0
  %v5391 = vadd.f32 0.0, %v5390
  %v5392 = vpop.f32.mrb[0].mxu0
  %v5393 = vpop.f32.mrb[0].mxu0
  %v5394 = vadd.f32 0.0, %v5393
  %v5395 = vpop.f32.mrb[0].mxu0
  %5396 = vmatprep.mubr.bf16.mxu0 0
  %5397 = vmatmul.mubr.bf16.gmra.mrb[0].mxu0 %v5287
  %v5398 = vpop.f32.mrb[0].mxu0
  %v5399 = vadd.f32 0.0, %v5398
  %v5400 = vpop.f32.mrb[0].mxu0
  %v5401 = vpop.f32.mrb[0].mxu0
  %v5402 = vadd.f32 0.0, %v5401
  %v5403 = vpop.f32.mrb[0].mxu0
  %5404 = vmatprep.mubr.bf16.mxu0 0
  %5405 = vmatmul.mubr.bf16.gmra.mrb[0].mxu0 %v5290
  %v5406 = vpop.f32.mrb[0].mxu0
  %v5407 = vadd.f32 0.0, %v5406
  %v5408 = vpop.f32.mrb[0].mxu0
  %v5409 = vpop.f32.mrb[0].mxu0
  %v5410 = vpop.f32.mrb[0].mxu0
  %5411 = vdwg.mxu0
  %v5412 = vadd.f32 %v4939, %v5327
  %v5413 = vadd.f32 %v4940, %v5330
  %v5414 = vadd.f32 %v4941, %v5335
  %v5415 = vadd.f32 %v4942, %v5338
  %v5416 = vadd.f32 %v4943, %v5343
  %v5417 = vadd.f32 %v4944, %v5346
  %v5418 = vadd.f32 %v4945, %v5351
  %v5419 = vadd.f32 %v4946, %v5354
  %v5420 = vadd.f32 %v4947, %v5359
  %v5421 = vadd.f32 %v4948, %v5362
  %v5422 = vadd.f32 %v4949, %v5367
  %v5423 = vadd.f32 %v4950, %v5370
  %v5424 = vadd.f32 %v4951, %v5375
  %v5425 = vadd.f32 %v4952, %v5378
  %v5426 = vadd.f32 %v4953, %v5383
  %v5427 = vadd.f32 %v4954, %v5386
  %v5428 = vadd.f32 %v4955, %v5391
  %v5429 = vadd.f32 %v4956, %v5394
  %v5430 = vadd.f32 %v4957, %v5399
  %v5431 = vadd.f32 %v4958, %v5402
  %v5432 = vadd.f32 %v4959, %v5407
  %s5433 = scalar_lea.vmem %s5, 840
  %v5434 = vld [vmem:[%s5433] sm:$0xff]
  %v5435 = vld [vmem:[%s5433 + $0x8] sm:$0xff]
  %v5436 = vld [vmem:[%s5433 + $0x10] sm:$0xff]
  %v5437 = vld [vmem:[%s5433 + $0x18] sm:$0xff]
  %v5438 = vld [vmem:[%s5433 + $0x20] sm:$0xff]
  %v5439 = vld [vmem:[%s5433 + $0x28] sm:$0xff]
  %v5440 = vld [vmem:[%s5433 + $0x30] sm:$0xff]
  %v5441 = vld [vmem:[%s5433 + $0x38] sm:$0xff]
  %v5442 = vld [vmem:[%s5433 + $0x40] sm:$0xff]
  %v5443 = vld [vmem:[%s5433 + $0x48] sm:$0xff]
  %v5444 = vld [vmem:[%s5433 + $0x50] sm:$0xff]
  %v5445 = vld [vmem:[%s5433 + $0x58] sm:$0xff]
  %v5446 = vld [vmem:[%s5433 + $0x60] sm:$0xff]
  %v5447 = vld [vmem:[%s5433 + $0x68] sm:$0xff]
  %v5448 = vld [vmem:[%s5433 + $0x70] sm:$0xff]
  %v5449 = vld [vmem:[%s5433 + $0x78] sm:$0xff]
  %v5450 = vld [vmem:[%s5433 + $0x80] sm:$0xff]
  %v5451 = vld [vmem:[%s5433 + $0x88] sm:$0xff]
  %v5452 = vld [vmem:[%s5433 + $0x90] sm:$0xff]
  %v5453 = vld [vmem:[%s5433 + $0x98] sm:$0xff]
  %v5454 = vld [vmem:[%s5433 + $0xa0] sm:$0x11]
  %v5476 = vunpack.c.l.b16 %v5434
  %v5477 = vunpack.c.h.b16 %v5434
  %v5478 = vunpack.c.l.b16 %v5435
  %v5479 = vunpack.c.h.b16 %v5435
  %v5480 = vunpack.c.l.b16 %v5436
  %v5481 = vunpack.c.h.b16 %v5436
  %v5482 = vunpack.c.l.b16 %v5437
  %v5483 = vunpack.c.h.b16 %v5437
  %v5484 = vunpack.c.l.b16 %v5438
  %v5485 = vunpack.c.h.b16 %v5438
  %v5486 = vunpack.c.l.b16 %v5439
  %v5487 = vunpack.c.h.b16 %v5439
  %v5488 = vunpack.c.l.b16 %v5440
  %v5489 = vunpack.c.h.b16 %v5440
  %v5490 = vunpack.c.l.b16 %v5441
  %v5491 = vunpack.c.h.b16 %v5441
  %v5492 = vunpack.c.l.b16 %v5442
  %v5493 = vunpack.c.h.b16 %v5442
  %v5494 = vunpack.c.l.b16 %v5443
  %v5495 = vunpack.c.h.b16 %v5443
  %v5496 = vunpack.c.l.b16 %v5444
  %v5497 = vunpack.c.h.b16 %v5444
  %v5498 = vunpack.c.l.b16 %v5445
  %v5499 = vunpack.c.h.b16 %v5445
  %v5500 = vunpack.c.l.b16 %v5446
  %v5501 = vunpack.c.h.b16 %v5446
  %v5502 = vunpack.c.l.b16 %v5447
  %v5503 = vunpack.c.h.b16 %v5447
  %v5504 = vunpack.c.l.b16 %v5448
  %v5505 = vunpack.c.h.b16 %v5448
  %v5506 = vunpack.c.l.b16 %v5449
  %v5507 = vunpack.c.h.b16 %v5449
  %v5508 = vunpack.c.l.b16 %v5450
  %v5509 = vunpack.c.h.b16 %v5450
  %v5510 = vunpack.c.l.b16 %v5451
  %v5511 = vunpack.c.h.b16 %v5451
  %v5512 = vunpack.c.l.b16 %v5452
  %v5513 = vunpack.c.h.b16 %v5452
  %v5514 = vunpack.c.l.b16 %v5453
  %v5515 = vunpack.c.h.b16 %v5453
  %v5516 = vunpack.c.l.b16 %v5454
  %v5517 = vunpack.c.h.b16 %v5454
  %v5518 = vpack.c.b16 %v5478, %v5476
  %v5519 = vpack.c.b16 %v5479, %v5477
  %v5520 = vpack.c.b16 %v5482, %v5480
  %v5521 = vpack.c.b16 %v5483, %v5481
  %v5522 = vpack.c.b16 %v5486, %v5484
  %v5523 = vpack.c.b16 %v5487, %v5485
  %v5524 = vpack.c.b16 %v5490, %v5488
  %v5525 = vpack.c.b16 %v5491, %v5489
  %v5526 = vpack.c.b16 %v5494, %v5492
  %v5527 = vpack.c.b16 %v5495, %v5493
  %v5528 = vpack.c.b16 %v5498, %v5496
  %v5529 = vpack.c.b16 %v5499, %v5497
  %v5530 = vpack.c.b16 %v5502, %v5500
  %v5531 = vpack.c.b16 %v5503, %v5501
  %v5532 = vpack.c.b16 %v5506, %v5504
  %v5533 = vpack.c.b16 %v5507, %v5505
  %v5534 = vpack.c.b16 %v5510, %v5508
  %v5535 = vpack.c.b16 %v5511, %v5509
  %v5536 = vpack.c.b16 %v5514, %v5512
  %v5537 = vpack.c.b16 %v5515, %v5513
  %v5538 = vpack.c.b16 %v5516, %v5516
  %v5539 = vpack.c.b16 %v5517, %v5517
  %v5552 = vsel %vm3224, %v5519, 0
  %v5555 = vsel %vm3224, %v5521, 0
  %v5558 = vsel %vm3224, %v5523, 0
  %v5561 = vsel %vm3224, %v5525, 0
  %v5564 = vsel %vm3224, %v5527, 0
  %v5567 = vsel %vm3224, %v5529, 0
  %v5570 = vsel %vm3224, %v5531, 0
  %v5573 = vsel %vm3224, %v5533, 0
  %v5576 = vsel %vm3224, %v5535, 0
  %v5579 = vsel %vm3224, %v5537, 0
  %v5582 = vsel %vm3224, %v5539, 0
  %5584 = vmatprep.subr.bf16.mxu0 0
  %5585 = vmatpush1.bf16.msra.mxu0 %v3096
  %5586 = vmatprep.subr.bf16.mxu0 0
  %5587 = vmatpush1.bf16.msra.mxu0 %v3097
  %5588 = vmatprep.subr.bf16.mxu0 0
  %5589 = vmatpush1.bf16.msra.mxu0 %v3098
  %5590 = vmatprep.subr.bf16.mxu0 0
  %5591 = vmatpush1.bf16.msra.mxu0 %v3099
  %5592 = vmatprep.subr.bf16.mxu0 0
  %5593 = vmatpush1.bf16.msra.mxu0 %v3100
  %5594 = vmatprep.subr.bf16.mxu0 0
  %5595 = vmatpush1.bf16.msra.mxu0 %v3101
  %5596 = vmatprep.subr.bf16.mxu0 0
  %5597 = vmatpush1.bf16.msra.mxu0 %v3102
  %5598 = vmatprep.subr.bf16.mxu0 0
  %5599 = vmatpush1.bf16.msra.mxu0 %v3103
  %5600 = vmatprep.subr.bf16.mxu0 0
  %5601 = vmatpush1.bf16.msra.mxu0 %v3104
  %5602 = vmatprep.subr.bf16.mxu0 0
  %5603 = vmatpush1.bf16.msra.mxu0 %v3105
  %5604 = vmatprep.subr.bf16.mxu0 0
  %5605 = vmatpush1.bf16.msra.mxu0 %v3260
  %5606 = vmatprep.subr.bf16.mxu0 0
  %5607 = vmatpush1.bf16.msra.mxu0 0
  %5608 = vmatprep.subr.bf16.mxu0 0
  %5609 = vmatpush1.bf16.msra.mxu0 0
  %5610 = vmatprep.subr.bf16.mxu0 0
  %5611 = vmatpush1.bf16.msra.mxu0 0
  %5612 = vmatprep.subr.bf16.mxu0 0
  %5613 = vmatpush1.bf16.msra.mxu0 0
  %5614 = vmatprep.subr.bf16.mxu0 0
  %5615 = vmatpush1.bf16.msra.mxu0 0
  %5616 = vmatprep.mubr.bf16.mxu0 %v5552
  %5617 = vmatmul.mubr.bf16.gmra.mrb[0].mxu0 %v5518
  %v5618 = vpop.f32.mrb[0].mxu0
  %v5619 = vadd.f32 0.0, %v5618
  %v5620 = vpop.f32.mrb[0].mxu0
  %v5621 = vpop.f32.mrb[0].mxu0
  %v5622 = vadd.f32 0.0, %v5621
  %v5623 = vpop.f32.mrb[0].mxu0
  %5624 = vmatprep.mubr.bf16.mxu0 %v5555
  %5625 = vmatmul.mubr.bf16.gmra.mrb[0].mxu0 %v5520
  %v5626 = vpop.f32.mrb[0].mxu0
  %v5627 = vadd.f32 0.0, %v5626
  %v5628 = vpop.f32.mrb[0].mxu0
  %v5629 = vpop.f32.mrb[0].mxu0
  %v5630 = vadd.f32 0.0, %v5629
  %v5631 = vpop.f32.mrb[0].mxu0
  %5632 = vmatprep.mubr.bf16.mxu0 %v5558
  %5633 = vmatmul.mubr.bf16.gmra.mrb[0].mxu0 %v5522
  %v5634 = vpop.f32.mrb[0].mxu0
  %v5635 = vadd.f32 0.0, %v5634
  %v5636 = vpop.f32.mrb[0].mxu0
  %v5637 = vpop.f32.mrb[0].mxu0
  %v5638 = vadd.f32 0.0, %v5637
  %v5639 = vpop.f32.mrb[0].mxu0
  %5640 = vmatprep.mubr.bf16.mxu0 %v5561
  %5641 = vmatmul.mubr.bf16.gmra.mrb[0].mxu0 %v5524
  %v5642 = vpop.f32.mrb[0].mxu0
  %v5643 = vadd.f32 0.0, %v5642
  %v5644 = vpop.f32.mrb[0].mxu0
  %v5645 = vpop.f32.mrb[0].mxu0
  %v5646 = vadd.f32 0.0, %v5645
  %v5647 = vpop.f32.mrb[0].mxu0
  %5648 = vmatprep.mubr.bf16.mxu0 %v5564
  %5649 = vmatmul.mubr.bf16.gmra.mrb[0].mxu0 %v5526
  %v5650 = vpop.f32.mrb[0].mxu0
  %v5651 = vadd.f32 0.0, %v5650
  %v5652 = vpop.f32.mrb[0].mxu0
  %v5653 = vpop.f32.mrb[0].mxu0
  %v5654 = vadd.f32 0.0, %v5653
  %v5655 = vpop.f32.mrb[0].mxu0
  %5656 = vmatprep.mubr.bf16.mxu0 %v5567
  %5657 = vmatmul.mubr.bf16.gmra.mrb[0].mxu0 %v5528
  %v5658 = vpop.f32.mrb[0].mxu0
  %v5659 = vadd.f32 0.0, %v5658
  %v5660 = vpop.f32.mrb[0].mxu0
  %v5661 = vpop.f32.mrb[0].mxu0
  %v5662 = vadd.f32 0.0, %v5661
  %v5663 = vpop.f32.mrb[0].mxu0
  %5664 = vmatprep.mubr.bf16.mxu0 %v5570
  %5665 = vmatmul.mubr.bf16.gmra.mrb[0].mxu0 %v5530
  %v5666 = vpop.f32.mrb[0].mxu0
  %v5667 = vadd.f32 0.0, %v5666
  %v5668 = vpop.f32.mrb[0].mxu0
  %v5669 = vpop.f32.mrb[0].mxu0
  %v5670 = vadd.f32 0.0, %v5669
  %v5671 = vpop.f32.mrb[0].mxu0
  %5672 = vmatprep.mubr.bf16.mxu0 %v5573
  %5673 = vmatmul.mubr.bf16.gmra.mrb[0].mxu0 %v5532
  %v5674 = vpop.f32.mrb[0].mxu0
  %v5675 = vadd.f32 0.0, %v5674
  %v5676 = vpop.f32.mrb[0].mxu0
  %v5677 = vpop.f32.mrb[0].mxu0
  %v5678 = vadd.f32 0.0, %v5677
  %v5679 = vpop.f32.mrb[0].mxu0
  %5680 = vmatprep.mubr.bf16.mxu0 %v5576
  %5681 = vmatmul.mubr.bf16.gmra.mrb[0].mxu0 %v5534
  %v5682 = vpop.f32.mrb[0].mxu0
  %v5683 = vadd.f32 0.0, %v5682
  %v5684 = vpop.f32.mrb[0].mxu0
  %v5685 = vpop.f32.mrb[0].mxu0
  %v5686 = vadd.f32 0.0, %v5685
  %v5687 = vpop.f32.mrb[0].mxu0
  %5688 = vmatprep.mubr.bf16.mxu0 %v5579
  %5689 = vmatmul.mubr.bf16.gmra.mrb[0].mxu0 %v5536
  %v5690 = vpop.f32.mrb[0].mxu0
  %v5691 = vadd.f32 0.0, %v5690
  %v5692 = vpop.f32.mrb[0].mxu0
  %v5693 = vpop.f32.mrb[0].mxu0
  %v5694 = vadd.f32 0.0, %v5693
  %v5695 = vpop.f32.mrb[0].mxu0
  %5696 = vmatprep.mubr.bf16.mxu0 %v5582
  %5697 = vmatmul.mubr.bf16.gmra.mrb[0].mxu0 %v5538
  %v5698 = vpop.f32.mrb[0].mxu0
  %v5699 = vadd.f32 0.0, %v5698
  %v5700 = vpop.f32.mrb[0].mxu0
  %v5701 = vpop.f32.mrb[0].mxu0
  %v5702 = vpop.f32.mrb[0].mxu0
  %5703 = vdwg.mxu0
  %v5704 = vpack.c.bf16 %v5622, %v5619
  %v5705 = vpack.c.bf16 %v5630, %v5627
  %v5706 = vpack.c.bf16 %v5638, %v5635
  %v5707 = vpack.c.bf16 %v5646, %v5643
  %v5708 = vpack.c.bf16 %v5654, %v5651
  %v5709 = vpack.c.bf16 %v5662, %v5659
  %v5710 = vpack.c.bf16 %v5670, %v5667
  %v5711 = vpack.c.bf16 %v5678, %v5675
  %v5712 = vpack.c.bf16 %v5686, %v5683
  %v5713 = vpack.c.bf16 %v5694, %v5691
  %v5714 = vpack.c.bf16 %v5699, %v5699
  %s5715 = scalar_lea.vmem %s6, 80
  %v5716 = vld [vmem:[%s5715] sm:$0xf]
  %v5717 = vld [vmem:[%s5715 + $0x4] sm:$0xf]
  %v5718 = vld [vmem:[%s5715 + $0x8] sm:$0xf]
  %v5719 = vld [vmem:[%s5715 + $0xc] sm:$0xf]
  %v5724 = vunpack.c.l.b16 %v5716
  %v5725 = vunpack.c.l.b16 %v5717
  %v5726 = vunpack.c.l.b16 %v5718
  %v5727 = vunpack.c.l.b16 %v5719
  %v5728 = vpack.c.b16 %v5725, %v5724
  %v5729 = vpack.c.b16 %v5727, %v5726
  %v5733 = vsel %vm647, %v5704, 0
  %v5736 = vsel %vm647, %v5705, 0
  %v5739 = vsel %vm647, %v5706, 0
  %v5742 = vsel %vm647, %v5707, 0
  %v5745 = vsel %vm647, %v5708, 0
  %v5748 = vsel %vm647, %v5709, 0
  %v5751 = vsel %vm647, %v5710, 0
  %v5754 = vsel %vm647, %v5711, 0
  %v5757 = vsel %vm647, %v5712, 0
  %v5760 = vsel %vm647, %v5713, 0
  %v5763 = vsel %vm647, %v5714, 0
  %5765 = vmatprep.subr.bf16.mxu0 0
  %5766 = vmatpush1.bf16.msra.mxu0 %v5728
  %5767 = vmatprep.subr.bf16.mxu0 0
  %5768 = vmatpush1.bf16.msra.mxu0 %v5729
  %5769 = vmatprep.subr.bf16.mxu0 0
  %5770 = vmatpush1.bf16.msra.mxu0 0
  %5771 = vmatprep.subr.bf16.mxu0 0
  %5772 = vmatpush1.bf16.msra.mxu0 0
  %5773 = vmatprep.subr.bf16.mxu0 0
  %5774 = vmatpush1.bf16.msra.mxu0 0
  %5775 = vmatprep.subr.bf16.mxu0 0
  %5776 = vmatpush1.bf16.msra.mxu0 0
  %5777 = vmatprep.subr.bf16.mxu0 0
  %5778 = vmatpush1.bf16.msra.mxu0 0
  %5779 = vmatprep.subr.bf16.mxu0 0
  %5780 = vmatpush1.bf16.msra.mxu0 0
  %5781 = vmatprep.subr.bf16.mxu0 0
  %5782 = vmatpush1.bf16.msra.mxu0 0
  %5783 = vmatprep.subr.bf16.mxu0 0
  %5784 = vmatpush1.bf16.msra.mxu0 0
  %5785 = vmatprep.subr.bf16.mxu0 0
  %5786 = vmatpush1.bf16.msra.mxu0 0
  %5787 = vmatprep.subr.bf16.mxu0 0
  %5788 = vmatpush1.bf16.msra.mxu0 0
  %5789 = vmatprep.subr.bf16.mxu0 0
  %5790 = vmatpush1.bf16.msra.mxu0 0
  %5791 = vmatprep.subr.bf16.mxu0 0
  %5792 = vmatpush1.bf16.msra.mxu0 0
  %5793 = vmatprep.subr.bf16.mxu0 0
  %5794 = vmatpush1.bf16.msra.mxu0 0
  %5795 = vmatprep.subr.bf16.mxu0 0
  %5796 = vmatpush1.bf16.msra.mxu0 0
  %5797 = vmatprep.mubr.bf16.mxu0 0
  %5798 = vmatmul.mubr.bf16.gmra.mrb[0].mxu0 %v5733
  %v5799 = vpop.f32.mrb[0].mxu0
  %v5800 = vadd.f32 0.0, %v5799
  %v5801 = vpop.f32.mrb[0].mxu0
  %v5802 = vpop.f32.mrb[0].mxu0
  %v5803 = vadd.f32 0.0, %v5802
  %v5804 = vpop.f32.mrb[0].mxu0
  %5805 = vmatprep.mubr.bf16.mxu0 0
  %5806 = vmatmul.mubr.bf16.gmra.mrb[0].mxu0 %v5736
  %v5807 = vpop.f32.mrb[0].mxu0
  %v5808 = vadd.f32 0.0, %v5807
  %v5809 = vpop.f32.mrb[0].mxu0
  %v5810 = vpop.f32.mrb[0].mxu0
  %v5811 = vadd.f32 0.0, %v5810
  %v5812 = vpop.f32.mrb[0].mxu0
  %5813 = vmatprep.mubr.bf16.mxu0 0
  %5814 = vmatmul.mubr.bf16.gmra.mrb[0].mxu0 %v5739
  %v5815 = vpop.f32.mrb[0].mxu0
  %v5816 = vadd.f32 0.0, %v5815
  %v5817 = vpop.f32.mrb[0].mxu0
  %v5818 = vpop.f32.mrb[0].mxu0
  %v5819 = vadd.f32 0.0, %v5818
  %v5820 = vpop.f32.mrb[0].mxu0
  %5821 = vmatprep.mubr.bf16.mxu0 0
  %5822 = vmatmul.mubr.bf16.gmra.mrb[0].mxu0 %v5742
  %v5823 = vpop.f32.mrb[0].mxu0
  %v5824 = vadd.f32 0.0, %v5823
  %v5825 = vpop.f32.mrb[0].mxu0
  %v5826 = vpop.f32.mrb[0].mxu0
  %v5827 = vadd.f32 0.0, %v5826
  %v5828 = vpop.f32.mrb[0].mxu0
  %5829 = vmatprep.mubr.bf16.mxu0 0
  %5830 = vmatmul.mubr.bf16.gmra.mrb[0].mxu0 %v5745
  %v5831 = vpop.f32.mrb[0].mxu0
  %v5832 = vadd.f32 0.0, %v5831
  %v5833 = vpop.f32.mrb[0].mxu0
  %v5834 = vpop.f32.mrb[0].mxu0
  %v5835 = vadd.f32 0.0, %v5834
  %v5836 = vpop.f32.mrb[0].mxu0
  %5837 = vmatprep.mubr.bf16.mxu0 0
  %5838 = vmatmul.mubr.bf16.gmra.mrb[0].mxu0 %v5748
  %v5839 = vpop.f32.mrb[0].mxu0
  %v5840 = vadd.f32 0.0, %v5839
  %v5841 = vpop.f32.mrb[0].mxu0
  %v5842 = vpop.f32.mrb[0].mxu0
  %v5843 = vadd.f32 0.0, %v5842
  %v5844 = vpop.f32.mrb[0].mxu0
  %5845 = vmatprep.mubr.bf16.mxu0 0
  %5846 = vmatmul.mubr.bf16.gmra.mrb[0].mxu0 %v5751
  %v5847 = vpop.f32.mrb[0].mxu0
  %v5848 = vadd.f32 0.0, %v5847
  %v5849 = vpop.f32.mrb[0].mxu0
  %v5850 = vpop.f32.mrb[0].mxu0
  %v5851 = vadd.f32 0.0, %v5850
  %v5852 = vpop.f32.mrb[0].mxu0
  %5853 = vmatprep.mubr.bf16.mxu0 0
  %5854 = vmatmul.mubr.bf16.gmra.mrb[0].mxu0 %v5754
  %v5855 = vpop.f32.mrb[0].mxu0
  %v5856 = vadd.f32 0.0, %v5855
  %v5857 = vpop.f32.mrb[0].mxu0
  %v5858 = vpop.f32.mrb[0].mxu0
  %v5859 = vadd.f32 0.0, %v5858
  %v5860 = vpop.f32.mrb[0].mxu0
  %5861 = vmatprep.mubr.bf16.mxu0 0
  %5862 = vmatmul.mubr.bf16.gmra.mrb[0].mxu0 %v5757
  %v5863 = vpop.f32.mrb[0].mxu0
  %v5864 = vadd.f32 0.0, %v5863
  %v5865 = vpop.f32.mrb[0].mxu0
  %v5866 = vpop.f32.mrb[0].mxu0
  %v5867 = vadd.f32 0.0, %v5866
  %v5868 = vpop.f32.mrb[0].mxu0
  %5869 = vmatprep.mubr.bf16.mxu0 0
  %5870 = vmatmul.mubr.bf16.gmra.mrb[0].mxu0 %v5760
  %v5871 = vpop.f32.mrb[0].mxu0
  %v5872 = vadd.f32 0.0, %v5871
  %v5873 = vpop.f32.mrb[0].mxu0
  %v5874 = vpop.f32.mrb[0].mxu0
  %v5875 = vadd.f32 0.0, %v5874
  %v5876 = vpop.f32.mrb[0].mxu0
  %5877 = vmatprep.mubr.bf16.mxu0 0
  %5878 = vmatmul.mubr.bf16.gmra.mrb[0].mxu0 %v5763
  %v5879 = vpop.f32.mrb[0].mxu0
  %v5880 = vadd.f32 0.0, %v5879
  %v5881 = vpop.f32.mrb[0].mxu0
  %v5882 = vpop.f32.mrb[0].mxu0
  %v5883 = vpop.f32.mrb[0].mxu0
  %5884 = vdwg.mxu0
  %v5885 = vadd.f32 %v5412, %v5800
  %v5886 = vadd.f32 %v5413, %v5803
  %v5887 = vadd.f32 %v5414, %v5808
  %v5888 = vadd.f32 %v5415, %v5811
  %v5889 = vadd.f32 %v5416, %v5816
  %v5890 = vadd.f32 %v5417, %v5819
  %v5891 = vadd.f32 %v5418, %v5824
  %v5892 = vadd.f32 %v5419, %v5827
  %v5893 = vadd.f32 %v5420, %v5832
  %v5894 = vadd.f32 %v5421, %v5835
  %v5895 = vadd.f32 %v5422, %v5840
  %v5896 = vadd.f32 %v5423, %v5843
  %v5897 = vadd.f32 %v5424, %v5848
  %v5898 = vadd.f32 %v5425, %v5851
  %v5899 = vadd.f32 %v5426, %v5856
  %v5900 = vadd.f32 %v5427, %v5859
  %v5901 = vadd.f32 %v5428, %v5864
  %v5902 = vadd.f32 %v5429, %v5867
  %v5903 = vadd.f32 %v5430, %v5872
  %v5904 = vadd.f32 %v5431, %v5875
  %v5905 = vadd.f32 %v5432, %v5880
  %s5906 = scalar_lea.vmem %s5, 1008
  %v5907 = vld [vmem:[%s5906] sm:$0xff]
  %v5908 = vld [vmem:[%s5906 + $0x8] sm:$0xff]
  %v5909 = vld [vmem:[%s5906 + $0x10] sm:$0xff]
  %v5910 = vld [vmem:[%s5906 + $0x18] sm:$0xff]
  %v5911 = vld [vmem:[%s5906 + $0x20] sm:$0xff]
  %v5912 = vld [vmem:[%s5906 + $0x28] sm:$0xff]
  %v5913 = vld [vmem:[%s5906 + $0x30] sm:$0xff]
  %v5914 = vld [vmem:[%s5906 + $0x38] sm:$0xff]
  %v5915 = vld [vmem:[%s5906 + $0x40] sm:$0xff]
  %v5916 = vld [vmem:[%s5906 + $0x48] sm:$0xff]
  %v5917 = vld [vmem:[%s5906 + $0x50] sm:$0xff]
  %v5918 = vld [vmem:[%s5906 + $0x58] sm:$0xff]
  %v5919 = vld [vmem:[%s5906 + $0x60] sm:$0xff]
  %v5920 = vld [vmem:[%s5906 + $0x68] sm:$0xff]
  %v5921 = vld [vmem:[%s5906 + $0x70] sm:$0xff]
  %v5922 = vld [vmem:[%s5906 + $0x78] sm:$0xff]
  %v5923 = vld [vmem:[%s5906 + $0x80] sm:$0xff]
  %v5924 = vld [vmem:[%s5906 + $0x88] sm:$0xff]
  %v5925 = vld [vmem:[%s5906 + $0x90] sm:$0xff]
  %v5926 = vld [vmem:[%s5906 + $0x98] sm:$0xff]
  %v5927 = vld [vmem:[%s5906 + $0xa0] sm:$0x11]
  %v5949 = vunpack.c.l.b16 %v5907
  %v5950 = vunpack.c.h.b16 %v5907
  %v5951 = vunpack.c.l.b16 %v5908
  %v5952 = vunpack.c.h.b16 %v5908
  %v5953 = vunpack.c.l.b16 %v5909
  %v5954 = vunpack.c.h.b16 %v5909
  %v5955 = vunpack.c.l.b16 %v5910
  %v5956 = vunpack.c.h.b16 %v5910
  %v5957 = vunpack.c.l.b16 %v5911
  %v5958 = vunpack.c.h.b16 %v5911
  %v5959 = vunpack.c.l.b16 %v5912
  %v5960 = vunpack.c.h.b16 %v5912
  %v5961 = vunpack.c.l.b16 %v5913
  %v5962 = vunpack.c.h.b16 %v5913
  %v5963 = vunpack.c.l.b16 %v5914
  %v5964 = vunpack.c.h.b16 %v5914
  %v5965 = vunpack.c.l.b16 %v5915
  %v5966 = vunpack.c.h.b16 %v5915
  %v5967 = vunpack.c.l.b16 %v5916
  %v5968 = vunpack.c.h.b16 %v5916
  %v5969 = vunpack.c.l.b16 %v5917
  %v5970 = vunpack.c.h.b16 %v5917
  %v5971 = vunpack.c.l.b16 %v5918
  %v5972 = vunpack.c.h.b16 %v5918
  %v5973 = vunpack.c.l.b16 %v5919
  %v5974 = vunpack.c.h.b16 %v5919
  %v5975 = vunpack.c.l.b16 %v5920
  %v5976 = vunpack.c.h.b16 %v5920
  %v5977 = vunpack.c.l.b16 %v5921
  %v5978 = vunpack.c.h.b16 %v5921
  %v5979 = vunpack.c.l.b16 %v5922
  %v5980 = vunpack.c.h.b16 %v5922
  %v5981 = vunpack.c.l.b16 %v5923
  %v5982 = vunpack.c.h.b16 %v5923
  %v5983 = vunpack.c.l.b16 %v5924
  %v5984 = vunpack.c.h.b16 %v5924
  %v5985 = vunpack.c.l.b16 %v5925
  %v5986 = vunpack.c.h.b16 %v5925
  %v5987 = vunpack.c.l.b16 %v5926
  %v5988 = vunpack.c.h.b16 %v5926
  %v5989 = vunpack.c.l.b16 %v5927
  %v5990 = vunpack.c.h.b16 %v5927
  %v5991 = vpack.c.b16 %v5951, %v5949
  %v5992 = vpack.c.b16 %v5952, %v5950
  %v5993 = vpack.c.b16 %v5955, %v5953
  %v5994 = vpack.c.b16 %v5956, %v5954
  %v5995 = vpack.c.b16 %v5959, %v5957
  %v5996 = vpack.c.b16 %v5960, %v5958
  %v5997 = vpack.c.b16 %v5963, %v5961
  %v5998 = vpack.c.b16 %v5964, %v5962
  %v5999 = vpack.c.b16 %v5967, %v5965
  %v6000 = vpack.c.b16 %v5968, %v5966
  %v6001 = vpack.c.b16 %v5971, %v5969
  %v6002 = vpack.c.b16 %v5972, %v5970
  %v6003 = vpack.c.b16 %v5975, %v5973
  %v6004 = vpack.c.b16 %v5976, %v5974
  %v6005 = vpack.c.b16 %v5979, %v5977
  %v6006 = vpack.c.b16 %v5980, %v5978
  %v6007 = vpack.c.b16 %v5983, %v5981
  %v6008 = vpack.c.b16 %v5984, %v5982
  %v6009 = vpack.c.b16 %v5987, %v5985
  %v6010 = vpack.c.b16 %v5988, %v5986
  %v6011 = vpack.c.b16 %v5989, %v5989
  %v6012 = vpack.c.b16 %v5990, %v5990
  %v6025 = vsel %vm3224, %v5992, 0
  %v6028 = vsel %vm3224, %v5994, 0
  %v6031 = vsel %vm3224, %v5996, 0
  %v6034 = vsel %vm3224, %v5998, 0
  %v6037 = vsel %vm3224, %v6000, 0
  %v6040 = vsel %vm3224, %v6002, 0
  %v6043 = vsel %vm3224, %v6004, 0
  %v6046 = vsel %vm3224, %v6006, 0
  %v6049 = vsel %vm3224, %v6008, 0
  %v6052 = vsel %vm3224, %v6010, 0
  %v6055 = vsel %vm3224, %v6012, 0
  %6057 = vmatprep.subr.bf16.mxu0 0
  %6058 = vmatpush1.bf16.msra.mxu0 %v3096
  %6059 = vmatprep.subr.bf16.mxu0 0
  %6060 = vmatpush1.bf16.msra.mxu0 %v3097
  %6061 = vmatprep.subr.bf16.mxu0 0
  %6062 = vmatpush1.bf16.msra.mxu0 %v3098
  %6063 = vmatprep.subr.bf16.mxu0 0
  %6064 = vmatpush1.bf16.msra.mxu0 %v3099
  %6065 = vmatprep.subr.bf16.mxu0 0
  %6066 = vmatpush1.bf16.msra.mxu0 %v3100
  %6067 = vmatprep.subr.bf16.mxu0 0
  %6068 = vmatpush1.bf16.msra.mxu0 %v3101
  %6069 = vmatprep.subr.bf16.mxu0 0
  %6070 = vmatpush1.bf16.msra.mxu0 %v3102
  %6071 = vmatprep.subr.bf16.mxu0 0
  %6072 = vmatpush1.bf16.msra.mxu0 %v3103
  %6073 = vmatprep.subr.bf16.mxu0 0
  %6074 = vmatpush1.bf16.msra.mxu0 %v3104
  %6075 = vmatprep.subr.bf16.mxu0 0
  %6076 = vmatpush1.bf16.msra.mxu0 %v3105
  %6077 = vmatprep.subr.bf16.mxu0 0
  %6078 = vmatpush1.bf16.msra.mxu0 %v3260
  %6079 = vmatprep.subr.bf16.mxu0 0
  %6080 = vmatpush1.bf16.msra.mxu0 0
  %6081 = vmatprep.subr.bf16.mxu0 0
  %6082 = vmatpush1.bf16.msra.mxu0 0
  %6083 = vmatprep.subr.bf16.mxu0 0
  %6084 = vmatpush1.bf16.msra.mxu0 0
  %6085 = vmatprep.subr.bf16.mxu0 0
  %6086 = vmatpush1.bf16.msra.mxu0 0
  %6087 = vmatprep.subr.bf16.mxu0 0
  %6088 = vmatpush1.bf16.msra.mxu0 0
  %6089 = vmatprep.mubr.bf16.mxu0 %v6025
  %6090 = vmatmul.mubr.bf16.gmra.mrb[0].mxu0 %v5991
  %v6091 = vpop.f32.mrb[0].mxu0
  %v6092 = vadd.f32 0.0, %v6091
  %v6093 = vpop.f32.mrb[0].mxu0
  %v6094 = vpop.f32.mrb[0].mxu0
  %v6095 = vadd.f32 0.0, %v6094
  %v6096 = vpop.f32.mrb[0].mxu0
  %6097 = vmatprep.mubr.bf16.mxu0 %v6028
  %6098 = vmatmul.mubr.bf16.gmra.mrb[0].mxu0 %v5993
  %v6099 = vpop.f32.mrb[0].mxu0
  %v6100 = vadd.f32 0.0, %v6099
  %v6101 = vpop.f32.mrb[0].mxu0
  %v6102 = vpop.f32.mrb[0].mxu0
  %v6103 = vadd.f32 0.0, %v6102
  %v6104 = vpop.f32.mrb[0].mxu0
  %6105 = vmatprep.mubr.bf16.mxu0 %v6031
  %6106 = vmatmul.mubr.bf16.gmra.mrb[0].mxu0 %v5995
  %v6107 = vpop.f32.mrb[0].mxu0
  %v6108 = vadd.f32 0.0, %v6107
  %v6109 = vpop.f32.mrb[0].mxu0
  %v6110 = vpop.f32.mrb[0].mxu0
  %v6111 = vadd.f32 0.0, %v6110
  %v6112 = vpop.f32.mrb[0].mxu0
  %6113 = vmatprep.mubr.bf16.mxu0 %v6034
  %6114 = vmatmul.mubr.bf16.gmra.mrb[0].mxu0 %v5997
  %v6115 = vpop.f32.mrb[0].mxu0
  %v6116 = vadd.f32 0.0, %v6115
  %v6117 = vpop.f32.mrb[0].mxu0
  %v6118 = vpop.f32.mrb[0].mxu0
  %v6119 = vadd.f32 0.0, %v6118
  %v6120 = vpop.f32.mrb[0].mxu0
  %6121 = vmatprep.mubr.bf16.mxu0 %v6037
  %6122 = vmatmul.mubr.bf16.gmra.mrb[0].mxu0 %v5999
  %v6123 = vpop.f32.mrb[0].mxu0
  %v6124 = vadd.f32 0.0, %v6123
  %v6125 = vpop.f32.mrb[0].mxu0
  %v6126 = vpop.f32.mrb[0].mxu0
  %v6127 = vadd.f32 0.0, %v6126
  %v6128 = vpop.f32.mrb[0].mxu0
  %6129 = vmatprep.mubr.bf16.mxu0 %v6040
  %6130 = vmatmul.mubr.bf16.gmra.mrb[0].mxu0 %v6001
  %v6131 = vpop.f32.mrb[0].mxu0
  %v6132 = vadd.f32 0.0, %v6131
  %v6133 = vpop.f32.mrb[0].mxu0
  %v6134 = vpop.f32.mrb[0].mxu0
  %v6135 = vadd.f32 0.0, %v6134
  %v6136 = vpop.f32.mrb[0].mxu0
  %6137 = vmatprep.mubr.bf16.mxu0 %v6043
  %6138 = vmatmul.mubr.bf16.gmra.mrb[0].mxu0 %v6003
  %v6139 = vpop.f32.mrb[0].mxu0
  %v6140 = vadd.f32 0.0, %v6139
  %v6141 = vpop.f32.mrb[0].mxu0
  %v6142 = vpop.f32.mrb[0].mxu0
  %v6143 = vadd.f32 0.0, %v6142
  %v6144 = vpop.f32.mrb[0].mxu0
  %6145 = vmatprep.mubr.bf16.mxu0 %v6046
  %6146 = vmatmul.mubr.bf16.gmra.mrb[0].mxu0 %v6005
  %v6147 = vpop.f32.mrb[0].mxu0
  %v6148 = vadd.f32 0.0, %v6147
  %v6149 = vpop.f32.mrb[0].mxu0
  %v6150 = vpop.f32.mrb[0].mxu0
  %v6151 = vadd.f32 0.0, %v6150
  %v6152 = vpop.f32.mrb[0].mxu0
  %6153 = vmatprep.mubr.bf16.mxu0 %v6049
  %6154 = vmatmul.mubr.bf16.gmra.mrb[0].mxu0 %v6007
  %v6155 = vpop.f32.mrb[0].mxu0
  %v6156 = vadd.f32 0.0, %v6155
  %v6157 = vpop.f32.mrb[0].mxu0
  %v6158 = vpop.f32.mrb[0].mxu0
  %v6159 = vadd.f32 0.0, %v6158
  %v6160 = vpop.f32.mrb[0].mxu0
  %6161 = vmatprep.mubr.bf16.mxu0 %v6052
  %6162 = vmatmul.mubr.bf16.gmra.mrb[0].mxu0 %v6009
  %v6163 = vpop.f32.mrb[0].mxu0
  %v6164 = vadd.f32 0.0, %v6163
  %v6165 = vpop.f32.mrb[0].mxu0
  %v6166 = vpop.f32.mrb[0].mxu0
  %v6167 = vadd.f32 0.0, %v6166
  %v6168 = vpop.f32.mrb[0].mxu0
  %6169 = vmatprep.mubr.bf16.mxu0 %v6055
  %6170 = vmatmul.mubr.bf16.gmra.mrb[0].mxu0 %v6011
  %v6171 = vpop.f32.mrb[0].mxu0
  %v6172 = vadd.f32 0.0, %v6171
  %v6173 = vpop.f32.mrb[0].mxu0
  %v6174 = vpop.f32.mrb[0].mxu0
  %v6175 = vpop.f32.mrb[0].mxu0
  %6176 = vdwg.mxu0
  %v6177 = vpack.c.bf16 %v6095, %v6092
  %v6178 = vpack.c.bf16 %v6103, %v6100
  %v6179 = vpack.c.bf16 %v6111, %v6108
  %v6180 = vpack.c.bf16 %v6119, %v6116
  %v6181 = vpack.c.bf16 %v6127, %v6124
  %v6182 = vpack.c.bf16 %v6135, %v6132
  %v6183 = vpack.c.bf16 %v6143, %v6140
  %v6184 = vpack.c.bf16 %v6151, %v6148
  %v6185 = vpack.c.bf16 %v6159, %v6156
  %v6186 = vpack.c.bf16 %v6167, %v6164
  %v6187 = vpack.c.bf16 %v6172, %v6172
  %s6188 = scalar_lea.vmem %s6, 96
  %v6189 = vld [vmem:[%s6188] sm:$0xf]
  %v6190 = vld [vmem:[%s6188 + $0x4] sm:$0xf]
  %v6191 = vld [vmem:[%s6188 + $0x8] sm:$0xf]
  %v6192 = vld [vmem:[%s6188 + $0xc] sm:$0xf]
  %v6197 = vunpack.c.l.b16 %v6189
  %v6198 = vunpack.c.l.b16 %v6190
  %v6199 = vunpack.c.l.b16 %v6191
  %v6200 = vunpack.c.l.b16 %v6192
  %v6201 = vpack.c.b16 %v6198, %v6197
  %v6202 = vpack.c.b16 %v6200, %v6199
  %v6206 = vsel %vm647, %v6177, 0
  %v6209 = vsel %vm647, %v6178, 0
  %v6212 = vsel %vm647, %v6179, 0
  %v6215 = vsel %vm647, %v6180, 0
  %v6218 = vsel %vm647, %v6181, 0
  %v6221 = vsel %vm647, %v6182, 0
  %v6224 = vsel %vm647, %v6183, 0
  %v6227 = vsel %vm647, %v6184, 0
  %v6230 = vsel %vm647, %v6185, 0
  %v6233 = vsel %vm647, %v6186, 0
  %v6236 = vsel %vm647, %v6187, 0
  %6238 = vmatprep.subr.bf16.mxu0 0
  %6239 = vmatpush1.bf16.msra.mxu0 %v6201
  %6240 = vmatprep.subr.bf16.mxu0 0
  %6241 = vmatpush1.bf16.msra.mxu0 %v6202
  %6242 = vmatprep.subr.bf16.mxu0 0
  %6243 = vmatpush1.bf16.msra.mxu0 0
  %6244 = vmatprep.subr.bf16.mxu0 0
  %6245 = vmatpush1.bf16.msra.mxu0 0
  %6246 = vmatprep.subr.bf16.mxu0 0
  %6247 = vmatpush1.bf16.msra.mxu0 0
  %6248 = vmatprep.subr.bf16.mxu0 0
  %6249 = vmatpush1.bf16.msra.mxu0 0
  %6250 = vmatprep.subr.bf16.mxu0 0
  %6251 = vmatpush1.bf16.msra.mxu0 0
  %6252 = vmatprep.subr.bf16.mxu0 0
  %6253 = vmatpush1.bf16.msra.mxu0 0
  %6254 = vmatprep.subr.bf16.mxu0 0
  %6255 = vmatpush1.bf16.msra.mxu0 0
  %6256 = vmatprep.subr.bf16.mxu0 0
  %6257 = vmatpush1.bf16.msra.mxu0 0
  %6258 = vmatprep.subr.bf16.mxu0 0
  %6259 = vmatpush1.bf16.msra.mxu0 0
  %6260 = vmatprep.subr.bf16.mxu0 0
  %6261 = vmatpush1.bf16.msra.mxu0 0
  %6262 = vmatprep.subr.bf16.mxu0 0
  %6263 = vmatpush1.bf16.msra.mxu0 0
  %6264 = vmatprep.subr.bf16.mxu0 0
  %6265 = vmatpush1.bf16.msra.mxu0 0
  %6266 = vmatprep.subr.bf16.mxu0 0
  %6267 = vmatpush1.bf16.msra.mxu0 0
  %6268 = vmatprep.subr.bf16.mxu0 0
  %6269 = vmatpush1.bf16.msra.mxu0 0
  %6270 = vmatprep.mubr.bf16.mxu0 0
  %6271 = vmatmul.mubr.bf16.gmra.mrb[0].mxu0 %v6206
  %v6272 = vpop.f32.mrb[0].mxu0
  %v6273 = vadd.f32 0.0, %v6272
  %v6274 = vpop.f32.mrb[0].mxu0
  %v6275 = vpop.f32.mrb[0].mxu0
  %v6276 = vadd.f32 0.0, %v6275
  %v6277 = vpop.f32.mrb[0].mxu0
  %6278 = vmatprep.mubr.bf16.mxu0 0
  %6279 = vmatmul.mubr.bf16.gmra.mrb[0].mxu0 %v6209
  %v6280 = vpop.f32.mrb[0].mxu0
  %v6281 = vadd.f32 0.0, %v6280
  %v6282 = vpop.f32.mrb[0].mxu0
  %v6283 = vpop.f32.mrb[0].mxu0
  %v6284 = vadd.f32 0.0, %v6283
  %v6285 = vpop.f32.mrb[0].mxu0
  %6286 = vmatprep.mubr.bf16.mxu0 0
  %6287 = vmatmul.mubr.bf16.gmra.mrb[0].mxu0 %v6212
  %v6288 = vpop.f32.mrb[0].mxu0
  %v6289 = vadd.f32 0.0, %v6288
  %v6290 = vpop.f32.mrb[0].mxu0
  %v6291 = vpop.f32.mrb[0].mxu0
  %v6292 = vadd.f32 0.0, %v6291
  %v6293 = vpop.f32.mrb[0].mxu0
  %6294 = vmatprep.mubr.bf16.mxu0 0
  %6295 = vmatmul.mubr.bf16.gmra.mrb[0].mxu0 %v6215
  %v6296 = vpop.f32.mrb[0].mxu0
  %v6297 = vadd.f32 0.0, %v6296
  %v6298 = vpop.f32.mrb[0].mxu0
  %v6299 = vpop.f32.mrb[0].mxu0
  %v6300 = vadd.f32 0.0, %v6299
  %v6301 = vpop.f32.mrb[0].mxu0
  %6302 = vmatprep.mubr.bf16.mxu0 0
  %6303 = vmatmul.mubr.bf16.gmra.mrb[0].mxu0 %v6218
  %v6304 = vpop.f32.mrb[0].mxu0
  %v6305 = vadd.f32 0.0, %v6304
  %v6306 = vpop.f32.mrb[0].mxu0
  %v6307 = vpop.f32.mrb[0].mxu0
  %v6308 = vadd.f32 0.0, %v6307
  %v6309 = vpop.f32.mrb[0].mxu0
  %6310 = vmatprep.mubr.bf16.mxu0 0
  %6311 = vmatmul.mubr.bf16.gmra.mrb[0].mxu0 %v6221
  %v6312 = vpop.f32.mrb[0].mxu0
  %v6313 = vadd.f32 0.0, %v6312
  %v6314 = vpop.f32.mrb[0].mxu0
  %v6315 = vpop.f32.mrb[0].mxu0
  %v6316 = vadd.f32 0.0, %v6315
  %v6317 = vpop.f32.mrb[0].mxu0
  %6318 = vmatprep.mubr.bf16.mxu0 0
  %6319 = vmatmul.mubr.bf16.gmra.mrb[0].mxu0 %v6224
  %v6320 = vpop.f32.mrb[0].mxu0
  %v6321 = vadd.f32 0.0, %v6320
  %v6322 = vpop.f32.mrb[0].mxu0
  %v6323 = vpop.f32.mrb[0].mxu0
  %v6324 = vadd.f32 0.0, %v6323
  %v6325 = vpop.f32.mrb[0].mxu0
  %6326 = vmatprep.mubr.bf16.mxu0 0
  %6327 = vmatmul.mubr.bf16.gmra.mrb[0].mxu0 %v6227
  %v6328 = vpop.f32.mrb[0].mxu0
  %v6329 = vadd.f32 0.0, %v6328
  %v6330 = vpop.f32.mrb[0].mxu0
  %v6331 = vpop.f32.mrb[0].mxu0
  %v6332 = vadd.f32 0.0, %v6331
  %v6333 = vpop.f32.mrb[0].mxu0
  %6334 = vmatprep.mubr.bf16.mxu0 0
  %6335 = vmatmul.mubr.bf16.gmra.mrb[0].mxu0 %v6230
  %v6336 = vpop.f32.mrb[0].mxu0
  %v6337 = vadd.f32 0.0, %v6336
  %v6338 = vpop.f32.mrb[0].mxu0
  %v6339 = vpop.f32.mrb[0].mxu0
  %v6340 = vadd.f32 0.0, %v6339
  %v6341 = vpop.f32.mrb[0].mxu0
  %6342 = vmatprep.mubr.bf16.mxu0 0
  %6343 = vmatmul.mubr.bf16.gmra.mrb[0].mxu0 %v6233
  %v6344 = vpop.f32.mrb[0].mxu0
  %v6345 = vadd.f32 0.0, %v6344
  %v6346 = vpop.f32.mrb[0].mxu0
  %v6347 = vpop.f32.mrb[0].mxu0
  %v6348 = vadd.f32 0.0, %v6347
  %v6349 = vpop.f32.mrb[0].mxu0
  %6350 = vmatprep.mubr.bf16.mxu0 0
  %6351 = vmatmul.mubr.bf16.gmra.mrb[0].mxu0 %v6236
  %v6352 = vpop.f32.mrb[0].mxu0
  %v6353 = vadd.f32 0.0, %v6352
  %v6354 = vpop.f32.mrb[0].mxu0
  %v6355 = vpop.f32.mrb[0].mxu0
  %v6356 = vpop.f32.mrb[0].mxu0
  %6357 = vdwg.mxu0
  %v6358 = vadd.f32 %v5885, %v6273
  %v6359 = vadd.f32 %v5886, %v6276
  %v6360 = vadd.f32 %v5887, %v6281
  %v6361 = vadd.f32 %v5888, %v6284
  %v6362 = vadd.f32 %v5889, %v6289
  %v6363 = vadd.f32 %v5890, %v6292
  %v6364 = vadd.f32 %v5891, %v6297
  %v6365 = vadd.f32 %v5892, %v6300
  %v6366 = vadd.f32 %v5893, %v6305
  %v6367 = vadd.f32 %v5894, %v6308
  %v6368 = vadd.f32 %v5895, %v6313
  %v6369 = vadd.f32 %v5896, %v6316
  %v6370 = vadd.f32 %v5897, %v6321
  %v6371 = vadd.f32 %v5898, %v6324
  %v6372 = vadd.f32 %v5899, %v6329
  %v6373 = vadd.f32 %v5900, %v6332
  %v6374 = vadd.f32 %v5901, %v6337
  %v6375 = vadd.f32 %v5902, %v6340
  %v6376 = vadd.f32 %v5903, %v6345
  %v6377 = vadd.f32 %v5904, %v6348
  %v6378 = vadd.f32 %v5905, %v6353
  %s6379 = scalar_lea.vmem %s5, 1176
  %v6380 = vld [vmem:[%s6379] sm:$0xff]
  %v6381 = vld [vmem:[%s6379 + $0x8] sm:$0xff]
  %v6382 = vld [vmem:[%s6379 + $0x10] sm:$0xff]
  %v6383 = vld [vmem:[%s6379 + $0x18] sm:$0xff]
  %v6384 = vld [vmem:[%s6379 + $0x20] sm:$0xff]
  %v6385 = vld [vmem:[%s6379 + $0x28] sm:$0xff]
  %v6386 = vld [vmem:[%s6379 + $0x30] sm:$0xff]
  %v6387 = vld [vmem:[%s6379 + $0x38] sm:$0xff]
  %v6388 = vld [vmem:[%s6379 + $0x40] sm:$0xff]
  %v6389 = vld [vmem:[%s6379 + $0x48] sm:$0xff]
  %v6390 = vld [vmem:[%s6379 + $0x50] sm:$0xff]
  %v6391 = vld [vmem:[%s6379 + $0x58] sm:$0xff]
  %v6392 = vld [vmem:[%s6379 + $0x60] sm:$0xff]
  %v6393 = vld [vmem:[%s6379 + $0x68] sm:$0xff]
  %v6394 = vld [vmem:[%s6379 + $0x70] sm:$0xff]
  %v6395 = vld [vmem:[%s6379 + $0x78] sm:$0xff]
  %v6396 = vld [vmem:[%s6379 + $0x80] sm:$0xff]
  %v6397 = vld [vmem:[%s6379 + $0x88] sm:$0xff]
  %v6398 = vld [vmem:[%s6379 + $0x90] sm:$0xff]
  %v6399 = vld [vmem:[%s6379 + $0x98] sm:$0xff]
  %v6400 = vld [vmem:[%s6379 + $0xa0] sm:$0x11]
  %v6422 = vunpack.c.l.b16 %v6380
  %v6423 = vunpack.c.h.b16 %v6380
  %v6424 = vunpack.c.l.b16 %v6381
  %v6425 = vunpack.c.h.b16 %v6381
  %v6426 = vunpack.c.l.b16 %v6382
  %v6427 = vunpack.c.h.b16 %v6382
  %v6428 = vunpack.c.l.b16 %v6383
  %v6429 = vunpack.c.h.b16 %v6383
  %v6430 = vunpack.c.l.b16 %v6384
  %v6431 = vunpack.c.h.b16 %v6384
  %v6432 = vunpack.c.l.b16 %v6385
  %v6433 = vunpack.c.h.b16 %v6385
  %v6434 = vunpack.c.l.b16 %v6386
  %v6435 = vunpack.c.h.b16 %v6386
  %v6436 = vunpack.c.l.b16 %v6387
  %v6437 = vunpack.c.h.b16 %v6387
  %v6438 = vunpack.c.l.b16 %v6388
  %v6439 = vunpack.c.h.b16 %v6388
  %v6440 = vunpack.c.l.b16 %v6389
  %v6441 = vunpack.c.h.b16 %v6389
  %v6442 = vunpack.c.l.b16 %v6390
  %v6443 = vunpack.c.h.b16 %v6390
  %v6444 = vunpack.c.l.b16 %v6391
  %v6445 = vunpack.c.h.b16 %v6391
  %v6446 = vunpack.c.l.b16 %v6392
  %v6447 = vunpack.c.h.b16 %v6392
  %v6448 = vunpack.c.l.b16 %v6393
  %v6449 = vunpack.c.h.b16 %v6393
  %v6450 = vunpack.c.l.b16 %v6394
  %v6451 = vunpack.c.h.b16 %v6394
  %v6452 = vunpack.c.l.b16 %v6395
  %v6453 = vunpack.c.h.b16 %v6395
  %v6454 = vunpack.c.l.b16 %v6396
  %v6455 = vunpack.c.h.b16 %v6396
  %v6456 = vunpack.c.l.b16 %v6397
  %v6457 = vunpack.c.h.b16 %v6397
  %v6458 = vunpack.c.l.b16 %v6398
  %v6459 = vunpack.c.h.b16 %v6398
  %v6460 = vunpack.c.l.b16 %v6399
  %v6461 = vunpack.c.h.b16 %v6399
  %v6462 = vunpack.c.l.b16 %v6400
  %v6463 = vunpack.c.h.b16 %v6400
  %v6464 = vpack.c.b16 %v6424, %v6422
  %v6465 = vpack.c.b16 %v6425, %v6423
  %v6466 = vpack.c.b16 %v6428, %v6426
  %v6467 = vpack.c.b16 %v6429, %v6427
  %v6468 = vpack.c.b16 %v6432, %v6430
  %v6469 = vpack.c.b16 %v6433, %v6431
  %v6470 = vpack.c.b16 %v6436, %v6434
  %v6471 = vpack.c.b16 %v6437, %v6435
  %v6472 = vpack.c.b16 %v6440, %v6438
  %v6473 = vpack.c.b16 %v6441, %v6439
  %v6474 = vpack.c.b16 %v6444, %v6442
  %v6475 = vpack.c.b16 %v6445, %v6443
  %v6476 = vpack.c.b16 %v6448, %v6446
  %v6477 = vpack.c.b16 %v6449, %v6447
  %v6478 = vpack.c.b16 %v6452, %v6450
  %v6479 = vpack.c.b16 %v6453, %v6451
  %v6480 = vpack.c.b16 %v6456, %v6454
  %v6481 = vpack.c.b16 %v6457, %v6455
  %v6482 = vpack.c.b16 %v6460, %v6458
  %v6483 = vpack.c.b16 %v6461, %v6459
  %v6484 = vpack.c.b16 %v6462, %v6462
  %v6485 = vpack.c.b16 %v6463, %v6463
  %v6498 = vsel %vm3224, %v6465, 0
  %v6501 = vsel %vm3224, %v6467, 0
  %v6504 = vsel %vm3224, %v6469, 0
  %v6507 = vsel %vm3224, %v6471, 0
  %v6510 = vsel %vm3224, %v6473, 0
  %v6513 = vsel %vm3224, %v6475, 0
  %v6516 = vsel %vm3224, %v6477, 0
  %v6519 = vsel %vm3224, %v6479, 0
  %v6522 = vsel %vm3224, %v6481, 0
  %v6525 = vsel %vm3224, %v6483, 0
  %v6528 = vsel %vm3224, %v6485, 0
  %6530 = vmatprep.subr.bf16.mxu0 0
  %6531 = vmatpush1.bf16.msra.mxu0 %v3096
  %6532 = vmatprep.subr.bf16.mxu0 0
  %6533 = vmatpush1.bf16.msra.mxu0 %v3097
  %6534 = vmatprep.subr.bf16.mxu0 0
  %6535 = vmatpush1.bf16.msra.mxu0 %v3098
  %6536 = vmatprep.subr.bf16.mxu0 0
  %6537 = vmatpush1.bf16.msra.mxu0 %v3099
  %6538 = vmatprep.subr.bf16.mxu0 0
  %6539 = vmatpush1.bf16.msra.mxu0 %v3100
  %6540 = vmatprep.subr.bf16.mxu0 0
  %6541 = vmatpush1.bf16.msra.mxu0 %v3101
  %6542 = vmatprep.subr.bf16.mxu0 0
  %6543 = vmatpush1.bf16.msra.mxu0 %v3102
  %6544 = vmatprep.subr.bf16.mxu0 0
  %6545 = vmatpush1.bf16.msra.mxu0 %v3103
  %6546 = vmatprep.subr.bf16.mxu0 0
  %6547 = vmatpush1.bf16.msra.mxu0 %v3104
  %6548 = vmatprep.subr.bf16.mxu0 0
  %6549 = vmatpush1.bf16.msra.mxu0 %v3105
  %6550 = vmatprep.subr.bf16.mxu0 0
  %6551 = vmatpush1.bf16.msra.mxu0 %v3260
  %6552 = vmatprep.subr.bf16.mxu0 0
  %6553 = vmatpush1.bf16.msra.mxu0 0
  %6554 = vmatprep.subr.bf16.mxu0 0
  %6555 = vmatpush1.bf16.msra.mxu0 0
  %6556 = vmatprep.subr.bf16.mxu0 0
  %6557 = vmatpush1.bf16.msra.mxu0 0
  %6558 = vmatprep.subr.bf16.mxu0 0
  %6559 = vmatpush1.bf16.msra.mxu0 0
  %6560 = vmatprep.subr.bf16.mxu0 0
  %6561 = vmatpush1.bf16.msra.mxu0 0
  %6562 = vmatprep.mubr.bf16.mxu0 %v6498
  %6563 = vmatmul.mubr.bf16.gmra.mrb[0].mxu0 %v6464
  %v6564 = vpop.f32.mrb[0].mxu0
  %v6565 = vadd.f32 0.0, %v6564
  %v6566 = vpop.f32.mrb[0].mxu0
  %v6567 = vpop.f32.mrb[0].mxu0
  %v6568 = vadd.f32 0.0, %v6567
  %v6569 = vpop.f32.mrb[0].mxu0
  %6570 = vmatprep.mubr.bf16.mxu0 %v6501
  %6571 = vmatmul.mubr.bf16.gmra.mrb[0].mxu0 %v6466
  %v6572 = vpop.f32.mrb[0].mxu0
  %v6573 = vadd.f32 0.0, %v6572
  %v6574 = vpop.f32.mrb[0].mxu0
  %v6575 = vpop.f32.mrb[0].mxu0
  %v6576 = vadd.f32 0.0, %v6575
  %v6577 = vpop.f32.mrb[0].mxu0
  %6578 = vmatprep.mubr.bf16.mxu0 %v6504
  %6579 = vmatmul.mubr.bf16.gmra.mrb[0].mxu0 %v6468
  %v6580 = vpop.f32.mrb[0].mxu0
  %v6581 = vadd.f32 0.0, %v6580
  %v6582 = vpop.f32.mrb[0].mxu0
  %v6583 = vpop.f32.mrb[0].mxu0
  %v6584 = vadd.f32 0.0, %v6583
  %v6585 = vpop.f32.mrb[0].mxu0
  %6586 = vmatprep.mubr.bf16.mxu0 %v6507
  %6587 = vmatmul.mubr.bf16.gmra.mrb[0].mxu0 %v6470
  %v6588 = vpop.f32.mrb[0].mxu0
  %v6589 = vadd.f32 0.0, %v6588
  %v6590 = vpop.f32.mrb[0].mxu0
  %v6591 = vpop.f32.mrb[0].mxu0
  %v6592 = vadd.f32 0.0, %v6591
  %v6593 = vpop.f32.mrb[0].mxu0
  %6594 = vmatprep.mubr.bf16.mxu0 %v6510
  %6595 = vmatmul.mubr.bf16.gmra.mrb[0].mxu0 %v6472
  %v6596 = vpop.f32.mrb[0].mxu0
  %v6597 = vadd.f32 0.0, %v6596
  %v6598 = vpop.f32.mrb[0].mxu0
  %v6599 = vpop.f32.mrb[0].mxu0
  %v6600 = vadd.f32 0.0, %v6599
  %v6601 = vpop.f32.mrb[0].mxu0
  %6602 = vmatprep.mubr.bf16.mxu0 %v6513
  %6603 = vmatmul.mubr.bf16.gmra.mrb[0].mxu0 %v6474
  %v6604 = vpop.f32.mrb[0].mxu0
  %v6605 = vadd.f32 0.0, %v6604
  %v6606 = vpop.f32.mrb[0].mxu0
  %v6607 = vpop.f32.mrb[0].mxu0
  %v6608 = vadd.f32 0.0, %v6607
  %v6609 = vpop.f32.mrb[0].mxu0
  %6610 = vmatprep.mubr.bf16.mxu0 %v6516
  %6611 = vmatmul.mubr.bf16.gmra.mrb[0].mxu0 %v6476
  %v6612 = vpop.f32.mrb[0].mxu0
  %v6613 = vadd.f32 0.0, %v6612
  %v6614 = vpop.f32.mrb[0].mxu0
  %v6615 = vpop.f32.mrb[0].mxu0
  %v6616 = vadd.f32 0.0, %v6615
  %v6617 = vpop.f32.mrb[0].mxu0
  %6618 = vmatprep.mubr.bf16.mxu0 %v6519
  %6619 = vmatmul.mubr.bf16.gmra.mrb[0].mxu0 %v6478
  %v6620 = vpop.f32.mrb[0].mxu0
  %v6621 = vadd.f32 0.0, %v6620
  %v6622 = vpop.f32.mrb[0].mxu0
  %v6623 = vpop.f32.mrb[0].mxu0
  %v6624 = vadd.f32 0.0, %v6623
  %v6625 = vpop.f32.mrb[0].mxu0
  %6626 = vmatprep.mubr.bf16.mxu0 %v6522
  %6627 = vmatmul.mubr.bf16.gmra.mrb[0].mxu0 %v6480
  %v6628 = vpop.f32.mrb[0].mxu0
  %v6629 = vadd.f32 0.0, %v6628
  %v6630 = vpop.f32.mrb[0].mxu0
  %v6631 = vpop.f32.mrb[0].mxu0
  %v6632 = vadd.f32 0.0, %v6631
  %v6633 = vpop.f32.mrb[0].mxu0
  %6634 = vmatprep.mubr.bf16.mxu0 %v6525
  %6635 = vmatmul.mubr.bf16.gmra.mrb[0].mxu0 %v6482
  %v6636 = vpop.f32.mrb[0].mxu0
  %v6637 = vadd.f32 0.0, %v6636
  %v6638 = vpop.f32.mrb[0].mxu0
  %v6639 = vpop.f32.mrb[0].mxu0
  %v6640 = vadd.f32 0.0, %v6639
  %v6641 = vpop.f32.mrb[0].mxu0
  %6642 = vmatprep.mubr.bf16.mxu0 %v6528
  %6643 = vmatmul.mubr.bf16.gmra.mrb[0].mxu0 %v6484
  %v6644 = vpop.f32.mrb[0].mxu0
  %v6645 = vadd.f32 0.0, %v6644
  %v6646 = vpop.f32.mrb[0].mxu0
  %v6647 = vpop.f32.mrb[0].mxu0
  %v6648 = vpop.f32.mrb[0].mxu0
  %6649 = vdwg.mxu0
  %v6650 = vpack.c.bf16 %v6568, %v6565
  %v6651 = vpack.c.bf16 %v6576, %v6573
  %v6652 = vpack.c.bf16 %v6584, %v6581
  %v6653 = vpack.c.bf16 %v6592, %v6589
  %v6654 = vpack.c.bf16 %v6600, %v6597
  %v6655 = vpack.c.bf16 %v6608, %v6605
  %v6656 = vpack.c.bf16 %v6616, %v6613
  %v6657 = vpack.c.bf16 %v6624, %v6621
  %v6658 = vpack.c.bf16 %v6632, %v6629
  %v6659 = vpack.c.bf16 %v6640, %v6637
  %v6660 = vpack.c.bf16 %v6645, %v6645
  %s6661 = scalar_lea.vmem %s6, 112
  %v6662 = vld [vmem:[%s6661] sm:$0xf]
  %v6663 = vld [vmem:[%s6661 + $0x4] sm:$0xf]
  %v6664 = vld [vmem:[%s6661 + $0x8] sm:$0xf]
  %v6665 = vld [vmem:[%s6661 + $0xc] sm:$0xf]
  %v6670 = vunpack.c.l.b16 %v6662
  %v6671 = vunpack.c.l.b16 %v6663
  %v6672 = vunpack.c.l.b16 %v6664
  %v6673 = vunpack.c.l.b16 %v6665
  %v6674 = vpack.c.b16 %v6671, %v6670
  %v6675 = vpack.c.b16 %v6673, %v6672
  %v6679 = vsel %vm647, %v6650, 0
  %v6682 = vsel %vm647, %v6651, 0
  %v6685 = vsel %vm647, %v6652, 0
  %v6688 = vsel %vm647, %v6653, 0
  %v6691 = vsel %vm647, %v6654, 0
  %v6694 = vsel %vm647, %v6655, 0
  %v6697 = vsel %vm647, %v6656, 0
  %v6700 = vsel %vm647, %v6657, 0
  %v6703 = vsel %vm647, %v6658, 0
  %v6706 = vsel %vm647, %v6659, 0
  %v6709 = vsel %vm647, %v6660, 0
  %6711 = vmatprep.subr.bf16.mxu0 0
  %6712 = vmatpush1.bf16.msra.mxu0 %v6674
  %6713 = vmatprep.subr.bf16.mxu0 0
  %6714 = vmatpush1.bf16.msra.mxu0 %v6675
  %6715 = vmatprep.subr.bf16.mxu0 0
  %6716 = vmatpush1.bf16.msra.mxu0 0
  %6717 = vmatprep.subr.bf16.mxu0 0
  %6718 = vmatpush1.bf16.msra.mxu0 0
  %6719 = vmatprep.subr.bf16.mxu0 0
  %6720 = vmatpush1.bf16.msra.mxu0 0
  %6721 = vmatprep.subr.bf16.mxu0 0
  %6722 = vmatpush1.bf16.msra.mxu0 0
  %6723 = vmatprep.subr.bf16.mxu0 0
  %6724 = vmatpush1.bf16.msra.mxu0 0
  %6725 = vmatprep.subr.bf16.mxu0 0
  %6726 = vmatpush1.bf16.msra.mxu0 0
  %6727 = vmatprep.subr.bf16.mxu0 0
  %6728 = vmatpush1.bf16.msra.mxu0 0
  %6729 = vmatprep.subr.bf16.mxu0 0
  %6730 = vmatpush1.bf16.msra.mxu0 0
  %6731 = vmatprep.subr.bf16.mxu0 0
  %6732 = vmatpush1.bf16.msra.mxu0 0
  %6733 = vmatprep.subr.bf16.mxu0 0
  %6734 = vmatpush1.bf16.msra.mxu0 0
  %6735 = vmatprep.subr.bf16.mxu0 0
  %6736 = vmatpush1.bf16.msra.mxu0 0
  %6737 = vmatprep.subr.bf16.mxu0 0
  %6738 = vmatpush1.bf16.msra.mxu0 0
  %6739 = vmatprep.subr.bf16.mxu0 0
  %6740 = vmatpush1.bf16.msra.mxu0 0
  %6741 = vmatprep.subr.bf16.mxu0 0
  %6742 = vmatpush1.bf16.msra.mxu0 0
  %6743 = vmatprep.mubr.bf16.mxu0 0
  %6744 = vmatmul.mubr.bf16.gmra.mrb[0].mxu0 %v6679
  %v6745 = vpop.f32.mrb[0].mxu0
  %v6746 = vadd.f32 0.0, %v6745
  %v6747 = vpop.f32.mrb[0].mxu0
  %v6748 = vpop.f32.mrb[0].mxu0
  %v6749 = vadd.f32 0.0, %v6748
  %v6750 = vpop.f32.mrb[0].mxu0
  %6751 = vmatprep.mubr.bf16.mxu0 0
  %6752 = vmatmul.mubr.bf16.gmra.mrb[0].mxu0 %v6682
  %v6753 = vpop.f32.mrb[0].mxu0
  %v6754 = vadd.f32 0.0, %v6753
  %v6755 = vpop.f32.mrb[0].mxu0
  %v6756 = vpop.f32.mrb[0].mxu0
  %v6757 = vadd.f32 0.0, %v6756
  %v6758 = vpop.f32.mrb[0].mxu0
  %6759 = vmatprep.mubr.bf16.mxu0 0
  %6760 = vmatmul.mubr.bf16.gmra.mrb[0].mxu0 %v6685
  %v6761 = vpop.f32.mrb[0].mxu0
  %v6762 = vadd.f32 0.0, %v6761
  %v6763 = vpop.f32.mrb[0].mxu0
  %v6764 = vpop.f32.mrb[0].mxu0
  %v6765 = vadd.f32 0.0, %v6764
  %v6766 = vpop.f32.mrb[0].mxu0
  %6767 = vmatprep.mubr.bf16.mxu0 0
  %6768 = vmatmul.mubr.bf16.gmra.mrb[0].mxu0 %v6688
  %v6769 = vpop.f32.mrb[0].mxu0
  %v6770 = vadd.f32 0.0, %v6769
  %v6771 = vpop.f32.mrb[0].mxu0
  %v6772 = vpop.f32.mrb[0].mxu0
  %v6773 = vadd.f32 0.0, %v6772
  %v6774 = vpop.f32.mrb[0].mxu0
  %6775 = vmatprep.mubr.bf16.mxu0 0
  %6776 = vmatmul.mubr.bf16.gmra.mrb[0].mxu0 %v6691
  %v6777 = vpop.f32.mrb[0].mxu0
  %v6778 = vadd.f32 0.0, %v6777
  %v6779 = vpop.f32.mrb[0].mxu0
  %v6780 = vpop.f32.mrb[0].mxu0
  %v6781 = vadd.f32 0.0, %v6780
  %v6782 = vpop.f32.mrb[0].mxu0
  %6783 = vmatprep.mubr.bf16.mxu0 0
  %6784 = vmatmul.mubr.bf16.gmra.mrb[0].mxu0 %v6694
  %v6785 = vpop.f32.mrb[0].mxu0
  %v6786 = vadd.f32 0.0, %v6785
  %v6787 = vpop.f32.mrb[0].mxu0
  %v6788 = vpop.f32.mrb[0].mxu0
  %v6789 = vadd.f32 0.0, %v6788
  %v6790 = vpop.f32.mrb[0].mxu0
  %6791 = vmatprep.mubr.bf16.mxu0 0
  %6792 = vmatmul.mubr.bf16.gmra.mrb[0].mxu0 %v6697
  %v6793 = vpop.f32.mrb[0].mxu0
  %v6794 = vadd.f32 0.0, %v6793
  %v6795 = vpop.f32.mrb[0].mxu0
  %v6796 = vpop.f32.mrb[0].mxu0
  %v6797 = vadd.f32 0.0, %v6796
  %v6798 = vpop.f32.mrb[0].mxu0
  %6799 = vmatprep.mubr.bf16.mxu0 0
  %6800 = vmatmul.mubr.bf16.gmra.mrb[0].mxu0 %v6700
  %v6801 = vpop.f32.mrb[0].mxu0
  %v6802 = vadd.f32 0.0, %v6801
  %v6803 = vpop.f32.mrb[0].mxu0
  %v6804 = vpop.f32.mrb[0].mxu0
  %v6805 = vadd.f32 0.0, %v6804
  %v6806 = vpop.f32.mrb[0].mxu0
  %6807 = vmatprep.mubr.bf16.mxu0 0
  %6808 = vmatmul.mubr.bf16.gmra.mrb[0].mxu0 %v6703
  %v6809 = vpop.f32.mrb[0].mxu0
  %v6810 = vadd.f32 0.0, %v6809
  %v6811 = vpop.f32.mrb[0].mxu0
  %v6812 = vpop.f32.mrb[0].mxu0
  %v6813 = vadd.f32 0.0, %v6812
  %v6814 = vpop.f32.mrb[0].mxu0
  %6815 = vmatprep.mubr.bf16.mxu0 0
  %6816 = vmatmul.mubr.bf16.gmra.mrb[0].mxu0 %v6706
  %v6817 = vpop.f32.mrb[0].mxu0
  %v6818 = vadd.f32 0.0, %v6817
  %v6819 = vpop.f32.mrb[0].mxu0
  %v6820 = vpop.f32.mrb[0].mxu0
  %v6821 = vadd.f32 0.0, %v6820
  %v6822 = vpop.f32.mrb[0].mxu0
  %6823 = vmatprep.mubr.bf16.mxu0 0
  %6824 = vmatmul.mubr.bf16.gmra.mrb[0].mxu0 %v6709
  %v6825 = vpop.f32.mrb[0].mxu0
  %v6826 = vadd.f32 0.0, %v6825
  %v6827 = vpop.f32.mrb[0].mxu0
  %v6828 = vpop.f32.mrb[0].mxu0
  %v6829 = vpop.f32.mrb[0].mxu0
  %6830 = vdwg.mxu0
  %v6831 = vadd.f32 %v6358, %v6746
  %v6832 = vadd.f32 %v6359, %v6749
  %v6833 = vadd.f32 %v6360, %v6754
  %v6834 = vadd.f32 %v6361, %v6757
  %v6835 = vadd.f32 %v6362, %v6762
  %v6836 = vadd.f32 %v6363, %v6765
  %v6837 = vadd.f32 %v6364, %v6770
  %v6838 = vadd.f32 %v6365, %v6773
  %v6839 = vadd.f32 %v6366, %v6778
  %v6840 = vadd.f32 %v6367, %v6781
  %v6841 = vadd.f32 %v6368, %v6786
  %v6842 = vadd.f32 %v6369, %v6789
  %v6843 = vadd.f32 %v6370, %v6794
  %v6844 = vadd.f32 %v6371, %v6797
  %v6845 = vadd.f32 %v6372, %v6802
  %v6846 = vadd.f32 %v6373, %v6805
  %v6847 = vadd.f32 %v6374, %v6810
  %v6848 = vadd.f32 %v6375, %v6813
  %v6849 = vadd.f32 %v6376, %v6818
  %v6850 = vadd.f32 %v6377, %v6821
  %v6851 = vadd.f32 %v6378, %v6826
  %s6852 = scalar_lea.vmem %s5, 1344
  %v6853 = vld [vmem:[%s6852] sm:$0xff]
  %v6854 = vld [vmem:[%s6852 + $0x8] sm:$0xff]
  %v6855 = vld [vmem:[%s6852 + $0x10] sm:$0xff]
  %v6856 = vld [vmem:[%s6852 + $0x18] sm:$0xff]
  %v6857 = vld [vmem:[%s6852 + $0x20] sm:$0xff]
  %v6858 = vld [vmem:[%s6852 + $0x28] sm:$0xff]
  %v6859 = vld [vmem:[%s6852 + $0x30] sm:$0xff]
  %v6860 = vld [vmem:[%s6852 + $0x38] sm:$0xff]
  %v6861 = vld [vmem:[%s6852 + $0x40] sm:$0xff]
  %v6862 = vld [vmem:[%s6852 + $0x48] sm:$0xff]
  %v6863 = vld [vmem:[%s6852 + $0x50] sm:$0xff]
  %v6864 = vld [vmem:[%s6852 + $0x58] sm:$0xff]
  %v6865 = vld [vmem:[%s6852 + $0x60] sm:$0xff]
  %v6866 = vld [vmem:[%s6852 + $0x68] sm:$0xff]
  %v6867 = vld [vmem:[%s6852 + $0x70] sm:$0xff]
  %v6868 = vld [vmem:[%s6852 + $0x78] sm:$0xff]
  %v6869 = vld [vmem:[%s6852 + $0x80] sm:$0xff]
  %v6870 = vld [vmem:[%s6852 + $0x88] sm:$0xff]
  %v6871 = vld [vmem:[%s6852 + $0x90] sm:$0xff]
  %v6872 = vld [vmem:[%s6852 + $0x98] sm:$0xff]
  %v6873 = vld [vmem:[%s6852 + $0xa0] sm:$0x11]
  %v6895 = vunpack.c.l.b16 %v6853
  %v6896 = vunpack.c.h.b16 %v6853
  %v6897 = vunpack.c.l.b16 %v6854
  %v6898 = vunpack.c.h.b16 %v6854
  %v6899 = vunpack.c.l.b16 %v6855
  %v6900 = vunpack.c.h.b16 %v6855
  %v6901 = vunpack.c.l.b16 %v6856
  %v6902 = vunpack.c.h.b16 %v6856
  %v6903 = vunpack.c.l.b16 %v6857
  %v6904 = vunpack.c.h.b16 %v6857
  %v6905 = vunpack.c.l.b16 %v6858
  %v6906 = vunpack.c.h.b16 %v6858
  %v6907 = vunpack.c.l.b16 %v6859
  %v6908 = vunpack.c.h.b16 %v6859
  %v6909 = vunpack.c.l.b16 %v6860
  %v6910 = vunpack.c.h.b16 %v6860
  %v6911 = vunpack.c.l.b16 %v6861
  %v6912 = vunpack.c.h.b16 %v6861
  %v6913 = vunpack.c.l.b16 %v6862
  %v6914 = vunpack.c.h.b16 %v6862
  %v6915 = vunpack.c.l.b16 %v6863
  %v6916 = vunpack.c.h.b16 %v6863
  %v6917 = vunpack.c.l.b16 %v6864
  %v6918 = vunpack.c.h.b16 %v6864
  %v6919 = vunpack.c.l.b16 %v6865
  %v6920 = vunpack.c.h.b16 %v6865
  %v6921 = vunpack.c.l.b16 %v6866
  %v6922 = vunpack.c.h.b16 %v6866
  %v6923 = vunpack.c.l.b16 %v6867
  %v6924 = vunpack.c.h.b16 %v6867
  %v6925 = vunpack.c.l.b16 %v6868
  %v6926 = vunpack.c.h.b16 %v6868
  %v6927 = vunpack.c.l.b16 %v6869
  %v6928 = vunpack.c.h.b16 %v6869
  %v6929 = vunpack.c.l.b16 %v6870
  %v6930 = vunpack.c.h.b16 %v6870
  %v6931 = vunpack.c.l.b16 %v6871
  %v6932 = vunpack.c.h.b16 %v6871
  %v6933 = vunpack.c.l.b16 %v6872
  %v6934 = vunpack.c.h.b16 %v6872
  %v6935 = vunpack.c.l.b16 %v6873
  %v6936 = vunpack.c.h.b16 %v6873
  %v6937 = vpack.c.b16 %v6897, %v6895
  %v6938 = vpack.c.b16 %v6898, %v6896
  %v6939 = vpack.c.b16 %v6901, %v6899
  %v6940 = vpack.c.b16 %v6902, %v6900
  %v6941 = vpack.c.b16 %v6905, %v6903
  %v6942 = vpack.c.b16 %v6906, %v6904
  %v6943 = vpack.c.b16 %v6909, %v6907
  %v6944 = vpack.c.b16 %v6910, %v6908
  %v6945 = vpack.c.b16 %v6913, %v6911
  %v6946 = vpack.c.b16 %v6914, %v6912
  %v6947 = vpack.c.b16 %v6917, %v6915
  %v6948 = vpack.c.b16 %v6918, %v6916
  %v6949 = vpack.c.b16 %v6921, %v6919
  %v6950 = vpack.c.b16 %v6922, %v6920
  %v6951 = vpack.c.b16 %v6925, %v6923
  %v6952 = vpack.c.b16 %v6926, %v6924
  %v6953 = vpack.c.b16 %v6929, %v6927
  %v6954 = vpack.c.b16 %v6930, %v6928
  %v6955 = vpack.c.b16 %v6933, %v6931
  %v6956 = vpack.c.b16 %v6934, %v6932
  %v6957 = vpack.c.b16 %v6935, %v6935
  %v6958 = vpack.c.b16 %v6936, %v6936
  %v6971 = vsel %vm3224, %v6938, 0
  %v6974 = vsel %vm3224, %v6940, 0
  %v6977 = vsel %vm3224, %v6942, 0
  %v6980 = vsel %vm3224, %v6944, 0
  %v6983 = vsel %vm3224, %v6946, 0
  %v6986 = vsel %vm3224, %v6948, 0
  %v6989 = vsel %vm3224, %v6950, 0
  %v6992 = vsel %vm3224, %v6952, 0
  %v6995 = vsel %vm3224, %v6954, 0
  %v6998 = vsel %vm3224, %v6956, 0
  %v7001 = vsel %vm3224, %v6958, 0
  %7003 = vmatprep.subr.bf16.mxu0 0
  %7004 = vmatpush1.bf16.msra.mxu0 %v3096
  %7005 = vmatprep.subr.bf16.mxu0 0
  %7006 = vmatpush1.bf16.msra.mxu0 %v3097
  %7007 = vmatprep.subr.bf16.mxu0 0
  %7008 = vmatpush1.bf16.msra.mxu0 %v3098
  %7009 = vmatprep.subr.bf16.mxu0 0
  %7010 = vmatpush1.bf16.msra.mxu0 %v3099
  %7011 = vmatprep.subr.bf16.mxu0 0
  %7012 = vmatpush1.bf16.msra.mxu0 %v3100
  %7013 = vmatprep.subr.bf16.mxu0 0
  %7014 = vmatpush1.bf16.msra.mxu0 %v3101
  %7015 = vmatprep.subr.bf16.mxu0 0
  %7016 = vmatpush1.bf16.msra.mxu0 %v3102
  %7017 = vmatprep.subr.bf16.mxu0 0
  %7018 = vmatpush1.bf16.msra.mxu0 %v3103
  %7019 = vmatprep.subr.bf16.mxu0 0
  %7020 = vmatpush1.bf16.msra.mxu0 %v3104
  %7021 = vmatprep.subr.bf16.mxu0 0
  %7022 = vmatpush1.bf16.msra.mxu0 %v3105
  %7023 = vmatprep.subr.bf16.mxu0 0
  %7024 = vmatpush1.bf16.msra.mxu0 %v3260
  %7025 = vmatprep.subr.bf16.mxu0 0
  %7026 = vmatpush1.bf16.msra.mxu0 0
  %7027 = vmatprep.subr.bf16.mxu0 0
  %7028 = vmatpush1.bf16.msra.mxu0 0
  %7029 = vmatprep.subr.bf16.mxu0 0
  %7030 = vmatpush1.bf16.msra.mxu0 0
  %7031 = vmatprep.subr.bf16.mxu0 0
  %7032 = vmatpush1.bf16.msra.mxu0 0
  %7033 = vmatprep.subr.bf16.mxu0 0
  %7034 = vmatpush1.bf16.msra.mxu0 0
  %7035 = vmatprep.mubr.bf16.mxu0 %v6971
  %7036 = vmatmul.mubr.bf16.gmra.mrb[0].mxu0 %v6937
  %v7037 = vpop.f32.mrb[0].mxu0
  %v7038 = vadd.f32 0.0, %v7037
  %v7039 = vpop.f32.mrb[0].mxu0
  %v7040 = vpop.f32.mrb[0].mxu0
  %v7041 = vadd.f32 0.0, %v7040
  %v7042 = vpop.f32.mrb[0].mxu0
  %7043 = vmatprep.mubr.bf16.mxu0 %v6974
  %7044 = vmatmul.mubr.bf16.gmra.mrb[0].mxu0 %v6939
  %v7045 = vpop.f32.mrb[0].mxu0
  %v7046 = vadd.f32 0.0, %v7045
  %v7047 = vpop.f32.mrb[0].mxu0
  %v7048 = vpop.f32.mrb[0].mxu0
  %v7049 = vadd.f32 0.0, %v7048
  %v7050 = vpop.f32.mrb[0].mxu0
  %7051 = vmatprep.mubr.bf16.mxu0 %v6977
  %7052 = vmatmul.mubr.bf16.gmra.mrb[0].mxu0 %v6941
  %v7053 = vpop.f32.mrb[0].mxu0
  %v7054 = vadd.f32 0.0, %v7053
  %v7055 = vpop.f32.mrb[0].mxu0
  %v7056 = vpop.f32.mrb[0].mxu0
  %v7057 = vadd.f32 0.0, %v7056
  %v7058 = vpop.f32.mrb[0].mxu0
  %7059 = vmatprep.mubr.bf16.mxu0 %v6980
  %7060 = vmatmul.mubr.bf16.gmra.mrb[0].mxu0 %v6943
  %v7061 = vpop.f32.mrb[0].mxu0
  %v7062 = vadd.f32 0.0, %v7061
  %v7063 = vpop.f32.mrb[0].mxu0
  %v7064 = vpop.f32.mrb[0].mxu0
  %v7065 = vadd.f32 0.0, %v7064
  %v7066 = vpop.f32.mrb[0].mxu0
  %7067 = vmatprep.mubr.bf16.mxu0 %v6983
  %7068 = vmatmul.mubr.bf16.gmra.mrb[0].mxu0 %v6945
  %v7069 = vpop.f32.mrb[0].mxu0
  %v7070 = vadd.f32 0.0, %v7069
  %v7071 = vpop.f32.mrb[0].mxu0
  %v7072 = vpop.f32.mrb[0].mxu0
  %v7073 = vadd.f32 0.0, %v7072
  %v7074 = vpop.f32.mrb[0].mxu0
  %7075 = vmatprep.mubr.bf16.mxu0 %v6986
  %7076 = vmatmul.mubr.bf16.gmra.mrb[0].mxu0 %v6947
  %v7077 = vpop.f32.mrb[0].mxu0
  %v7078 = vadd.f32 0.0, %v7077
  %v7079 = vpop.f32.mrb[0].mxu0
  %v7080 = vpop.f32.mrb[0].mxu0
  %v7081 = vadd.f32 0.0, %v7080
  %v7082 = vpop.f32.mrb[0].mxu0
  %7083 = vmatprep.mubr.bf16.mxu0 %v6989
  %7084 = vmatmul.mubr.bf16.gmra.mrb[0].mxu0 %v6949
  %v7085 = vpop.f32.mrb[0].mxu0
  %v7086 = vadd.f32 0.0, %v7085
  %v7087 = vpop.f32.mrb[0].mxu0
  %v7088 = vpop.f32.mrb[0].mxu0
  %v7089 = vadd.f32 0.0, %v7088
  %v7090 = vpop.f32.mrb[0].mxu0
  %7091 = vmatprep.mubr.bf16.mxu0 %v6992
  %7092 = vmatmul.mubr.bf16.gmra.mrb[0].mxu0 %v6951
  %v7093 = vpop.f32.mrb[0].mxu0
  %v7094 = vadd.f32 0.0, %v7093
  %v7095 = vpop.f32.mrb[0].mxu0
  %v7096 = vpop.f32.mrb[0].mxu0
  %v7097 = vadd.f32 0.0, %v7096
  %v7098 = vpop.f32.mrb[0].mxu0
  %7099 = vmatprep.mubr.bf16.mxu0 %v6995
  %7100 = vmatmul.mubr.bf16.gmra.mrb[0].mxu0 %v6953
  %v7101 = vpop.f32.mrb[0].mxu0
  %v7102 = vadd.f32 0.0, %v7101
  %v7103 = vpop.f32.mrb[0].mxu0
  %v7104 = vpop.f32.mrb[0].mxu0
  %v7105 = vadd.f32 0.0, %v7104
  %v7106 = vpop.f32.mrb[0].mxu0
  %7107 = vmatprep.mubr.bf16.mxu0 %v6998
  %7108 = vmatmul.mubr.bf16.gmra.mrb[0].mxu0 %v6955
  %v7109 = vpop.f32.mrb[0].mxu0
  %v7110 = vadd.f32 0.0, %v7109
  %v7111 = vpop.f32.mrb[0].mxu0
  %v7112 = vpop.f32.mrb[0].mxu0
  %v7113 = vadd.f32 0.0, %v7112
  %v7114 = vpop.f32.mrb[0].mxu0
  %7115 = vmatprep.mubr.bf16.mxu0 %v7001
  %7116 = vmatmul.mubr.bf16.gmra.mrb[0].mxu0 %v6957
  %v7117 = vpop.f32.mrb[0].mxu0
  %v7118 = vadd.f32 0.0, %v7117
  %v7119 = vpop.f32.mrb[0].mxu0
  %v7120 = vpop.f32.mrb[0].mxu0
  %v7121 = vpop.f32.mrb[0].mxu0
  %7122 = vdwg.mxu0
  %v7123 = vpack.c.bf16 %v7041, %v7038
  %v7124 = vpack.c.bf16 %v7049, %v7046
  %v7125 = vpack.c.bf16 %v7057, %v7054
  %v7126 = vpack.c.bf16 %v7065, %v7062
  %v7127 = vpack.c.bf16 %v7073, %v7070
  %v7128 = vpack.c.bf16 %v7081, %v7078
  %v7129 = vpack.c.bf16 %v7089, %v7086
  %v7130 = vpack.c.bf16 %v7097, %v7094
  %v7131 = vpack.c.bf16 %v7105, %v7102
  %v7132 = vpack.c.bf16 %v7113, %v7110
  %v7133 = vpack.c.bf16 %v7118, %v7118
  %s7134 = scalar_lea.vmem %s6, 128
  %v7135 = vld [vmem:[%s7134] sm:$0xf]
  %v7136 = vld [vmem:[%s7134 + $0x4] sm:$0xf]
  %v7137 = vld [vmem:[%s7134 + $0x8] sm:$0xf]
  %v7138 = vld [vmem:[%s7134 + $0xc] sm:$0xf]
  %v7143 = vunpack.c.l.b16 %v7135
  %v7144 = vunpack.c.l.b16 %v7136
  %v7145 = vunpack.c.l.b16 %v7137
  %v7146 = vunpack.c.l.b16 %v7138
  %v7147 = vpack.c.b16 %v7144, %v7143
  %v7148 = vpack.c.b16 %v7146, %v7145
  %v7152 = vsel %vm647, %v7123, 0
  %v7155 = vsel %vm647, %v7124, 0
  %v7158 = vsel %vm647, %v7125, 0
  %v7161 = vsel %vm647, %v7126, 0
  %v7164 = vsel %vm647, %v7127, 0
  %v7167 = vsel %vm647, %v7128, 0
  %v7170 = vsel %vm647, %v7129, 0
  %v7173 = vsel %vm647, %v7130, 0
  %v7176 = vsel %vm647, %v7131, 0
  %v7179 = vsel %vm647, %v7132, 0
  %v7182 = vsel %vm647, %v7133, 0
  %7184 = vmatprep.subr.bf16.mxu0 0
  %7185 = vmatpush1.bf16.msra.mxu0 %v7147
  %7186 = vmatprep.subr.bf16.mxu0 0
  %7187 = vmatpush1.bf16.msra.mxu0 %v7148
  %7188 = vmatprep.subr.bf16.mxu0 0
  %7189 = vmatpush1.bf16.msra.mxu0 0
  %7190 = vmatprep.subr.bf16.mxu0 0
  %7191 = vmatpush1.bf16.msra.mxu0 0
  %7192 = vmatprep.subr.bf16.mxu0 0
  %7193 = vmatpush1.bf16.msra.mxu0 0
  %7194 = vmatprep.subr.bf16.mxu0 0
  %7195 = vmatpush1.bf16.msra.mxu0 0
  %7196 = vmatprep.subr.bf16.mxu0 0
  %7197 = vmatpush1.bf16.msra.mxu0 0
  %7198 = vmatprep.subr.bf16.mxu0 0
  %7199 = vmatpush1.bf16.msra.mxu0 0
  %7200 = vmatprep.subr.bf16.mxu0 0
  %7201 = vmatpush1.bf16.msra.mxu0 0
  %7202 = vmatprep.subr.bf16.mxu0 0
  %7203 = vmatpush1.bf16.msra.mxu0 0
  %7204 = vmatprep.subr.bf16.mxu0 0
  %7205 = vmatpush1.bf16.msra.mxu0 0
  %7206 = vmatprep.subr.bf16.mxu0 0
  %7207 = vmatpush1.bf16.msra.mxu0 0
  %7208 = vmatprep.subr.bf16.mxu0 0
  %7209 = vmatpush1.bf16.msra.mxu0 0
  %7210 = vmatprep.subr.bf16.mxu0 0
  %7211 = vmatpush1.bf16.msra.mxu0 0
  %7212 = vmatprep.subr.bf16.mxu0 0
  %7213 = vmatpush1.bf16.msra.mxu0 0
  %7214 = vmatprep.subr.bf16.mxu0 0
  %7215 = vmatpush1.bf16.msra.mxu0 0
  %7216 = vmatprep.mubr.bf16.mxu0 0
  %7217 = vmatmul.mubr.bf16.gmra.mrb[0].mxu0 %v7152
  %v7218 = vpop.f32.mrb[0].mxu0
  %v7219 = vadd.f32 0.0, %v7218
  %v7220 = vpop.f32.mrb[0].mxu0
  %v7221 = vpop.f32.mrb[0].mxu0
  %v7222 = vadd.f32 0.0, %v7221
  %v7223 = vpop.f32.mrb[0].mxu0
  %7224 = vmatprep.mubr.bf16.mxu0 0
  %7225 = vmatmul.mubr.bf16.gmra.mrb[0].mxu0 %v7155
  %v7226 = vpop.f32.mrb[0].mxu0
  %v7227 = vadd.f32 0.0, %v7226
  %v7228 = vpop.f32.mrb[0].mxu0
  %v7229 = vpop.f32.mrb[0].mxu0
  %v7230 = vadd.f32 0.0, %v7229
  %v7231 = vpop.f32.mrb[0].mxu0
  %7232 = vmatprep.mubr.bf16.mxu0 0
  %7233 = vmatmul.mubr.bf16.gmra.mrb[0].mxu0 %v7158
  %v7234 = vpop.f32.mrb[0].mxu0
  %v7235 = vadd.f32 0.0, %v7234
  %v7236 = vpop.f32.mrb[0].mxu0
  %v7237 = vpop.f32.mrb[0].mxu0
  %v7238 = vadd.f32 0.0, %v7237
  %v7239 = vpop.f32.mrb[0].mxu0
  %7240 = vmatprep.mubr.bf16.mxu0 0
  %7241 = vmatmul.mubr.bf16.gmra.mrb[0].mxu0 %v7161
  %v7242 = vpop.f32.mrb[0].mxu0
  %v7243 = vadd.f32 0.0, %v7242
  %v7244 = vpop.f32.mrb[0].mxu0
  %v7245 = vpop.f32.mrb[0].mxu0
  %v7246 = vadd.f32 0.0, %v7245
  %v7247 = vpop.f32.mrb[0].mxu0
  %7248 = vmatprep.mubr.bf16.mxu0 0
  %7249 = vmatmul.mubr.bf16.gmra.mrb[0].mxu0 %v7164
  %v7250 = vpop.f32.mrb[0].mxu0
  %v7251 = vadd.f32 0.0, %v7250
  %v7252 = vpop.f32.mrb[0].mxu0
  %v7253 = vpop.f32.mrb[0].mxu0
  %v7254 = vadd.f32 0.0, %v7253
  %v7255 = vpop.f32.mrb[0].mxu0
  %7256 = vmatprep.mubr.bf16.mxu0 0
  %7257 = vmatmul.mubr.bf16.gmra.mrb[0].mxu0 %v7167
  %v7258 = vpop.f32.mrb[0].mxu0
  %v7259 = vadd.f32 0.0, %v7258
  %v7260 = vpop.f32.mrb[0].mxu0
  %v7261 = vpop.f32.mrb[0].mxu0
  %v7262 = vadd.f32 0.0, %v7261
  %v7263 = vpop.f32.mrb[0].mxu0
  %7264 = vmatprep.mubr.bf16.mxu0 0
  %7265 = vmatmul.mubr.bf16.gmra.mrb[0].mxu0 %v7170
  %v7266 = vpop.f32.mrb[0].mxu0
  %v7267 = vadd.f32 0.0, %v7266
  %v7268 = vpop.f32.mrb[0].mxu0
  %v7269 = vpop.f32.mrb[0].mxu0
  %v7270 = vadd.f32 0.0, %v7269
  %v7271 = vpop.f32.mrb[0].mxu0
  %7272 = vmatprep.mubr.bf16.mxu0 0
  %7273 = vmatmul.mubr.bf16.gmra.mrb[0].mxu0 %v7173
  %v7274 = vpop.f32.mrb[0].mxu0
  %v7275 = vadd.f32 0.0, %v7274
  %v7276 = vpop.f32.mrb[0].mxu0
  %v7277 = vpop.f32.mrb[0].mxu0
  %v7278 = vadd.f32 0.0, %v7277
  %v7279 = vpop.f32.mrb[0].mxu0
  %7280 = vmatprep.mubr.bf16.mxu0 0
  %7281 = vmatmul.mubr.bf16.gmra.mrb[0].mxu0 %v7176
  %v7282 = vpop.f32.mrb[0].mxu0
  %v7283 = vadd.f32 0.0, %v7282
  %v7284 = vpop.f32.mrb[0].mxu0
  %v7285 = vpop.f32.mrb[0].mxu0
  %v7286 = vadd.f32 0.0, %v7285
  %v7287 = vpop.f32.mrb[0].mxu0
  %7288 = vmatprep.mubr.bf16.mxu0 0
  %7289 = vmatmul.mubr.bf16.gmra.mrb[0].mxu0 %v7179
  %v7290 = vpop.f32.mrb[0].mxu0
  %v7291 = vadd.f32 0.0, %v7290
  %v7292 = vpop.f32.mrb[0].mxu0
  %v7293 = vpop.f32.mrb[0].mxu0
  %v7294 = vadd.f32 0.0, %v7293
  %v7295 = vpop.f32.mrb[0].mxu0
  %7296 = vmatprep.mubr.bf16.mxu0 0
  %7297 = vmatmul.mubr.bf16.gmra.mrb[0].mxu0 %v7182
  %v7298 = vpop.f32.mrb[0].mxu0
  %v7299 = vadd.f32 0.0, %v7298
  %v7300 = vpop.f32.mrb[0].mxu0
  %v7301 = vpop.f32.mrb[0].mxu0
  %v7302 = vpop.f32.mrb[0].mxu0
  %7303 = vdwg.mxu0
  %v7304 = vadd.f32 %v6831, %v7219
  %v7305 = vadd.f32 %v6832, %v7222
  %v7306 = vadd.f32 %v6833, %v7227
  %v7307 = vadd.f32 %v6834, %v7230
  %v7308 = vadd.f32 %v6835, %v7235
  %v7309 = vadd.f32 %v6836, %v7238
  %v7310 = vadd.f32 %v6837, %v7243
  %v7311 = vadd.f32 %v6838, %v7246
  %v7312 = vadd.f32 %v6839, %v7251
  %v7313 = vadd.f32 %v6840, %v7254
  %v7314 = vadd.f32 %v6841, %v7259
  %v7315 = vadd.f32 %v6842, %v7262
  %v7316 = vadd.f32 %v6843, %v7267
  %v7317 = vadd.f32 %v6844, %v7270
  %v7318 = vadd.f32 %v6845, %v7275
  %v7319 = vadd.f32 %v6846, %v7278
  %v7320 = vadd.f32 %v6847, %v7283
  %v7321 = vadd.f32 %v6848, %v7286
  %v7322 = vadd.f32 %v6849, %v7291
  %v7323 = vadd.f32 %v6850, %v7294
  %v7324 = vadd.f32 %v6851, %v7299
  %v7325 = vld [vmem:[%s7] sm:$0x1]
  %v7326 = vld [vmem:[%s8] sm:$0x1]
  %v7327 = vsel %vm647, %v7304, 0.0
  %v7328 = vsel %vm647, %v7305, 0.0
  %v7329 = vadd.f32 %v7327, %v7328
  %v7330 = vsel %vm647, %v7306, 0.0
  %v7331 = vadd.f32 %v7329, %v7330
  %v7332 = vsel %vm647, %v7307, 0.0
  %v7333 = vadd.f32 %v7331, %v7332
  %v7334 = vsel %vm647, %v7308, 0.0
  %v7335 = vadd.f32 %v7333, %v7334
  %v7336 = vsel %vm647, %v7309, 0.0
  %v7337 = vadd.f32 %v7335, %v7336
  %v7338 = vsel %vm647, %v7310, 0.0
  %v7339 = vadd.f32 %v7337, %v7338
  %v7340 = vsel %vm647, %v7311, 0.0
  %v7341 = vadd.f32 %v7339, %v7340
  %v7342 = vsel %vm647, %v7312, 0.0
  %v7343 = vadd.f32 %v7341, %v7342
  %v7344 = vsel %vm647, %v7313, 0.0
  %v7345 = vadd.f32 %v7343, %v7344
  %v7346 = vsel %vm647, %v7314, 0.0
  %v7347 = vadd.f32 %v7345, %v7346
  %v7348 = vsel %vm647, %v7315, 0.0
  %v7349 = vadd.f32 %v7347, %v7348
  %v7350 = vsel %vm647, %v7316, 0.0
  %v7351 = vadd.f32 %v7349, %v7350
  %v7352 = vsel %vm647, %v7317, 0.0
  %v7353 = vadd.f32 %v7351, %v7352
  %v7354 = vsel %vm647, %v7318, 0.0
  %v7355 = vadd.f32 %v7353, %v7354
  %v7356 = vsel %vm647, %v7319, 0.0
  %v7357 = vadd.f32 %v7355, %v7356
  %v7358 = vsel %vm647, %v7320, 0.0
  %v7359 = vadd.f32 %v7357, %v7358
  %v7360 = vsel %vm647, %v7321, 0.0
  %v7361 = vadd.f32 %v7359, %v7360
  %v7362 = vsel %vm647, %v7322, 0.0
  %v7363 = vadd.f32 %v7361, %v7362
  %v7364 = vsel %vm647, %v7323, 0.0
  %v7365 = vadd.f32 %v7363, %v7364
  %vm7366 = vcmask 254976
  %v7367 = vsel %vm7366, %v7324, 0.0
  %v7368 = vadd.f32 %v7365, %v7367
  %v7369 = vrot.slane %v7368, 4
  %v7370 = vadd.f32 %v7368, %v7369
  %v7371 = vrot.slane %v7370, 2
  %v7372 = vadd.f32 %v7370, %v7371
  %v7373 = vrot.slane %v7372, 1
  %v7374 = vadd.f32 %v7372, %v7373
  %v7375 = vmul.f32 %v7374, 0.0061728396
  %v7376 = vsub.f32 %v7304, %v7375
  %v7377 = vsub.f32 %v7305, %v7375
  %v7378 = vsub.f32 %v7306, %v7375
  %v7379 = vsub.f32 %v7307, %v7375
  %v7380 = vsub.f32 %v7308, %v7375
  %v7381 = vsub.f32 %v7309, %v7375
  %v7382 = vsub.f32 %v7310, %v7375
  %v7383 = vsub.f32 %v7311, %v7375
  %v7384 = vsub.f32 %v7312, %v7375
  %v7385 = vsub.f32 %v7313, %v7375
  %v7386 = vsub.f32 %v7314, %v7375
  %v7387 = vsub.f32 %v7315, %v7375
  %v7388 = vsub.f32 %v7316, %v7375
  %v7389 = vsub.f32 %v7317, %v7375
  %v7390 = vsub.f32 %v7318, %v7375
  %v7391 = vsub.f32 %v7319, %v7375
  %v7392 = vsub.f32 %v7320, %v7375
  %v7393 = vsub.f32 %v7321, %v7375
  %v7394 = vsub.f32 %v7322, %v7375
  %v7395 = vsub.f32 %v7323, %v7375
  %v7396 = vsub.f32 %v7324, %v7375
  %v7397 = vmul.f32 %v7376, %v7376
  %v7398 = vmul.f32 %v7377, %v7377
  %v7399 = vmul.f32 %v7378, %v7378
  %v7400 = vmul.f32 %v7379, %v7379
  %v7401 = vmul.f32 %v7380, %v7380
  %v7402 = vmul.f32 %v7381, %v7381
  %v7403 = vmul.f32 %v7382, %v7382
  %v7404 = vmul.f32 %v7383, %v7383
  %v7405 = vmul.f32 %v7384, %v7384
  %v7406 = vmul.f32 %v7385, %v7385
  %v7407 = vmul.f32 %v7386, %v7386
  %v7408 = vmul.f32 %v7387, %v7387
  %v7409 = vmul.f32 %v7388, %v7388
  %v7410 = vmul.f32 %v7389, %v7389
  %v7411 = vmul.f32 %v7390, %v7390
  %v7412 = vmul.f32 %v7391, %v7391
  %v7413 = vmul.f32 %v7392, %v7392
  %v7414 = vmul.f32 %v7393, %v7393
  %v7415 = vmul.f32 %v7394, %v7394
  %v7416 = vmul.f32 %v7395, %v7395
  %v7417 = vmul.f32 %v7396, %v7396
  %v7418 = vsel %vm647, %v7397, 0.0
  %v7419 = vsel %vm647, %v7398, 0.0
  %v7420 = vadd.f32 %v7418, %v7419
  %v7421 = vsel %vm647, %v7399, 0.0
  %v7422 = vadd.f32 %v7420, %v7421
  %v7423 = vsel %vm647, %v7400, 0.0
  %v7424 = vadd.f32 %v7422, %v7423
  %v7425 = vsel %vm647, %v7401, 0.0
  %v7426 = vadd.f32 %v7424, %v7425
  %v7427 = vsel %vm647, %v7402, 0.0
  %v7428 = vadd.f32 %v7426, %v7427
  %v7429 = vsel %vm647, %v7403, 0.0
  %v7430 = vadd.f32 %v7428, %v7429
  %v7431 = vsel %vm647, %v7404, 0.0
  %v7432 = vadd.f32 %v7430, %v7431
  %v7433 = vsel %vm647, %v7405, 0.0
  %v7434 = vadd.f32 %v7432, %v7433
  %v7435 = vsel %vm647, %v7406, 0.0
  %v7436 = vadd.f32 %v7434, %v7435
  %v7437 = vsel %vm647, %v7407, 0.0
  %v7438 = vadd.f32 %v7436, %v7437
  %v7439 = vsel %vm647, %v7408, 0.0
  %v7440 = vadd.f32 %v7438, %v7439
  %v7441 = vsel %vm647, %v7409, 0.0
  %v7442 = vadd.f32 %v7440, %v7441
  %v7443 = vsel %vm647, %v7410, 0.0
  %v7444 = vadd.f32 %v7442, %v7443
  %v7445 = vsel %vm647, %v7411, 0.0
  %v7446 = vadd.f32 %v7444, %v7445
  %v7447 = vsel %vm647, %v7412, 0.0
  %v7448 = vadd.f32 %v7446, %v7447
  %v7449 = vsel %vm647, %v7413, 0.0
  %v7450 = vadd.f32 %v7448, %v7449
  %v7451 = vsel %vm647, %v7414, 0.0
  %v7452 = vadd.f32 %v7450, %v7451
  %v7453 = vsel %vm647, %v7415, 0.0
  %v7454 = vadd.f32 %v7452, %v7453
  %v7455 = vsel %vm647, %v7416, 0.0
  %v7456 = vadd.f32 %v7454, %v7455
  %v7457 = vsel %vm7366, %v7417, 0.0
  %v7458 = vadd.f32 %v7456, %v7457
  %v7459 = vrot.slane %v7458, 4
  %v7460 = vadd.f32 %v7458, %v7459
  %v7461 = vrot.slane %v7460, 2
  %v7462 = vadd.f32 %v7460, %v7461
  %v7463 = vrot.slane %v7462, 1
  %v7464 = vadd.f32 %v7462, %v7463
  %v7465 = vmul.f32 %v7464, 0.0061728396
  %v7466 = vadd.f32 %v7465, 1e-05
  %v7467 = vrsqrt.pop %v7466
  %v7468 = vmul.f32 %v7467, %v7325
  %v7469 = vlaneseq
  %v7470 = vshrl.u32 %v7469, 7
  %v7471 = vsub.s32 0, %v7470
  %v7472 = vrot.slane %v7468, %v7471
  %v7473 = vmul.f32 %v7376, %v7472
  %v7474 = vmul.f32 %v7377, %v7472
  %v7475 = vmul.f32 %v7378, %v7472
  %v7476 = vmul.f32 %v7379, %v7472
  %v7477 = vmul.f32 %v7380, %v7472
  %v7478 = vmul.f32 %v7381, %v7472
  %v7479 = vmul.f32 %v7382, %v7472
  %v7480 = vmul.f32 %v7383, %v7472
  %v7481 = vmul.f32 %v7384, %v7472
  %v7482 = vmul.f32 %v7385, %v7472
  %v7483 = vmul.f32 %v7386, %v7472
  %v7484 = vmul.f32 %v7387, %v7472
  %v7485 = vmul.f32 %v7388, %v7472
  %v7486 = vmul.f32 %v7389, %v7472
  %v7487 = vmul.f32 %v7390, %v7472
  %v7488 = vmul.f32 %v7391, %v7472
  %v7489 = vmul.f32 %v7392, %v7472
  %v7490 = vmul.f32 %v7393, %v7472
  %v7491 = vmul.f32 %v7394, %v7472
  %v7492 = vmul.f32 %v7395, %v7472
  %v7493 = vmul.f32 %v7396, %v7472
  %v7495 = vlaneseq
  %v7496 = vshrl.u32 %v7495, 7
  %v7497 = vsub.s32 0, %v7496
  %v7498 = vrot.slane %v7326, %v7497
  %v7500 = vadd.f32 %v7473, %v7498
  %v7501 = vadd.f32 %v7474, %v7498
  %v7502 = vadd.f32 %v7475, %v7498
  %v7503 = vadd.f32 %v7476, %v7498
  %v7504 = vadd.f32 %v7477, %v7498
  %v7505 = vadd.f32 %v7478, %v7498
  %v7506 = vadd.f32 %v7479, %v7498
  %v7507 = vadd.f32 %v7480, %v7498
  %v7508 = vadd.f32 %v7481, %v7498
  %v7509 = vadd.f32 %v7482, %v7498
  %v7510 = vadd.f32 %v7483, %v7498
  %v7511 = vadd.f32 %v7484, %v7498
  %v7512 = vadd.f32 %v7485, %v7498
  %v7513 = vadd.f32 %v7486, %v7498
  %v7514 = vadd.f32 %v7487, %v7498
  %v7515 = vadd.f32 %v7488, %v7498
  %v7516 = vadd.f32 %v7489, %v7498
  %v7517 = vadd.f32 %v7490, %v7498
  %v7518 = vadd.f32 %v7491, %v7498
  %v7519 = vadd.f32 %v7492, %v7498
  %v7520 = vadd.f32 %v7493, %v7498
  %v7521 = vtanh.pop %v7500
  %v7522 = vtanh.pop %v7501
  %v7523 = vtanh.pop %v7502
  %v7524 = vtanh.pop %v7503
  %v7525 = vtanh.pop %v7504
  %v7526 = vtanh.pop %v7505
  %v7527 = vtanh.pop %v7506
  %v7528 = vtanh.pop %v7507
  %v7529 = vtanh.pop %v7508
  %v7530 = vtanh.pop %v7509
  %v7531 = vtanh.pop %v7510
  %v7532 = vtanh.pop %v7511
  %v7533 = vtanh.pop %v7512
  %v7534 = vtanh.pop %v7513
  %v7535 = vtanh.pop %v7514
  %v7536 = vtanh.pop %v7515
  %v7537 = vtanh.pop %v7516
  %v7538 = vtanh.pop %v7517
  %v7539 = vtanh.pop %v7518
  %v7540 = vtanh.pop %v7519
  %v7541 = vtanh.pop %v7520
  %v7542 = vadd.f32 %v7521, 2.0
  %v7543 = vadd.f32 %v7522, 2.0
  %v7544 = vadd.f32 %v7523, 2.0
  %v7545 = vadd.f32 %v7524, 2.0
  %v7546 = vadd.f32 %v7525, 2.0
  %v7547 = vadd.f32 %v7526, 2.0
  %v7548 = vadd.f32 %v7527, 2.0
  %v7549 = vadd.f32 %v7528, 2.0
  %v7550 = vadd.f32 %v7529, 2.0
  %v7551 = vadd.f32 %v7530, 2.0
  %v7552 = vadd.f32 %v7531, 2.0
  %v7553 = vadd.f32 %v7532, 2.0
  %v7554 = vadd.f32 %v7533, 2.0
  %v7555 = vadd.f32 %v7534, 2.0
  %v7556 = vadd.f32 %v7535, 2.0
  %v7557 = vadd.f32 %v7536, 2.0
  %v7558 = vadd.f32 %v7537, 2.0
  %v7559 = vadd.f32 %v7538, 2.0
  %v7560 = vadd.f32 %v7539, 2.0
  %v7561 = vadd.f32 %v7540, 2.0
  %v7562 = vadd.f32 %v7541, 2.0
  %v7563 = vld [vmem:[%s9] sm:$0xff]
  %v7564 = vld [vmem:[%s9 + $0x8] sm:$0xff]
  %v7565 = vld [vmem:[%s9 + $0x10] sm:$0xff]
  %v7566 = vld [vmem:[%s9 + $0x18] sm:$0xff]
  %v7567 = vld [vmem:[%s9 + $0x20] sm:$0xff]
  %v7568 = vld [vmem:[%s9 + $0x28] sm:$0xff]
  %v7569 = vld [vmem:[%s9 + $0x30] sm:$0xff]
  %v7570 = vld [vmem:[%s9 + $0x38] sm:$0xff]
  %v7571 = vld [vmem:[%s9 + $0x40] sm:$0xff]
  %v7572 = vld [vmem:[%s9 + $0x48] sm:$0xff]
  %v7573 = vld [vmem:[%s9 + $0x50] sm:$0xff]
  %v7574 = vld [vmem:[%s9 + $0x58] sm:$0xff]
  %v7575 = vld [vmem:[%s9 + $0x60] sm:$0x3]
  %v7576 = vld [vmem:[%s9 + $0x68] sm:$0x3]
  %v7578 = vsel %vm3224, %v7564, 0
  %v7581 = vsel %vm3224, %v7566, 0
  %v7584 = vsel %vm3224, %v7568, 0
  %v7587 = vsel %vm3224, %v7570, 0
  %v7590 = vsel %vm3224, %v7572, 0
  %v7593 = vsel %vm3224, %v7574, 0
  %v7596 = vsel %vm3224, %v7576, 0
  %vm7598 = vcmask 1041408
  %v7600 = vsel %vm7598, %v7562, 0
  %7602 = vmatprep.subr.mxu0 0.0
  %7603 = vmatpush1.msra.mxu0 %v7542
  %7604 = vmatprep.subr.mxu0 0.0
  %7605 = vmatpush1.msra.mxu0 %v7543
  %7606 = vmatprep.subr.mxu0 0.0
  %7607 = vmatpush1.msra.mxu0 %v7544
  %7608 = vmatprep.subr.mxu0 0.0
  %7609 = vmatpush1.msra.mxu0 %v7545
  %7610 = vmatprep.subr.mxu0 0.0
  %7611 = vmatpush1.msra.mxu0 %v7546
  %7612 = vmatprep.subr.mxu0 0.0
  %7613 = vmatpush1.msra.mxu0 %v7547
  %7614 = vmatprep.subr.mxu0 0.0
  %7615 = vmatpush1.msra.mxu0 %v7548
  %7616 = vmatprep.subr.mxu0 0.0
  %7617 = vmatpush1.msra.mxu0 %v7549
  %7618 = vmatprep.subr.mxu0 0.0
  %7619 = vmatpush1.msra.mxu0 %v7550
  %7620 = vmatprep.subr.mxu0 0.0
  %7621 = vmatpush1.msra.mxu0 %v7551
  %7622 = vmatprep.subr.mxu0 0.0
  %7623 = vmatpush1.msra.mxu0 %v7552
  %7624 = vmatprep.subr.mxu0 0.0
  %7625 = vmatpush1.msra.mxu0 %v7553
  %7626 = vmatprep.subr.mxu0 0.0
  %7627 = vmatpush1.msra.mxu0 %v7554
  %7628 = vmatprep.subr.mxu0 0.0
  %7629 = vmatpush1.msra.mxu0 %v7555
  %7630 = vmatprep.subr.mxu0 0.0
  %7631 = vmatpush1.msra.mxu0 %v7556
  %7632 = vmatprep.subr.mxu0 0.0
  %7633 = vmatpush1.msra.mxu0 %v7557
  %7634 = vmatprep.subr.mxu0 0.0
  %7635 = vmatpush1.msra.mxu0 %v7558
  %7636 = vmatprep.subr.mxu0 0.0
  %7637 = vmatpush1.msra.mxu0 %v7559
  %7638 = vmatprep.subr.mxu0 0.0
  %7639 = vmatpush1.msra.mxu0 %v7560
  %7640 = vmatprep.subr.mxu0 0.0
  %7641 = vmatpush1.msra.mxu0 %v7561
  %7642 = vmatprep.subr.mxu0 0.0
  %7643 = vmatpush1.msra.mxu0 %v7600
  %7644 = vmatprep.subr.mxu0 0.0
  %7645 = vmatpush1.msra.mxu0 0.0
  %7646 = vmatprep.subr.mxu0 0.0
  %7647 = vmatpush1.msra.mxu0 0.0
  %7648 = vmatprep.subr.mxu0 0.0
  %7649 = vmatpush1.msra.mxu0 0.0
  %7650 = vmatprep.subr.mxu0 0.0
  %7651 = vmatpush1.msra.mxu0 0.0
  %7652 = vmatprep.subr.mxu0 0.0
  %7653 = vmatpush1.msra.mxu0 0.0
  %7654 = vmatprep.subr.mxu0 0.0
  %7655 = vmatpush1.msra.mxu0 0.0
  %7656 = vmatprep.subr.mxu0 0.0
  %7657 = vmatpush1.msra.mxu0 0.0
  %7658 = vmatprep.subr.mxu0 0.0
  %7659 = vmatpush1.msra.mxu0 0.0
  %7660 = vmatprep.subr.mxu0 0.0
  %7661 = vmatpush1.msra.mxu0 0.0
  %7662 = vmatprep.subr.mxu0 0.0
  %7663 = vmatpush1.msra.mxu0 0.0
  %7664 = vmatprep.subr.mxu0 0.0
  %7665 = vmatpush1.msra.mxu0 0.0
  %7666 = vmatprep.mubr.f32.mxu0 %v7578
  %7667 = vmatmul.mubr.f32.gmra.mrb[0].mxu0 %v7563
  %v7668 = vpop.f32.mrb[0].mxu0
  %v7669 = vadd.f32 0.0, %v7668
  %v7670 = vpop.f32.mrb[0].mxu0
  %7671 = vmatprep.mubr.f32.mxu0 %v7581
  %7672 = vmatmul.mubr.f32.gmra.mrb[0].mxu0 %v7565
  %v7673 = vpop.f32.mrb[0].mxu0
  %v7674 = vadd.f32 0.0, %v7673
  %v7675 = vpop.f32.mrb[0].mxu0
  %7676 = vmatprep.mubr.f32.mxu0 %v7584
  %7677 = vmatmul.mubr.f32.gmra.mrb[0].mxu0 %v7567
  %v7678 = vpop.f32.mrb[0].mxu0
  %v7679 = vadd.f32 0.0, %v7678
  %v7680 = vpop.f32.mrb[0].mxu0
  %7681 = vmatprep.mubr.f32.mxu0 %v7587
  %7682 = vmatmul.mubr.f32.gmra.mrb[0].mxu0 %v7569
  %v7683 = vpop.f32.mrb[0].mxu0
  %v7684 = vadd.f32 0.0, %v7683
  %v7685 = vpop.f32.mrb[0].mxu0
  %7686 = vmatprep.mubr.f32.mxu0 %v7590
  %7687 = vmatmul.mubr.f32.gmra.mrb[0].mxu0 %v7571
  %v7688 = vpop.f32.mrb[0].mxu0
  %v7689 = vadd.f32 0.0, %v7688
  %v7690 = vpop.f32.mrb[0].mxu0
  %7691 = vmatprep.mubr.f32.mxu0 %v7593
  %7692 = vmatmul.mubr.f32.gmra.mrb[0].mxu0 %v7573
  %v7693 = vpop.f32.mrb[0].mxu0
  %v7694 = vadd.f32 0.0, %v7693
  %v7695 = vpop.f32.mrb[0].mxu0
  %7696 = vmatprep.mubr.f32.mxu0 %v7596
  %7697 = vmatmul.mubr.f32.gmra.mrb[0].mxu0 %v7575
  %v7698 = vpop.f32.mrb[0].mxu0
  %v7699 = vadd.f32 0.0, %v7698
  %v7700 = vpop.f32.mrb[0].mxu0
  %7701 = vdwg.mxu0
  %s7702 = scalar_lea.vmem %s9, 112
  %v7703 = vld [vmem:[%s7702] sm:$0xff]
  %v7704 = vld [vmem:[%s7702 + $0x8] sm:$0xff]
  %v7705 = vld [vmem:[%s7702 + $0x10] sm:$0xff]
  %v7706 = vld [vmem:[%s7702 + $0x18] sm:$0xff]
  %v7707 = vld [vmem:[%s7702 + $0x20] sm:$0xff]
  %v7708 = vld [vmem:[%s7702 + $0x28] sm:$0xff]
  %v7709 = vld [vmem:[%s7702 + $0x30] sm:$0xff]
  %v7710 = vld [vmem:[%s7702 + $0x38] sm:$0xff]
  %v7711 = vld [vmem:[%s7702 + $0x40] sm:$0xff]
  %v7712 = vld [vmem:[%s7702 + $0x48] sm:$0xff]
  %v7713 = vld [vmem:[%s7702 + $0x50] sm:$0xff]
  %v7714 = vld [vmem:[%s7702 + $0x58] sm:$0xff]
  %v7715 = vld [vmem:[%s7702 + $0x60] sm:$0x3]
  %v7716 = vld [vmem:[%s7702 + $0x68] sm:$0x3]
  %v7718 = vsel %vm3224, %v7704, 0
  %v7721 = vsel %vm3224, %v7706, 0
  %v7724 = vsel %vm3224, %v7708, 0
  %v7727 = vsel %vm3224, %v7710, 0
  %v7730 = vsel %vm3224, %v7712, 0
  %v7733 = vsel %vm3224, %v7714, 0
  %v7736 = vsel %vm3224, %v7716, 0
  %7738 = vmatprep.subr.mxu0 0.0
  %7739 = vmatpush1.msra.mxu0 %v7542
  %7740 = vmatprep.subr.mxu0 0.0
  %7741 = vmatpush1.msra.mxu0 %v7543
  %7742 = vmatprep.subr.mxu0 0.0
  %7743 = vmatpush1.msra.mxu0 %v7544
  %7744 = vmatprep.subr.mxu0 0.0
  %7745 = vmatpush1.msra.mxu0 %v7545
  %7746 = vmatprep.subr.mxu0 0.0
  %7747 = vmatpush1.msra.mxu0 %v7546
  %7748 = vmatprep.subr.mxu0 0.0
  %7749 = vmatpush1.msra.mxu0 %v7547
  %7750 = vmatprep.subr.mxu0 0.0
  %7751 = vmatpush1.msra.mxu0 %v7548
  %7752 = vmatprep.subr.mxu0 0.0
  %7753 = vmatpush1.msra.mxu0 %v7549
  %7754 = vmatprep.subr.mxu0 0.0
  %7755 = vmatpush1.msra.mxu0 %v7550
  %7756 = vmatprep.subr.mxu0 0.0
  %7757 = vmatpush1.msra.mxu0 %v7551
  %7758 = vmatprep.subr.mxu0 0.0
  %7759 = vmatpush1.msra.mxu0 %v7552
  %7760 = vmatprep.subr.mxu0 0.0
  %7761 = vmatpush1.msra.mxu0 %v7553
  %7762 = vmatprep.subr.mxu0 0.0
  %7763 = vmatpush1.msra.mxu0 %v7554
  %7764 = vmatprep.subr.mxu0 0.0
  %7765 = vmatpush1.msra.mxu0 %v7555
  %7766 = vmatprep.subr.mxu0 0.0
  %7767 = vmatpush1.msra.mxu0 %v7556
  %7768 = vmatprep.subr.mxu0 0.0
  %7769 = vmatpush1.msra.mxu0 %v7557
  %7770 = vmatprep.subr.mxu0 0.0
  %7771 = vmatpush1.msra.mxu0 %v7558
  %7772 = vmatprep.subr.mxu0 0.0
  %7773 = vmatpush1.msra.mxu0 %v7559
  %7774 = vmatprep.subr.mxu0 0.0
  %7775 = vmatpush1.msra.mxu0 %v7560
  %7776 = vmatprep.subr.mxu0 0.0
  %7777 = vmatpush1.msra.mxu0 %v7561
  %7778 = vmatprep.subr.mxu0 0.0
  %7779 = vmatpush1.msra.mxu0 %v7600
  %7780 = vmatprep.subr.mxu0 0.0
  %7781 = vmatpush1.msra.mxu0 0.0
  %7782 = vmatprep.subr.mxu0 0.0
  %7783 = vmatpush1.msra.mxu0 0.0
  %7784 = vmatprep.subr.mxu0 0.0
  %7785 = vmatpush1.msra.mxu0 0.0
  %7786 = vmatprep.subr.mxu0 0.0
  %7787 = vmatpush1.msra.mxu0 0.0
  %7788 = vmatprep.subr.mxu0 0.0
  %7789 = vmatpush1.msra.mxu0 0.0
  %7790 = vmatprep.subr.mxu0 0.0
  %7791 = vmatpush1.msra.mxu0 0.0
  %7792 = vmatprep.subr.mxu0 0.0
  %7793 = vmatpush1.msra.mxu0 0.0
  %7794 = vmatprep.subr.mxu0 0.0
  %7795 = vmatpush1.msra.mxu0 0.0
  %7796 = vmatprep.subr.mxu0 0.0
  %7797 = vmatpush1.msra.mxu0 0.0
  %7798 = vmatprep.subr.mxu0 0.0
  %7799 = vmatpush1.msra.mxu0 0.0
  %7800 = vmatprep.subr.mxu0 0.0
  %7801 = vmatpush1.msra.mxu0 0.0
  %7802 = vmatprep.mubr.f32.mxu0 %v7718
  %7803 = vmatmul.mubr.f32.gmra.mrb[0].mxu0 %v7703
  %v7804 = vpop.f32.mrb[0].mxu0
  %v7805 = vadd.f32 0.0, %v7804
  %v7806 = vpop.f32.mrb[0].mxu0
  %7807 = vmatprep.mubr.f32.mxu0 %v7721
  %7808 = vmatmul.mubr.f32.gmra.mrb[0].mxu0 %v7705
  %v7809 = vpop.f32.mrb[0].mxu0
  %v7810 = vadd.f32 0.0, %v7809
  %v7811 = vpop.f32.mrb[0].mxu0
  %7812 = vmatprep.mubr.f32.mxu0 %v7724
  %7813 = vmatmul.mubr.f32.gmra.mrb[0].mxu0 %v7707
  %v7814 = vpop.f32.mrb[0].mxu0
  %v7815 = vadd.f32 0.0, %v7814
  %v7816 = vpop.f32.mrb[0].mxu0
  %7817 = vmatprep.mubr.f32.mxu0 %v7727
  %7818 = vmatmul.mubr.f32.gmra.mrb[0].mxu0 %v7709
  %v7819 = vpop.f32.mrb[0].mxu0
  %v7820 = vadd.f32 0.0, %v7819
  %v7821 = vpop.f32.mrb[0].mxu0
  %7822 = vmatprep.mubr.f32.mxu0 %v7730
  %7823 = vmatmul.mubr.f32.gmra.mrb[0].mxu0 %v7711
  %v7824 = vpop.f32.mrb[0].mxu0
  %v7825 = vadd.f32 0.0, %v7824
  %v7826 = vpop.f32.mrb[0].mxu0
  %7827 = vmatprep.mubr.f32.mxu0 %v7733
  %7828 = vmatmul.mubr.f32.gmra.mrb[0].mxu0 %v7713
  %v7829 = vpop.f32.mrb[0].mxu0
  %v7830 = vadd.f32 0.0, %v7829
  %v7831 = vpop.f32.mrb[0].mxu0
  %7832 = vmatprep.mubr.f32.mxu0 %v7736
  %7833 = vmatmul.mubr.f32.gmra.mrb[0].mxu0 %v7715
  %v7834 = vpop.f32.mrb[0].mxu0
  %v7835 = vadd.f32 0.0, %v7834
  %v7836 = vpop.f32.mrb[0].mxu0
  %7837 = vdwg.mxu0
  %v7838 = vmax.f32 %v7669, %v7805
  %v7839 = vmax.f32 %v7674, %v7810
  %v7840 = vmax.f32 %v7679, %v7815
  %v7841 = vmax.f32 %v7684, %v7820
  %v7842 = vmax.f32 %v7689, %v7825
  %v7843 = vmax.f32 %v7694, %v7830
  %v7844 = vmax.f32 %v7699, %v7835
  %s7845 = scalar_lea.vmem %s9, 224
  %v7846 = vld [vmem:[%s7845] sm:$0xff]
  %v7847 = vld [vmem:[%s7845 + $0x8] sm:$0xff]
  %v7848 = vld [vmem:[%s7845 + $0x10] sm:$0xff]
  %v7849 = vld [vmem:[%s7845 + $0x18] sm:$0xff]
  %v7850 = vld [vmem:[%s7845 + $0x20] sm:$0xff]
  %v7851 = vld [vmem:[%s7845 + $0x28] sm:$0xff]
  %v7852 = vld [vmem:[%s7845 + $0x30] sm:$0xff]
  %v7853 = vld [vmem:[%s7845 + $0x38] sm:$0xff]
  %v7854 = vld [vmem:[%s7845 + $0x40] sm:$0xff]
  %v7855 = vld [vmem:[%s7845 + $0x48] sm:$0xff]
  %v7856 = vld [vmem:[%s7845 + $0x50] sm:$0xff]
  %v7857 = vld [vmem:[%s7845 + $0x58] sm:$0xff]
  %v7858 = vld [vmem:[%s7845 + $0x60] sm:$0x3]
  %v7859 = vld [vmem:[%s7845 + $0x68] sm:$0x3]
  %v7861 = vsel %vm3224, %v7847, 0
  %v7864 = vsel %vm3224, %v7849, 0
  %v7867 = vsel %vm3224, %v7851, 0
  %v7870 = vsel %vm3224, %v7853, 0
  %v7873 = vsel %vm3224, %v7855, 0
  %v7876 = vsel %vm3224, %v7857, 0
  %v7879 = vsel %vm3224, %v7859, 0
  %7881 = vmatprep.subr.mxu0 0.0
  %7882 = vmatpush1.msra.mxu0 %v7542
  %7883 = vmatprep.subr.mxu0 0.0
  %7884 = vmatpush1.msra.mxu0 %v7543
  %7885 = vmatprep.subr.mxu0 0.0
  %7886 = vmatpush1.msra.mxu0 %v7544
  %7887 = vmatprep.subr.mxu0 0.0
  %7888 = vmatpush1.msra.mxu0 %v7545
  %7889 = vmatprep.subr.mxu0 0.0
  %7890 = vmatpush1.msra.mxu0 %v7546
  %7891 = vmatprep.subr.mxu0 0.0
  %7892 = vmatpush1.msra.mxu0 %v7547
  %7893 = vmatprep.subr.mxu0 0.0
  %7894 = vmatpush1.msra.mxu0 %v7548
  %7895 = vmatprep.subr.mxu0 0.0
  %7896 = vmatpush1.msra.mxu0 %v7549
  %7897 = vmatprep.subr.mxu0 0.0
  %7898 = vmatpush1.msra.mxu0 %v7550
  %7899 = vmatprep.subr.mxu0 0.0
  %7900 = vmatpush1.msra.mxu0 %v7551
  %7901 = vmatprep.subr.mxu0 0.0
  %7902 = vmatpush1.msra.mxu0 %v7552
  %7903 = vmatprep.subr.mxu0 0.0
  %7904 = vmatpush1.msra.mxu0 %v7553
  %7905 = vmatprep.subr.mxu0 0.0
  %7906 = vmatpush1.msra.mxu0 %v7554
  %7907 = vmatprep.subr.mxu0 0.0
  %7908 = vmatpush1.msra.mxu0 %v7555
  %7909 = vmatprep.subr.mxu0 0.0
  %7910 = vmatpush1.msra.mxu0 %v7556
  %7911 = vmatprep.subr.mxu0 0.0
  %7912 = vmatpush1.msra.mxu0 %v7557
  %7913 = vmatprep.subr.mxu0 0.0
  %7914 = vmatpush1.msra.mxu0 %v7558
  %7915 = vmatprep.subr.mxu0 0.0
  %7916 = vmatpush1.msra.mxu0 %v7559
  %7917 = vmatprep.subr.mxu0 0.0
  %7918 = vmatpush1.msra.mxu0 %v7560
  %7919 = vmatprep.subr.mxu0 0.0
  %7920 = vmatpush1.msra.mxu0 %v7561
  %7921 = vmatprep.subr.mxu0 0.0
  %7922 = vmatpush1.msra.mxu0 %v7600
  %7923 = vmatprep.subr.mxu0 0.0
  %7924 = vmatpush1.msra.mxu0 0.0
  %7925 = vmatprep.subr.mxu0 0.0
  %7926 = vmatpush1.msra.mxu0 0.0
  %7927 = vmatprep.subr.mxu0 0.0
  %7928 = vmatpush1.msra.mxu0 0.0
  %7929 = vmatprep.subr.mxu0 0.0
  %7930 = vmatpush1.msra.mxu0 0.0
  %7931 = vmatprep.subr.mxu0 0.0
  %7932 = vmatpush1.msra.mxu0 0.0
  %7933 = vmatprep.subr.mxu0 0.0
  %7934 = vmatpush1.msra.mxu0 0.0
  %7935 = vmatprep.subr.mxu0 0.0
  %7936 = vmatpush1.msra.mxu0 0.0
  %7937 = vmatprep.subr.mxu0 0.0
  %7938 = vmatpush1.msra.mxu0 0.0
  %7939 = vmatprep.subr.mxu0 0.0
  %7940 = vmatpush1.msra.mxu0 0.0
  %7941 = vmatprep.subr.mxu0 0.0
  %7942 = vmatpush1.msra.mxu0 0.0
  %7943 = vmatprep.subr.mxu0 0.0
  %7944 = vmatpush1.msra.mxu0 0.0
  %7945 = vmatprep.mubr.f32.mxu0 %v7861
  %7946 = vmatmul.mubr.f32.gmra.mrb[0].mxu0 %v7846
  %v7947 = vpop.f32.mrb[0].mxu0
  %v7948 = vadd.f32 0.0, %v7947
  %v7949 = vpop.f32.mrb[0].mxu0
  %7950 = vmatprep.mubr.f32.mxu0 %v7864
  %7951 = vmatmul.mubr.f32.gmra.mrb[0].mxu0 %v7848
  %v7952 = vpop.f32.mrb[0].mxu0
  %v7953 = vadd.f32 0.0, %v7952
  %v7954 = vpop.f32.mrb[0].mxu0
  %7955 = vmatprep.mubr.f32.mxu0 %v7867
  %7956 = vmatmul.mubr.f32.gmra.mrb[0].mxu0 %v7850
  %v7957 = vpop.f32.mrb[0].mxu0
  %v7958 = vadd.f32 0.0, %v7957
  %v7959 = vpop.f32.mrb[0].mxu0
  %7960 = vmatprep.mubr.f32.mxu0 %v7870
  %7961 = vmatmul.mubr.f32.gmra.mrb[0].mxu0 %v7852
  %v7962 = vpop.f32.mrb[0].mxu0
  %v7963 = vadd.f32 0.0, %v7962
  %v7964 = vpop.f32.mrb[0].mxu0
  %7965 = vmatprep.mubr.f32.mxu0 %v7873
  %7966 = vmatmul.mubr.f32.gmra.mrb[0].mxu0 %v7854
  %v7967 = vpop.f32.mrb[0].mxu0
  %v7968 = vadd.f32 0.0, %v7967
  %v7969 = vpop.f32.mrb[0].mxu0
  %7970 = vmatprep.mubr.f32.mxu0 %v7876
  %7971 = vmatmul.mubr.f32.gmra.mrb[0].mxu0 %v7856
  %v7972 = vpop.f32.mrb[0].mxu0
  %v7973 = vadd.f32 0.0, %v7972
  %v7974 = vpop.f32.mrb[0].mxu0
  %7975 = vmatprep.mubr.f32.mxu0 %v7879
  %7976 = vmatmul.mubr.f32.gmra.mrb[0].mxu0 %v7858
  %v7977 = vpop.f32.mrb[0].mxu0
  %v7978 = vadd.f32 0.0, %v7977
  %v7979 = vpop.f32.mrb[0].mxu0
  %7980 = vdwg.mxu0
  %v7981 = vmax.f32 %v7838, %v7948
  %v7982 = vmax.f32 %v7839, %v7953
  %v7983 = vmax.f32 %v7840, %v7958
  %v7984 = vmax.f32 %v7841, %v7963
  %v7985 = vmax.f32 %v7842, %v7968
  %v7986 = vmax.f32 %v7843, %v7973
  %v7987 = vmax.f32 %v7844, %v7978
  %s7988 = scalar_lea.vmem %s9, 336
  %v7989 = vld [vmem:[%s7988] sm:$0xff]
  %v7990 = vld [vmem:[%s7988 + $0x8] sm:$0xff]
  %v7991 = vld [vmem:[%s7988 + $0x10] sm:$0xff]
  %v7992 = vld [vmem:[%s7988 + $0x18] sm:$0xff]
  %v7993 = vld [vmem:[%s7988 + $0x20] sm:$0xff]
  %v7994 = vld [vmem:[%s7988 + $0x28] sm:$0xff]
  %v7995 = vld [vmem:[%s7988 + $0x30] sm:$0xff]
  %v7996 = vld [vmem:[%s7988 + $0x38] sm:$0xff]
  %v7997 = vld [vmem:[%s7988 + $0x40] sm:$0xff]
  %v7998 = vld [vmem:[%s7988 + $0x48] sm:$0xff]
  %v7999 = vld [vmem:[%s7988 + $0x50] sm:$0xff]
  %v8000 = vld [vmem:[%s7988 + $0x58] sm:$0xff]
  %v8001 = vld [vmem:[%s7988 + $0x60] sm:$0x3]
  %v8002 = vld [vmem:[%s7988 + $0x68] sm:$0x3]
  %v8004 = vsel %vm3224, %v7990, 0
  %v8007 = vsel %vm3224, %v7992, 0
  %v8010 = vsel %vm3224, %v7994, 0
  %v8013 = vsel %vm3224, %v7996, 0
  %v8016 = vsel %vm3224, %v7998, 0
  %v8019 = vsel %vm3224, %v8000, 0
  %v8022 = vsel %vm3224, %v8002, 0
  %8024 = vmatprep.subr.mxu0 0.0
  %8025 = vmatpush1.msra.mxu0 %v7542
  %8026 = vmatprep.subr.mxu0 0.0
  %8027 = vmatpush1.msra.mxu0 %v7543
  %8028 = vmatprep.subr.mxu0 0.0
  %8029 = vmatpush1.msra.mxu0 %v7544
  %8030 = vmatprep.subr.mxu0 0.0
  %8031 = vmatpush1.msra.mxu0 %v7545
  %8032 = vmatprep.subr.mxu0 0.0
  %8033 = vmatpush1.msra.mxu0 %v7546
  %8034 = vmatprep.subr.mxu0 0.0
  %8035 = vmatpush1.msra.mxu0 %v7547
  %8036 = vmatprep.subr.mxu0 0.0
  %8037 = vmatpush1.msra.mxu0 %v7548
  %8038 = vmatprep.subr.mxu0 0.0
  %8039 = vmatpush1.msra.mxu0 %v7549
  %8040 = vmatprep.subr.mxu0 0.0
  %8041 = vmatpush1.msra.mxu0 %v7550
  %8042 = vmatprep.subr.mxu0 0.0
  %8043 = vmatpush1.msra.mxu0 %v7551
  %8044 = vmatprep.subr.mxu0 0.0
  %8045 = vmatpush1.msra.mxu0 %v7552
  %8046 = vmatprep.subr.mxu0 0.0
  %8047 = vmatpush1.msra.mxu0 %v7553
  %8048 = vmatprep.subr.mxu0 0.0
  %8049 = vmatpush1.msra.mxu0 %v7554
  %8050 = vmatprep.subr.mxu0 0.0
  %8051 = vmatpush1.msra.mxu0 %v7555
  %8052 = vmatprep.subr.mxu0 0.0
  %8053 = vmatpush1.msra.mxu0 %v7556
  %8054 = vmatprep.subr.mxu0 0.0
  %8055 = vmatpush1.msra.mxu0 %v7557
  %8056 = vmatprep.subr.mxu0 0.0
  %8057 = vmatpush1.msra.mxu0 %v7558
  %8058 = vmatprep.subr.mxu0 0.0
  %8059 = vmatpush1.msra.mxu0 %v7559
  %8060 = vmatprep.subr.mxu0 0.0
  %8061 = vmatpush1.msra.mxu0 %v7560
  %8062 = vmatprep.subr.mxu0 0.0
  %8063 = vmatpush1.msra.mxu0 %v7561
  %8064 = vmatprep.subr.mxu0 0.0
  %8065 = vmatpush1.msra.mxu0 %v7600
  %8066 = vmatprep.subr.mxu0 0.0
  %8067 = vmatpush1.msra.mxu0 0.0
  %8068 = vmatprep.subr.mxu0 0.0
  %8069 = vmatpush1.msra.mxu0 0.0
  %8070 = vmatprep.subr.mxu0 0.0
  %8071 = vmatpush1.msra.mxu0 0.0
  %8072 = vmatprep.subr.mxu0 0.0
  %8073 = vmatpush1.msra.mxu0 0.0
  %8074 = vmatprep.subr.mxu0 0.0
  %8075 = vmatpush1.msra.mxu0 0.0
  %8076 = vmatprep.subr.mxu0 0.0
  %8077 = vmatpush1.msra.mxu0 0.0
  %8078 = vmatprep.subr.mxu0 0.0
  %8079 = vmatpush1.msra.mxu0 0.0
  %8080 = vmatprep.subr.mxu0 0.0
  %8081 = vmatpush1.msra.mxu0 0.0
  %8082 = vmatprep.subr.mxu0 0.0
  %8083 = vmatpush1.msra.mxu0 0.0
  %8084 = vmatprep.subr.mxu0 0.0
  %8085 = vmatpush1.msra.mxu0 0.0
  %8086 = vmatprep.subr.mxu0 0.0
  %8087 = vmatpush1.msra.mxu0 0.0
  %8088 = vmatprep.mubr.f32.mxu0 %v8004
  %8089 = vmatmul.mubr.f32.gmra.mrb[0].mxu0 %v7989
  %v8090 = vpop.f32.mrb[0].mxu0
  %v8091 = vadd.f32 0.0, %v8090
  %v8092 = vpop.f32.mrb[0].mxu0
  %8093 = vmatprep.mubr.f32.mxu0 %v8007
  %8094 = vmatmul.mubr.f32.gmra.mrb[0].mxu0 %v7991
  %v8095 = vpop.f32.mrb[0].mxu0
  %v8096 = vadd.f32 0.0, %v8095
  %v8097 = vpop.f32.mrb[0].mxu0
  %8098 = vmatprep.mubr.f32.mxu0 %v8010
  %8099 = vmatmul.mubr.f32.gmra.mrb[0].mxu0 %v7993
  %v8100 = vpop.f32.mrb[0].mxu0
  %v8101 = vadd.f32 0.0, %v8100
  %v8102 = vpop.f32.mrb[0].mxu0
  %8103 = vmatprep.mubr.f32.mxu0 %v8013
  %8104 = vmatmul.mubr.f32.gmra.mrb[0].mxu0 %v7995
  %v8105 = vpop.f32.mrb[0].mxu0
  %v8106 = vadd.f32 0.0, %v8105
  %v8107 = vpop.f32.mrb[0].mxu0
  %8108 = vmatprep.mubr.f32.mxu0 %v8016
  %8109 = vmatmul.mubr.f32.gmra.mrb[0].mxu0 %v7997
  %v8110 = vpop.f32.mrb[0].mxu0
  %v8111 = vadd.f32 0.0, %v8110
  %v8112 = vpop.f32.mrb[0].mxu0
  %8113 = vmatprep.mubr.f32.mxu0 %v8019
  %8114 = vmatmul.mubr.f32.gmra.mrb[0].mxu0 %v7999
  %v8115 = vpop.f32.mrb[0].mxu0
  %v8116 = vadd.f32 0.0, %v8115
  %v8117 = vpop.f32.mrb[0].mxu0
  %8118 = vmatprep.mubr.f32.mxu0 %v8022
  %8119 = vmatmul.mubr.f32.gmra.mrb[0].mxu0 %v8001
  %v8120 = vpop.f32.mrb[0].mxu0
  %v8121 = vadd.f32 0.0, %v8120
  %v8122 = vpop.f32.mrb[0].mxu0
  %8123 = vdwg.mxu0
  %v8124 = vmax.f32 %v7981, %v8091
  %v8125 = vmax.f32 %v7982, %v8096
  %v8126 = vmax.f32 %v7983, %v8101
  %v8127 = vmax.f32 %v7984, %v8106
  %v8128 = vmax.f32 %v7985, %v8111
  %v8129 = vmax.f32 %v7986, %v8116
  %v8130 = vmax.f32 %v7987, %v8121
  %v8131 = vsub.f32 %v8124, 2.0
  %v8132 = vsub.f32 %v8125, 2.0
  %v8133 = vsub.f32 %v8126, 2.0
  %v8134 = vsub.f32 %v8127, 2.0
  %v8135 = vsub.f32 %v8128, 2.0
  %v8136 = vsub.f32 %v8129, 2.0
  %v8137 = vsub.f32 %v8130, 2.0
  %8138 = vst.msk [vmem:[%s10] sm:$0xff] %vm647, %v8131
  %8139 = vst.msk [vmem:[%s10 + $0x8] sm:$0xff] %vm647, %v8132
  %8140 = vst.msk [vmem:[%s10 + $0x10] sm:$0xff] %vm647, %v8133
  %8141 = vst.msk [vmem:[%s10 + $0x18] sm:$0xff] %vm647, %v8134
  %8142 = vst.msk [vmem:[%s10 + $0x20] sm:$0xff] %vm647, %v8135
  %8143 = vst.msk [vmem:[%s10 + $0x28] sm:$0xff] %vm647, %v8136
  %8144 = vst.msk [vmem:[%s10 + $0x30] sm:$0x3] %vm7366, %v8137
  // Predicated region
  $region42: #{base_conv_forward.1} parent=0 // pred_check
    _
  $region43: #{base_conv_forward.1} parent=0 // pred_check_branch
    %8146 = sbr.rel (0) target = $region45
  $region44: #{base_conv_forward.1} parent=0 // pred_region
    _
  $region45: #{base_conv_forward.1} parent=0 // pred_fallthru
    _
  // Predicated region
  $region46: #{base_conv_forward.1} parent=0 // pred_check
    _
  $region47: #{base_conv_forward.1} parent=0 // pred_check_branch
    %8148 = sbr.rel (0) target = $region49
  $region48: #{base_conv_forward.1} parent=0 // pred_region
    _
  $region49: #{base_conv_forward.1} parent=0 // pred_fallthru
    _

</llo_original>
